<compile_context>
chip_gen: v6e
topology: v6e:2x2x1
jax: 0.10.0
libtpu: 0.0.40
codegen_flags: <defaults>
</compile_context>

<pallas_src>
import functools

import jax
import jax.numpy as jnp
from jax.experimental import pallas as pl
from jax.experimental.pallas import tpu as pltpu

BN_EPS = 1e-5
EXPANSION = 4


# ----------------------------- Pallas kernels ------------------------------ #

def _matmul_kernel(x_ref, w_ref, b_ref, *rest, relu, has_residual):
    """(tm,K)@(K,tn) on the MXU (bf16 in, f32 acc) + bias [+ residual] [+ ReLU]."""
    if has_residual:
        r_ref, o_ref = rest
    else:
        (o_ref,) = rest
    acc = jnp.dot(x_ref[...], w_ref[...], preferred_element_type=jnp.float32)
    y = acc + b_ref[...]
    if has_residual:
        y = y + r_ref[...]
    if relu:
        y = jnp.maximum(y, 0.0)
    o_ref[...] = y.astype(o_ref.dtype)


def matmul_bn_act(x, w, bias, *, relu, residual=None, out_dtype=jnp.float32):
    """y = maybe_relu(x @ w + bias [+ residual]).

    x: (M, K) any float dtype (cast to bf16), w: (K, N) BN-folded weights,
    bias: (N,) f32, residual: optional (M, N) added in f32.
    """
    m, k = x.shape
    k2, n = w.shape
    assert k == k2
    tm = 128 if m % 128 == 0 else m               # M tile (full if not 128-aligned)
    tn = 256 if (n > 256 and n % 256 == 0) else n  # N tile; K kept whole (small)
    grid = (m // tm, n // tn)

    x_bf = x.astype(jnp.bfloat16)
    w_bf = w.astype(jnp.bfloat16)
    b2 = bias.reshape(1, n).astype(jnp.float32)

    in_specs = [
        pl.BlockSpec((tm, k), lambda i, j: (i, 0)),
        pl.BlockSpec((k, tn), lambda i, j: (0, j)),
        pl.BlockSpec((1, tn), lambda i, j: (0, j)),
    ]
    args = [x_bf, w_bf, b2]
    if residual is not None:
        in_specs.append(pl.BlockSpec((tm, tn), lambda i, j: (i, j)))
        args.append(residual.astype(jnp.float32))

    kernel = functools.partial(_matmul_kernel, relu=relu,
                               has_residual=residual is not None)
    return pl.pallas_call(
        kernel,
        out_shape=jax.ShapeDtypeStruct((m, n), out_dtype),
        grid=grid,
        in_specs=in_specs,
        out_specs=pl.BlockSpec((tm, tn), lambda i, j: (i, j)),
        compiler_params=pltpu.CompilerParams(
            dimension_semantics=("parallel", "parallel")),
    )(*args)


def _conv3x3_kernel(xp_ref, w_ref, b_ref, o_ref, *, nb, ho, wo, relu):
    """3x3 conv (stride 1, pad already applied) as 9 tap matmuls accumulated in f32.

    xp_ref: (nb, ho+2, wo+2, cin) bf16 padded activation (resident in VMEM)
    w_ref : (9, cin, cout) bf16 BN-folded weights, tap index = di*3 + dj
    b_ref : (1, cout) f32 bias
    o_ref : (nb*ho*wo, cout) bf16 output
    """
    cout = o_ref.shape[-1]
    acc = jnp.zeros((nb * ho * wo, cout), jnp.float32)
    for di in range(3):
        for dj in range(3):
            tap = xp_ref[:, di:di + ho, dj:dj + wo, :]       # static slice, no HBM copy
            tap2d = tap.reshape(nb * ho * wo, tap.shape[-1])
            acc = acc + jnp.dot(tap2d, w_ref[di * 3 + dj],
                                preferred_element_type=jnp.float32)
    y = acc + b_ref[...]
    if relu:
        y = jnp.maximum(y, 0.0)
    o_ref[...] = y.astype(o_ref.dtype)


def conv3x3_bn_relu(x_nhwc, w9, bias, *, stride=1):
    """3x3 conv (padding=1, bias=False) + folded BN + ReLU.  Returns NHWC bf16."""
    nb, h, w, cin = x_nhwc.shape
    cout = w9.shape[-1]
    xp = jnp.pad(x_nhwc.astype(jnp.bfloat16), ((0, 0), (1, 1), (1, 1), (0, 0)))
    kernel = functools.partial(_conv3x3_kernel, nb=nb, ho=h, wo=w, relu=True)
    # Whole (small) arrays resident in VMEM: single program, weights stay loaded,
    # no im2col patches materialized in HBM.
    y = pl.pallas_call(
        kernel,
        out_shape=jax.ShapeDtypeStruct((nb * h * w, cout), jnp.bfloat16),
    )(xp, w9.astype(jnp.bfloat16), bias.reshape(1, cout).astype(jnp.float32))
    y = y.reshape(nb, h, w, cout)
    if stride > 1:
        # stride-s 3x3 conv (padding=1) == stride-1 conv subsampled at ::s
        # (correct, but recomputes skipped rows; fine for the small demo shapes).
        y = y[:, ::stride, ::stride, :]
    return y


# --------------------------- parameter creation ----------------------------- #

def _kaiming(key, shape, fan_out):
    return jax.random.normal(key, shape, jnp.float32) * (2.0 / fan_out) ** 0.5


def init_bn(c):
    return dict(gamma=jnp.ones((c,), jnp.float32), beta=jnp.zeros((c,), jnp.float32),
                mean=jnp.zeros((c,), jnp.float32), var=jnp.ones((c,), jnp.float32))


def fold_bn(w, bn):
    """Fold inference BN into conv weights: returns (w*scale as bf16, bias f32)."""
    scale = bn['gamma'] * jax.lax.rsqrt(bn['var'] + BN_EPS)
    w_folded = (w * scale).astype(jnp.bfloat16)          # scale broadcasts over cout
    bias = (bn['beta'] - bn['mean'] * scale).astype(jnp.float32)
    return w_folded, bias


def init_bottleneck(key, inplanes, planes, with_downsample, base_width=64, groups=1):
    # TODO(synk): groups > 1 and dilation > 1 variants of conv3x3 are not implemented
    #             (module defaults groups=1, dilation=1 are what we support).
    width = int(planes * (base_width / 64.0)) * groups
    cout = planes * EXPANSION
    ks = jax.random.split(key, 4)
    # Weights stored in matmul layout: 1x1 -> (cin, cout); 3x3 -> (9, cin, cout)
    # with tap index di*3+dj (PyTorch (Cout,Cin,kh,kw) maps via transpose(2,3,1,0)).
    w1 = _kaiming(ks[0], (inplanes, width), fan_out=width)
    w2 = _kaiming(ks[1], (9, width, width), fan_out=width * 9)
    w3 = _kaiming(ks[2], (width, cout), fan_out=cout)
    p = dict(conv1=fold_bn(w1, init_bn(width)),
             conv2=fold_bn(w2, init_bn(width)),
             conv3=fold_bn(w3, init_bn(cout)))
    if with_downsample:
        wd = _kaiming(ks[3], (inplanes, cout), fan_out=cout)
        p['down'] = fold_bn(wd, init_bn(cout))
    return p


# ------------------------------- forward ------------------------------------ #

def bottleneck_forward(params, x_nchw, *, stride=1):
    """Inference forward of one Bottleneck block.  x: NCHW f32 -> NCHW f32."""
    nb, cin, h, w = x_nchw.shape
    x = jnp.transpose(x_nchw, (0, 2, 3, 1))                     # NHWC internal layout
    x2d = x.reshape(nb * h * w, cin)

    # conv1 (1x1) + bn1 + relu  -> bf16 activation
    w1, b1 = params['conv1']
    width = w1.shape[1]
    out = matmul_bn_act(x2d, w1, b1, relu=True, out_dtype=jnp.bfloat16)
    out = out.reshape(nb, h, w, width)

    # conv2 (3x3, stride) + bn2 + relu  -> bf16 activation
    w2, b2 = params['conv2']
    out = conv3x3_bn_relu(out, w2, b2, stride=stride)
    _, ho, wo, _ = out.shape

    # identity / downsample branch (f32)
    if 'down' in params:
        wd, bd = params['down']
        xs = x[:, ::stride, ::stride, :] if stride > 1 else x    # strided 1x1 conv
        identity = matmul_bn_act(xs.reshape(nb * ho * wo, cin), wd, bd,
                                 relu=False, out_dtype=jnp.float32)
    else:
        assert stride == 1 and cin == params['conv3'][0].shape[1]
        identity = x2d.astype(jnp.float32)

    # conv3 (1x1) + bn3 + residual add + relu, fused in one kernel epilogue
    w3, b3 = params['conv3']
    y = matmul_bn_act(out.reshape(nb * ho * wo, width), w3, b3,
                      relu=True, residual=identity, out_dtype=jnp.float32)
    y = y.reshape(nb, ho, wo, w3.shape[1])
    return jnp.transpose(y, (0, 3, 1, 2))                        # back to NCHW


if __name__ == "__main__":
    key = jax.random.PRNGKey(0)
    k1, k2, kx = jax.random.split(key, 3)

    NB, INPLANES, H, W = 2, 64, 16, 16
    PLANES, STRIDE = 32, 1                      # width=32, output channels = 128

    # Block 1: has a downsample (inplanes != planes*expansion).
    block1 = init_bottleneck(k1, INPLANES, PLANES, with_downsample=True)
    # Block 2: plain identity residual (inplanes == planes*expansion).
    block2 = init_bottleneck(k2, PLANES * EXPANSION, PLANES, with_downsample=False)

    x = jax.random.normal(kx, (NB, INPLANES, H, W), jnp.float32)

    @jax.jit
    def fwd(p1, p2, xx):
        y = bottleneck_forward(p1, xx, stride=STRIDE)
        return bottleneck_forward(p2, y, stride=1)

    out = fwd(block1, block2, x)
    out = jax.block_until_ready(out)
    assert out.shape == (NB, PLANES * EXPANSION, H // STRIDE, W // STRIDE)
    assert bool(jnp.all(jnp.isfinite(out)))
    print("KERNEL_OK")
</pallas_src>

<mosaic_0001>
module attributes {stable_mosaic.version = 11 : i64} {
  func.func @_matmul_kernel(%arg0: i32, %arg1: i32, %arg2: memref<128x64xbf16, #tpu.memory_space<vmem>>, %arg3: memref<64x32xbf16, #tpu.memory_space<vmem>>, %arg4: memref<1x32xf32, #tpu.memory_space<vmem>>, %arg5: memref<128x32xbf16, #tpu.memory_space<vmem>>) attributes {dimension_semantics = [#tpu.dimension_semantics<parallel>, #tpu.dimension_semantics<parallel>], iteration_bounds = array<i64: 4, 1>, scalar_prefetch = 0 : i64, scratch_operands = 0 : i64, tpu.core_type = #tpu.core_type<tc>, window_params = [{transform_indices = @transform_0, window_bounds = array<i64: 128, 64>}, {transform_indices = @transform_1, window_bounds = array<i64: 64, 32>}, {transform_indices = @transform_2, window_bounds = array<i64: 1, 32>}, {transform_indices = @transform_3, window_bounds = array<i64: 128, 32>}]} {
    %c0 = arith.constant 0 : index
    %c0_0 = arith.constant 0 : index
    %0 = vector.load %arg2[%c0, %c0_0] : memref<128x64xbf16, #tpu.memory_space<vmem>>, vector<128x64xbf16>
    %c0_1 = arith.constant 0 : index
    %c0_2 = arith.constant 0 : index
    %1 = vector.load %arg3[%c0_1, %c0_2] : memref<64x32xbf16, #tpu.memory_space<vmem>>, vector<64x32xbf16>
    %cst = arith.constant dense<0.000000e+00> : vector<128x32xf32>
    %2 = tpu.matmul %0, %1, %cst {dimension_numbers = #tpu.dot_dimension_numbers<[1], [0], [0], [1], [0, 0, 1, 1], [], []>} : vector<128x64xbf16>, vector<64x32xbf16>, vector<128x32xf32> -> vector<128x32xf32>
    %c0_3 = arith.constant 0 : index
    %c0_4 = arith.constant 0 : index
    %3 = vector.load %arg4[%c0_3, %c0_4] : memref<1x32xf32, #tpu.memory_space<vmem>>, vector<1x32xf32>
    %4 = vector.broadcast %3 : vector<1x32xf32> to vector<128x32xf32>
    %5 = arith.addf %2, %4 : vector<128x32xf32>
    %cst_5 = arith.constant 0.000000e+00 : f32
    %6 = vector.broadcast %cst_5 : f32 to vector<128x32xf32>
    %7 = arith.maximumf %5, %6 : vector<128x32xf32>
    %8 = arith.truncf %7 : vector<128x32xf32> to vector<128x32xbf16>
    %c0_6 = arith.constant 0 : index
    %c0_7 = arith.constant 0 : index
    %9 = vector.load %arg5[%c0_6, %c0_7] : memref<128x32xbf16, #tpu.memory_space<vmem>>, vector<128x32xbf16>
    tpu.vector_store %arg5[%c0_6, %c0_7], %8 {strides = array<i32>} : memref<128x32xbf16, #tpu.memory_space<vmem>>, vector<128x32xbf16>,
    return
  }
  func.func @transform_0(%arg0: i32, %arg1: i32) -> (i32, i32) {
    %c0_i32 = arith.constant 0 : i32
    %c0_i32_0 = arith.constant 0 : i32
    return %arg0, %c0_i32 : i32, i32
  }
  func.func @transform_1(%arg0: i32, %arg1: i32) -> (i32, i32) {
    %c0_i32 = arith.constant 0 : i32
    %c0_i32_0 = arith.constant 0 : i32
    return %c0_i32, %arg1 : i32, i32
  }
  func.func @transform_2(%arg0: i32, %arg1: i32) -> (i32, i32) {
    %c0_i32 = arith.constant 0 : i32
    %c0_i32_0 = arith.constant 0 : i32
    return %c0_i32, %arg1 : i32, i32
  }
  func.func @transform_3(%arg0: i32, %arg1: i32) -> (i32, i32) {
    %c0_i32 = arith.constant 0 : i32
    return %arg0, %arg1 : i32, i32
  }
}

module attributes {stable_mosaic.version = 11 : i64} {
  func.func @_matmul_kernel(%arg0: i32, %arg1: i32, %arg2: memref<128x64xbf16, #tpu.memory_space<vmem>>, %arg3: memref<64x128xbf16, #tpu.memory_space<vmem>>, %arg4: memref<1x128xf32, #tpu.memory_space<vmem>>, %arg5: memref<128x128xf32, #tpu.memory_space<vmem>>) attributes {dimension_semantics = [#tpu.dimension_semantics<parallel>, #tpu.dimension_semantics<parallel>], iteration_bounds = array<i64: 4, 1>, scalar_prefetch = 0 : i64, scratch_operands = 0 : i64, tpu.core_type = #tpu.core_type<tc>, window_params = [{transform_indices = @transform_0, window_bounds = array<i64: 128, 64>}, {transform_indices = @transform_1, window_bounds = array<i64: 64, 128>}, {transform_indices = @transform_2, window_bounds = array<i64: 1, 128>}, {transform_indices = @transform_3, window_bounds = array<i64: 128, 128>}]} {
    %c0 = arith.constant 0 : index
    %c0_0 = arith.constant 0 : index
    %0 = vector.load %arg2[%c0, %c0_0] : memref<128x64xbf16, #tpu.memory_space<vmem>>, vector<128x64xbf16>
    %c0_1 = arith.constant 0 : index
    %c0_2 = arith.constant 0 : index
    %1 = vector.load %arg3[%c0_1, %c0_2] : memref<64x128xbf16, #tpu.memory_space<vmem>>, vector<64x128xbf16>
    %cst = arith.constant dense<0.000000e+00> : vector<128x128xf32>
    %2 = tpu.matmul %0, %1, %cst {dimension_numbers = #tpu.dot_dimension_numbers<[1], [0], [0], [1], [0, 0, 1, 1], [], []>} : vector<128x64xbf16>, vector<64x128xbf16>, vector<128x128xf32> -> vector<128x128xf32>
    %c0_3 = arith.constant 0 : index
    %c0_4 = arith.constant 0 : index
    %3 = vector.load %arg4[%c0_3, %c0_4] : memref<1x128xf32, #tpu.memory_space<vmem>>, vector<1x128xf32>
    %4 = vector.broadcast %3 : vector<1x128xf32> to vector<128x128xf32>
    %5 = arith.addf %2, %4 : vector<128x128xf32>
    %c0_5 = arith.constant 0 : index
    %c0_6 = arith.constant 0 : index
    %6 = vector.load %arg5[%c0_5, %c0_6] : memref<128x128xf32, #tpu.memory_space<vmem>>, vector<128x128xf32>
    tpu.vector_store %arg5[%c0_5, %c0_6], %5 {strides = array<i32>} : memref<128x128xf32, #tpu.memory_space<vmem>>, vector<128x128xf32>,
    return
  }
  func.func @transform_0(%arg0: i32, %arg1: i32) -> (i32, i32) {
    %c0_i32 = arith.constant 0 : i32
    %c0_i32_0 = arith.constant 0 : i32
    return %arg0, %c0_i32 : i32, i32
  }
  func.func @transform_1(%arg0: i32, %arg1: i32) -> (i32, i32) {
    %c0_i32 = arith.constant 0 : i32
    %c0_i32_0 = arith.constant 0 : i32
    return %c0_i32, %arg1 : i32, i32
  }
  func.func @transform_2(%arg0: i32, %arg1: i32) -> (i32, i32) {
    %c0_i32 = arith.constant 0 : i32
    %c0_i32_0 = arith.constant 0 : i32
    return %c0_i32, %arg1 : i32, i32
  }
  func.func @transform_3(%arg0: i32, %arg1: i32) -> (i32, i32) {
    %c0_i32 = arith.constant 0 : i32
    return %arg0, %arg1 : i32, i32
  }
}

module attributes {stable_mosaic.version = 11 : i64} {
  func.func @_conv3x3_kernel(%arg0: memref<2x18x18x32xbf16, #tpu.memory_space<vmem>>, %arg1: memref<9x32x32xbf16, #tpu.memory_space<vmem>>, %arg2: memref<1x32xf32, #tpu.memory_space<vmem>>, %arg3: memref<512x32xbf16, #tpu.memory_space<vmem>>) attributes {dimension_semantics = [], scalar_prefetch = 0 : i64, scratch_operands = 0 : i64, tpu.core_type = #tpu.core_type<tc>} {
    %cst = arith.constant 0.000000e+00 : f32
    %0 = vector.broadcast %cst : f32 to vector<512x32xf32>
    %c0 = arith.constant 0 : index
    %c0_0 = arith.constant 0 : index
    %c0_1 = arith.constant 0 : index
    %c0_2 = arith.constant 0 : index
    %1 = vector.load %arg0[%c0, %c0_0, %c0_1, %c0_2] : memref<2x18x18x32xbf16, #tpu.memory_space<vmem>>, vector<2x16x16x32xbf16>
    %2 = vector.shape_cast %1 : vector<2x16x16x32xbf16> to vector<512x32xbf16>
    %c0_3 = arith.constant 0 : index
    %c0_4 = arith.constant 0 : index
    %c0_5 = arith.constant 0 : index
    %3 = vector.load %arg1[%c0_3, %c0_4, %c0_5] : memref<9x32x32xbf16, #tpu.memory_space<vmem>>, vector<1x32x32xbf16>
    %4 = vector.shape_cast %3 : vector<1x32x32xbf16> to vector<32x32xbf16>
    %cst_6 = arith.constant dense<0.000000e+00> : vector<512x32xf32>
    %5 = tpu.matmul %2, %4, %cst_6 {dimension_numbers = #tpu.dot_dimension_numbers<[1], [0], [0], [1], [0, 0, 1, 1], [], []>} : vector<512x32xbf16>, vector<32x32xbf16>, vector<512x32xf32> -> vector<512x32xf32>
    %6 = arith.addf %0, %5 : vector<512x32xf32>
    %c0_7 = arith.constant 0 : index
    %c0_8 = arith.constant 0 : index
    %c1 = arith.constant 1 : index
    %c0_9 = arith.constant 0 : index
    %7 = vector.load %arg0[%c0_7, %c0_8, %c1, %c0_9] : memref<2x18x18x32xbf16, #tpu.memory_space<vmem>>, vector<2x16x16x32xbf16>
    %8 = vector.shape_cast %7 : vector<2x16x16x32xbf16> to vector<512x32xbf16>
    %c1_10 = arith.constant 1 : index
    %c0_11 = arith.constant 0 : index
    %c0_12 = arith.constant 0 : index
    %9 = vector.load %arg1[%c1_10, %c0_11, %c0_12] : memref<9x32x32xbf16, #tpu.memory_space<vmem>>, vector<1x32x32xbf16>
    %10 = vector.shape_cast %9 : vector<1x32x32xbf16> to vector<32x32xbf16>
    %cst_13 = arith.constant dense<0.000000e+00> : vector<512x32xf32>
    %11 = tpu.matmul %8, %10, %cst_13 {dimension_numbers = #tpu.dot_dimension_numbers<[1], [0], [0], [1], [0, 0, 1, 1], [], []>} : vector<512x32xbf16>, vector<32x32xbf16>, vector<512x32xf32> -> vector<512x32xf32>
    %12 = arith.addf %6, %11 : vector<512x32xf32>
    %c0_14 = arith.constant 0 : index
    %c0_15 = arith.constant 0 : index
    %c2 = arith.constant 2 : index
    %c0_16 = arith.constant 0 : index
    %13 = vector.load %arg0[%c0_14, %c0_15, %c2, %c0_16] : memref<2x18x18x32xbf16, #tpu.memory_space<vmem>>, vector<2x16x16x32xbf16>
    %14 = vector.shape_cast %13 : vector<2x16x16x32xbf16> to vector<512x32xbf16>
    %c2_17 = arith.constant 2 : index
    %c0_18 = arith.constant 0 : index
    %c0_19 = arith.constant 0 : index
    %15 = vector.load %arg1[%c2_17, %c0_18, %c0_19] : memref<9x32x32xbf16, #tpu.memory_space<vmem>>, vector<1x32x32xbf16>
    %16 = vector.shape_cast %15 : vector<1x32x32xbf16> to vector<32x32xbf16>
    %cst_20 = arith.constant dense<0.000000e+00> : vector<512x32xf32>
    %17 = tpu.matmul %14, %16, %cst_20 {dimension_numbers = #tpu.dot_dimension_numbers<[1], [0], [0], [1], [0, 0, 1, 1], [], []>} : vector<512x32xbf16>, vector<32x32xbf16>, vector<512x32xf32> -> vector<512x32xf32>
    %18 = arith.addf %12, %17 : vector<512x32xf32>
    %c0_21 = arith.constant 0 : index
    %c1_22 = arith.constant 1 : index
    %c0_23 = arith.constant 0 : index
    %c0_24 = arith.constant 0 : index
    %19 = vector.load %arg0[%c0_21, %c1_22, %c0_23, %c0_24] : memref<2x18x18x32xbf16, #tpu.memory_space<vmem>>, vector<2x16x16x32xbf16>
    %20 = vector.shape_cast %19 : vector<2x16x16x32xbf16> to vector<512x32xbf16>
    %c3 = arith.constant 3 : index
    %c0_25 = arith.constant 0 : index
    %c0_26 = arith.constant 0 : index
    %21 = vector.load %arg1[%c3, %c0_25, %c0_26] : memref<9x32x32xbf16, #tpu.memory_space<vmem>>, vector<1x32x32xbf16>
    %22 = vector.shape_cast %21 : vector<1x32x32xbf16> to vector<32x32xbf16>
    %cst_27 = arith.constant dense<0.000000e+00> : vector<512x32xf32>
    %23 = tpu.matmul %20, %22, %cst_27 {dimension_numbers = #tpu.dot_dimension_numbers<[1], [0], [0], [1], [0, 0, 1, 1], [], []>} : vector<512x32xbf16>, vector<32x32xbf16>, vector<512x32xf32> -> vector<512x32xf32>
    %24 = arith.addf %18, %23 : vector<512x32xf32>
    %c0_28 = arith.constant 0 : index
    %c1_29 = arith.constant 1 : index
    %c1_30 = arith.constant 1 : index
    %c0_31 = arith.constant 0 : index
    %25 = vector.load %arg0[%c0_28, %c1_29, %c1_30, %c0_31] : memref<2x18x18x32xbf16, #tpu.memory_space<vmem>>, vector<2x16x16x32xbf16>
    %26 = vector.shape_cast %25 : vector<2x16x16x32xbf16> to vector<512x32xbf16>
    %c4 = arith.constant 4 : index
    %c0_32 = arith.constant 0 : index
    %c0_33 = arith.constant 0 : index
    %27 = vector.load %arg1[%c4, %c0_32, %c0_33] : memref<9x32x32xbf16, #tpu.memory_space<vmem>>, vector<1x32x32xbf16>
    %28 = vector.shape_cast %27 : vector<1x32x32xbf16> to vector<32x32xbf16>
    %cst_34 = arith.constant dense<0.000000e+00> : vector<512x32xf32>
    %29 = tpu.matmul %26, %28, %cst_34 {dimension_numbers = #tpu.dot_dimension_numbers<[1], [0], [0], [1], [0, 0, 1, 1], [], []>} : vector<512x32xbf16>, vector<32x32xbf16>, vector<512x32xf32> -> vector<512x32xf32>
    %30 = arith.addf %24, %29 : vector<512x32xf32>
    %c0_35 = arith.constant 0 : index
    %c1_36 = arith.constant 1 : index
    %c2_37 = arith.constant 2 : index
    %c0_38 = arith.constant 0 : index
    %31 = vector.load %arg0[%c0_35, %c1_36, %c2_37, %c0_38] : memref<2x18x18x32xbf16, #tpu.memory_space<vmem>>, vector<2x16x16x32xbf16>
    %32 = vector.shape_cast %31 : vector<2x16x16x32xbf16> to vector<512x32xbf16>
    %c5 = arith.constant 5 : index
    %c0_39 = arith.constant 0 : index
    %c0_40 = arith.constant 0 : index
    %33 = vector.load %arg1[%c5, %c0_39, %c0_40] : memref<9x32x32xbf16, #tpu.memory_space<vmem>>, vector<1x32x32xbf16>
    %34 = vector.shape_cast %33 : vector<1x32x32xbf16> to vector<32x32xbf16>
    %cst_41 = arith.constant dense<0.000000e+00> : vector<512x32xf32>
    %35 = tpu.matmul %32, %34, %cst_41 {dimension_numbers = #tpu.dot_dimension_numbers<[1], [0], [0], [1], [0, 0, 1, 1], [], []>} : vector<512x32xbf16>, vector<32x32xbf16>, vector<512x32xf32> -> vector<512x32xf32>
    %36 = arith.addf %30, %35 : vector<512x32xf32>
    %c0_42 = arith.constant 0 : index
    %c2_43 = arith.constant 2 : index
    %c0_44 = arith.constant 0 : index
    %c0_45 = arith.constant 0 : index
    %37 = vector.load %arg0[%c0_42, %c2_43, %c0_44, %c0_45] : memref<2x18x18x32xbf16, #tpu.memory_space<vmem>>, vector<2x16x16x32xbf16>
    %38 = vector.shape_cast %37 : vector<2x16x16x32xbf16> to vector<512x32xbf16>
    %c6 = arith.constant 6 : index
    %c0_46 = arith.constant 0 : index
    %c0_47 = arith.constant 0 : index
    %39 = vector.load %arg1[%c6, %c0_46, %c0_47] : memref<9x32x32xbf16, #tpu.memory_space<vmem>>, vector<1x32x32xbf16>
    %40 = vector.shape_cast %39 : vector<1x32x32xbf16> to vector<32x32xbf16>
    %cst_48 = arith.constant dense<0.000000e+00> : vector<512x32xf32>
    %41 = tpu.matmul %38, %40, %cst_48 {dimension_numbers = #tpu.dot_dimension_numbers<[1], [0], [0], [1], [0, 0, 1, 1], [], []>} : vector<512x32xbf16>, vector<32x32xbf16>, vector<512x32xf32> -> vector<512x32xf32>
    %42 = arith.addf %36, %41 : vector<512x32xf32>
    %c0_49 = arith.constant 0 : index
    %c2_50 = arith.constant 2 : index
    %c1_51 = arith.constant 1 : index
    %c0_52 = arith.constant 0 : index
    %43 = vector.load %arg0[%c0_49, %c2_50, %c1_51, %c0_52] : memref<2x18x18x32xbf16, #tpu.memory_space<vmem>>, vector<2x16x16x32xbf16>
    %44 = vector.shape_cast %43 : vector<2x16x16x32xbf16> to vector<512x32xbf16>
    %c7 = arith.constant 7 : index
    %c0_53 = arith.constant 0 : index
    %c0_54 = arith.constant 0 : index
    %45 = vector.load %arg1[%c7, %c0_53, %c0_54] : memref<9x32x32xbf16, #tpu.memory_space<vmem>>, vector<1x32x32xbf16>
    %46 = vector.shape_cast %45 : vector<1x32x32xbf16> to vector<32x32xbf16>
    %cst_55 = arith.constant dense<0.000000e+00> : vector<512x32xf32>
    %47 = tpu.matmul %44, %46, %cst_55 {dimension_numbers = #tpu.dot_dimension_numbers<[1], [0], [0], [1], [0, 0, 1, 1], [], []>} : vector<512x32xbf16>, vector<32x32xbf16>, vector<512x32xf32> -> vector<512x32xf32>
    %48 = arith.addf %42, %47 : vector<512x32xf32>
    %c0_56 = arith.constant 0 : index
    %c2_57 = arith.constant 2 : index
    %c2_58 = arith.constant 2 : index
    %c0_59 = arith.constant 0 : index
    %49 = vector.load %arg0[%c0_56, %c2_57, %c2_58, %c0_59] : memref<2x18x18x32xbf16, #tpu.memory_space<vmem>>, vector<2x16x16x32xbf16>
    %50 = vector.shape_cast %49 : vector<2x16x16x32xbf16> to vector<512x32xbf16>
    %c8 = arith.constant 8 : index
    %c0_60 = arith.constant 0 : index
    %c0_61 = arith.constant 0 : index
    %51 = vector.load %arg1[%c8, %c0_60, %c0_61] : memref<9x32x32xbf16, #tpu.memory_space<vmem>>, vector<1x32x32xbf16>
    %52 = vector.shape_cast %51 : vector<1x32x32xbf16> to vector<32x32xbf16>
    %cst_62 = arith.constant dense<0.000000e+00> : vector<512x32xf32>
    %53 = tpu.matmul %50, %52, %cst_62 {dimension_numbers = #tpu.dot_dimension_numbers<[1], [0], [0], [1], [0, 0, 1, 1], [], []>} : vector<512x32xbf16>, vector<32x32xbf16>, vector<512x32xf32> -> vector<512x32xf32>
    %54 = arith.addf %48, %53 : vector<512x32xf32>
    %c0_63 = arith.constant 0 : index
    %c0_64 = arith.constant 0 : index
    %55 = vector.load %arg2[%c0_63, %c0_64] : memref<1x32xf32, #tpu.memory_space<vmem>>, vector<1x32xf32>
    %56 = vector.broadcast %55 : vector<1x32xf32> to vector<512x32xf32>
    %57 = arith.addf %54, %56 : vector<512x32xf32>
    %cst_65 = arith.constant 0.000000e+00 : f32
    %58 = vector.broadcast %cst_65 : f32 to vector<512x32xf32>
    %59 = arith.maximumf %57, %58 : vector<512x32xf32>
    %60 = arith.truncf %59 : vector<512x32xf32> to vector<512x32xbf16>
    %c0_66 = arith.constant 0 : index
    %c0_67 = arith.constant 0 : index
    %61 = vector.load %arg3[%c0_66, %c0_67] : memref<512x32xbf16, #tpu.memory_space<vmem>>, vector<512x32xbf16>
    tpu.vector_store %arg3[%c0_66, %c0_67], %60 {strides = array<i32>} : memref<512x32xbf16, #tpu.memory_space<vmem>>, vector<512x32xbf16>,
    return
  }
}

module attributes {stable_mosaic.version = 11 : i64} {
  func.func @_matmul_kernel(%arg0: i32, %arg1: i32, %arg2: memref<128x32xbf16, #tpu.memory_space<vmem>>, %arg3: memref<32x128xbf16, #tpu.memory_space<vmem>>, %arg4: memref<1x128xf32, #tpu.memory_space<vmem>>, %arg5: memref<128x128xf32, #tpu.memory_space<vmem>>, %arg6: memref<128x128xf32, #tpu.memory_space<vmem>>) attributes {dimension_semantics = [#tpu.dimension_semantics<parallel>, #tpu.dimension_semantics<parallel>], iteration_bounds = array<i64: 4, 1>, scalar_prefetch = 0 : i64, scratch_operands = 0 : i64, tpu.core_type = #tpu.core_type<tc>, window_params = [{transform_indices = @transform_0, window_bounds = array<i64: 128, 32>}, {transform_indices = @transform_1, window_bounds = array<i64: 32, 128>}, {transform_indices = @transform_2, window_bounds = array<i64: 1, 128>}, {transform_indices = @transform_3, window_bounds = array<i64: 128, 128>}, {transform_indices = @transform_4, window_bounds = array<i64: 128, 128>}]} {
    %c0 = arith.constant 0 : index
    %c0_0 = arith.constant 0 : index
    %0 = vector.load %arg2[%c0, %c0_0] : memref<128x32xbf16, #tpu.memory_space<vmem>>, vector<128x32xbf16>
    %c0_1 = arith.constant 0 : index
    %c0_2 = arith.constant 0 : index
    %1 = vector.load %arg3[%c0_1, %c0_2] : memref<32x128xbf16, #tpu.memory_space<vmem>>, vector<32x128xbf16>
    %cst = arith.constant dense<0.000000e+00> : vector<128x128xf32>
    %2 = tpu.matmul %0, %1, %cst {dimension_numbers = #tpu.dot_dimension_numbers<[1], [0], [0], [1], [0, 0, 1, 1], [], []>} : vector<128x32xbf16>, vector<32x128xbf16>, vector<128x128xf32> -> vector<128x128xf32>
    %c0_3 = arith.constant 0 : index
    %c0_4 = arith.constant 0 : index
    %3 = vector.load %arg4[%c0_3, %c0_4] : memref<1x128xf32, #tpu.memory_space<vmem>>, vector<1x128xf32>
    %4 = vector.broadcast %3 : vector<1x128xf32> to vector<128x128xf32>
    %5 = arith.addf %2, %4 : vector<128x128xf32>
    %c0_5 = arith.constant 0 : index
    %c0_6 = arith.constant 0 : index
    %6 = vector.load %arg5[%c0_5, %c0_6] : memref<128x128xf32, #tpu.memory_space<vmem>>, vector<128x128xf32>
    %7 = arith.addf %5, %6 : vector<128x128xf32>
    %cst_7 = arith.constant 0.000000e+00 : f32
    %8 = vector.broadcast %cst_7 : f32 to vector<128x128xf32>
    %9 = arith.maximumf %7, %8 : vector<128x128xf32>
    %c0_8 = arith.constant 0 : index
    %c0_9 = arith.constant 0 : index
    %10 = vector.load %arg6[%c0_8, %c0_9] : memref<128x128xf32, #tpu.memory_space<vmem>>, vector<128x128xf32>
    tpu.vector_store %arg6[%c0_8, %c0_9], %9 {strides = array<i32>} : memref<128x128xf32, #tpu.memory_space<vmem>>, vector<128x128xf32>,
    return
  }
  func.func @transform_0(%arg0: i32, %arg1: i32) -> (i32, i32) {
    %c0_i32 = arith.constant 0 : i32
    %c0_i32_0 = arith.constant 0 : i32
    return %arg0, %c0_i32 : i32, i32
  }
  func.func @transform_1(%arg0: i32, %arg1: i32) -> (i32, i32) {
    %c0_i32 = arith.constant 0 : i32
    %c0_i32_0 = arith.constant 0 : i32
    return %c0_i32, %arg1 : i32, i32
  }
  func.func @transform_2(%arg0: i32, %arg1: i32) -> (i32, i32) {
    %c0_i32 = arith.constant 0 : i32
    %c0_i32_0 = arith.constant 0 : i32
    return %c0_i32, %arg1 : i32, i32
  }
  func.func @transform_3(%arg0: i32, %arg1: i32) -> (i32, i32) {
    %c0_i32 = arith.constant 0 : i32
    return %arg0, %arg1 : i32, i32
  }
  func.func @transform_4(%arg0: i32, %arg1: i32) -> (i32, i32) {
    %c0_i32 = arith.constant 0 : i32
    return %arg0, %arg1 : i32, i32
  }
}

module attributes {stable_mosaic.version = 11 : i64} {
  func.func @_matmul_kernel(%arg0: i32, %arg1: i32, %arg2: memref<128x128xbf16, #tpu.memory_space<vmem>>, %arg3: memref<128x32xbf16, #tpu.memory_space<vmem>>, %arg4: memref<1x32xf32, #tpu.memory_space<vmem>>, %arg5: memref<128x32xbf16, #tpu.memory_space<vmem>>) attributes {dimension_semantics = [#tpu.dimension_semantics<parallel>, #tpu.dimension_semantics<parallel>], iteration_bounds = array<i64: 4, 1>, scalar_prefetch = 0 : i64, scratch_operands = 0 : i64, tpu.core_type = #tpu.core_type<tc>, window_params = [{transform_indices = @transform_0, window_bounds = array<i64: 128, 128>}, {transform_indices = @transform_1, window_bounds = array<i64: 128, 32>}, {transform_indices = @transform_2, window_bounds = array<i64: 1, 32>}, {transform_indices = @transform_3, window_bounds = array<i64: 128, 32>}]} {
    %c0 = arith.constant 0 : index
    %c0_0 = arith.constant 0 : index
    %0 = vector.load %arg2[%c0, %c0_0] : memref<128x128xbf16, #tpu.memory_space<vmem>>, vector<128x128xbf16>
    %c0_1 = arith.constant 0 : index
    %c0_2 = arith.constant 0 : index
    %1 = vector.load %arg3[%c0_1, %c0_2] : memref<128x32xbf16, #tpu.memory_space<vmem>>, vector<128x32xbf16>
    %cst = arith.constant dense<0.000000e+00> : vector<128x32xf32>
    %2 = tpu.matmul %0, %1, %cst {dimension_numbers = #tpu.dot_dimension_numbers<[1], [0], [0], [1], [0, 0, 1, 1], [], []>} : vector<128x128xbf16>, vector<128x32xbf16>, vector<128x32xf32> -> vector<128x32xf32>
    %c0_3 = arith.constant 0 : index
    %c0_4 = arith.constant 0 : index
    %3 = vector.load %arg4[%c0_3, %c0_4] : memref<1x32xf32, #tpu.memory_space<vmem>>, vector<1x32xf32>
    %4 = vector.broadcast %3 : vector<1x32xf32> to vector<128x32xf32>
    %5 = arith.addf %2, %4 : vector<128x32xf32>
    %cst_5 = arith.constant 0.000000e+00 : f32
    %6 = vector.broadcast %cst_5 : f32 to vector<128x32xf32>
    %7 = arith.maximumf %5, %6 : vector<128x32xf32>
    %8 = arith.truncf %7 : vector<128x32xf32> to vector<128x32xbf16>
    %c0_6 = arith.constant 0 : index
    %c0_7 = arith.constant 0 : index
    %9 = vector.load %arg5[%c0_6, %c0_7] : memref<128x32xbf16, #tpu.memory_space<vmem>>, vector<128x32xbf16>
    tpu.vector_store %arg5[%c0_6, %c0_7], %8 {strides = array<i32>} : memref<128x32xbf16, #tpu.memory_space<vmem>>, vector<128x32xbf16>,
    return
  }
  func.func @transform_0(%arg0: i32, %arg1: i32) -> (i32, i32) {
    %c0_i32 = arith.constant 0 : i32
    %c0_i32_0 = arith.constant 0 : i32
    return %arg0, %c0_i32 : i32, i32
  }
  func.func @transform_1(%arg0: i32, %arg1: i32) -> (i32, i32) {
    %c0_i32 = arith.constant 0 : i32
    %c0_i32_0 = arith.constant 0 : i32
    return %c0_i32, %arg1 : i32, i32
  }
  func.func @transform_2(%arg0: i32, %arg1: i32) -> (i32, i32) {
    %c0_i32 = arith.constant 0 : i32
    %c0_i32_0 = arith.constant 0 : i32
    return %c0_i32, %arg1 : i32, i32
  }
  func.func @transform_3(%arg0: i32, %arg1: i32) -> (i32, i32) {
    %c0_i32 = arith.constant 0 : i32
    return %arg0, %arg1 : i32, i32
  }
}

module attributes {stable_mosaic.version = 11 : i64} {
  func.func @_matmul_kernel(%arg0: i32, %arg1: i32, %arg2: memref<128x32xbf16, #tpu.memory_space<vmem>>, %arg3: memref<32x128xbf16, #tpu.memory_space<vmem>>, %arg4: memref<1x128xf32, #tpu.memory_space<vmem>>, %arg5: memref<128x128xf32, #tpu.memory_space<vmem>>, %arg6: memref<128x128xf32, #tpu.memory_space<vmem>>) attributes {dimension_semantics = [#tpu.dimension_semantics<parallel>, #tpu.dimension_semantics<parallel>], iteration_bounds = array<i64: 4, 1>, scalar_prefetch = 0 : i64, scratch_operands = 0 : i64, tpu.core_type = #tpu.core_type<tc>, window_params = [{transform_indices = @transform_0, window_bounds = array<i64: 128, 32>}, {transform_indices = @transform_1, window_bounds = array<i64: 32, 128>}, {transform_indices = @transform_2, window_bounds = array<i64: 1, 128>}, {transform_indices = @transform_3, window_bounds = array<i64: 128, 128>}, {transform_indices = @transform_4, window_bounds = array<i64: 128, 128>}]} {
    %c0 = arith.constant 0 : index
    %c0_0 = arith.constant 0 : index
    %0 = vector.load %arg2[%c0, %c0_0] : memref<128x32xbf16, #tpu.memory_space<vmem>>, vector<128x32xbf16>
    %c0_1 = arith.constant 0 : index
    %c0_2 = arith.constant 0 : index
    %1 = vector.load %arg3[%c0_1, %c0_2] : memref<32x128xbf16, #tpu.memory_space<vmem>>, vector<32x128xbf16>
    %cst = arith.constant dense<0.000000e+00> : vector<128x128xf32>
    %2 = tpu.matmul %0, %1, %cst {dimension_numbers = #tpu.dot_dimension_numbers<[1], [0], [0], [1], [0, 0, 1, 1], [], []>} : vector<128x32xbf16>, vector<32x128xbf16>, vector<128x128xf32> -> vector<128x128xf32>
    %c0_3 = arith.constant 0 : index
    %c0_4 = arith.constant 0 : index
    %3 = vector.load %arg4[%c0_3, %c0_4] : memref<1x128xf32, #tpu.memory_space<vmem>>, vector<1x128xf32>
    %4 = vector.broadcast %3 : vector<1x128xf32> to vector<128x128xf32>
    %5 = arith.addf %2, %4 : vector<128x128xf32>
    %c0_5 = arith.constant 0 : index
    %c0_6 = arith.constant 0 : index
    %6 = vector.load %arg5[%c0_5, %c0_6] : memref<128x128xf32, #tpu.memory_space<vmem>>, vector<128x128xf32>
    %7 = arith.addf %5, %6 : vector<128x128xf32>
    %cst_7 = arith.constant 0.000000e+00 : f32
    %8 = vector.broadcast %cst_7 : f32 to vector<128x128xf32>
    %9 = arith.maximumf %7, %8 : vector<128x128xf32>
    %c0_8 = arith.constant 0 : index
    %c0_9 = arith.constant 0 : index
    %10 = vector.load %arg6[%c0_8, %c0_9] : memref<128x128xf32, #tpu.memory_space<vmem>>, vector<128x128xf32>
    tpu.vector_store %arg6[%c0_8, %c0_9], %9 {strides = array<i32>} : memref<128x128xf32, #tpu.memory_space<vmem>>, vector<128x128xf32>,
    return
  }
  func.func @transform_0(%arg0: i32, %arg1: i32) -> (i32, i32) {
    %c0_i32 = arith.constant 0 : i32
    %c0_i32_0 = arith.constant 0 : i32
    return %arg0, %c0_i32 : i32, i32
  }
  func.func @transform_1(%arg0: i32, %arg1: i32) -> (i32, i32) {
    %c0_i32 = arith.constant 0 : i32
    %c0_i32_0 = arith.constant 0 : i32
    return %c0_i32, %arg1 : i32, i32
  }
  func.func @transform_2(%arg0: i32, %arg1: i32) -> (i32, i32) {
    %c0_i32 = arith.constant 0 : i32
    %c0_i32_0 = arith.constant 0 : i32
    return %c0_i32, %arg1 : i32, i32
  }
  func.func @transform_3(%arg0: i32, %arg1: i32) -> (i32, i32) {
    %c0_i32 = arith.constant 0 : i32
    return %arg0, %arg1 : i32, i32
  }
  func.func @transform_4(%arg0: i32, %arg1: i32) -> (i32, i32) {
    %c0_i32 = arith.constant 0 : i32
    return %arg0, %arg1 : i32, i32
  }
}

</mosaic_0001>

<llo_original>
// kernel: fwd.9
$region0: #{fwd.9}
  #allocation0 [shape = 'u32[]', space=smem, size = 0x4, offset = 0x4, fixed_abs, tag = 'smem constant byte address 0x4 - core index']
  #allocation1 [shape = 'u32[144,128]{1,0:T(1,128)}', space=vmem, size = 0x12000, scoped, tag = 'internal scratch']
  %s0 = inlined_call_operand.vmem [shape: bf16[512,64], index: 0, kind: input, shape index: {}]
  %s1 = inlined_call_operand.vmem [shape: bf16[64,128], index: 1, kind: input, shape index: {}]
  %s2 = inlined_call_operand.vmem [shape: f32[1,128], index: 2, kind: input, shape index: {}]
  %s3 = inlined_call_operand.vmem [shape: f32[512,128], index: 3, kind: output, shape index: {}]
  %s4 = sld [smem:[#allocation0]]
  $region45: #{fwd.9} parent=0
    _
  %s6 = ssub.s32 1, %s4
  %s7 = scalar_select 0, %s6, %s4
  loop: start=0, step=1, limit=6
  $region2: #{fwd.9} parent=0 // loop_pre_header
    _
  $region3: #{fwd.9} parent=0 // loop_header
    %s9 = sphi 0, %s13
    %p10 = scmp.ge.s32.totalorder %s9, 6
    %s16 = sphi 0, %s28
    %s17 = sphi 0, %s24
    %s18 = sphi 0, %s16
    %s19 = sphi 0, %s17
    %s20 = sphi 0, %s18
    %s21 = sphi 0, %s19
    %s31 = sphi 0, %s33
    %s34 = sphi 0, %s31
    %s35 = sphi 0, %s34
    %s51 = sphi 0, %s35
    %s57 = sphi 0, %s59
    %s60 = sphi 0, %s57
    %s61 = sphi 0, %s60
    %s77 = sphi 0, %s61
    %s83 = sphi 0, %s85
    %s86 = sphi 0, %s83
    %s87 = sphi 0, %s86
    %s103 = sphi 0, %s87
    %s111 = sphi 0, %s113
    %s114 = sphi 0, %s111
    %s115 = sphi 0, %s114
    %s131 = sphi 0, %s115
  $region4: #{fwd.9} parent=0 // loop_header_branch
    %12 = sbr.rel (%p10) target = $region8
  $region5: #{fwd.9} parent=0 // loop_body
    %s14 = ssub.s32 %s9, 1
    %s15 = ssub.s32 %s9, 2
    %s22 = sadd.s32 1, %s17
    %p23 = scmp.ge.s32.totalorder %s22, 1
    %s24 = scalar_select %p23, 0, %s22
    %s25 = sadd.s32 1, %s16
    %s26 = scalar_select %p23, %s25, %s16
    %p27 = scmp.ge.s32.totalorder %s26, 4
    %s28 = scalar_select %p27, 0, %s26
    %s29 = ssub.s32 %s16, %s28
    %p30 = scmp.eq.s32.totalorder %s29, 0
    %s32 = sadd.s32 %s31, 1
    %s33 = scalar_select %p30, %s31, %s32
    %p36 = pneg %p30
    %p37 = scmp.eq.s32.totalorder %s9, 3
    %p38 = por %p36, %p37
    %p39 = scmp.ne.s32.totalorder %s31, %s34
    %p40 = scmp.eq.s32.totalorder %s9, 0
    %p41 = por %p39, %p40
    %p42 = scmp.ne.s32.totalorder %s31, %s34
    %p43 = scmp.eq.s32.totalorder %s14, 3
    %p44 = por %p42, %p43
    %p45 = scmp.ne.s32.totalorder %s34, %s35
    %p46 = scmp.eq.s32.totalorder %s14, 0
    %p47 = por %p45, %p46
    %p48 = scmp.ne.s32.totalorder %s34, %s35
    %p49 = scmp.eq.s32.totalorder %s15, 3
    %p50 = por %p48, %p49
    %p52 = scmp.ne.s32.totalorder %s35, %s51
    %p53 = scmp.eq.s32.totalorder %s15, 0
    %p54 = por %p52, %p53
    %s55 = ssub.s32 %s17, %s24
    %p56 = scmp.eq.s32.totalorder %s55, 0
    %s58 = sadd.s32 %s57, 1
    %s59 = scalar_select %p56, %s57, %s58
    %p62 = pneg %p56
    %p63 = scmp.eq.s32.totalorder %s9, 3
    %p64 = por %p62, %p63
    %p65 = scmp.ne.s32.totalorder %s57, %s60
    %p66 = scmp.eq.s32.totalorder %s9, 0
    %p67 = por %p65, %p66
    %p68 = scmp.ne.s32.totalorder %s57, %s60
    %p69 = scmp.eq.s32.totalorder %s14, 3
    %p70 = por %p68, %p69
    %p71 = scmp.ne.s32.totalorder %s60, %s61
    %p72 = scmp.eq.s32.totalorder %s14, 0
    %p73 = por %p71, %p72
    %p74 = scmp.ne.s32.totalorder %s60, %s61
    %p75 = scmp.eq.s32.totalorder %s15, 3
    %p76 = por %p74, %p75
    %p78 = scmp.ne.s32.totalorder %s61, %s77
    %p79 = scmp.eq.s32.totalorder %s15, 0
    %p80 = por %p78, %p79
    %s81 = ssub.s32 %s17, %s24
    %p82 = scmp.eq.s32.totalorder %s81, 0
    %s84 = sadd.s32 %s83, 1
    %s85 = scalar_select %p82, %s83, %s84
    %p88 = pneg %p82
    %p89 = scmp.eq.s32.totalorder %s9, 3
    %p90 = por %p88, %p89
    %p91 = scmp.ne.s32.totalorder %s83, %s86
    %p92 = scmp.eq.s32.totalorder %s9, 0
    %p93 = por %p91, %p92
    %p94 = scmp.ne.s32.totalorder %s83, %s86
    %p95 = scmp.eq.s32.totalorder %s14, 3
    %p96 = por %p94, %p95
    %p97 = scmp.ne.s32.totalorder %s86, %s87
    %p98 = scmp.eq.s32.totalorder %s14, 0
    %p99 = por %p97, %p98
    %p100 = scmp.ne.s32.totalorder %s86, %s87
    %p101 = scmp.eq.s32.totalorder %s15, 3
    %p102 = por %p100, %p101
    %p104 = scmp.ne.s32.totalorder %s87, %s103
    %p105 = scmp.eq.s32.totalorder %s15, 0
    %p106 = por %p104, %p105
    %s107 = ssub.s32 %s16, %s28
    %s108 = ssub.s32 %s17, %s24
    %s109 = sor.u32 %s107, %s108
    %p110 = scmp.eq.s32.totalorder %s109, 0
    %s112 = sadd.s32 %s111, 1
    %s113 = scalar_select %p110, %s111, %s112
    %p116 = pneg %p110
    %p117 = scmp.eq.s32.totalorder %s9, 3
    %p118 = por %p116, %p117
    %p119 = scmp.ne.s32.totalorder %s111, %s114
    %p120 = scmp.eq.s32.totalorder %s9, 0
    %p121 = por %p119, %p120
    %p122 = scmp.ne.s32.totalorder %s111, %s114
    %p123 = scmp.eq.s32.totalorder %s14, 3
    %p124 = por %p122, %p123
    %p125 = scmp.ne.s32.totalorder %s114, %s115
    %p126 = scmp.eq.s32.totalorder %s14, 0
    %p127 = por %p125, %p126
    %p128 = scmp.ne.s32.totalorder %s114, %s115
    %p129 = scmp.eq.s32.totalorder %s15, 3
    %p130 = por %p128, %p129
    %p132 = scmp.ne.s32.totalorder %s115, %s131
    %p133 = scmp.eq.s32.totalorder %s15, 0
    %p134 = por %p132, %p133
    %p135 = scmp.le.s32.totalorder 1, %s9
    %p136 = scmp.lt.s32.totalorder %s9, 5
    %p137 = pnand %p135, %p136
    %p138 = pneg %p137
    // Predicated region
    $region9: #{fwd.9} parent=5 // pred_check
      _
    $region10: #{fwd.9} parent=5 // pred_check_branch
      %140 = sbr.rel (%p137) target = $region12
    $region11: #{fwd.9} parent=5 // pred_region
      %s141 = ssub.s32 %s9, 1
      // Predicated region
      $region13: #{fwd.9} parent=11 // pred_check
        %p142 = pneg %p73
      $region14: #{fwd.9} parent=11 // pred_check_branch
        %144 = sbr.rel (%p142) target = $region16
      $region15: #{fwd.9} parent=11 // pred_region
        %p145 = scmp.lt.s32.totalorder %s19, 0
        %s146 = scalar_select %p145, %s19, 0
        %s147 = smul.addr %s146, 4
        %s148 = scalar_lea.vmem %s1, %s147
      $region16: #{fwd.9} parent=11 // pred_fallthru
        _
      // Predicated region
      $region17: #{fwd.9} parent=11 // pred_check
        %p149 = pneg %p99
      $region18: #{fwd.9} parent=11 // pred_check_branch
        %151 = sbr.rel (%p149) target = $region20
      $region19: #{fwd.9} parent=11 // pred_region
        %p152 = scmp.lt.s32.totalorder %s19, 0
        %s153 = scalar_select %p152, %s19, 0
        %s154 = scalar_lea.vmem %s2, %s153
      $region20: #{fwd.9} parent=11 // pred_fallthru
        _
    $region12: #{fwd.9} parent=5 // pred_fallthru
      _
    %p155 = scmp.lt.s32.totalorder %s9, 4
    // Predicated region
    $region21: #{fwd.9} parent=5 // pred_check
      %p156 = pneg %p155
    $region22: #{fwd.9} parent=5 // pred_check_branch
      %158 = sbr.rel (%p156) target = $region24
    $region23: #{fwd.9} parent=5 // pred_region
      // Predicated region
      $region25: #{fwd.9} parent=23 // pred_check
        %p159 = pneg %p41
      $region26: #{fwd.9} parent=23 // pred_check_branch
        %161 = sbr.rel (%p159) target = $region28
      $region27: #{fwd.9} parent=23 // pred_region
        %s162 = smul.u32 16, %s16
        %p163 = scmp.lt.s32.totalorder %s162, 63
        %s164 = scalar_select %p163, %s162, 63
        %s165 = smul.addr %s164, 4
        %s166 = scalar_lea.vmem %s0, %s165
        %s167 = smul.u32 16, %s16
      $region28: #{fwd.9} parent=23 // pred_fallthru
        _
    $region24: #{fwd.9} parent=5 // pred_fallthru
      _
    %p168 = scmp.le.s32.totalorder 1, %s9
    %p169 = scmp.lt.s32.totalorder %s9, 5
    %p170 = pnand %p168, %p169
    %p171 = pneg %p170
    // Predicated region
    $region29: #{fwd.9} parent=5 // pred_check
      _
    $region30: #{fwd.9} parent=5 // pred_check_branch
      %173 = sbr.rel (%p170) target = $region32
    $region31: #{fwd.9} parent=5 // pred_region
      %s174 = ssub.s32 %s9, 1
      %s175 = smul.u32 16, %s18
      %p176 = scmp.lt.s32.totalorder %s175, 63
      %s177 = scalar_select %p176, %s175, 63
      %s178 = smul.addr %s177, 4
      %s179 = scalar_lea.vmem %s0, %s178
      %p180 = pneg %p47
      %p181 = pneg %p44
      %p182 = scmp.lt.s32.totalorder %s19, 0
      %s183 = scalar_select %p182, %s19, 0
      %s184 = smul.addr %s183, 4
      %s185 = scalar_lea.vmem %s1, %s184
      %p186 = pneg %p73
      %p187 = pneg %p70
      %p188 = scmp.lt.s32.totalorder %s19, 0
      %s189 = scalar_select %p188, %s19, 0
      %s190 = scalar_lea.vmem %s2, %s189
      %p191 = pneg %p99
      %p192 = pneg %p96
      %p193 = pneg %p127
      %p194 = pneg %p124
      %s195 = smul.u32 16, %s18
      %p196 = scmp.lt.s32.totalorder %s195, 63
      %s197 = scalar_select %p196, %s195, 63
      %p198 = scmp.lt.s32.totalorder %s19, 0
      %s199 = scalar_select %p198, %s19, 0
      %s200 = sadd.s32 %s199, %s197
      %s201 = smul.addr %s200, 8
      %s202 = scalar_lea.vmem %s3, %s201
      %s203 = smul.u32 16, %s18
      %p204 = scmp.lt.s32.totalorder %s203, 63
      %s205 = scalar_select %p204, %s203, 63
      %s206 = smul.addr %s205, 4
      %s207 = scalar_lea.vmem %s0, %s206
      %s208 = smul.u32 16, %s18
      %p209 = scmp.lt.s32.totalorder %s19, 0
      %s210 = scalar_select %p209, %s19, 0
      %s211 = smul.addr %s210, 4
      %s212 = scalar_lea.vmem %s1, %s211
      %p213 = scmp.lt.s32.totalorder %s19, 0
      %s214 = scalar_select %p213, %s19, 0
      %s215 = scalar_lea.vmem %s2, %s214
      %s216 = smul.u32 16, %s18
      %p217 = scmp.lt.s32.totalorder %s216, 63
      %s218 = scalar_select %p217, %s216, 63
      %p219 = scmp.lt.s32.totalorder %s19, 0
      %s220 = scalar_select %p219, %s19, 0
      %s221 = sadd.s32 %s220, %s218
      %s222 = smul.addr %s221, 8
      %s223 = scalar_lea.vmem %s3, %s222
      %s224 = smul.u32 16, %s18
      %v226 = vld [vmem:[%s207] sm:$0xf]
      %v227 = vld [vmem:[%s207 + $0x4] sm:$0xf]
      %v228 = vld [vmem:[%s207 + $0x8] sm:$0xf]
      %v229 = vld [vmem:[%s207 + $0xc] sm:$0xf]
      %v230 = vld [vmem:[%s207 + $0x10] sm:$0xf]
      %v231 = vld [vmem:[%s207 + $0x14] sm:$0xf]
      %v232 = vld [vmem:[%s207 + $0x18] sm:$0xf]
      %v233 = vld [vmem:[%s207 + $0x1c] sm:$0xf]
      %v234 = vld [vmem:[%s207 + $0x20] sm:$0xf]
      %v235 = vld [vmem:[%s207 + $0x24] sm:$0xf]
      %v236 = vld [vmem:[%s207 + $0x28] sm:$0xf]
      %v237 = vld [vmem:[%s207 + $0x2c] sm:$0xf]
      %v238 = vld [vmem:[%s207 + $0x30] sm:$0xf]
      %v239 = vld [vmem:[%s207 + $0x34] sm:$0xf]
      %v240 = vld [vmem:[%s207 + $0x38] sm:$0xf]
      %v241 = vld [vmem:[%s207 + $0x3c] sm:$0xf]
      %v242 = vld [vmem:[%s212] sm:$0xf]
      %v243 = vld [vmem:[%s212 + $0x4] sm:$0xf]
      %v244 = vld [vmem:[%s212 + $0x8] sm:$0xf]
      %v245 = vld [vmem:[%s212 + $0xc] sm:$0xf]
      %v246 = vld [vmem:[%s212 + $0x10] sm:$0xf]
      %v247 = vld [vmem:[%s212 + $0x14] sm:$0xf]
      %v248 = vld [vmem:[%s212 + $0x18] sm:$0xf]
      %v249 = vld [vmem:[%s212 + $0x1c] sm:$0xf]
      %v250 = vld [vmem:[%s215] sm:$0x1]
      %v252 = vlaneseq
      %v253 = vshrl.u32 %v252, 7
      %v254 = vsub.s32 0, %v253
      %v255 = vrot.slane %v250, %v254
      %v273 = vunpack.c.l.b16 %v226
      %v274 = vunpack.c.l.b16 %v227
      %v275 = vunpack.c.l.b16 %v228
      %v276 = vunpack.c.l.b16 %v229
      %v277 = vunpack.c.l.b16 %v230
      %v278 = vunpack.c.l.b16 %v231
      %v279 = vunpack.c.l.b16 %v232
      %v280 = vunpack.c.l.b16 %v233
      %v281 = vunpack.c.l.b16 %v234
      %v282 = vunpack.c.l.b16 %v235
      %v283 = vunpack.c.l.b16 %v236
      %v284 = vunpack.c.l.b16 %v237
      %v285 = vunpack.c.l.b16 %v238
      %v286 = vunpack.c.l.b16 %v239
      %v287 = vunpack.c.l.b16 %v240
      %v288 = vunpack.c.l.b16 %v241
      %v289 = vpack.c.b16 %v274, %v273
      %v290 = vpack.c.b16 %v276, %v275
      %v291 = vpack.c.b16 %v278, %v277
      %v292 = vpack.c.b16 %v280, %v279
      %v293 = vpack.c.b16 %v282, %v281
      %v294 = vpack.c.b16 %v284, %v283
      %v295 = vpack.c.b16 %v286, %v285
      %v296 = vpack.c.b16 %v288, %v287
      %v305 = vunpack.c.l.b16 %v242
      %v306 = vunpack.c.l.b16 %v243
      %v307 = vunpack.c.l.b16 %v244
      %v308 = vunpack.c.l.b16 %v245
      %v309 = vunpack.c.l.b16 %v246
      %v310 = vunpack.c.l.b16 %v247
      %v311 = vunpack.c.l.b16 %v248
      %v312 = vunpack.c.l.b16 %v249
      %v313 = vpack.c.b16 %v306, %v305
      %v314 = vpack.c.b16 %v308, %v307
      %v315 = vpack.c.b16 %v310, %v309
      %v316 = vpack.c.b16 %v312, %v311
      %vm321 = vcmask 523264
      %v323 = vsel %vm321, %v289, 0
      %v326 = vsel %vm321, %v290, 0
      %v329 = vsel %vm321, %v291, 0
      %v332 = vsel %vm321, %v292, 0
      %v335 = vsel %vm321, %v293, 0
      %v338 = vsel %vm321, %v294, 0
      %v341 = vsel %vm321, %v295, 0
      %v344 = vsel %vm321, %v296, 0
      %346 = vmatprep.subr.bf16.mxu0 0
      %347 = vmatpush1.bf16.msra.mxu0 0
      %348 = vmatprep.subr.bf16.mxu0 0
      %349 = vmatpush1.bf16.msra.mxu0 0
      %350 = vmatprep.subr.bf16.mxu0 0
      %351 = vmatpush1.bf16.msra.mxu0 0
      %352 = vmatprep.subr.bf16.mxu0 0
      %353 = vmatpush1.bf16.msra.mxu0 0
      %354 = vmatprep.subr.bf16.mxu0 0
      %355 = vmatpush1.bf16.msra.mxu0 %v316
      %356 = vmatprep.subr.bf16.mxu0 0
      %357 = vmatpush1.bf16.msra.mxu0 %v315
      %358 = vmatprep.subr.bf16.mxu0 0
      %359 = vmatpush1.bf16.msra.mxu0 %v314
      %360 = vmatprep.subr.bf16.mxu0 0
      %361 = vmatpush1.bf16.msra.mxu0 %v313
      %362 = vmatprep.subr.bf16.mxu0 0
      %363 = vmatpush2.bf16.msra.mxu0 0
      %364 = vmatprep.subr.bf16.mxu0 0
      %365 = vmatpush2.bf16.msra.mxu0 0
      %366 = vmatprep.subr.bf16.mxu0 0
      %367 = vmatpush2.bf16.msra.mxu0 0
      %368 = vmatprep.subr.bf16.mxu0 0
      %369 = vmatpush2.bf16.msra.mxu0 0
      %370 = vmatprep.subr.bf16.mxu0 0
      %371 = vmatpush2.bf16.msra.mxu0 0
      %372 = vmatprep.subr.bf16.mxu0 0
      %373 = vmatpush2.bf16.msra.mxu0 0
      %374 = vmatprep.subr.bf16.mxu0 0
      %375 = vmatpush2.bf16.msra.mxu0 0
      %376 = vmatprep.subr.bf16.mxu0 0
      %377 = vmatpush2.bf16.msra.mxu0 0
      %378 = vmatprep.mubr.bf16.mxu0 0
      %379 = vmatmul.mubr.bf16.gmra.mxu0 %v323
      %v380 = vpop.f32.mrf.mxu0
      %v381 = vadd.f32 %v255, %v380
      %v382 = vpop.f32.mrf.mxu0
      %v383 = vpop.f32.mrf.mxu0
      %v384 = vadd.f32 %v255, %v383
      %v385 = vpop.f32.mrf.mxu0
      %386 = vmatprep.mubr.bf16.mxu0 0
      %387 = vmatmul.mubr.bf16.gmra.mxu0 %v326
      %v388 = vpop.f32.mrf.mxu0
      %v389 = vadd.f32 %v255, %v388
      %v390 = vpop.f32.mrf.mxu0
      %v391 = vpop.f32.mrf.mxu0
      %v392 = vadd.f32 %v255, %v391
      %v393 = vpop.f32.mrf.mxu0
      %394 = vmatprep.mubr.bf16.mxu0 0
      %395 = vmatmul.mubr.bf16.gmra.mxu0 %v329
      %v396 = vpop.f32.mrf.mxu0
      %v397 = vadd.f32 %v255, %v396
      %v398 = vpop.f32.mrf.mxu0
      %v399 = vpop.f32.mrf.mxu0
      %v400 = vadd.f32 %v255, %v399
      %v401 = vpop.f32.mrf.mxu0
      %402 = vmatprep.mubr.bf16.mxu0 0
      %403 = vmatmul.mubr.bf16.gmra.mxu0 %v332
      %v404 = vpop.f32.mrf.mxu0
      %v405 = vadd.f32 %v255, %v404
      %v406 = vpop.f32.mrf.mxu0
      %v407 = vpop.f32.mrf.mxu0
      %v408 = vadd.f32 %v255, %v407
      %v409 = vpop.f32.mrf.mxu0
      %410 = vmatprep.mubr.bf16.mxu0 0
      %411 = vmatmul.mubr.bf16.gmra.mxu0 %v335
      %v412 = vpop.f32.mrf.mxu0
      %v413 = vadd.f32 %v255, %v412
      %v414 = vpop.f32.mrf.mxu0
      %v415 = vpop.f32.mrf.mxu0
      %v416 = vadd.f32 %v255, %v415
      %v417 = vpop.f32.mrf.mxu0
      %418 = vmatprep.mubr.bf16.mxu0 0
      %419 = vmatmul.mubr.bf16.gmra.mxu0 %v338
      %v420 = vpop.f32.mrf.mxu0
      %v421 = vadd.f32 %v255, %v420
      %v422 = vpop.f32.mrf.mxu0
      %v423 = vpop.f32.mrf.mxu0
      %v424 = vadd.f32 %v255, %v423
      %v425 = vpop.f32.mrf.mxu0
      %426 = vmatprep.mubr.bf16.mxu0 0
      %427 = vmatmul.mubr.bf16.gmra.mxu0 %v341
      %v428 = vpop.f32.mrf.mxu0
      %v429 = vadd.f32 %v255, %v428
      %v430 = vpop.f32.mrf.mxu0
      %v431 = vpop.f32.mrf.mxu0
      %v432 = vadd.f32 %v255, %v431
      %v433 = vpop.f32.mrf.mxu0
      %434 = vmatprep.mubr.bf16.mxu0 0
      %435 = vmatmul.mubr.bf16.gmra.mxu0 %v344
      %v436 = vpop.f32.mrf.mxu0
      %v437 = vadd.f32 %v255, %v436
      %v438 = vpop.f32.mrf.mxu0
      %v439 = vpop.f32.mrf.mxu0
      %v440 = vadd.f32 %v255, %v439
      %v441 = vpop.f32.mrf.mxu0
      %442 = vdwg.mxu0
      %443 = vst [vmem:[%s223] sm:$0xff] %v381
      %444 = vst [vmem:[%s223 + $0x8] sm:$0xff] %v384
      %445 = vst [vmem:[%s223 + $0x10] sm:$0xff] %v389
      %446 = vst [vmem:[%s223 + $0x18] sm:$0xff] %v392
      %447 = vst [vmem:[%s223 + $0x20] sm:$0xff] %v397
      %448 = vst [vmem:[%s223 + $0x28] sm:$0xff] %v400
      %449 = vst [vmem:[%s223 + $0x30] sm:$0xff] %v405
      %450 = vst [vmem:[%s223 + $0x38] sm:$0xff] %v408
      %451 = vst [vmem:[%s223 + $0x40] sm:$0xff] %v413
      %452 = vst [vmem:[%s223 + $0x48] sm:$0xff] %v416
      %453 = vst [vmem:[%s223 + $0x50] sm:$0xff] %v421
      %454 = vst [vmem:[%s223 + $0x58] sm:$0xff] %v424
      %455 = vst [vmem:[%s223 + $0x60] sm:$0xff] %v429
      %456 = vst [vmem:[%s223 + $0x68] sm:$0xff] %v432
      %457 = vst [vmem:[%s223 + $0x70] sm:$0xff] %v437
      %458 = vst [vmem:[%s223 + $0x78] sm:$0xff] %v440
      %s459 = smul.u32 16, %s18
      %p460 = scmp.lt.s32.totalorder %s459, 63
      %s461 = scalar_select %p460, %s459, 63
      %p462 = scmp.lt.s32.totalorder %s19, 0
      %s463 = scalar_select %p462, %s19, 0
      %s464 = sadd.s32 %s463, %s461
      %s465 = smul.addr %s464, 8
      %s466 = scalar_lea.vmem %s3, %s465
      // Predicated region
      $region33: #{fwd.9} parent=31 // pred_check
        %p467 = pneg %p124
      $region34: #{fwd.9} parent=31 // pred_check_branch
        %469 = sbr.rel (%p467) target = $region36
      $region35: #{fwd.9} parent=31 // pred_region
        %s470 = smul.u32 16, %s18
      $region36: #{fwd.9} parent=31 // pred_fallthru
        _
    $region32: #{fwd.9} parent=5 // pred_fallthru
      _
    %p471 = scmp.le.s32.totalorder 2, %s9
    // Predicated region
    $region37: #{fwd.9} parent=5 // pred_check
      %p472 = pneg %p471
    $region38: #{fwd.9} parent=5 // pred_check_branch
      %474 = sbr.rel (%p472) target = $region40
    $region39: #{fwd.9} parent=5 // pred_region
      %s475 = ssub.s32 %s9, 2
      // Predicated region
      $region41: #{fwd.9} parent=39 // pred_check
        %p476 = pneg %p130
      $region42: #{fwd.9} parent=39 // pred_check_branch
        %478 = sbr.rel (%p476) target = $region44
      $region43: #{fwd.9} parent=39 // pred_region
        %s479 = smul.u32 16, %s20
        %p480 = scmp.lt.s32.totalorder %s479, 63
        %s481 = scalar_select %p480, %s479, 63
        %p482 = scmp.lt.s32.totalorder %s21, 0
        %s483 = scalar_select %p482, %s21, 0
        %s484 = sadd.s32 %s483, %s481
        %s485 = smul.addr %s484, 8
        %s486 = scalar_lea.vmem %s3, %s485
      $region44: #{fwd.9} parent=39 // pred_fallthru
        _
    $region40: #{fwd.9} parent=5 // pred_fallthru
      _
  $region6: #{fwd.9} parent=0 // loop_footer
    %s13 = sadd.s32 1, %s9
  $region7: #{fwd.9} parent=0 // loop_footer_branch
    %8 = sbr.rel target = $region3
  $region8: #{fwd.9} parent=0 // loop_exit
    _

// kernel: fwd.7
$region0: #{fwd.7}
  #allocation0 [shape = 'u32[]', space=smem, size = 0x4, offset = 0x4, fixed_abs, tag = 'smem constant byte address 0x4 - core index']
  #allocation1 [shape = 'u32[144,128]{1,0:T(1,128)}', space=vmem, size = 0x12000, scoped, tag = 'internal scratch']
  %s0 = inlined_call_operand.vmem [shape: bf16[512,64], index: 0, kind: input, shape index: {}]
  %s1 = inlined_call_operand.vmem [shape: bf16[64,32], index: 1, kind: input, shape index: {}]
  %s2 = inlined_call_operand.vmem [shape: f32[1,32], index: 2, kind: input, shape index: {}]
  %s3 = inlined_call_operand.vmem [shape: bf16[512,32], index: 3, kind: output, shape index: {}]
  %s4 = sld [smem:[#allocation0]]
  $region45: #{fwd.7} parent=0
    _
  %s6 = ssub.s32 1, %s4
  %s7 = scalar_select 0, %s6, %s4
  loop: start=0, step=1, limit=6
  $region2: #{fwd.7} parent=0 // loop_pre_header
    _
  $region3: #{fwd.7} parent=0 // loop_header
    %s9 = sphi 0, %s13
    %p10 = scmp.ge.s32.totalorder %s9, 6
    %s16 = sphi 0, %s28
    %s17 = sphi 0, %s24
    %s18 = sphi 0, %s16
    %s19 = sphi 0, %s17
    %s20 = sphi 0, %s18
    %s21 = sphi 0, %s19
    %s31 = sphi 0, %s33
    %s34 = sphi 0, %s31
    %s35 = sphi 0, %s34
    %s51 = sphi 0, %s35
    %s57 = sphi 0, %s59
    %s60 = sphi 0, %s57
    %s61 = sphi 0, %s60
    %s77 = sphi 0, %s61
    %s83 = sphi 0, %s85
    %s86 = sphi 0, %s83
    %s87 = sphi 0, %s86
    %s103 = sphi 0, %s87
    %s111 = sphi 0, %s113
    %s114 = sphi 0, %s111
    %s115 = sphi 0, %s114
    %s131 = sphi 0, %s115
  $region4: #{fwd.7} parent=0 // loop_header_branch
    %12 = sbr.rel (%p10) target = $region8
  $region5: #{fwd.7} parent=0 // loop_body
    %s14 = ssub.s32 %s9, 1
    %s15 = ssub.s32 %s9, 2
    %s22 = sadd.s32 1, %s17
    %p23 = scmp.ge.s32.totalorder %s22, 1
    %s24 = scalar_select %p23, 0, %s22
    %s25 = sadd.s32 1, %s16
    %s26 = scalar_select %p23, %s25, %s16
    %p27 = scmp.ge.s32.totalorder %s26, 4
    %s28 = scalar_select %p27, 0, %s26
    %s29 = ssub.s32 %s16, %s28
    %p30 = scmp.eq.s32.totalorder %s29, 0
    %s32 = sadd.s32 %s31, 1
    %s33 = scalar_select %p30, %s31, %s32
    %p36 = pneg %p30
    %p37 = scmp.eq.s32.totalorder %s9, 3
    %p38 = por %p36, %p37
    %p39 = scmp.ne.s32.totalorder %s31, %s34
    %p40 = scmp.eq.s32.totalorder %s9, 0
    %p41 = por %p39, %p40
    %p42 = scmp.ne.s32.totalorder %s31, %s34
    %p43 = scmp.eq.s32.totalorder %s14, 3
    %p44 = por %p42, %p43
    %p45 = scmp.ne.s32.totalorder %s34, %s35
    %p46 = scmp.eq.s32.totalorder %s14, 0
    %p47 = por %p45, %p46
    %p48 = scmp.ne.s32.totalorder %s34, %s35
    %p49 = scmp.eq.s32.totalorder %s15, 3
    %p50 = por %p48, %p49
    %p52 = scmp.ne.s32.totalorder %s35, %s51
    %p53 = scmp.eq.s32.totalorder %s15, 0
    %p54 = por %p52, %p53
    %s55 = ssub.s32 %s17, %s24
    %p56 = scmp.eq.s32.totalorder %s55, 0
    %s58 = sadd.s32 %s57, 1
    %s59 = scalar_select %p56, %s57, %s58
    %p62 = pneg %p56
    %p63 = scmp.eq.s32.totalorder %s9, 3
    %p64 = por %p62, %p63
    %p65 = scmp.ne.s32.totalorder %s57, %s60
    %p66 = scmp.eq.s32.totalorder %s9, 0
    %p67 = por %p65, %p66
    %p68 = scmp.ne.s32.totalorder %s57, %s60
    %p69 = scmp.eq.s32.totalorder %s14, 3
    %p70 = por %p68, %p69
    %p71 = scmp.ne.s32.totalorder %s60, %s61
    %p72 = scmp.eq.s32.totalorder %s14, 0
    %p73 = por %p71, %p72
    %p74 = scmp.ne.s32.totalorder %s60, %s61
    %p75 = scmp.eq.s32.totalorder %s15, 3
    %p76 = por %p74, %p75
    %p78 = scmp.ne.s32.totalorder %s61, %s77
    %p79 = scmp.eq.s32.totalorder %s15, 0
    %p80 = por %p78, %p79
    %s81 = ssub.s32 %s17, %s24
    %p82 = scmp.eq.s32.totalorder %s81, 0
    %s84 = sadd.s32 %s83, 1
    %s85 = scalar_select %p82, %s83, %s84
    %p88 = pneg %p82
    %p89 = scmp.eq.s32.totalorder %s9, 3
    %p90 = por %p88, %p89
    %p91 = scmp.ne.s32.totalorder %s83, %s86
    %p92 = scmp.eq.s32.totalorder %s9, 0
    %p93 = por %p91, %p92
    %p94 = scmp.ne.s32.totalorder %s83, %s86
    %p95 = scmp.eq.s32.totalorder %s14, 3
    %p96 = por %p94, %p95
    %p97 = scmp.ne.s32.totalorder %s86, %s87
    %p98 = scmp.eq.s32.totalorder %s14, 0
    %p99 = por %p97, %p98
    %p100 = scmp.ne.s32.totalorder %s86, %s87
    %p101 = scmp.eq.s32.totalorder %s15, 3
    %p102 = por %p100, %p101
    %p104 = scmp.ne.s32.totalorder %s87, %s103
    %p105 = scmp.eq.s32.totalorder %s15, 0
    %p106 = por %p104, %p105
    %s107 = ssub.s32 %s16, %s28
    %s108 = ssub.s32 %s17, %s24
    %s109 = sor.u32 %s107, %s108
    %p110 = scmp.eq.s32.totalorder %s109, 0
    %s112 = sadd.s32 %s111, 1
    %s113 = scalar_select %p110, %s111, %s112
    %p116 = pneg %p110
    %p117 = scmp.eq.s32.totalorder %s9, 3
    %p118 = por %p116, %p117
    %p119 = scmp.ne.s32.totalorder %s111, %s114
    %p120 = scmp.eq.s32.totalorder %s9, 0
    %p121 = por %p119, %p120
    %p122 = scmp.ne.s32.totalorder %s111, %s114
    %p123 = scmp.eq.s32.totalorder %s14, 3
    %p124 = por %p122, %p123
    %p125 = scmp.ne.s32.totalorder %s114, %s115
    %p126 = scmp.eq.s32.totalorder %s14, 0
    %p127 = por %p125, %p126
    %p128 = scmp.ne.s32.totalorder %s114, %s115
    %p129 = scmp.eq.s32.totalorder %s15, 3
    %p130 = por %p128, %p129
    %p132 = scmp.ne.s32.totalorder %s115, %s131
    %p133 = scmp.eq.s32.totalorder %s15, 0
    %p134 = por %p132, %p133
    %p135 = scmp.le.s32.totalorder 1, %s9
    %p136 = scmp.lt.s32.totalorder %s9, 5
    %p137 = pnand %p135, %p136
    %p138 = pneg %p137
    // Predicated region
    $region9: #{fwd.7} parent=5 // pred_check
      _
    $region10: #{fwd.7} parent=5 // pred_check_branch
      %140 = sbr.rel (%p137) target = $region12
    $region11: #{fwd.7} parent=5 // pred_region
      %s141 = ssub.s32 %s9, 1
      // Predicated region
      $region13: #{fwd.7} parent=11 // pred_check
        %p142 = pneg %p73
      $region14: #{fwd.7} parent=11 // pred_check_branch
        %144 = sbr.rel (%p142) target = $region16
      $region15: #{fwd.7} parent=11 // pred_region
        %p145 = scmp.lt.s32.totalorder %s19, 0
        %s146 = scalar_select %p145, %s19, 0
        %s147 = smul.addr %s146, 4
        %s148 = scalar_lea.vmem %s1, %s147
      $region16: #{fwd.7} parent=11 // pred_fallthru
        _
      // Predicated region
      $region17: #{fwd.7} parent=11 // pred_check
        %p149 = pneg %p99
      $region18: #{fwd.7} parent=11 // pred_check_branch
        %151 = sbr.rel (%p149) target = $region20
      $region19: #{fwd.7} parent=11 // pred_region
        %p152 = scmp.lt.s32.totalorder %s19, 0
        %s153 = scalar_select %p152, %s19, 0
        %s154 = scalar_lea.vmem %s2, %s153
      $region20: #{fwd.7} parent=11 // pred_fallthru
        _
    $region12: #{fwd.7} parent=5 // pred_fallthru
      _
    %p155 = scmp.lt.s32.totalorder %s9, 4
    // Predicated region
    $region21: #{fwd.7} parent=5 // pred_check
      %p156 = pneg %p155
    $region22: #{fwd.7} parent=5 // pred_check_branch
      %158 = sbr.rel (%p156) target = $region24
    $region23: #{fwd.7} parent=5 // pred_region
      // Predicated region
      $region25: #{fwd.7} parent=23 // pred_check
        %p159 = pneg %p41
      $region26: #{fwd.7} parent=23 // pred_check_branch
        %161 = sbr.rel (%p159) target = $region28
      $region27: #{fwd.7} parent=23 // pred_region
        %s162 = smul.u32 16, %s16
        %p163 = scmp.lt.s32.totalorder %s162, 63
        %s164 = scalar_select %p163, %s162, 63
        %s165 = smul.addr %s164, 4
        %s166 = scalar_lea.vmem %s0, %s165
        %s167 = smul.u32 16, %s16
      $region28: #{fwd.7} parent=23 // pred_fallthru
        _
    $region24: #{fwd.7} parent=5 // pred_fallthru
      _
    %p168 = scmp.le.s32.totalorder 1, %s9
    %p169 = scmp.lt.s32.totalorder %s9, 5
    %p170 = pnand %p168, %p169
    %p171 = pneg %p170
    // Predicated region
    $region29: #{fwd.7} parent=5 // pred_check
      _
    $region30: #{fwd.7} parent=5 // pred_check_branch
      %173 = sbr.rel (%p170) target = $region32
    $region31: #{fwd.7} parent=5 // pred_region
      %s174 = ssub.s32 %s9, 1
      %s175 = smul.u32 16, %s18
      %p176 = scmp.lt.s32.totalorder %s175, 63
      %s177 = scalar_select %p176, %s175, 63
      %s178 = smul.addr %s177, 4
      %s179 = scalar_lea.vmem %s0, %s178
      %p180 = pneg %p47
      %p181 = pneg %p44
      %p182 = scmp.lt.s32.totalorder %s19, 0
      %s183 = scalar_select %p182, %s19, 0
      %s184 = smul.addr %s183, 4
      %s185 = scalar_lea.vmem %s1, %s184
      %p186 = pneg %p73
      %p187 = pneg %p70
      %p188 = scmp.lt.s32.totalorder %s19, 0
      %s189 = scalar_select %p188, %s19, 0
      %s190 = scalar_lea.vmem %s2, %s189
      %p191 = pneg %p99
      %p192 = pneg %p96
      %p193 = pneg %p127
      %p194 = pneg %p124
      %s195 = smul.u32 16, %s18
      %p196 = scmp.lt.s32.totalorder %s195, 63
      %s197 = scalar_select %p196, %s195, 63
      %p198 = scmp.lt.s32.totalorder %s19, 0
      %s199 = scalar_select %p198, %s19, 0
      %s200 = sadd.s32 %s199, %s197
      %s201 = smul.addr %s200, 4
      %s202 = scalar_lea.vmem %s3, %s201
      %s203 = smul.u32 16, %s18
      %p204 = scmp.lt.s32.totalorder %s203, 63
      %s205 = scalar_select %p204, %s203, 63
      %s206 = smul.addr %s205, 4
      %s207 = scalar_lea.vmem %s0, %s206
      %s208 = smul.u32 16, %s18
      %p209 = scmp.lt.s32.totalorder %s19, 0
      %s210 = scalar_select %p209, %s19, 0
      %s211 = smul.addr %s210, 4
      %s212 = scalar_lea.vmem %s1, %s211
      %p213 = scmp.lt.s32.totalorder %s19, 0
      %s214 = scalar_select %p213, %s19, 0
      %s215 = scalar_lea.vmem %s2, %s214
      %s216 = smul.u32 16, %s18
      %p217 = scmp.lt.s32.totalorder %s216, 63
      %s218 = scalar_select %p217, %s216, 63
      %p219 = scmp.lt.s32.totalorder %s19, 0
      %s220 = scalar_select %p219, %s19, 0
      %s221 = sadd.s32 %s220, %s218
      %s222 = smul.addr %s221, 4
      %s223 = scalar_lea.vmem %s3, %s222
      %s224 = smul.u32 16, %s18
      %v226 = vld [vmem:[%s207] sm:$0xf]
      %v227 = vld [vmem:[%s207 + $0x4] sm:$0xf]
      %v228 = vld [vmem:[%s207 + $0x8] sm:$0xf]
      %v229 = vld [vmem:[%s207 + $0xc] sm:$0xf]
      %v230 = vld [vmem:[%s207 + $0x10] sm:$0xf]
      %v231 = vld [vmem:[%s207 + $0x14] sm:$0xf]
      %v232 = vld [vmem:[%s207 + $0x18] sm:$0xf]
      %v233 = vld [vmem:[%s207 + $0x1c] sm:$0xf]
      %v234 = vld [vmem:[%s207 + $0x20] sm:$0xf]
      %v235 = vld [vmem:[%s207 + $0x24] sm:$0xf]
      %v236 = vld [vmem:[%s207 + $0x28] sm:$0xf]
      %v237 = vld [vmem:[%s207 + $0x2c] sm:$0xf]
      %v238 = vld [vmem:[%s207 + $0x30] sm:$0xf]
      %v239 = vld [vmem:[%s207 + $0x34] sm:$0xf]
      %v240 = vld [vmem:[%s207 + $0x38] sm:$0xf]
      %v241 = vld [vmem:[%s207 + $0x3c] sm:$0xf]
      %v242 = vld [vmem:[%s212] sm:$0xf]
      %v243 = vld [vmem:[%s212 + $0x4] sm:$0xf]
      %v244 = vld [vmem:[%s212 + $0x8] sm:$0xf]
      %v245 = vld [vmem:[%s212 + $0xc] sm:$0xf]
      %v246 = vld [vmem:[%s212 + $0x10] sm:$0xf]
      %v247 = vld [vmem:[%s212 + $0x14] sm:$0xf]
      %v248 = vld [vmem:[%s212 + $0x18] sm:$0xf]
      %v249 = vld [vmem:[%s212 + $0x1c] sm:$0xf]
      %v250 = vld [vmem:[%s215] sm:$0x1]
      %v252 = vlaneseq
      %v253 = vshrl.u32 %v252, 7
      %v254 = vsub.s32 0, %v253
      %v255 = vrot.slane %v250, %v254
      %v273 = vunpack.c.l.b16 %v226
      %v274 = vunpack.c.l.b16 %v227
      %v275 = vunpack.c.l.b16 %v228
      %v276 = vunpack.c.l.b16 %v229
      %v277 = vunpack.c.l.b16 %v230
      %v278 = vunpack.c.l.b16 %v231
      %v279 = vunpack.c.l.b16 %v232
      %v280 = vunpack.c.l.b16 %v233
      %v281 = vunpack.c.l.b16 %v234
      %v282 = vunpack.c.l.b16 %v235
      %v283 = vunpack.c.l.b16 %v236
      %v284 = vunpack.c.l.b16 %v237
      %v285 = vunpack.c.l.b16 %v238
      %v286 = vunpack.c.l.b16 %v239
      %v287 = vunpack.c.l.b16 %v240
      %v288 = vunpack.c.l.b16 %v241
      %v289 = vpack.c.b16 %v274, %v273
      %v290 = vpack.c.b16 %v276, %v275
      %v291 = vpack.c.b16 %v278, %v277
      %v292 = vpack.c.b16 %v280, %v279
      %v293 = vpack.c.b16 %v282, %v281
      %v294 = vpack.c.b16 %v284, %v283
      %v295 = vpack.c.b16 %v286, %v285
      %v296 = vpack.c.b16 %v288, %v287
      %v305 = vunpack.c.l.b16 %v242
      %v306 = vunpack.c.l.b16 %v243
      %v307 = vunpack.c.l.b16 %v244
      %v308 = vunpack.c.l.b16 %v245
      %v309 = vunpack.c.l.b16 %v246
      %v310 = vunpack.c.l.b16 %v247
      %v311 = vunpack.c.l.b16 %v248
      %v312 = vunpack.c.l.b16 %v249
      %v313 = vpack.c.b16 %v306, %v305
      %v314 = vpack.c.b16 %v308, %v307
      %v315 = vpack.c.b16 %v310, %v309
      %v316 = vpack.c.b16 %v312, %v311
      %vm321 = vcmask 523264
      %v323 = vsel %vm321, %v289, 0
      %v326 = vsel %vm321, %v290, 0
      %v329 = vsel %vm321, %v291, 0
      %v332 = vsel %vm321, %v292, 0
      %v335 = vsel %vm321, %v293, 0
      %v338 = vsel %vm321, %v294, 0
      %v341 = vsel %vm321, %v295, 0
      %v344 = vsel %vm321, %v296, 0
      %346 = vmatprep.subr.bf16.mxu0 0
      %347 = vmatpush1.bf16.msra.mxu0 0
      %348 = vmatprep.subr.bf16.mxu0 0
      %349 = vmatpush1.bf16.msra.mxu0 0
      %350 = vmatprep.subr.bf16.mxu0 0
      %351 = vmatpush1.bf16.msra.mxu0 0
      %352 = vmatprep.subr.bf16.mxu0 0
      %353 = vmatpush1.bf16.msra.mxu0 0
      %354 = vmatprep.subr.bf16.mxu0 0
      %355 = vmatpush1.bf16.msra.mxu0 %v316
      %356 = vmatprep.subr.bf16.mxu0 0
      %357 = vmatpush1.bf16.msra.mxu0 %v315
      %358 = vmatprep.subr.bf16.mxu0 0
      %359 = vmatpush1.bf16.msra.mxu0 %v314
      %360 = vmatprep.subr.bf16.mxu0 0
      %361 = vmatpush1.bf16.msra.mxu0 %v313
      %362 = vmatprep.subr.bf16.mxu0 0
      %363 = vmatpush2.bf16.msra.mxu0 0
      %364 = vmatprep.subr.bf16.mxu0 0
      %365 = vmatpush2.bf16.msra.mxu0 0
      %366 = vmatprep.subr.bf16.mxu0 0
      %367 = vmatpush2.bf16.msra.mxu0 0
      %368 = vmatprep.subr.bf16.mxu0 0
      %369 = vmatpush2.bf16.msra.mxu0 0
      %370 = vmatprep.subr.bf16.mxu0 0
      %371 = vmatpush2.bf16.msra.mxu0 0
      %372 = vmatprep.subr.bf16.mxu0 0
      %373 = vmatpush2.bf16.msra.mxu0 0
      %374 = vmatprep.subr.bf16.mxu0 0
      %375 = vmatpush2.bf16.msra.mxu0 0
      %376 = vmatprep.subr.bf16.mxu0 0
      %377 = vmatpush2.bf16.msra.mxu0 0
      %378 = vmatprep.mubr.bf16.mxu0 0
      %379 = vmatmul.mubr.bf16.gmra.mxu0 %v323
      %v380 = vpop.f32.mrf.mxu0
      %v381 = vadd.f32 %v255, %v380
      %v382 = vpop.f32.mrf.mxu0
      %v383 = vpop.f32.mrf.mxu0
      %v384 = vadd.f32 %v255, %v383
      %v385 = vpop.f32.mrf.mxu0
      %386 = vmatprep.mubr.bf16.mxu0 0
      %387 = vmatmul.mubr.bf16.gmra.mxu0 %v326
      %v388 = vpop.f32.mrf.mxu0
      %v389 = vadd.f32 %v255, %v388
      %v390 = vpop.f32.mrf.mxu0
      %v391 = vpop.f32.mrf.mxu0
      %v392 = vadd.f32 %v255, %v391
      %v393 = vpop.f32.mrf.mxu0
      %394 = vmatprep.mubr.bf16.mxu0 0
      %395 = vmatmul.mubr.bf16.gmra.mxu0 %v329
      %v396 = vpop.f32.mrf.mxu0
      %v397 = vadd.f32 %v255, %v396
      %v398 = vpop.f32.mrf.mxu0
      %v399 = vpop.f32.mrf.mxu0
      %v400 = vadd.f32 %v255, %v399
      %v401 = vpop.f32.mrf.mxu0
      %402 = vmatprep.mubr.bf16.mxu0 0
      %403 = vmatmul.mubr.bf16.gmra.mxu0 %v332
      %v404 = vpop.f32.mrf.mxu0
      %v405 = vadd.f32 %v255, %v404
      %v406 = vpop.f32.mrf.mxu0
      %v407 = vpop.f32.mrf.mxu0
      %v408 = vadd.f32 %v255, %v407
      %v409 = vpop.f32.mrf.mxu0
      %410 = vmatprep.mubr.bf16.mxu0 0
      %411 = vmatmul.mubr.bf16.gmra.mxu0 %v335
      %v412 = vpop.f32.mrf.mxu0
      %v413 = vadd.f32 %v255, %v412
      %v414 = vpop.f32.mrf.mxu0
      %v415 = vpop.f32.mrf.mxu0
      %v416 = vadd.f32 %v255, %v415
      %v417 = vpop.f32.mrf.mxu0
      %418 = vmatprep.mubr.bf16.mxu0 0
      %419 = vmatmul.mubr.bf16.gmra.mxu0 %v338
      %v420 = vpop.f32.mrf.mxu0
      %v421 = vadd.f32 %v255, %v420
      %v422 = vpop.f32.mrf.mxu0
      %v423 = vpop.f32.mrf.mxu0
      %v424 = vadd.f32 %v255, %v423
      %v425 = vpop.f32.mrf.mxu0
      %426 = vmatprep.mubr.bf16.mxu0 0
      %427 = vmatmul.mubr.bf16.gmra.mxu0 %v341
      %v428 = vpop.f32.mrf.mxu0
      %v429 = vadd.f32 %v255, %v428
      %v430 = vpop.f32.mrf.mxu0
      %v431 = vpop.f32.mrf.mxu0
      %v432 = vadd.f32 %v255, %v431
      %v433 = vpop.f32.mrf.mxu0
      %434 = vmatprep.mubr.bf16.mxu0 0
      %435 = vmatmul.mubr.bf16.gmra.mxu0 %v344
      %v436 = vpop.f32.mrf.mxu0
      %v437 = vadd.f32 %v255, %v436
      %v438 = vpop.f32.mrf.mxu0
      %v439 = vpop.f32.mrf.mxu0
      %v440 = vadd.f32 %v255, %v439
      %v441 = vpop.f32.mrf.mxu0
      %442 = vdwg.mxu0
      %v443 = vmax.f32 %v381, 0.0
      %v444 = vmax.f32 %v384, 0.0
      %v445 = vmax.f32 %v389, 0.0
      %v446 = vmax.f32 %v392, 0.0
      %v447 = vmax.f32 %v397, 0.0
      %v448 = vmax.f32 %v400, 0.0
      %v449 = vmax.f32 %v405, 0.0
      %v450 = vmax.f32 %v408, 0.0
      %v451 = vmax.f32 %v413, 0.0
      %v452 = vmax.f32 %v416, 0.0
      %v453 = vmax.f32 %v421, 0.0
      %v454 = vmax.f32 %v424, 0.0
      %v455 = vmax.f32 %v429, 0.0
      %v456 = vmax.f32 %v432, 0.0
      %v457 = vmax.f32 %v437, 0.0
      %v458 = vmax.f32 %v440, 0.0
      %v459 = vpack.c.bf16 %v444, %v443
      %v460 = vpack.c.bf16 %v446, %v445
      %v461 = vpack.c.bf16 %v448, %v447
      %v462 = vpack.c.bf16 %v450, %v449
      %v463 = vpack.c.bf16 %v452, %v451
      %v464 = vpack.c.bf16 %v454, %v453
      %v465 = vpack.c.bf16 %v456, %v455
      %v466 = vpack.c.bf16 %v458, %v457
      %v475 = vunpack.c.l.b16 %v459
      %v476 = vunpack.c.h.b16 %v459
      %v477 = vunpack.c.l.b16 %v460
      %v478 = vunpack.c.h.b16 %v460
      %v479 = vunpack.c.l.b16 %v461
      %v480 = vunpack.c.h.b16 %v461
      %v481 = vunpack.c.l.b16 %v462
      %v482 = vunpack.c.h.b16 %v462
      %v483 = vunpack.c.l.b16 %v463
      %v484 = vunpack.c.h.b16 %v463
      %v485 = vunpack.c.l.b16 %v464
      %v486 = vunpack.c.h.b16 %v464
      %v487 = vunpack.c.l.b16 %v465
      %v488 = vunpack.c.h.b16 %v465
      %v489 = vunpack.c.l.b16 %v466
      %v490 = vunpack.c.h.b16 %v466
      %v491 = vpack.c.b16 %v475, %v475
      %v492 = vpack.c.b16 %v476, %v476
      %v493 = vpack.c.b16 %v477, %v477
      %v494 = vpack.c.b16 %v478, %v478
      %v495 = vpack.c.b16 %v479, %v479
      %v496 = vpack.c.b16 %v480, %v480
      %v497 = vpack.c.b16 %v481, %v481
      %v498 = vpack.c.b16 %v482, %v482
      %v499 = vpack.c.b16 %v483, %v483
      %v500 = vpack.c.b16 %v484, %v484
      %v501 = vpack.c.b16 %v485, %v485
      %v502 = vpack.c.b16 %v486, %v486
      %v503 = vpack.c.b16 %v487, %v487
      %v504 = vpack.c.b16 %v488, %v488
      %v505 = vpack.c.b16 %v489, %v489
      %v506 = vpack.c.b16 %v490, %v490
      %vm523 = vcmask 257024
      %524 = vst.msk [vmem:[%s223] sm:$0xf] %vm523, %v491
      %525 = vst.msk [vmem:[%s223 + $0x4] sm:$0xf] %vm523, %v492
      %526 = vst.msk [vmem:[%s223 + $0x8] sm:$0xf] %vm523, %v493
      %527 = vst.msk [vmem:[%s223 + $0xc] sm:$0xf] %vm523, %v494
      %528 = vst.msk [vmem:[%s223 + $0x10] sm:$0xf] %vm523, %v495
      %529 = vst.msk [vmem:[%s223 + $0x14] sm:$0xf] %vm523, %v496
      %530 = vst.msk [vmem:[%s223 + $0x18] sm:$0xf] %vm523, %v497
      %531 = vst.msk [vmem:[%s223 + $0x1c] sm:$0xf] %vm523, %v498
      %532 = vst.msk [vmem:[%s223 + $0x20] sm:$0xf] %vm523, %v499
      %533 = vst.msk [vmem:[%s223 + $0x24] sm:$0xf] %vm523, %v500
      %534 = vst.msk [vmem:[%s223 + $0x28] sm:$0xf] %vm523, %v501
      %535 = vst.msk [vmem:[%s223 + $0x2c] sm:$0xf] %vm523, %v502
      %536 = vst.msk [vmem:[%s223 + $0x30] sm:$0xf] %vm523, %v503
      %537 = vst.msk [vmem:[%s223 + $0x34] sm:$0xf] %vm523, %v504
      %538 = vst.msk [vmem:[%s223 + $0x38] sm:$0xf] %vm523, %v505
      %539 = vst.msk [vmem:[%s223 + $0x3c] sm:$0xf] %vm523, %v506
      %s540 = smul.u32 16, %s18
      %p541 = scmp.lt.s32.totalorder %s540, 63
      %s542 = scalar_select %p541, %s540, 63
      %p543 = scmp.lt.s32.totalorder %s19, 0
      %s544 = scalar_select %p543, %s19, 0
      %s545 = sadd.s32 %s544, %s542
      %s546 = smul.addr %s545, 4
      %s547 = scalar_lea.vmem %s3, %s546
      // Predicated region
      $region33: #{fwd.7} parent=31 // pred_check
        %p548 = pneg %p124
      $region34: #{fwd.7} parent=31 // pred_check_branch
        %550 = sbr.rel (%p548) target = $region36
      $region35: #{fwd.7} parent=31 // pred_region
        %s551 = smul.u32 16, %s18
      $region36: #{fwd.7} parent=31 // pred_fallthru
        _
    $region32: #{fwd.7} parent=5 // pred_fallthru
      _
    %p552 = scmp.le.s32.totalorder 2, %s9
    // Predicated region
    $region37: #{fwd.7} parent=5 // pred_check
      %p553 = pneg %p552
    $region38: #{fwd.7} parent=5 // pred_check_branch
      %555 = sbr.rel (%p553) target = $region40
    $region39: #{fwd.7} parent=5 // pred_region
      %s556 = ssub.s32 %s9, 2
      // Predicated region
      $region41: #{fwd.7} parent=39 // pred_check
        %p557 = pneg %p130
      $region42: #{fwd.7} parent=39 // pred_check_branch
        %559 = sbr.rel (%p557) target = $region44
      $region43: #{fwd.7} parent=39 // pred_region
        %s560 = smul.u32 16, %s20
        %p561 = scmp.lt.s32.totalorder %s560, 63
        %s562 = scalar_select %p561, %s560, 63
        %p563 = scmp.lt.s32.totalorder %s21, 0
        %s564 = scalar_select %p563, %s21, 0
        %s565 = sadd.s32 %s564, %s562
        %s566 = smul.addr %s565, 4
        %s567 = scalar_lea.vmem %s3, %s566
      $region44: #{fwd.7} parent=39 // pred_fallthru
        _
    $region40: #{fwd.7} parent=5 // pred_fallthru
      _
  $region6: #{fwd.7} parent=0 // loop_footer
    %s13 = sadd.s32 1, %s9
  $region7: #{fwd.7} parent=0 // loop_footer_branch
    %8 = sbr.rel target = $region3
  $region8: #{fwd.7} parent=0 // loop_exit
    _

// kernel: fwd.10
$region0: #{fwd.10}
  #allocation0 [shape = 'u32[]', space=smem, size = 0x4, offset = 0x4, fixed_abs, tag = 'smem constant byte address 0x4 - core index']
  #allocation1 [shape = 'u32[144,128]{1,0:T(1,128)}', space=vmem, size = 0x12000, scoped, tag = 'internal scratch']
  %s0 = inlined_call_operand.vmem [shape: bf16[512,32], index: 0, kind: input, shape index: {}]
  %s1 = inlined_call_operand.vmem [shape: bf16[32,128], index: 1, kind: input, shape index: {}]
  %s2 = inlined_call_operand.vmem [shape: f32[1,128], index: 2, kind: input, shape index: {}]
  %s3 = inlined_call_operand.vmem [shape: f32[512,128], index: 3, kind: input, shape index: {}]
  %s4 = inlined_call_operand.vmem [shape: f32[512,128], index: 4, kind: output, shape index: {}]
  %s5 = sld [smem:[#allocation0]]
  $region49: #{fwd.10} parent=0
    _
  %s7 = ssub.s32 1, %s5
  %s8 = scalar_select 0, %s7, %s5
  loop: start=0, step=1, limit=6
  $region2: #{fwd.10} parent=0 // loop_pre_header
    _
  $region3: #{fwd.10} parent=0 // loop_header
    %s10 = sphi 0, %s14
    %p11 = scmp.ge.s32.totalorder %s10, 6
    %s17 = sphi 0, %s29
    %s18 = sphi 0, %s25
    %s19 = sphi 0, %s17
    %s20 = sphi 0, %s18
    %s21 = sphi 0, %s19
    %s22 = sphi 0, %s20
    %s32 = sphi 0, %s34
    %s35 = sphi 0, %s32
    %s36 = sphi 0, %s35
    %s52 = sphi 0, %s36
    %s58 = sphi 0, %s60
    %s61 = sphi 0, %s58
    %s62 = sphi 0, %s61
    %s78 = sphi 0, %s62
    %s84 = sphi 0, %s86
    %s87 = sphi 0, %s84
    %s88 = sphi 0, %s87
    %s104 = sphi 0, %s88
    %s112 = sphi 0, %s114
    %s115 = sphi 0, %s112
    %s116 = sphi 0, %s115
    %s132 = sphi 0, %s116
    %s140 = sphi 0, %s142
    %s143 = sphi 0, %s140
    %s144 = sphi 0, %s143
    %s160 = sphi 0, %s144
  $region4: #{fwd.10} parent=0 // loop_header_branch
    %13 = sbr.rel (%p11) target = $region8
  $region5: #{fwd.10} parent=0 // loop_body
    %s15 = ssub.s32 %s10, 1
    %s16 = ssub.s32 %s10, 2
    %s23 = sadd.s32 1, %s18
    %p24 = scmp.ge.s32.totalorder %s23, 1
    %s25 = scalar_select %p24, 0, %s23
    %s26 = sadd.s32 1, %s17
    %s27 = scalar_select %p24, %s26, %s17
    %p28 = scmp.ge.s32.totalorder %s27, 4
    %s29 = scalar_select %p28, 0, %s27
    %s30 = ssub.s32 %s17, %s29
    %p31 = scmp.eq.s32.totalorder %s30, 0
    %s33 = sadd.s32 %s32, 1
    %s34 = scalar_select %p31, %s32, %s33
    %p37 = pneg %p31
    %p38 = scmp.eq.s32.totalorder %s10, 3
    %p39 = por %p37, %p38
    %p40 = scmp.ne.s32.totalorder %s32, %s35
    %p41 = scmp.eq.s32.totalorder %s10, 0
    %p42 = por %p40, %p41
    %p43 = scmp.ne.s32.totalorder %s32, %s35
    %p44 = scmp.eq.s32.totalorder %s15, 3
    %p45 = por %p43, %p44
    %p46 = scmp.ne.s32.totalorder %s35, %s36
    %p47 = scmp.eq.s32.totalorder %s15, 0
    %p48 = por %p46, %p47
    %p49 = scmp.ne.s32.totalorder %s35, %s36
    %p50 = scmp.eq.s32.totalorder %s16, 3
    %p51 = por %p49, %p50
    %p53 = scmp.ne.s32.totalorder %s36, %s52
    %p54 = scmp.eq.s32.totalorder %s16, 0
    %p55 = por %p53, %p54
    %s56 = ssub.s32 %s18, %s25
    %p57 = scmp.eq.s32.totalorder %s56, 0
    %s59 = sadd.s32 %s58, 1
    %s60 = scalar_select %p57, %s58, %s59
    %p63 = pneg %p57
    %p64 = scmp.eq.s32.totalorder %s10, 3
    %p65 = por %p63, %p64
    %p66 = scmp.ne.s32.totalorder %s58, %s61
    %p67 = scmp.eq.s32.totalorder %s10, 0
    %p68 = por %p66, %p67
    %p69 = scmp.ne.s32.totalorder %s58, %s61
    %p70 = scmp.eq.s32.totalorder %s15, 3
    %p71 = por %p69, %p70
    %p72 = scmp.ne.s32.totalorder %s61, %s62
    %p73 = scmp.eq.s32.totalorder %s15, 0
    %p74 = por %p72, %p73
    %p75 = scmp.ne.s32.totalorder %s61, %s62
    %p76 = scmp.eq.s32.totalorder %s16, 3
    %p77 = por %p75, %p76
    %p79 = scmp.ne.s32.totalorder %s62, %s78
    %p80 = scmp.eq.s32.totalorder %s16, 0
    %p81 = por %p79, %p80
    %s82 = ssub.s32 %s18, %s25
    %p83 = scmp.eq.s32.totalorder %s82, 0
    %s85 = sadd.s32 %s84, 1
    %s86 = scalar_select %p83, %s84, %s85
    %p89 = pneg %p83
    %p90 = scmp.eq.s32.totalorder %s10, 3
    %p91 = por %p89, %p90
    %p92 = scmp.ne.s32.totalorder %s84, %s87
    %p93 = scmp.eq.s32.totalorder %s10, 0
    %p94 = por %p92, %p93
    %p95 = scmp.ne.s32.totalorder %s84, %s87
    %p96 = scmp.eq.s32.totalorder %s15, 3
    %p97 = por %p95, %p96
    %p98 = scmp.ne.s32.totalorder %s87, %s88
    %p99 = scmp.eq.s32.totalorder %s15, 0
    %p100 = por %p98, %p99
    %p101 = scmp.ne.s32.totalorder %s87, %s88
    %p102 = scmp.eq.s32.totalorder %s16, 3
    %p103 = por %p101, %p102
    %p105 = scmp.ne.s32.totalorder %s88, %s104
    %p106 = scmp.eq.s32.totalorder %s16, 0
    %p107 = por %p105, %p106
    %s108 = ssub.s32 %s17, %s29
    %s109 = ssub.s32 %s18, %s25
    %s110 = sor.u32 %s108, %s109
    %p111 = scmp.eq.s32.totalorder %s110, 0
    %s113 = sadd.s32 %s112, 1
    %s114 = scalar_select %p111, %s112, %s113
    %p117 = pneg %p111
    %p118 = scmp.eq.s32.totalorder %s10, 3
    %p119 = por %p117, %p118
    %p120 = scmp.ne.s32.totalorder %s112, %s115
    %p121 = scmp.eq.s32.totalorder %s10, 0
    %p122 = por %p120, %p121
    %p123 = scmp.ne.s32.totalorder %s112, %s115
    %p124 = scmp.eq.s32.totalorder %s15, 3
    %p125 = por %p123, %p124
    %p126 = scmp.ne.s32.totalorder %s115, %s116
    %p127 = scmp.eq.s32.totalorder %s15, 0
    %p128 = por %p126, %p127
    %p129 = scmp.ne.s32.totalorder %s115, %s116
    %p130 = scmp.eq.s32.totalorder %s16, 3
    %p131 = por %p129, %p130
    %p133 = scmp.ne.s32.totalorder %s116, %s132
    %p134 = scmp.eq.s32.totalorder %s16, 0
    %p135 = por %p133, %p134
    %s136 = ssub.s32 %s17, %s29
    %s137 = ssub.s32 %s18, %s25
    %s138 = sor.u32 %s136, %s137
    %p139 = scmp.eq.s32.totalorder %s138, 0
    %s141 = sadd.s32 %s140, 1
    %s142 = scalar_select %p139, %s140, %s141
    %p145 = pneg %p139
    %p146 = scmp.eq.s32.totalorder %s10, 3
    %p147 = por %p145, %p146
    %p148 = scmp.ne.s32.totalorder %s140, %s143
    %p149 = scmp.eq.s32.totalorder %s10, 0
    %p150 = por %p148, %p149
    %p151 = scmp.ne.s32.totalorder %s140, %s143
    %p152 = scmp.eq.s32.totalorder %s15, 3
    %p153 = por %p151, %p152
    %p154 = scmp.ne.s32.totalorder %s143, %s144
    %p155 = scmp.eq.s32.totalorder %s15, 0
    %p156 = por %p154, %p155
    %p157 = scmp.ne.s32.totalorder %s143, %s144
    %p158 = scmp.eq.s32.totalorder %s16, 3
    %p159 = por %p157, %p158
    %p161 = scmp.ne.s32.totalorder %s144, %s160
    %p162 = scmp.eq.s32.totalorder %s16, 0
    %p163 = por %p161, %p162
    %p164 = scmp.le.s32.totalorder 1, %s10
    %p165 = scmp.lt.s32.totalorder %s10, 5
    %p166 = pnand %p164, %p165
    %p167 = pneg %p166
    // Predicated region
    $region9: #{fwd.10} parent=5 // pred_check
      _
    $region10: #{fwd.10} parent=5 // pred_check_branch
      %169 = sbr.rel (%p166) target = $region12
    $region11: #{fwd.10} parent=5 // pred_region
      %s170 = ssub.s32 %s10, 1
      // Predicated region
      $region13: #{fwd.10} parent=11 // pred_check
        %p171 = pneg %p74
      $region14: #{fwd.10} parent=11 // pred_check_branch
        %173 = sbr.rel (%p171) target = $region16
      $region15: #{fwd.10} parent=11 // pred_region
        %p174 = scmp.lt.s32.totalorder %s20, 0
        %s175 = scalar_select %p174, %s20, 0
        %s176 = smul.addr %s175, 4
        %s177 = scalar_lea.vmem %s1, %s176
      $region16: #{fwd.10} parent=11 // pred_fallthru
        _
      // Predicated region
      $region17: #{fwd.10} parent=11 // pred_check
        %p178 = pneg %p100
      $region18: #{fwd.10} parent=11 // pred_check_branch
        %180 = sbr.rel (%p178) target = $region20
      $region19: #{fwd.10} parent=11 // pred_region
        %p181 = scmp.lt.s32.totalorder %s20, 0
        %s182 = scalar_select %p181, %s20, 0
        %s183 = scalar_lea.vmem %s2, %s182
      $region20: #{fwd.10} parent=11 // pred_fallthru
        _
    $region12: #{fwd.10} parent=5 // pred_fallthru
      _
    %p184 = scmp.lt.s32.totalorder %s10, 4
    // Predicated region
    $region21: #{fwd.10} parent=5 // pred_check
      %p185 = pneg %p184
    $region22: #{fwd.10} parent=5 // pred_check_branch
      %187 = sbr.rel (%p185) target = $region24
    $region23: #{fwd.10} parent=5 // pred_region
      // Predicated region
      $region25: #{fwd.10} parent=23 // pred_check
        %p188 = pneg %p42
      $region26: #{fwd.10} parent=23 // pred_check_branch
        %190 = sbr.rel (%p188) target = $region28
      $region27: #{fwd.10} parent=23 // pred_region
        %s191 = smul.u32 16, %s17
        %p192 = scmp.lt.s32.totalorder %s191, 63
        %s193 = scalar_select %p192, %s191, 63
        %s194 = smul.addr %s193, 4
        %s195 = scalar_lea.vmem %s0, %s194
        %s196 = smul.u32 16, %s17
      $region28: #{fwd.10} parent=23 // pred_fallthru
        _
      // Predicated region
      $region29: #{fwd.10} parent=23 // pred_check
        %p197 = pneg %p122
      $region30: #{fwd.10} parent=23 // pred_check_branch
        %199 = sbr.rel (%p197) target = $region32
      $region31: #{fwd.10} parent=23 // pred_region
        %s200 = smul.u32 16, %s17
        %p201 = scmp.lt.s32.totalorder %s200, 63
        %s202 = scalar_select %p201, %s200, 63
        %p203 = scmp.lt.s32.totalorder %s18, 0
        %s204 = scalar_select %p203, %s18, 0
        %s205 = sadd.s32 %s204, %s202
        %s206 = smul.addr %s205, 8
        %s207 = scalar_lea.vmem %s3, %s206
        %s208 = smul.u32 16, %s17
      $region32: #{fwd.10} parent=23 // pred_fallthru
        _
    $region24: #{fwd.10} parent=5 // pred_fallthru
      _
    %p209 = scmp.le.s32.totalorder 1, %s10
    %p210 = scmp.lt.s32.totalorder %s10, 5
    %p211 = pnand %p209, %p210
    %p212 = pneg %p211
    // Predicated region
    $region33: #{fwd.10} parent=5 // pred_check
      _
    $region34: #{fwd.10} parent=5 // pred_check_branch
      %214 = sbr.rel (%p211) target = $region36
    $region35: #{fwd.10} parent=5 // pred_region
      %s215 = ssub.s32 %s10, 1
      %s216 = smul.u32 16, %s19
      %p217 = scmp.lt.s32.totalorder %s216, 63
      %s218 = scalar_select %p217, %s216, 63
      %s219 = smul.addr %s218, 4
      %s220 = scalar_lea.vmem %s0, %s219
      %p221 = pneg %p48
      %p222 = pneg %p45
      %p223 = scmp.lt.s32.totalorder %s20, 0
      %s224 = scalar_select %p223, %s20, 0
      %s225 = smul.addr %s224, 4
      %s226 = scalar_lea.vmem %s1, %s225
      %p227 = pneg %p74
      %p228 = pneg %p71
      %p229 = scmp.lt.s32.totalorder %s20, 0
      %s230 = scalar_select %p229, %s20, 0
      %s231 = scalar_lea.vmem %s2, %s230
      %p232 = pneg %p100
      %p233 = pneg %p97
      %s234 = smul.u32 16, %s19
      %p235 = scmp.lt.s32.totalorder %s234, 63
      %s236 = scalar_select %p235, %s234, 63
      %p237 = scmp.lt.s32.totalorder %s20, 0
      %s238 = scalar_select %p237, %s20, 0
      %s239 = sadd.s32 %s238, %s236
      %s240 = smul.addr %s239, 8
      %s241 = scalar_lea.vmem %s3, %s240
      %p242 = pneg %p128
      %p243 = pneg %p125
      %p244 = pneg %p156
      %p245 = pneg %p153
      %s246 = smul.u32 16, %s19
      %p247 = scmp.lt.s32.totalorder %s246, 63
      %s248 = scalar_select %p247, %s246, 63
      %p249 = scmp.lt.s32.totalorder %s20, 0
      %s250 = scalar_select %p249, %s20, 0
      %s251 = sadd.s32 %s250, %s248
      %s252 = smul.addr %s251, 8
      %s253 = scalar_lea.vmem %s4, %s252
      %s254 = smul.u32 16, %s19
      %p255 = scmp.lt.s32.totalorder %s254, 63
      %s256 = scalar_select %p255, %s254, 63
      %s257 = smul.addr %s256, 4
      %s258 = scalar_lea.vmem %s0, %s257
      %s259 = smul.u32 16, %s19
      %p260 = scmp.lt.s32.totalorder %s20, 0
      %s261 = scalar_select %p260, %s20, 0
      %s262 = smul.addr %s261, 4
      %s263 = scalar_lea.vmem %s1, %s262
      %p264 = scmp.lt.s32.totalorder %s20, 0
      %s265 = scalar_select %p264, %s20, 0
      %s266 = scalar_lea.vmem %s2, %s265
      %s267 = smul.u32 16, %s19
      %p268 = scmp.lt.s32.totalorder %s267, 63
      %s269 = scalar_select %p268, %s267, 63
      %p270 = scmp.lt.s32.totalorder %s20, 0
      %s271 = scalar_select %p270, %s20, 0
      %s272 = sadd.s32 %s271, %s269
      %s273 = smul.addr %s272, 8
      %s274 = scalar_lea.vmem %s3, %s273
      %s275 = smul.u32 16, %s19
      %s276 = smul.u32 16, %s19
      %p277 = scmp.lt.s32.totalorder %s276, 63
      %s278 = scalar_select %p277, %s276, 63
      %p279 = scmp.lt.s32.totalorder %s20, 0
      %s280 = scalar_select %p279, %s20, 0
      %s281 = sadd.s32 %s280, %s278
      %s282 = smul.addr %s281, 8
      %s283 = scalar_lea.vmem %s4, %s282
      %s284 = smul.u32 16, %s19
      %v286 = vld [vmem:[%s258] sm:$0xf]
      %v287 = vld [vmem:[%s258 + $0x4] sm:$0xf]
      %v288 = vld [vmem:[%s258 + $0x8] sm:$0xf]
      %v289 = vld [vmem:[%s258 + $0xc] sm:$0xf]
      %v290 = vld [vmem:[%s258 + $0x10] sm:$0xf]
      %v291 = vld [vmem:[%s258 + $0x14] sm:$0xf]
      %v292 = vld [vmem:[%s258 + $0x18] sm:$0xf]
      %v293 = vld [vmem:[%s258 + $0x1c] sm:$0xf]
      %v294 = vld [vmem:[%s258 + $0x20] sm:$0xf]
      %v295 = vld [vmem:[%s258 + $0x24] sm:$0xf]
      %v296 = vld [vmem:[%s258 + $0x28] sm:$0xf]
      %v297 = vld [vmem:[%s258 + $0x2c] sm:$0xf]
      %v298 = vld [vmem:[%s258 + $0x30] sm:$0xf]
      %v299 = vld [vmem:[%s258 + $0x34] sm:$0xf]
      %v300 = vld [vmem:[%s258 + $0x38] sm:$0xf]
      %v301 = vld [vmem:[%s258 + $0x3c] sm:$0xf]
      %v302 = vld [vmem:[%s263] sm:$0xf]
      %v303 = vld [vmem:[%s263 + $0x4] sm:$0xf]
      %v304 = vld [vmem:[%s263 + $0x8] sm:$0xf]
      %v305 = vld [vmem:[%s263 + $0xc] sm:$0xf]
      %v306 = vld [vmem:[%s266] sm:$0x1]
      %v308 = vlaneseq
      %v309 = vshrl.u32 %v308, 7
      %v310 = vsub.s32 0, %v309
      %v311 = vrot.slane %v306, %v310
      %v329 = vunpack.c.l.b16 %v286
      %v330 = vunpack.c.l.b16 %v287
      %v331 = vunpack.c.l.b16 %v288
      %v332 = vunpack.c.l.b16 %v289
      %v333 = vunpack.c.l.b16 %v290
      %v334 = vunpack.c.l.b16 %v291
      %v335 = vunpack.c.l.b16 %v292
      %v336 = vunpack.c.l.b16 %v293
      %v337 = vunpack.c.l.b16 %v294
      %v338 = vunpack.c.l.b16 %v295
      %v339 = vunpack.c.l.b16 %v296
      %v340 = vunpack.c.l.b16 %v297
      %v341 = vunpack.c.l.b16 %v298
      %v342 = vunpack.c.l.b16 %v299
      %v343 = vunpack.c.l.b16 %v300
      %v344 = vunpack.c.l.b16 %v301
      %v345 = vpack.c.b16 %v330, %v329
      %v346 = vpack.c.b16 %v332, %v331
      %v347 = vpack.c.b16 %v334, %v333
      %v348 = vpack.c.b16 %v336, %v335
      %v349 = vpack.c.b16 %v338, %v337
      %v350 = vpack.c.b16 %v340, %v339
      %v351 = vpack.c.b16 %v342, %v341
      %v352 = vpack.c.b16 %v344, %v343
      %v357 = vunpack.c.l.b16 %v302
      %v358 = vunpack.c.l.b16 %v303
      %v359 = vunpack.c.l.b16 %v304
      %v360 = vunpack.c.l.b16 %v305
      %v361 = vpack.c.b16 %v358, %v357
      %v362 = vpack.c.b16 %v360, %v359
      %vm365 = vcmask 261120
      %v367 = vsel %vm365, %v345, 0
      %v370 = vsel %vm365, %v346, 0
      %v373 = vsel %vm365, %v347, 0
      %v376 = vsel %vm365, %v348, 0
      %v379 = vsel %vm365, %v349, 0
      %v382 = vsel %vm365, %v350, 0
      %v385 = vsel %vm365, %v351, 0
      %v388 = vsel %vm365, %v352, 0
      %390 = vmatprep.subr.bf16.mxu0 0
      %391 = vmatpush1.bf16.msra.mxu0 0
      %392 = vmatprep.subr.bf16.mxu0 0
      %393 = vmatpush1.bf16.msra.mxu0 0
      %394 = vmatprep.subr.bf16.mxu0 0
      %395 = vmatpush1.bf16.msra.mxu0 0
      %396 = vmatprep.subr.bf16.mxu0 0
      %397 = vmatpush1.bf16.msra.mxu0 0
      %398 = vmatprep.subr.bf16.mxu0 0
      %399 = vmatpush1.bf16.msra.mxu0 0
      %400 = vmatprep.subr.bf16.mxu0 0
      %401 = vmatpush1.bf16.msra.mxu0 0
      %402 = vmatprep.subr.bf16.mxu0 0
      %403 = vmatpush1.bf16.msra.mxu0 %v362
      %404 = vmatprep.subr.bf16.mxu0 0
      %405 = vmatpush1.bf16.msra.mxu0 %v361
      %406 = vmatprep.subr.bf16.mxu0 0
      %407 = vmatpush2.bf16.msra.mxu0 0
      %408 = vmatprep.subr.bf16.mxu0 0
      %409 = vmatpush2.bf16.msra.mxu0 0
      %410 = vmatprep.subr.bf16.mxu0 0
      %411 = vmatpush2.bf16.msra.mxu0 0
      %412 = vmatprep.subr.bf16.mxu0 0
      %413 = vmatpush2.bf16.msra.mxu0 0
      %414 = vmatprep.subr.bf16.mxu0 0
      %415 = vmatpush2.bf16.msra.mxu0 0
      %416 = vmatprep.subr.bf16.mxu0 0
      %417 = vmatpush2.bf16.msra.mxu0 0
      %418 = vmatprep.subr.bf16.mxu0 0
      %419 = vmatpush2.bf16.msra.mxu0 0
      %420 = vmatprep.subr.bf16.mxu0 0
      %421 = vmatpush2.bf16.msra.mxu0 0
      %422 = vmatprep.mubr.bf16.mxu0 0
      %423 = vmatmul.mubr.bf16.gmra.mxu0 %v367
      %v424 = vpop.f32.mrf.mxu0
      %v425 = vadd.f32 %v311, %v424
      %v426 = vpop.f32.mrf.mxu0
      %v427 = vpop.f32.mrf.mxu0
      %v428 = vadd.f32 %v311, %v427
      %v429 = vpop.f32.mrf.mxu0
      %430 = vmatprep.mubr.bf16.mxu0 0
      %431 = vmatmul.mubr.bf16.gmra.mxu0 %v370
      %v432 = vpop.f32.mrf.mxu0
      %v433 = vadd.f32 %v311, %v432
      %v434 = vpop.f32.mrf.mxu0
      %v435 = vpop.f32.mrf.mxu0
      %v436 = vadd.f32 %v311, %v435
      %v437 = vpop.f32.mrf.mxu0
      %438 = vmatprep.mubr.bf16.mxu0 0
      %439 = vmatmul.mubr.bf16.gmra.mxu0 %v373
      %v440 = vpop.f32.mrf.mxu0
      %v441 = vadd.f32 %v311, %v440
      %v442 = vpop.f32.mrf.mxu0
      %v443 = vpop.f32.mrf.mxu0
      %v444 = vadd.f32 %v311, %v443
      %v445 = vpop.f32.mrf.mxu0
      %446 = vmatprep.mubr.bf16.mxu0 0
      %447 = vmatmul.mubr.bf16.gmra.mxu0 %v376
      %v448 = vpop.f32.mrf.mxu0
      %v449 = vadd.f32 %v311, %v448
      %v450 = vpop.f32.mrf.mxu0
      %v451 = vpop.f32.mrf.mxu0
      %v452 = vadd.f32 %v311, %v451
      %v453 = vpop.f32.mrf.mxu0
      %454 = vmatprep.mubr.bf16.mxu0 0
      %455 = vmatmul.mubr.bf16.gmra.mxu0 %v379
      %v456 = vpop.f32.mrf.mxu0
      %v457 = vadd.f32 %v311, %v456
      %v458 = vpop.f32.mrf.mxu0
      %v459 = vpop.f32.mrf.mxu0
      %v460 = vadd.f32 %v311, %v459
      %v461 = vpop.f32.mrf.mxu0
      %462 = vmatprep.mubr.bf16.mxu0 0
      %463 = vmatmul.mubr.bf16.gmra.mxu0 %v382
      %v464 = vpop.f32.mrf.mxu0
      %v465 = vadd.f32 %v311, %v464
      %v466 = vpop.f32.mrf.mxu0
      %v467 = vpop.f32.mrf.mxu0
      %v468 = vadd.f32 %v311, %v467
      %v469 = vpop.f32.mrf.mxu0
      %470 = vmatprep.mubr.bf16.mxu0 0
      %471 = vmatmul.mubr.bf16.gmra.mxu0 %v385
      %v472 = vpop.f32.mrf.mxu0
      %v473 = vadd.f32 %v311, %v472
      %v474 = vpop.f32.mrf.mxu0
      %v475 = vpop.f32.mrf.mxu0
      %v476 = vadd.f32 %v311, %v475
      %v477 = vpop.f32.mrf.mxu0
      %478 = vmatprep.mubr.bf16.mxu0 0
      %479 = vmatmul.mubr.bf16.gmra.mxu0 %v388
      %v480 = vpop.f32.mrf.mxu0
      %v481 = vadd.f32 %v311, %v480
      %v482 = vpop.f32.mrf.mxu0
      %v483 = vpop.f32.mrf.mxu0
      %v484 = vadd.f32 %v311, %v483
      %v485 = vpop.f32.mrf.mxu0
      %486 = vdwg.mxu0
      %v487 = vld [vmem:[%s274] sm:$0xff]
      %v488 = vld [vmem:[%s274 + $0x8] sm:$0xff]
      %v489 = vld [vmem:[%s274 + $0x10] sm:$0xff]
      %v490 = vld [vmem:[%s274 + $0x18] sm:$0xff]
      %v491 = vld [vmem:[%s274 + $0x20] sm:$0xff]
      %v492 = vld [vmem:[%s274 + $0x28] sm:$0xff]
      %v493 = vld [vmem:[%s274 + $0x30] sm:$0xff]
      %v494 = vld [vmem:[%s274 + $0x38] sm:$0xff]
      %v495 = vld [vmem:[%s274 + $0x40] sm:$0xff]
      %v496 = vld [vmem:[%s274 + $0x48] sm:$0xff]
      %v497 = vld [vmem:[%s274 + $0x50] sm:$0xff]
      %v498 = vld [vmem:[%s274 + $0x58] sm:$0xff]
      %v499 = vld [vmem:[%s274 + $0x60] sm:$0xff]
      %v500 = vld [vmem:[%s274 + $0x68] sm:$0xff]
      %v501 = vld [vmem:[%s274 + $0x70] sm:$0xff]
      %v502 = vld [vmem:[%s274 + $0x78] sm:$0xff]
      %v503 = vadd.f32 %v425, %v487
      %v504 = vadd.f32 %v428, %v488
      %v505 = vadd.f32 %v433, %v489
      %v506 = vadd.f32 %v436, %v490
      %v507 = vadd.f32 %v441, %v491
      %v508 = vadd.f32 %v444, %v492
      %v509 = vadd.f32 %v449, %v493
      %v510 = vadd.f32 %v452, %v494
      %v511 = vadd.f32 %v457, %v495
      %v512 = vadd.f32 %v460, %v496
      %v513 = vadd.f32 %v465, %v497
      %v514 = vadd.f32 %v468, %v498
      %v515 = vadd.f32 %v473, %v499
      %v516 = vadd.f32 %v476, %v500
      %v517 = vadd.f32 %v481, %v501
      %v518 = vadd.f32 %v484, %v502
      %v519 = vmax.f32 %v503, 0.0
      %v520 = vmax.f32 %v504, 0.0
      %v521 = vmax.f32 %v505, 0.0
      %v522 = vmax.f32 %v506, 0.0
      %v523 = vmax.f32 %v507, 0.0
      %v524 = vmax.f32 %v508, 0.0
      %v525 = vmax.f32 %v509, 0.0
      %v526 = vmax.f32 %v510, 0.0
      %v527 = vmax.f32 %v511, 0.0
      %v528 = vmax.f32 %v512, 0.0
      %v529 = vmax.f32 %v513, 0.0
      %v530 = vmax.f32 %v514, 0.0
      %v531 = vmax.f32 %v515, 0.0
      %v532 = vmax.f32 %v516, 0.0
      %v533 = vmax.f32 %v517, 0.0
      %v534 = vmax.f32 %v518, 0.0
      %535 = vst [vmem:[%s283] sm:$0xff] %v519
      %536 = vst [vmem:[%s283 + $0x8] sm:$0xff] %v520
      %537 = vst [vmem:[%s283 + $0x10] sm:$0xff] %v521
      %538 = vst [vmem:[%s283 + $0x18] sm:$0xff] %v522
      %539 = vst [vmem:[%s283 + $0x20] sm:$0xff] %v523
      %540 = vst [vmem:[%s283 + $0x28] sm:$0xff] %v524
      %541 = vst [vmem:[%s283 + $0x30] sm:$0xff] %v525
      %542 = vst [vmem:[%s283 + $0x38] sm:$0xff] %v526
      %543 = vst [vmem:[%s283 + $0x40] sm:$0xff] %v527
      %544 = vst [vmem:[%s283 + $0x48] sm:$0xff] %v528
      %545 = vst [vmem:[%s283 + $0x50] sm:$0xff] %v529
      %546 = vst [vmem:[%s283 + $0x58] sm:$0xff] %v530
      %547 = vst [vmem:[%s283 + $0x60] sm:$0xff] %v531
      %548 = vst [vmem:[%s283 + $0x68] sm:$0xff] %v532
      %549 = vst [vmem:[%s283 + $0x70] sm:$0xff] %v533
      %550 = vst [vmem:[%s283 + $0x78] sm:$0xff] %v534
      %s551 = smul.u32 16, %s19
      %p552 = scmp.lt.s32.totalorder %s551, 63
      %s553 = scalar_select %p552, %s551, 63
      %p554 = scmp.lt.s32.totalorder %s20, 0
      %s555 = scalar_select %p554, %s20, 0
      %s556 = sadd.s32 %s555, %s553
      %s557 = smul.addr %s556, 8
      %s558 = scalar_lea.vmem %s4, %s557
      // Predicated region
      $region37: #{fwd.10} parent=35 // pred_check
        %p559 = pneg %p153
      $region38: #{fwd.10} parent=35 // pred_check_branch
        %561 = sbr.rel (%p559) target = $region40
      $region39: #{fwd.10} parent=35 // pred_region
        %s562 = smul.u32 16, %s19
      $region40: #{fwd.10} parent=35 // pred_fallthru
        _
    $region36: #{fwd.10} parent=5 // pred_fallthru
      _
    %p563 = scmp.le.s32.totalorder 2, %s10
    // Predicated region
    $region41: #{fwd.10} parent=5 // pred_check
      %p564 = pneg %p563
    $region42: #{fwd.10} parent=5 // pred_check_branch
      %566 = sbr.rel (%p564) target = $region44
    $region43: #{fwd.10} parent=5 // pred_region
      %s567 = ssub.s32 %s10, 2
      // Predicated region
      $region45: #{fwd.10} parent=43 // pred_check
        %p568 = pneg %p159
      $region46: #{fwd.10} parent=43 // pred_check_branch
        %570 = sbr.rel (%p568) target = $region48
      $region47: #{fwd.10} parent=43 // pred_region
        %s571 = smul.u32 16, %s21
        %p572 = scmp.lt.s32.totalorder %s571, 63
        %s573 = scalar_select %p572, %s571, 63
        %p574 = scmp.lt.s32.totalorder %s22, 0
        %s575 = scalar_select %p574, %s22, 0
        %s576 = sadd.s32 %s575, %s573
        %s577 = smul.addr %s576, 8
        %s578 = scalar_lea.vmem %s4, %s577
      $region48: #{fwd.10} parent=43 // pred_fallthru
        _
    $region44: #{fwd.10} parent=5 // pred_fallthru
      _
  $region6: #{fwd.10} parent=0 // loop_footer
    %s14 = sadd.s32 1, %s10
  $region7: #{fwd.10} parent=0 // loop_footer_branch
    %9 = sbr.rel target = $region3
  $region8: #{fwd.10} parent=0 // loop_exit
    _

// kernel: fwd.13
$region0: #{fwd.13}
  #allocation0 [shape = 'u32[]', space=smem, size = 0x4, offset = 0x4, fixed_abs, tag = 'smem constant byte address 0x4 - core index']
  #allocation1 [shape = 'u32[144,128]{1,0:T(1,128)}', space=vmem, size = 0x12000, scoped, tag = 'internal scratch']
  %s0 = inlined_call_operand.vmem [shape: bf16[512,32], index: 0, kind: input, shape index: {}]
  %s1 = inlined_call_operand.vmem [shape: bf16[32,128], index: 1, kind: input, shape index: {}]
  %s2 = inlined_call_operand.vmem [shape: f32[1,128], index: 2, kind: input, shape index: {}]
  %s3 = inlined_call_operand.vmem [shape: f32[512,128], index: 3, kind: input, shape index: {}]
  %s4 = inlined_call_operand.hbm [shape: f32[512,128], index: 4, kind: output, shape index: {}]
  %s5 = sld [smem:[#allocation0]]
  $region49: #{fwd.13} parent=0
    _
  %s7 = ssub.s32 1, %s5
  %s8 = scalar_select 0, %s7, %s5
  $region1: #{fwd.13} parent=0
    #allocation2 [shape = 'u8[131072]{0}', space=vmem, size = 0x20000, scoped, tag = 'output window, operand 0']
    #allocation3 [shape = 's32[2]{0}', space=sflag, size = 0x8, scoped, tag = 'scoped memory for fwd.13']
    %9 = vsyncpa [#allocation3], 0
    %s10 = scalar_lea.sflag [#allocation3], 1
    %11 = vsyncpa %s10, 0
    loop: start=0, step=1, limit=6
    $region2: #{fwd.13} parent=1 // loop_pre_header
      _
    $region3: #{fwd.13} parent=1 // loop_header
      %s13 = sphi 0, %s17
      %p14 = scmp.ge.s32.totalorder %s13, 6
      %s20 = sphi 0, %s32
      %s21 = sphi 0, %s28
      %s22 = sphi 0, %s20
      %s23 = sphi 0, %s21
      %s24 = sphi 0, %s22
      %s25 = sphi 0, %s23
      %s35 = sphi 0, %s37
      %s38 = sphi 0, %s35
      %s39 = sphi 0, %s38
      %s55 = sphi 0, %s39
      %s61 = sphi 0, %s63
      %s64 = sphi 0, %s61
      %s65 = sphi 0, %s64
      %s81 = sphi 0, %s65
      %s87 = sphi 0, %s89
      %s90 = sphi 0, %s87
      %s91 = sphi 0, %s90
      %s107 = sphi 0, %s91
      %s115 = sphi 0, %s117
      %s118 = sphi 0, %s115
      %s119 = sphi 0, %s118
      %s135 = sphi 0, %s119
      %s143 = sphi 0, %s145
      %s146 = sphi 0, %s143
      %s147 = sphi 0, %s146
      %s163 = sphi 0, %s147
    $region4: #{fwd.13} parent=1 // loop_header_branch
      %16 = sbr.rel (%p14) target = $region8
    $region5: #{fwd.13} parent=1 // loop_body
      %s18 = ssub.s32 %s13, 1
      %s19 = ssub.s32 %s13, 2
      %s26 = sadd.s32 1, %s21
      %p27 = scmp.ge.s32.totalorder %s26, 1
      %s28 = scalar_select %p27, 0, %s26
      %s29 = sadd.s32 1, %s20
      %s30 = scalar_select %p27, %s29, %s20
      %p31 = scmp.ge.s32.totalorder %s30, 4
      %s32 = scalar_select %p31, 0, %s30
      %s33 = ssub.s32 %s20, %s32
      %p34 = scmp.eq.s32.totalorder %s33, 0
      %s36 = sadd.s32 %s35, 1
      %s37 = scalar_select %p34, %s35, %s36
      %p40 = pneg %p34
      %p41 = scmp.eq.s32.totalorder %s13, 3
      %p42 = por %p40, %p41
      %p43 = scmp.ne.s32.totalorder %s35, %s38
      %p44 = scmp.eq.s32.totalorder %s13, 0
      %p45 = por %p43, %p44
      %p46 = scmp.ne.s32.totalorder %s35, %s38
      %p47 = scmp.eq.s32.totalorder %s18, 3
      %p48 = por %p46, %p47
      %p49 = scmp.ne.s32.totalorder %s38, %s39
      %p50 = scmp.eq.s32.totalorder %s18, 0
      %p51 = por %p49, %p50
      %p52 = scmp.ne.s32.totalorder %s38, %s39
      %p53 = scmp.eq.s32.totalorder %s19, 3
      %p54 = por %p52, %p53
      %p56 = scmp.ne.s32.totalorder %s39, %s55
      %p57 = scmp.eq.s32.totalorder %s19, 0
      %p58 = por %p56, %p57
      %s59 = ssub.s32 %s21, %s28
      %p60 = scmp.eq.s32.totalorder %s59, 0
      %s62 = sadd.s32 %s61, 1
      %s63 = scalar_select %p60, %s61, %s62
      %p66 = pneg %p60
      %p67 = scmp.eq.s32.totalorder %s13, 3
      %p68 = por %p66, %p67
      %p69 = scmp.ne.s32.totalorder %s61, %s64
      %p70 = scmp.eq.s32.totalorder %s13, 0
      %p71 = por %p69, %p70
      %p72 = scmp.ne.s32.totalorder %s61, %s64
      %p73 = scmp.eq.s32.totalorder %s18, 3
      %p74 = por %p72, %p73
      %p75 = scmp.ne.s32.totalorder %s64, %s65
      %p76 = scmp.eq.s32.totalorder %s18, 0
      %p77 = por %p75, %p76
      %p78 = scmp.ne.s32.totalorder %s64, %s65
      %p79 = scmp.eq.s32.totalorder %s19, 3
      %p80 = por %p78, %p79
      %p82 = scmp.ne.s32.totalorder %s65, %s81
      %p83 = scmp.eq.s32.totalorder %s19, 0
      %p84 = por %p82, %p83
      %s85 = ssub.s32 %s21, %s28
      %p86 = scmp.eq.s32.totalorder %s85, 0
      %s88 = sadd.s32 %s87, 1
      %s89 = scalar_select %p86, %s87, %s88
      %p92 = pneg %p86
      %p93 = scmp.eq.s32.totalorder %s13, 3
      %p94 = por %p92, %p93
      %p95 = scmp.ne.s32.totalorder %s87, %s90
      %p96 = scmp.eq.s32.totalorder %s13, 0
      %p97 = por %p95, %p96
      %p98 = scmp.ne.s32.totalorder %s87, %s90
      %p99 = scmp.eq.s32.totalorder %s18, 3
      %p100 = por %p98, %p99
      %p101 = scmp.ne.s32.totalorder %s90, %s91
      %p102 = scmp.eq.s32.totalorder %s18, 0
      %p103 = por %p101, %p102
      %p104 = scmp.ne.s32.totalorder %s90, %s91
      %p105 = scmp.eq.s32.totalorder %s19, 3
      %p106 = por %p104, %p105
      %p108 = scmp.ne.s32.totalorder %s91, %s107
      %p109 = scmp.eq.s32.totalorder %s19, 0
      %p110 = por %p108, %p109
      %s111 = ssub.s32 %s20, %s32
      %s112 = ssub.s32 %s21, %s28
      %s113 = sor.u32 %s111, %s112
      %p114 = scmp.eq.s32.totalorder %s113, 0
      %s116 = sadd.s32 %s115, 1
      %s117 = scalar_select %p114, %s115, %s116
      %p120 = pneg %p114
      %p121 = scmp.eq.s32.totalorder %s13, 3
      %p122 = por %p120, %p121
      %p123 = scmp.ne.s32.totalorder %s115, %s118
      %p124 = scmp.eq.s32.totalorder %s13, 0
      %p125 = por %p123, %p124
      %p126 = scmp.ne.s32.totalorder %s115, %s118
      %p127 = scmp.eq.s32.totalorder %s18, 3
      %p128 = por %p126, %p127
      %p129 = scmp.ne.s32.totalorder %s118, %s119
      %p130 = scmp.eq.s32.totalorder %s18, 0
      %p131 = por %p129, %p130
      %p132 = scmp.ne.s32.totalorder %s118, %s119
      %p133 = scmp.eq.s32.totalorder %s19, 3
      %p134 = por %p132, %p133
      %p136 = scmp.ne.s32.totalorder %s119, %s135
      %p137 = scmp.eq.s32.totalorder %s19, 0
      %p138 = por %p136, %p137
      %s139 = ssub.s32 %s20, %s32
      %s140 = ssub.s32 %s21, %s28
      %s141 = sor.u32 %s139, %s140
      %p142 = scmp.eq.s32.totalorder %s141, 0
      %s144 = sadd.s32 %s143, 1
      %s145 = scalar_select %p142, %s143, %s144
      %p148 = pneg %p142
      %p149 = scmp.eq.s32.totalorder %s13, 3
      %p150 = por %p148, %p149
      %p151 = scmp.ne.s32.totalorder %s143, %s146
      %p152 = scmp.eq.s32.totalorder %s13, 0
      %p153 = por %p151, %p152
      %p154 = scmp.ne.s32.totalorder %s143, %s146
      %p155 = scmp.eq.s32.totalorder %s18, 3
      %p156 = por %p154, %p155
      %p157 = scmp.ne.s32.totalorder %s146, %s147
      %p158 = scmp.eq.s32.totalorder %s18, 0
      %p159 = por %p157, %p158
      %p160 = scmp.ne.s32.totalorder %s146, %s147
      %p161 = scmp.eq.s32.totalorder %s19, 3
      %p162 = por %p160, %p161
      %p164 = scmp.ne.s32.totalorder %s147, %s163
      %p165 = scmp.eq.s32.totalorder %s19, 0
      %p166 = por %p164, %p165
      %p167 = scmp.le.s32.totalorder 1, %s13
      %p168 = scmp.lt.s32.totalorder %s13, 5
      %p169 = pnand %p167, %p168
      %p170 = pneg %p169
      // Predicated region
      $region9: #{fwd.13} parent=5 // pred_check
        _
      $region10: #{fwd.13} parent=5 // pred_check_branch
        %172 = sbr.rel (%p169) target = $region12
      $region11: #{fwd.13} parent=5 // pred_region
        %s173 = ssub.s32 %s13, 1
        // Predicated region
        $region13: #{fwd.13} parent=11 // pred_check
          %p174 = pneg %p77
        $region14: #{fwd.13} parent=11 // pred_check_branch
          %176 = sbr.rel (%p174) target = $region16
        $region15: #{fwd.13} parent=11 // pred_region
          %p177 = scmp.lt.s32.totalorder %s23, 0
          %s178 = scalar_select %p177, %s23, 0
          %s179 = smul.addr %s178, 4
          %s180 = scalar_lea.vmem %s1, %s179
        $region16: #{fwd.13} parent=11 // pred_fallthru
          _
        // Predicated region
        $region17: #{fwd.13} parent=11 // pred_check
          %p181 = pneg %p103
        $region18: #{fwd.13} parent=11 // pred_check_branch
          %183 = sbr.rel (%p181) target = $region20
        $region19: #{fwd.13} parent=11 // pred_region
          %p184 = scmp.lt.s32.totalorder %s23, 0
          %s185 = scalar_select %p184, %s23, 0
          %s186 = scalar_lea.vmem %s2, %s185
        $region20: #{fwd.13} parent=11 // pred_fallthru
          _
      $region12: #{fwd.13} parent=5 // pred_fallthru
        _
      %p187 = scmp.lt.s32.totalorder %s13, 4
      // Predicated region
      $region21: #{fwd.13} parent=5 // pred_check
        %p188 = pneg %p187
      $region22: #{fwd.13} parent=5 // pred_check_branch
        %190 = sbr.rel (%p188) target = $region24
      $region23: #{fwd.13} parent=5 // pred_region
        // Predicated region
        $region25: #{fwd.13} parent=23 // pred_check
          %p191 = pneg %p45
        $region26: #{fwd.13} parent=23 // pred_check_branch
          %193 = sbr.rel (%p191) target = $region28
        $region27: #{fwd.13} parent=23 // pred_region
          %s194 = smul.u32 16, %s20
          %p195 = scmp.lt.s32.totalorder %s194, 63
          %s196 = scalar_select %p195, %s194, 63
          %s197 = smul.addr %s196, 4
          %s198 = scalar_lea.vmem %s0, %s197
          %s199 = smul.u32 16, %s20
        $region28: #{fwd.13} parent=23 // pred_fallthru
          _
        // Predicated region
        $region29: #{fwd.13} parent=23 // pred_check
          %p200 = pneg %p125
        $region30: #{fwd.13} parent=23 // pred_check_branch
          %202 = sbr.rel (%p200) target = $region32
        $region31: #{fwd.13} parent=23 // pred_region
          %s203 = smul.u32 16, %s20
          %p204 = scmp.lt.s32.totalorder %s203, 63
          %s205 = scalar_select %p204, %s203, 63
          %p206 = scmp.lt.s32.totalorder %s21, 0
          %s207 = scalar_select %p206, %s21, 0
          %s208 = sadd.s32 %s207, %s205
          %s209 = smul.addr %s208, 8
          %s210 = scalar_lea.vmem %s3, %s209
          %s211 = smul.u32 16, %s20
        $region32: #{fwd.13} parent=23 // pred_fallthru
          _
      $region24: #{fwd.13} parent=5 // pred_fallthru
        _
      %p212 = scmp.le.s32.totalorder 1, %s13
      %p213 = scmp.lt.s32.totalorder %s13, 5
      %p214 = pnand %p212, %p213
      %p215 = pneg %p214
      // Predicated region
      $region33: #{fwd.13} parent=5 // pred_check
        _
      $region34: #{fwd.13} parent=5 // pred_check_branch
        %217 = sbr.rel (%p214) target = $region36
      $region35: #{fwd.13} parent=5 // pred_region
        %s218 = ssub.s32 %s13, 1
        %s219 = smul.u32 16, %s22
        %p220 = scmp.lt.s32.totalorder %s219, 63
        %s221 = scalar_select %p220, %s219, 63
        %s222 = smul.addr %s221, 4
        %s223 = scalar_lea.vmem %s0, %s222
        %p224 = pneg %p51
        %p225 = pneg %p48
        %p226 = scmp.lt.s32.totalorder %s23, 0
        %s227 = scalar_select %p226, %s23, 0
        %s228 = smul.addr %s227, 4
        %s229 = scalar_lea.vmem %s1, %s228
        %p230 = pneg %p77
        %p231 = pneg %p74
        %p232 = scmp.lt.s32.totalorder %s23, 0
        %s233 = scalar_select %p232, %s23, 0
        %s234 = scalar_lea.vmem %s2, %s233
        %p235 = pneg %p103
        %p236 = pneg %p100
        %s237 = smul.u32 16, %s22
        %p238 = scmp.lt.s32.totalorder %s237, 63
        %s239 = scalar_select %p238, %s237, 63
        %p240 = scmp.lt.s32.totalorder %s23, 0
        %s241 = scalar_select %p240, %s23, 0
        %s242 = sadd.s32 %s241, %s239
        %s243 = smul.addr %s242, 8
        %s244 = scalar_lea.vmem %s3, %s243
        %p245 = pneg %p131
        %p246 = pneg %p128
        %p247 = pneg %p159
        %p248 = pneg %p156
        %s249 = sand.u32 %s146, 1
        %s250 = scalar_lea.sflag [#allocation3], %s249
        %s251 = sand.u32 %s146, 1
        %s252 = smul.addr %s251, 128
        %s253 = scalar_lea.vmem [#allocation2], %s252
        %s254 = smul.u32 16, %s22
        %p255 = scmp.lt.s32.totalorder %s254, 63
        %s256 = scalar_select %p255, %s254, 63
        %s257 = smul.addr %s256, 4
        %s258 = scalar_lea.vmem %s0, %s257
        %s259 = smul.u32 16, %s22
        %p260 = scmp.lt.s32.totalorder %s23, 0
        %s261 = scalar_select %p260, %s23, 0
        %s262 = smul.addr %s261, 4
        %s263 = scalar_lea.vmem %s1, %s262
        %p264 = scmp.lt.s32.totalorder %s23, 0
        %s265 = scalar_select %p264, %s23, 0
        %s266 = scalar_lea.vmem %s2, %s265
        %s267 = smul.u32 16, %s22
        %p268 = scmp.lt.s32.totalorder %s267, 63
        %s269 = scalar_select %p268, %s267, 63
        %p270 = scmp.lt.s32.totalorder %s23, 0
        %s271 = scalar_select %p270, %s23, 0
        %s272 = sadd.s32 %s271, %s269
        %s273 = smul.addr %s272, 8
        %s274 = scalar_lea.vmem %s3, %s273
        %s275 = smul.u32 16, %s22
        %s276 = smul.u32 16, %s22
        %v278 = vld [vmem:[%s258] sm:$0xf]
        %v279 = vld [vmem:[%s258 + $0x4] sm:$0xf]
        %v280 = vld [vmem:[%s258 + $0x8] sm:$0xf]
        %v281 = vld [vmem:[%s258 + $0xc] sm:$0xf]
        %v282 = vld [vmem:[%s258 + $0x10] sm:$0xf]
        %v283 = vld [vmem:[%s258 + $0x14] sm:$0xf]
        %v284 = vld [vmem:[%s258 + $0x18] sm:$0xf]
        %v285 = vld [vmem:[%s258 + $0x1c] sm:$0xf]
        %v286 = vld [vmem:[%s258 + $0x20] sm:$0xf]
        %v287 = vld [vmem:[%s258 + $0x24] sm:$0xf]
        %v288 = vld [vmem:[%s258 + $0x28] sm:$0xf]
        %v289 = vld [vmem:[%s258 + $0x2c] sm:$0xf]
        %v290 = vld [vmem:[%s258 + $0x30] sm:$0xf]
        %v291 = vld [vmem:[%s258 + $0x34] sm:$0xf]
        %v292 = vld [vmem:[%s258 + $0x38] sm:$0xf]
        %v293 = vld [vmem:[%s258 + $0x3c] sm:$0xf]
        %v294 = vld [vmem:[%s263] sm:$0xf]
        %v295 = vld [vmem:[%s263 + $0x4] sm:$0xf]
        %v296 = vld [vmem:[%s263 + $0x8] sm:$0xf]
        %v297 = vld [vmem:[%s263 + $0xc] sm:$0xf]
        %v298 = vld [vmem:[%s266] sm:$0x1]
        %v300 = vlaneseq
        %v301 = vshrl.u32 %v300, 7
        %v302 = vsub.s32 0, %v301
        %v303 = vrot.slane %v298, %v302
        %v321 = vunpack.c.l.b16 %v278
        %v322 = vunpack.c.l.b16 %v279
        %v323 = vunpack.c.l.b16 %v280
        %v324 = vunpack.c.l.b16 %v281
        %v325 = vunpack.c.l.b16 %v282
        %v326 = vunpack.c.l.b16 %v283
        %v327 = vunpack.c.l.b16 %v284
        %v328 = vunpack.c.l.b16 %v285
        %v329 = vunpack.c.l.b16 %v286
        %v330 = vunpack.c.l.b16 %v287
        %v331 = vunpack.c.l.b16 %v288
        %v332 = vunpack.c.l.b16 %v289
        %v333 = vunpack.c.l.b16 %v290
        %v334 = vunpack.c.l.b16 %v291
        %v335 = vunpack.c.l.b16 %v292
        %v336 = vunpack.c.l.b16 %v293
        %v337 = vpack.c.b16 %v322, %v321
        %v338 = vpack.c.b16 %v324, %v323
        %v339 = vpack.c.b16 %v326, %v325
        %v340 = vpack.c.b16 %v328, %v327
        %v341 = vpack.c.b16 %v330, %v329
        %v342 = vpack.c.b16 %v332, %v331
        %v343 = vpack.c.b16 %v334, %v333
        %v344 = vpack.c.b16 %v336, %v335
        %v349 = vunpack.c.l.b16 %v294
        %v350 = vunpack.c.l.b16 %v295
        %v351 = vunpack.c.l.b16 %v296
        %v352 = vunpack.c.l.b16 %v297
        %v353 = vpack.c.b16 %v350, %v349
        %v354 = vpack.c.b16 %v352, %v351
        %vm357 = vcmask 261120
        %v359 = vsel %vm357, %v337, 0
        %v362 = vsel %vm357, %v338, 0
        %v365 = vsel %vm357, %v339, 0
        %v368 = vsel %vm357, %v340, 0
        %v371 = vsel %vm357, %v341, 0
        %v374 = vsel %vm357, %v342, 0
        %v377 = vsel %vm357, %v343, 0
        %v380 = vsel %vm357, %v344, 0
        %382 = vmatprep.subr.bf16.mxu0 0
        %383 = vmatpush1.bf16.msra.mxu0 0
        %384 = vmatprep.subr.bf16.mxu0 0
        %385 = vmatpush1.bf16.msra.mxu0 0
        %386 = vmatprep.subr.bf16.mxu0 0
        %387 = vmatpush1.bf16.msra.mxu0 0
        %388 = vmatprep.subr.bf16.mxu0 0
        %389 = vmatpush1.bf16.msra.mxu0 0
        %390 = vmatprep.subr.bf16.mxu0 0
        %391 = vmatpush1.bf16.msra.mxu0 0
        %392 = vmatprep.subr.bf16.mxu0 0
        %393 = vmatpush1.bf16.msra.mxu0 0
        %394 = vmatprep.subr.bf16.mxu0 0
        %395 = vmatpush1.bf16.msra.mxu0 %v354
        %396 = vmatprep.subr.bf16.mxu0 0
        %397 = vmatpush1.bf16.msra.mxu0 %v353
        %398 = vmatprep.subr.bf16.mxu0 0
        %399 = vmatpush2.bf16.msra.mxu0 0
        %400 = vmatprep.subr.bf16.mxu0 0
        %401 = vmatpush2.bf16.msra.mxu0 0
        %402 = vmatprep.subr.bf16.mxu0 0
        %403 = vmatpush2.bf16.msra.mxu0 0
        %404 = vmatprep.subr.bf16.mxu0 0
        %405 = vmatpush2.bf16.msra.mxu0 0
        %406 = vmatprep.subr.bf16.mxu0 0
        %407 = vmatpush2.bf16.msra.mxu0 0
        %408 = vmatprep.subr.bf16.mxu0 0
        %409 = vmatpush2.bf16.msra.mxu0 0
        %410 = vmatprep.subr.bf16.mxu0 0
        %411 = vmatpush2.bf16.msra.mxu0 0
        %412 = vmatprep.subr.bf16.mxu0 0
        %413 = vmatpush2.bf16.msra.mxu0 0
        %414 = vmatprep.mubr.bf16.mxu0 0
        %415 = vmatmul.mubr.bf16.gmra.mxu0 %v359
        %v416 = vpop.f32.mrf.mxu0
        %v417 = vadd.f32 %v303, %v416
        %v418 = vpop.f32.mrf.mxu0
        %v419 = vpop.f32.mrf.mxu0
        %v420 = vadd.f32 %v303, %v419
        %v421 = vpop.f32.mrf.mxu0
        %422 = vmatprep.mubr.bf16.mxu0 0
        %423 = vmatmul.mubr.bf16.gmra.mxu0 %v362
        %v424 = vpop.f32.mrf.mxu0
        %v425 = vadd.f32 %v303, %v424
        %v426 = vpop.f32.mrf.mxu0
        %v427 = vpop.f32.mrf.mxu0
        %v428 = vadd.f32 %v303, %v427
        %v429 = vpop.f32.mrf.mxu0
        %430 = vmatprep.mubr.bf16.mxu0 0
        %431 = vmatmul.mubr.bf16.gmra.mxu0 %v365
        %v432 = vpop.f32.mrf.mxu0
        %v433 = vadd.f32 %v303, %v432
        %v434 = vpop.f32.mrf.mxu0
        %v435 = vpop.f32.mrf.mxu0
        %v436 = vadd.f32 %v303, %v435
        %v437 = vpop.f32.mrf.mxu0
        %438 = vmatprep.mubr.bf16.mxu0 0
        %439 = vmatmul.mubr.bf16.gmra.mxu0 %v368
        %v440 = vpop.f32.mrf.mxu0
        %v441 = vadd.f32 %v303, %v440
        %v442 = vpop.f32.mrf.mxu0
        %v443 = vpop.f32.mrf.mxu0
        %v444 = vadd.f32 %v303, %v443
        %v445 = vpop.f32.mrf.mxu0
        %446 = vmatprep.mubr.bf16.mxu0 0
        %447 = vmatmul.mubr.bf16.gmra.mxu0 %v371
        %v448 = vpop.f32.mrf.mxu0
        %v449 = vadd.f32 %v303, %v448
        %v450 = vpop.f32.mrf.mxu0
        %v451 = vpop.f32.mrf.mxu0
        %v452 = vadd.f32 %v303, %v451
        %v453 = vpop.f32.mrf.mxu0
        %454 = vmatprep.mubr.bf16.mxu0 0
        %455 = vmatmul.mubr.bf16.gmra.mxu0 %v374
        %v456 = vpop.f32.mrf.mxu0
        %v457 = vadd.f32 %v303, %v456
        %v458 = vpop.f32.mrf.mxu0
        %v459 = vpop.f32.mrf.mxu0
        %v460 = vadd.f32 %v303, %v459
        %v461 = vpop.f32.mrf.mxu0
        %462 = vmatprep.mubr.bf16.mxu0 0
        %463 = vmatmul.mubr.bf16.gmra.mxu0 %v377
        %v464 = vpop.f32.mrf.mxu0
        %v465 = vadd.f32 %v303, %v464
        %v466 = vpop.f32.mrf.mxu0
        %v467 = vpop.f32.mrf.mxu0
        %v468 = vadd.f32 %v303, %v467
        %v469 = vpop.f32.mrf.mxu0
        %470 = vmatprep.mubr.bf16.mxu0 0
        %471 = vmatmul.mubr.bf16.gmra.mxu0 %v380
        %v472 = vpop.f32.mrf.mxu0
        %v473 = vadd.f32 %v303, %v472
        %v474 = vpop.f32.mrf.mxu0
        %v475 = vpop.f32.mrf.mxu0
        %v476 = vadd.f32 %v303, %v475
        %v477 = vpop.f32.mrf.mxu0
        %478 = vdwg.mxu0
        %v479 = vld [vmem:[%s274] sm:$0xff]
        %v480 = vld [vmem:[%s274 + $0x8] sm:$0xff]
        %v481 = vld [vmem:[%s274 + $0x10] sm:$0xff]
        %v482 = vld [vmem:[%s274 + $0x18] sm:$0xff]
        %v483 = vld [vmem:[%s274 + $0x20] sm:$0xff]
        %v484 = vld [vmem:[%s274 + $0x28] sm:$0xff]
        %v485 = vld [vmem:[%s274 + $0x30] sm:$0xff]
        %v486 = vld [vmem:[%s274 + $0x38] sm:$0xff]
        %v487 = vld [vmem:[%s274 + $0x40] sm:$0xff]
        %v488 = vld [vmem:[%s274 + $0x48] sm:$0xff]
        %v489 = vld [vmem:[%s274 + $0x50] sm:$0xff]
        %v490 = vld [vmem:[%s274 + $0x58] sm:$0xff]
        %v491 = vld [vmem:[%s274 + $0x60] sm:$0xff]
        %v492 = vld [vmem:[%s274 + $0x68] sm:$0xff]
        %v493 = vld [vmem:[%s274 + $0x70] sm:$0xff]
        %v494 = vld [vmem:[%s274 + $0x78] sm:$0xff]
        %v495 = vadd.f32 %v417, %v479
        %v496 = vadd.f32 %v420, %v480
        %v497 = vadd.f32 %v425, %v481
        %v498 = vadd.f32 %v428, %v482
        %v499 = vadd.f32 %v433, %v483
        %v500 = vadd.f32 %v436, %v484
        %v501 = vadd.f32 %v441, %v485
        %v502 = vadd.f32 %v444, %v486
        %v503 = vadd.f32 %v449, %v487
        %v504 = vadd.f32 %v452, %v488
        %v505 = vadd.f32 %v457, %v489
        %v506 = vadd.f32 %v460, %v490
        %v507 = vadd.f32 %v465, %v491
        %v508 = vadd.f32 %v468, %v492
        %v509 = vadd.f32 %v473, %v493
        %v510 = vadd.f32 %v476, %v494
        %v511 = vmax.f32 %v495, 0.0
        %v512 = vmax.f32 %v496, 0.0
        %v513 = vmax.f32 %v497, 0.0
        %v514 = vmax.f32 %v498, 0.0
        %v515 = vmax.f32 %v499, 0.0
        %v516 = vmax.f32 %v500, 0.0
        %v517 = vmax.f32 %v501, 0.0
        %v518 = vmax.f32 %v502, 0.0
        %v519 = vmax.f32 %v503, 0.0
        %v520 = vmax.f32 %v504, 0.0
        %v521 = vmax.f32 %v505, 0.0
        %v522 = vmax.f32 %v506, 0.0
        %v523 = vmax.f32 %v507, 0.0
        %v524 = vmax.f32 %v508, 0.0
        %v525 = vmax.f32 %v509, 0.0
        %v526 = vmax.f32 %v510, 0.0
        %527 = vst [vmem:[%s253] sm:$0xff] %v511
        %528 = vst [vmem:[%s253 + $0x8] sm:$0xff] %v512
        %529 = vst [vmem:[%s253 + $0x10] sm:$0xff] %v513
        %530 = vst [vmem:[%s253 + $0x18] sm:$0xff] %v514
        %531 = vst [vmem:[%s253 + $0x20] sm:$0xff] %v515
        %532 = vst [vmem:[%s253 + $0x28] sm:$0xff] %v516
        %533 = vst [vmem:[%s253 + $0x30] sm:$0xff] %v517
        %534 = vst [vmem:[%s253 + $0x38] sm:$0xff] %v518
        %535 = vst [vmem:[%s253 + $0x40] sm:$0xff] %v519
        %536 = vst [vmem:[%s253 + $0x48] sm:$0xff] %v520
        %537 = vst [vmem:[%s253 + $0x50] sm:$0xff] %v521
        %538 = vst [vmem:[%s253 + $0x58] sm:$0xff] %v522
        %539 = vst [vmem:[%s253 + $0x60] sm:$0xff] %v523
        %540 = vst [vmem:[%s253 + $0x68] sm:$0xff] %v524
        %541 = vst [vmem:[%s253 + $0x70] sm:$0xff] %v525
        %542 = vst [vmem:[%s253 + $0x78] sm:$0xff] %v526
        %s543 = sand.u32 %s146, 1
        %s544 = scalar_lea.sflag [#allocation3], %s543
        %s545 = sand.u32 %s146, 1
        %s546 = smul.addr %s545, 128
        %s547 = scalar_lea.vmem [#allocation2], %s546
        // Predicated region
        $region37: #{fwd.13} parent=35 // pred_check
          %p548 = pneg %p156
        $region38: #{fwd.13} parent=35 // pred_check_branch
          %550 = sbr.rel (%p548) target = $region40
        $region39: #{fwd.13} parent=35 // pred_region
          %s551 = smul.u32 16, %s22
          %s553 = ssub.s32 2048, 2048
          %554 = vsyncadd %s544, %s553
          %s555 = sadd.s32 %s23, %s551
          %s556 = smul.addr %s555, 128
          %s557 = scalar_lea.hbm %s4, %s556
          %s558 = sshll.u32 %s547, 4
          %s559 = int_to_ptr.vmem [resolvable:$true] %s558
          %564 = dma.vmem_to_hbm [thread:$0]  %s559, 2048, %s557, %s544, 128, 128, 8
        $region40: #{fwd.13} parent=35 // pred_fallthru
          _
      $region36: #{fwd.13} parent=5 // pred_fallthru
        _
      %p565 = scmp.le.s32.totalorder 2, %s13
      // Predicated region
      $region41: #{fwd.13} parent=5 // pred_check
        %p566 = pneg %p565
      $region42: #{fwd.13} parent=5 // pred_check_branch
        %568 = sbr.rel (%p566) target = $region44
      $region43: #{fwd.13} parent=5 // pred_region
        %s569 = ssub.s32 %s13, 2
        // Predicated region
        $region45: #{fwd.13} parent=43 // pred_check
          %p570 = pneg %p162
        $region46: #{fwd.13} parent=43 // pred_check_branch
          %572 = sbr.rel (%p570) target = $region48
        $region47: #{fwd.13} parent=43 // pred_region
          %s573 = sand.u32 %s147, 1
          %s574 = scalar_lea.sflag [#allocation3], %s573
          %s575 = sand.u32 %s147, 1
          %s576 = smul.addr %s575, 128
          %s577 = scalar_lea.vmem [#allocation2], %s576
          %578 = dma.done %s574, 2048
        $region48: #{fwd.13} parent=43 // pred_fallthru
          _
      $region44: #{fwd.13} parent=5 // pred_fallthru
        _
    $region6: #{fwd.13} parent=1 // loop_footer
      %s17 = sadd.s32 1, %s13
    $region7: #{fwd.13} parent=1 // loop_footer_branch
      %12 = sbr.rel target = $region3
    $region8: #{fwd.13} parent=1 // loop_exit
      _
    %579 = vsyncpa [#allocation3], 1
    %s580 = scalar_lea.sflag [#allocation3], 1
    %581 = vsyncpa %s580, 1

// kernel: fwd.11
$region0: #{fwd.11}
  #allocation0 [shape = 'u32[]', space=smem, size = 0x4, offset = 0x4, fixed_abs, tag = 'smem constant byte address 0x4 - core index']
  #allocation1 [shape = 'u32[144,128]{1,0:T(1,128)}', space=vmem, size = 0x12000, scoped, tag = 'internal scratch']
  %s0 = inlined_call_operand.vmem [shape: bf16[512,128], index: 0, kind: input, shape index: {}]
  %s1 = inlined_call_operand.vmem [shape: bf16[128,32], index: 1, kind: input, shape index: {}]
  %s2 = inlined_call_operand.vmem [shape: f32[1,32], index: 2, kind: input, shape index: {}]
  %s3 = inlined_call_operand.vmem [shape: bf16[512,32], index: 3, kind: output, shape index: {}]
  %s4 = sld [smem:[#allocation0]]
  $region45: #{fwd.11} parent=0
    _
  %s6 = ssub.s32 1, %s4
  %s7 = scalar_select 0, %s6, %s4
  loop: start=0, step=1, limit=6
  $region2: #{fwd.11} parent=0 // loop_pre_header
    _
  $region3: #{fwd.11} parent=0 // loop_header
    %s9 = sphi 0, %s13
    %p10 = scmp.ge.s32.totalorder %s9, 6
    %s16 = sphi 0, %s28
    %s17 = sphi 0, %s24
    %s18 = sphi 0, %s16
    %s19 = sphi 0, %s17
    %s20 = sphi 0, %s18
    %s21 = sphi 0, %s19
    %s31 = sphi 0, %s33
    %s34 = sphi 0, %s31
    %s35 = sphi 0, %s34
    %s51 = sphi 0, %s35
    %s57 = sphi 0, %s59
    %s60 = sphi 0, %s57
    %s61 = sphi 0, %s60
    %s77 = sphi 0, %s61
    %s83 = sphi 0, %s85
    %s86 = sphi 0, %s83
    %s87 = sphi 0, %s86
    %s103 = sphi 0, %s87
    %s111 = sphi 0, %s113
    %s114 = sphi 0, %s111
    %s115 = sphi 0, %s114
    %s131 = sphi 0, %s115
  $region4: #{fwd.11} parent=0 // loop_header_branch
    %12 = sbr.rel (%p10) target = $region8
  $region5: #{fwd.11} parent=0 // loop_body
    %s14 = ssub.s32 %s9, 1
    %s15 = ssub.s32 %s9, 2
    %s22 = sadd.s32 1, %s17
    %p23 = scmp.ge.s32.totalorder %s22, 1
    %s24 = scalar_select %p23, 0, %s22
    %s25 = sadd.s32 1, %s16
    %s26 = scalar_select %p23, %s25, %s16
    %p27 = scmp.ge.s32.totalorder %s26, 4
    %s28 = scalar_select %p27, 0, %s26
    %s29 = ssub.s32 %s16, %s28
    %p30 = scmp.eq.s32.totalorder %s29, 0
    %s32 = sadd.s32 %s31, 1
    %s33 = scalar_select %p30, %s31, %s32
    %p36 = pneg %p30
    %p37 = scmp.eq.s32.totalorder %s9, 3
    %p38 = por %p36, %p37
    %p39 = scmp.ne.s32.totalorder %s31, %s34
    %p40 = scmp.eq.s32.totalorder %s9, 0
    %p41 = por %p39, %p40
    %p42 = scmp.ne.s32.totalorder %s31, %s34
    %p43 = scmp.eq.s32.totalorder %s14, 3
    %p44 = por %p42, %p43
    %p45 = scmp.ne.s32.totalorder %s34, %s35
    %p46 = scmp.eq.s32.totalorder %s14, 0
    %p47 = por %p45, %p46
    %p48 = scmp.ne.s32.totalorder %s34, %s35
    %p49 = scmp.eq.s32.totalorder %s15, 3
    %p50 = por %p48, %p49
    %p52 = scmp.ne.s32.totalorder %s35, %s51
    %p53 = scmp.eq.s32.totalorder %s15, 0
    %p54 = por %p52, %p53
    %s55 = ssub.s32 %s17, %s24
    %p56 = scmp.eq.s32.totalorder %s55, 0
    %s58 = sadd.s32 %s57, 1
    %s59 = scalar_select %p56, %s57, %s58
    %p62 = pneg %p56
    %p63 = scmp.eq.s32.totalorder %s9, 3
    %p64 = por %p62, %p63
    %p65 = scmp.ne.s32.totalorder %s57, %s60
    %p66 = scmp.eq.s32.totalorder %s9, 0
    %p67 = por %p65, %p66
    %p68 = scmp.ne.s32.totalorder %s57, %s60
    %p69 = scmp.eq.s32.totalorder %s14, 3
    %p70 = por %p68, %p69
    %p71 = scmp.ne.s32.totalorder %s60, %s61
    %p72 = scmp.eq.s32.totalorder %s14, 0
    %p73 = por %p71, %p72
    %p74 = scmp.ne.s32.totalorder %s60, %s61
    %p75 = scmp.eq.s32.totalorder %s15, 3
    %p76 = por %p74, %p75
    %p78 = scmp.ne.s32.totalorder %s61, %s77
    %p79 = scmp.eq.s32.totalorder %s15, 0
    %p80 = por %p78, %p79
    %s81 = ssub.s32 %s17, %s24
    %p82 = scmp.eq.s32.totalorder %s81, 0
    %s84 = sadd.s32 %s83, 1
    %s85 = scalar_select %p82, %s83, %s84
    %p88 = pneg %p82
    %p89 = scmp.eq.s32.totalorder %s9, 3
    %p90 = por %p88, %p89
    %p91 = scmp.ne.s32.totalorder %s83, %s86
    %p92 = scmp.eq.s32.totalorder %s9, 0
    %p93 = por %p91, %p92
    %p94 = scmp.ne.s32.totalorder %s83, %s86
    %p95 = scmp.eq.s32.totalorder %s14, 3
    %p96 = por %p94, %p95
    %p97 = scmp.ne.s32.totalorder %s86, %s87
    %p98 = scmp.eq.s32.totalorder %s14, 0
    %p99 = por %p97, %p98
    %p100 = scmp.ne.s32.totalorder %s86, %s87
    %p101 = scmp.eq.s32.totalorder %s15, 3
    %p102 = por %p100, %p101
    %p104 = scmp.ne.s32.totalorder %s87, %s103
    %p105 = scmp.eq.s32.totalorder %s15, 0
    %p106 = por %p104, %p105
    %s107 = ssub.s32 %s16, %s28
    %s108 = ssub.s32 %s17, %s24
    %s109 = sor.u32 %s107, %s108
    %p110 = scmp.eq.s32.totalorder %s109, 0
    %s112 = sadd.s32 %s111, 1
    %s113 = scalar_select %p110, %s111, %s112
    %p116 = pneg %p110
    %p117 = scmp.eq.s32.totalorder %s9, 3
    %p118 = por %p116, %p117
    %p119 = scmp.ne.s32.totalorder %s111, %s114
    %p120 = scmp.eq.s32.totalorder %s9, 0
    %p121 = por %p119, %p120
    %p122 = scmp.ne.s32.totalorder %s111, %s114
    %p123 = scmp.eq.s32.totalorder %s14, 3
    %p124 = por %p122, %p123
    %p125 = scmp.ne.s32.totalorder %s114, %s115
    %p126 = scmp.eq.s32.totalorder %s14, 0
    %p127 = por %p125, %p126
    %p128 = scmp.ne.s32.totalorder %s114, %s115
    %p129 = scmp.eq.s32.totalorder %s15, 3
    %p130 = por %p128, %p129
    %p132 = scmp.ne.s32.totalorder %s115, %s131
    %p133 = scmp.eq.s32.totalorder %s15, 0
    %p134 = por %p132, %p133
    %p135 = scmp.le.s32.totalorder 1, %s9
    %p136 = scmp.lt.s32.totalorder %s9, 5
    %p137 = pnand %p135, %p136
    %p138 = pneg %p137
    // Predicated region
    $region9: #{fwd.11} parent=5 // pred_check
      _
    $region10: #{fwd.11} parent=5 // pred_check_branch
      %140 = sbr.rel (%p137) target = $region12
    $region11: #{fwd.11} parent=5 // pred_region
      %s141 = ssub.s32 %s9, 1
      // Predicated region
      $region13: #{fwd.11} parent=11 // pred_check
        %p142 = pneg %p73
      $region14: #{fwd.11} parent=11 // pred_check_branch
        %144 = sbr.rel (%p142) target = $region16
      $region15: #{fwd.11} parent=11 // pred_region
        %p145 = scmp.lt.s32.totalorder %s19, 0
        %s146 = scalar_select %p145, %s19, 0
        %s147 = smul.addr %s146, 4
        %s148 = scalar_lea.vmem %s1, %s147
      $region16: #{fwd.11} parent=11 // pred_fallthru
        _
      // Predicated region
      $region17: #{fwd.11} parent=11 // pred_check
        %p149 = pneg %p99
      $region18: #{fwd.11} parent=11 // pred_check_branch
        %151 = sbr.rel (%p149) target = $region20
      $region19: #{fwd.11} parent=11 // pred_region
        %p152 = scmp.lt.s32.totalorder %s19, 0
        %s153 = scalar_select %p152, %s19, 0
        %s154 = scalar_lea.vmem %s2, %s153
      $region20: #{fwd.11} parent=11 // pred_fallthru
        _
    $region12: #{fwd.11} parent=5 // pred_fallthru
      _
    %p155 = scmp.lt.s32.totalorder %s9, 4
    // Predicated region
    $region21: #{fwd.11} parent=5 // pred_check
      %p156 = pneg %p155
    $region22: #{fwd.11} parent=5 // pred_check_branch
      %158 = sbr.rel (%p156) target = $region24
    $region23: #{fwd.11} parent=5 // pred_region
      // Predicated region
      $region25: #{fwd.11} parent=23 // pred_check
        %p159 = pneg %p41
      $region26: #{fwd.11} parent=23 // pred_check_branch
        %161 = sbr.rel (%p159) target = $region28
      $region27: #{fwd.11} parent=23 // pred_region
        %s162 = smul.u32 16, %s16
        %p163 = scmp.lt.s32.totalorder %s162, 63
        %s164 = scalar_select %p163, %s162, 63
        %s165 = smul.addr %s164, 4
        %s166 = scalar_lea.vmem %s0, %s165
        %s167 = smul.u32 16, %s16
      $region28: #{fwd.11} parent=23 // pred_fallthru
        _
    $region24: #{fwd.11} parent=5 // pred_fallthru
      _
    %p168 = scmp.le.s32.totalorder 1, %s9
    %p169 = scmp.lt.s32.totalorder %s9, 5
    %p170 = pnand %p168, %p169
    %p171 = pneg %p170
    // Predicated region
    $region29: #{fwd.11} parent=5 // pred_check
      _
    $region30: #{fwd.11} parent=5 // pred_check_branch
      %173 = sbr.rel (%p170) target = $region32
    $region31: #{fwd.11} parent=5 // pred_region
      %s174 = ssub.s32 %s9, 1
      %s175 = smul.u32 16, %s18
      %p176 = scmp.lt.s32.totalorder %s175, 63
      %s177 = scalar_select %p176, %s175, 63
      %s178 = smul.addr %s177, 4
      %s179 = scalar_lea.vmem %s0, %s178
      %p180 = pneg %p47
      %p181 = pneg %p44
      %p182 = scmp.lt.s32.totalorder %s19, 0
      %s183 = scalar_select %p182, %s19, 0
      %s184 = smul.addr %s183, 4
      %s185 = scalar_lea.vmem %s1, %s184
      %p186 = pneg %p73
      %p187 = pneg %p70
      %p188 = scmp.lt.s32.totalorder %s19, 0
      %s189 = scalar_select %p188, %s19, 0
      %s190 = scalar_lea.vmem %s2, %s189
      %p191 = pneg %p99
      %p192 = pneg %p96
      %p193 = pneg %p127
      %p194 = pneg %p124
      %s195 = smul.u32 16, %s18
      %p196 = scmp.lt.s32.totalorder %s195, 63
      %s197 = scalar_select %p196, %s195, 63
      %p198 = scmp.lt.s32.totalorder %s19, 0
      %s199 = scalar_select %p198, %s19, 0
      %s200 = sadd.s32 %s199, %s197
      %s201 = smul.addr %s200, 4
      %s202 = scalar_lea.vmem %s3, %s201
      %s203 = smul.u32 16, %s18
      %p204 = scmp.lt.s32.totalorder %s203, 63
      %s205 = scalar_select %p204, %s203, 63
      %s206 = smul.addr %s205, 4
      %s207 = scalar_lea.vmem %s0, %s206
      %s208 = smul.u32 16, %s18
      %p209 = scmp.lt.s32.totalorder %s19, 0
      %s210 = scalar_select %p209, %s19, 0
      %s211 = smul.addr %s210, 4
      %s212 = scalar_lea.vmem %s1, %s211
      %p213 = scmp.lt.s32.totalorder %s19, 0
      %s214 = scalar_select %p213, %s19, 0
      %s215 = scalar_lea.vmem %s2, %s214
      %s216 = smul.u32 16, %s18
      %p217 = scmp.lt.s32.totalorder %s216, 63
      %s218 = scalar_select %p217, %s216, 63
      %p219 = scmp.lt.s32.totalorder %s19, 0
      %s220 = scalar_select %p219, %s19, 0
      %s221 = sadd.s32 %s220, %s218
      %s222 = smul.addr %s221, 4
      %s223 = scalar_lea.vmem %s3, %s222
      %s224 = smul.u32 16, %s18
      %v226 = vld [vmem:[%s207] sm:$0xf]
      %v227 = vld [vmem:[%s207 + $0x4] sm:$0xf]
      %v228 = vld [vmem:[%s207 + $0x8] sm:$0xf]
      %v229 = vld [vmem:[%s207 + $0xc] sm:$0xf]
      %v230 = vld [vmem:[%s207 + $0x10] sm:$0xf]
      %v231 = vld [vmem:[%s207 + $0x14] sm:$0xf]
      %v232 = vld [vmem:[%s207 + $0x18] sm:$0xf]
      %v233 = vld [vmem:[%s207 + $0x1c] sm:$0xf]
      %v234 = vld [vmem:[%s207 + $0x20] sm:$0xf]
      %v235 = vld [vmem:[%s207 + $0x24] sm:$0xf]
      %v236 = vld [vmem:[%s207 + $0x28] sm:$0xf]
      %v237 = vld [vmem:[%s207 + $0x2c] sm:$0xf]
      %v238 = vld [vmem:[%s207 + $0x30] sm:$0xf]
      %v239 = vld [vmem:[%s207 + $0x34] sm:$0xf]
      %v240 = vld [vmem:[%s207 + $0x38] sm:$0xf]
      %v241 = vld [vmem:[%s207 + $0x3c] sm:$0xf]
      %v242 = vld [vmem:[%s212] sm:$0xf]
      %v243 = vld [vmem:[%s212 + $0x4] sm:$0xf]
      %v244 = vld [vmem:[%s212 + $0x8] sm:$0xf]
      %v245 = vld [vmem:[%s212 + $0xc] sm:$0xf]
      %v246 = vld [vmem:[%s212 + $0x10] sm:$0xf]
      %v247 = vld [vmem:[%s212 + $0x14] sm:$0xf]
      %v248 = vld [vmem:[%s212 + $0x18] sm:$0xf]
      %v249 = vld [vmem:[%s212 + $0x1c] sm:$0xf]
      %v250 = vld [vmem:[%s212 + $0x20] sm:$0xf]
      %v251 = vld [vmem:[%s212 + $0x24] sm:$0xf]
      %v252 = vld [vmem:[%s212 + $0x28] sm:$0xf]
      %v253 = vld [vmem:[%s212 + $0x2c] sm:$0xf]
      %v254 = vld [vmem:[%s212 + $0x30] sm:$0xf]
      %v255 = vld [vmem:[%s212 + $0x34] sm:$0xf]
      %v256 = vld [vmem:[%s212 + $0x38] sm:$0xf]
      %v257 = vld [vmem:[%s212 + $0x3c] sm:$0xf]
      %v258 = vld [vmem:[%s215] sm:$0x1]
      %v260 = vlaneseq
      %v261 = vshrl.u32 %v260, 7
      %v262 = vsub.s32 0, %v261
      %v263 = vrot.slane %v258, %v262
      %v281 = vunpack.c.l.b16 %v226
      %v282 = vunpack.c.l.b16 %v227
      %v283 = vunpack.c.l.b16 %v228
      %v284 = vunpack.c.l.b16 %v229
      %v285 = vunpack.c.l.b16 %v230
      %v286 = vunpack.c.l.b16 %v231
      %v287 = vunpack.c.l.b16 %v232
      %v288 = vunpack.c.l.b16 %v233
      %v289 = vunpack.c.l.b16 %v234
      %v290 = vunpack.c.l.b16 %v235
      %v291 = vunpack.c.l.b16 %v236
      %v292 = vunpack.c.l.b16 %v237
      %v293 = vunpack.c.l.b16 %v238
      %v294 = vunpack.c.l.b16 %v239
      %v295 = vunpack.c.l.b16 %v240
      %v296 = vunpack.c.l.b16 %v241
      %v297 = vpack.c.b16 %v282, %v281
      %v298 = vpack.c.b16 %v284, %v283
      %v299 = vpack.c.b16 %v286, %v285
      %v300 = vpack.c.b16 %v288, %v287
      %v301 = vpack.c.b16 %v290, %v289
      %v302 = vpack.c.b16 %v292, %v291
      %v303 = vpack.c.b16 %v294, %v293
      %v304 = vpack.c.b16 %v296, %v295
      %v329 = vunpack.c.l.b16 %v242
      %v330 = vunpack.c.l.b16 %v243
      %v331 = vunpack.c.l.b16 %v244
      %v332 = vunpack.c.l.b16 %v245
      %v333 = vunpack.c.l.b16 %v246
      %v334 = vunpack.c.l.b16 %v247
      %v335 = vunpack.c.l.b16 %v248
      %v336 = vunpack.c.l.b16 %v249
      %v337 = vunpack.c.l.b16 %v250
      %v338 = vunpack.c.l.b16 %v251
      %v339 = vunpack.c.l.b16 %v252
      %v340 = vunpack.c.l.b16 %v253
      %v341 = vunpack.c.l.b16 %v254
      %v342 = vunpack.c.l.b16 %v255
      %v343 = vunpack.c.l.b16 %v256
      %v344 = vunpack.c.l.b16 %v257
      %v345 = vpack.c.b16 %v330, %v329
      %v346 = vpack.c.b16 %v332, %v331
      %v347 = vpack.c.b16 %v334, %v333
      %v348 = vpack.c.b16 %v336, %v335
      %v349 = vpack.c.b16 %v338, %v337
      %v350 = vpack.c.b16 %v340, %v339
      %v351 = vpack.c.b16 %v342, %v341
      %v352 = vpack.c.b16 %v344, %v343
      %361 = vmatprep.subr.bf16.mxu0 0
      %362 = vmatpush1.bf16.msra.mxu0 %v352
      %363 = vmatprep.subr.bf16.mxu0 0
      %364 = vmatpush1.bf16.msra.mxu0 %v351
      %365 = vmatprep.subr.bf16.mxu0 0
      %366 = vmatpush1.bf16.msra.mxu0 %v350
      %367 = vmatprep.subr.bf16.mxu0 0
      %368 = vmatpush1.bf16.msra.mxu0 %v349
      %369 = vmatprep.subr.bf16.mxu0 0
      %370 = vmatpush1.bf16.msra.mxu0 %v348
      %371 = vmatprep.subr.bf16.mxu0 0
      %372 = vmatpush1.bf16.msra.mxu0 %v347
      %373 = vmatprep.subr.bf16.mxu0 0
      %374 = vmatpush1.bf16.msra.mxu0 %v346
      %375 = vmatprep.subr.bf16.mxu0 0
      %376 = vmatpush1.bf16.msra.mxu0 %v345
      %377 = vmatprep.subr.bf16.mxu0 0
      %378 = vmatpush2.bf16.msra.mxu0 0
      %379 = vmatprep.subr.bf16.mxu0 0
      %380 = vmatpush2.bf16.msra.mxu0 0
      %381 = vmatprep.subr.bf16.mxu0 0
      %382 = vmatpush2.bf16.msra.mxu0 0
      %383 = vmatprep.subr.bf16.mxu0 0
      %384 = vmatpush2.bf16.msra.mxu0 0
      %385 = vmatprep.subr.bf16.mxu0 0
      %386 = vmatpush2.bf16.msra.mxu0 0
      %387 = vmatprep.subr.bf16.mxu0 0
      %388 = vmatpush2.bf16.msra.mxu0 0
      %389 = vmatprep.subr.bf16.mxu0 0
      %390 = vmatpush2.bf16.msra.mxu0 0
      %391 = vmatprep.subr.bf16.mxu0 0
      %392 = vmatpush2.bf16.msra.mxu0 0
      %393 = vmatprep.mubr.bf16.mxu0 0
      %394 = vmatmul.mubr.bf16.gmra.mxu0 %v297
      %v395 = vpop.f32.mrf.mxu0
      %v396 = vadd.f32 %v263, %v395
      %v397 = vpop.f32.mrf.mxu0
      %v398 = vpop.f32.mrf.mxu0
      %v399 = vadd.f32 %v263, %v398
      %v400 = vpop.f32.mrf.mxu0
      %401 = vmatprep.mubr.bf16.mxu0 0
      %402 = vmatmul.mubr.bf16.gmra.mxu0 %v298
      %v403 = vpop.f32.mrf.mxu0
      %v404 = vadd.f32 %v263, %v403
      %v405 = vpop.f32.mrf.mxu0
      %v406 = vpop.f32.mrf.mxu0
      %v407 = vadd.f32 %v263, %v406
      %v408 = vpop.f32.mrf.mxu0
      %409 = vmatprep.mubr.bf16.mxu0 0
      %410 = vmatmul.mubr.bf16.gmra.mxu0 %v299
      %v411 = vpop.f32.mrf.mxu0
      %v412 = vadd.f32 %v263, %v411
      %v413 = vpop.f32.mrf.mxu0
      %v414 = vpop.f32.mrf.mxu0
      %v415 = vadd.f32 %v263, %v414
      %v416 = vpop.f32.mrf.mxu0
      %417 = vmatprep.mubr.bf16.mxu0 0
      %418 = vmatmul.mubr.bf16.gmra.mxu0 %v300
      %v419 = vpop.f32.mrf.mxu0
      %v420 = vadd.f32 %v263, %v419
      %v421 = vpop.f32.mrf.mxu0
      %v422 = vpop.f32.mrf.mxu0
      %v423 = vadd.f32 %v263, %v422
      %v424 = vpop.f32.mrf.mxu0
      %425 = vmatprep.mubr.bf16.mxu0 0
      %426 = vmatmul.mubr.bf16.gmra.mxu0 %v301
      %v427 = vpop.f32.mrf.mxu0
      %v428 = vadd.f32 %v263, %v427
      %v429 = vpop.f32.mrf.mxu0
      %v430 = vpop.f32.mrf.mxu0
      %v431 = vadd.f32 %v263, %v430
      %v432 = vpop.f32.mrf.mxu0
      %433 = vmatprep.mubr.bf16.mxu0 0
      %434 = vmatmul.mubr.bf16.gmra.mxu0 %v302
      %v435 = vpop.f32.mrf.mxu0
      %v436 = vadd.f32 %v263, %v435
      %v437 = vpop.f32.mrf.mxu0
      %v438 = vpop.f32.mrf.mxu0
      %v439 = vadd.f32 %v263, %v438
      %v440 = vpop.f32.mrf.mxu0
      %441 = vmatprep.mubr.bf16.mxu0 0
      %442 = vmatmul.mubr.bf16.gmra.mxu0 %v303
      %v443 = vpop.f32.mrf.mxu0
      %v444 = vadd.f32 %v263, %v443
      %v445 = vpop.f32.mrf.mxu0
      %v446 = vpop.f32.mrf.mxu0
      %v447 = vadd.f32 %v263, %v446
      %v448 = vpop.f32.mrf.mxu0
      %449 = vmatprep.mubr.bf16.mxu0 0
      %450 = vmatmul.mubr.bf16.gmra.mxu0 %v304
      %v451 = vpop.f32.mrf.mxu0
      %v452 = vadd.f32 %v263, %v451
      %v453 = vpop.f32.mrf.mxu0
      %v454 = vpop.f32.mrf.mxu0
      %v455 = vadd.f32 %v263, %v454
      %v456 = vpop.f32.mrf.mxu0
      %457 = vdwg.mxu0
      %v458 = vmax.f32 %v396, 0.0
      %v459 = vmax.f32 %v399, 0.0
      %v460 = vmax.f32 %v404, 0.0
      %v461 = vmax.f32 %v407, 0.0
      %v462 = vmax.f32 %v412, 0.0
      %v463 = vmax.f32 %v415, 0.0
      %v464 = vmax.f32 %v420, 0.0
      %v465 = vmax.f32 %v423, 0.0
      %v466 = vmax.f32 %v428, 0.0
      %v467 = vmax.f32 %v431, 0.0
      %v468 = vmax.f32 %v436, 0.0
      %v469 = vmax.f32 %v439, 0.0
      %v470 = vmax.f32 %v444, 0.0
      %v471 = vmax.f32 %v447, 0.0
      %v472 = vmax.f32 %v452, 0.0
      %v473 = vmax.f32 %v455, 0.0
      %v474 = vpack.c.bf16 %v459, %v458
      %v475 = vpack.c.bf16 %v461, %v460
      %v476 = vpack.c.bf16 %v463, %v462
      %v477 = vpack.c.bf16 %v465, %v464
      %v478 = vpack.c.bf16 %v467, %v466
      %v479 = vpack.c.bf16 %v469, %v468
      %v480 = vpack.c.bf16 %v471, %v470
      %v481 = vpack.c.bf16 %v473, %v472
      %v490 = vunpack.c.l.b16 %v474
      %v491 = vunpack.c.h.b16 %v474
      %v492 = vunpack.c.l.b16 %v475
      %v493 = vunpack.c.h.b16 %v475
      %v494 = vunpack.c.l.b16 %v476
      %v495 = vunpack.c.h.b16 %v476
      %v496 = vunpack.c.l.b16 %v477
      %v497 = vunpack.c.h.b16 %v477
      %v498 = vunpack.c.l.b16 %v478
      %v499 = vunpack.c.h.b16 %v478
      %v500 = vunpack.c.l.b16 %v479
      %v501 = vunpack.c.h.b16 %v479
      %v502 = vunpack.c.l.b16 %v480
      %v503 = vunpack.c.h.b16 %v480
      %v504 = vunpack.c.l.b16 %v481
      %v505 = vunpack.c.h.b16 %v481
      %v506 = vpack.c.b16 %v490, %v490
      %v507 = vpack.c.b16 %v491, %v491
      %v508 = vpack.c.b16 %v492, %v492
      %v509 = vpack.c.b16 %v493, %v493
      %v510 = vpack.c.b16 %v494, %v494
      %v511 = vpack.c.b16 %v495, %v495
      %v512 = vpack.c.b16 %v496, %v496
      %v513 = vpack.c.b16 %v497, %v497
      %v514 = vpack.c.b16 %v498, %v498
      %v515 = vpack.c.b16 %v499, %v499
      %v516 = vpack.c.b16 %v500, %v500
      %v517 = vpack.c.b16 %v501, %v501
      %v518 = vpack.c.b16 %v502, %v502
      %v519 = vpack.c.b16 %v503, %v503
      %v520 = vpack.c.b16 %v504, %v504
      %v521 = vpack.c.b16 %v505, %v505
      %vm538 = vcmask 257024
      %539 = vst.msk [vmem:[%s223] sm:$0xf] %vm538, %v506
      %540 = vst.msk [vmem:[%s223 + $0x4] sm:$0xf] %vm538, %v507
      %541 = vst.msk [vmem:[%s223 + $0x8] sm:$0xf] %vm538, %v508
      %542 = vst.msk [vmem:[%s223 + $0xc] sm:$0xf] %vm538, %v509
      %543 = vst.msk [vmem:[%s223 + $0x10] sm:$0xf] %vm538, %v510
      %544 = vst.msk [vmem:[%s223 + $0x14] sm:$0xf] %vm538, %v511
      %545 = vst.msk [vmem:[%s223 + $0x18] sm:$0xf] %vm538, %v512
      %546 = vst.msk [vmem:[%s223 + $0x1c] sm:$0xf] %vm538, %v513
      %547 = vst.msk [vmem:[%s223 + $0x20] sm:$0xf] %vm538, %v514
      %548 = vst.msk [vmem:[%s223 + $0x24] sm:$0xf] %vm538, %v515
      %549 = vst.msk [vmem:[%s223 + $0x28] sm:$0xf] %vm538, %v516
      %550 = vst.msk [vmem:[%s223 + $0x2c] sm:$0xf] %vm538, %v517
      %551 = vst.msk [vmem:[%s223 + $0x30] sm:$0xf] %vm538, %v518
      %552 = vst.msk [vmem:[%s223 + $0x34] sm:$0xf] %vm538, %v519
      %553 = vst.msk [vmem:[%s223 + $0x38] sm:$0xf] %vm538, %v520
      %554 = vst.msk [vmem:[%s223 + $0x3c] sm:$0xf] %vm538, %v521
      %s555 = smul.u32 16, %s18
      %p556 = scmp.lt.s32.totalorder %s555, 63
      %s557 = scalar_select %p556, %s555, 63
      %p558 = scmp.lt.s32.totalorder %s19, 0
      %s559 = scalar_select %p558, %s19, 0
      %s560 = sadd.s32 %s559, %s557
      %s561 = smul.addr %s560, 4
      %s562 = scalar_lea.vmem %s3, %s561
      // Predicated region
      $region33: #{fwd.11} parent=31 // pred_check
        %p563 = pneg %p124
      $region34: #{fwd.11} parent=31 // pred_check_branch
        %565 = sbr.rel (%p563) target = $region36
      $region35: #{fwd.11} parent=31 // pred_region
        %s566 = smul.u32 16, %s18
      $region36: #{fwd.11} parent=31 // pred_fallthru
        _
    $region32: #{fwd.11} parent=5 // pred_fallthru
      _
    %p567 = scmp.le.s32.totalorder 2, %s9
    // Predicated region
    $region37: #{fwd.11} parent=5 // pred_check
      %p568 = pneg %p567
    $region38: #{fwd.11} parent=5 // pred_check_branch
      %570 = sbr.rel (%p568) target = $region40
    $region39: #{fwd.11} parent=5 // pred_region
      %s571 = ssub.s32 %s9, 2
      // Predicated region
      $region41: #{fwd.11} parent=39 // pred_check
        %p572 = pneg %p130
      $region42: #{fwd.11} parent=39 // pred_check_branch
        %574 = sbr.rel (%p572) target = $region44
      $region43: #{fwd.11} parent=39 // pred_region
        %s575 = smul.u32 16, %s20
        %p576 = scmp.lt.s32.totalorder %s575, 63
        %s577 = scalar_select %p576, %s575, 63
        %p578 = scmp.lt.s32.totalorder %s21, 0
        %s579 = scalar_select %p578, %s21, 0
        %s580 = sadd.s32 %s579, %s577
        %s581 = smul.addr %s580, 4
        %s582 = scalar_lea.vmem %s3, %s581
      $region44: #{fwd.11} parent=39 // pred_fallthru
        _
    $region40: #{fwd.11} parent=5 // pred_fallthru
      _
  $region6: #{fwd.11} parent=0 // loop_footer
    %s13 = sadd.s32 1, %s9
  $region7: #{fwd.11} parent=0 // loop_footer_branch
    %8 = sbr.rel target = $region3
  $region8: #{fwd.11} parent=0 // loop_exit
    _

// kernel: fwd.8
$region0: #{fwd.8}
  #allocation0 [shape = 'u32[]', space=smem, size = 0x4, offset = 0x4, fixed_abs, tag = 'smem constant byte address 0x4 - core index']
  #allocation1 [shape = 'u32[144,128]{1,0:T(1,128)}', space=vmem, size = 0x12000, scoped, tag = 'internal scratch']
  %s0 = inlined_call_operand.vmem [shape: bf16[2,18,18,32], index: 0, kind: input, shape index: {}]
  %s1 = inlined_call_operand.vmem [shape: bf16[9,32,32], index: 1, kind: input, shape index: {}]
  %s2 = inlined_call_operand.vmem [shape: f32[1,32], index: 2, kind: input, shape index: {}]
  %s3 = inlined_call_operand.vmem [shape: bf16[512,32], index: 3, kind: output, shape index: {}]
  %s4 = sld [smem:[#allocation0]]
  $region22: #{fwd.8} parent=0
    _
  %s6 = ssub.s32 1, %s4
  %s7 = scalar_select 0, %s6, %s4
  // Predicated region
  $region2: #{fwd.8} parent=0 // pred_check
    _
  $region3: #{fwd.8} parent=0 // pred_check_branch
    %9 = sbr.rel (0) target = $region5
  $region4: #{fwd.8} parent=0 // pred_region
    _
  $region5: #{fwd.8} parent=0 // pred_fallthru
    _
  // Predicated region
  $region6: #{fwd.8} parent=0 // pred_check
    _
  $region7: #{fwd.8} parent=0 // pred_check_branch
    %11 = sbr.rel (0) target = $region9
  $region8: #{fwd.8} parent=0 // pred_region
    _
  $region9: #{fwd.8} parent=0 // pred_fallthru
    _
  // Predicated region
  $region10: #{fwd.8} parent=0 // pred_check
    _
  $region11: #{fwd.8} parent=0 // pred_check_branch
    %13 = sbr.rel (0) target = $region13
  $region12: #{fwd.8} parent=0 // pred_region
    _
  $region13: #{fwd.8} parent=0 // pred_fallthru
    _
  %v15 = vld [vmem:[%s0] sm:$0xf]
  %v16 = vld [vmem:[%s0 + $0x4] sm:$0xf]
  %v17 = vld [vmem:[%s0 + $0xc] sm:$0xf]
  %v18 = vld [vmem:[%s0 + $0x10] sm:$0xf]
  %v19 = vld [vmem:[%s0 + $0x18] sm:$0xf]
  %v20 = vld [vmem:[%s0 + $0x1c] sm:$0xf]
  %v21 = vld [vmem:[%s0 + $0x24] sm:$0xf]
  %v22 = vld [vmem:[%s0 + $0x28] sm:$0xf]
  %v23 = vld [vmem:[%s0 + $0x30] sm:$0xf]
  %v24 = vld [vmem:[%s0 + $0x34] sm:$0xf]
  %v25 = vld [vmem:[%s0 + $0x3c] sm:$0xf]
  %v26 = vld [vmem:[%s0 + $0x40] sm:$0xf]
  %v27 = vld [vmem:[%s0 + $0x48] sm:$0xf]
  %v28 = vld [vmem:[%s0 + $0x4c] sm:$0xf]
  %v29 = vld [vmem:[%s0 + $0x54] sm:$0xf]
  %v30 = vld [vmem:[%s0 + $0x58] sm:$0xf]
  %v31 = vld [vmem:[%s0 + $0x60] sm:$0xf]
  %v32 = vld [vmem:[%s0 + $0x64] sm:$0xf]
  %v33 = vld [vmem:[%s0 + $0x6c] sm:$0xf]
  %v34 = vld [vmem:[%s0 + $0x70] sm:$0xf]
  %v35 = vld [vmem:[%s0 + $0x78] sm:$0xf]
  %v36 = vld [vmem:[%s0 + $0x7c] sm:$0xf]
  %v37 = vld [vmem:[%s0 + $0x84] sm:$0xf]
  %v38 = vld [vmem:[%s0 + $0x88] sm:$0xf]
  %v39 = vld [vmem:[%s0 + $0x90] sm:$0xf]
  %v40 = vld [vmem:[%s0 + $0x94] sm:$0xf]
  %v41 = vld [vmem:[%s0 + $0x9c] sm:$0xf]
  %v42 = vld [vmem:[%s0 + $0xa0] sm:$0xf]
  %v43 = vld [vmem:[%s0 + $0xa8] sm:$0xf]
  %v44 = vld [vmem:[%s0 + $0xac] sm:$0xf]
  %v45 = vld [vmem:[%s0 + $0xb4] sm:$0xf]
  %v46 = vld [vmem:[%s0 + $0xb8] sm:$0xf]
  %v47 = vld [vmem:[%s0 + $0xd8] sm:$0xf]
  %v48 = vld [vmem:[%s0 + $0xdc] sm:$0xf]
  %v49 = vld [vmem:[%s0 + $0xe4] sm:$0xf]
  %v50 = vld [vmem:[%s0 + $0xe8] sm:$0xf]
  %v51 = vld [vmem:[%s0 + $0xf0] sm:$0xf]
  %v52 = vld [vmem:[%s0 + $0xf4] sm:$0xf]
  %v53 = vld [vmem:[%s0 + $0xfc] sm:$0xf]
  %v54 = vld [vmem:[%s0 + $0x100] sm:$0xf]
  %v55 = vld [vmem:[%s0 + $0x108] sm:$0xf]
  %v56 = vld [vmem:[%s0 + $0x10c] sm:$0xf]
  %v57 = vld [vmem:[%s0 + $0x114] sm:$0xf]
  %v58 = vld [vmem:[%s0 + $0x118] sm:$0xf]
  %v59 = vld [vmem:[%s0 + $0x120] sm:$0xf]
  %v60 = vld [vmem:[%s0 + $0x124] sm:$0xf]
  %v61 = vld [vmem:[%s0 + $0x12c] sm:$0xf]
  %v62 = vld [vmem:[%s0 + $0x130] sm:$0xf]
  %v63 = vld [vmem:[%s0 + $0x138] sm:$0xf]
  %v64 = vld [vmem:[%s0 + $0x13c] sm:$0xf]
  %v65 = vld [vmem:[%s0 + $0x144] sm:$0xf]
  %v66 = vld [vmem:[%s0 + $0x148] sm:$0xf]
  %v67 = vld [vmem:[%s0 + $0x150] sm:$0xf]
  %v68 = vld [vmem:[%s0 + $0x154] sm:$0xf]
  %v69 = vld [vmem:[%s0 + $0x15c] sm:$0xf]
  %v70 = vld [vmem:[%s0 + $0x160] sm:$0xf]
  %v71 = vld [vmem:[%s0 + $0x168] sm:$0xf]
  %v72 = vld [vmem:[%s0 + $0x16c] sm:$0xf]
  %v73 = vld [vmem:[%s0 + $0x174] sm:$0xf]
  %v74 = vld [vmem:[%s0 + $0x178] sm:$0xf]
  %v75 = vld [vmem:[%s0 + $0x180] sm:$0xf]
  %v76 = vld [vmem:[%s0 + $0x184] sm:$0xf]
  %v77 = vld [vmem:[%s0 + $0x18c] sm:$0xf]
  %v78 = vld [vmem:[%s0 + $0x190] sm:$0xf]
  %v79 = vld [vmem:[%s1] sm:$0xf]
  %v80 = vld [vmem:[%s1 + $0x4] sm:$0xf]
  %v81 = vld [vmem:[%s1 + $0x8] sm:$0xf]
  %v82 = vld [vmem:[%s1 + $0xc] sm:$0xf]
  %v83 = vld [vmem:[%s0 + $0x8] sm:$0x1]
  %v84 = vld [vmem:[%s0 + $0x14] sm:$0x1]
  %v85 = vld [vmem:[%s0 + $0x20] sm:$0x1]
  %v86 = vld [vmem:[%s0 + $0x2c] sm:$0x1]
  %v87 = vld [vmem:[%s0 + $0x38] sm:$0x1]
  %v88 = vld [vmem:[%s0 + $0x44] sm:$0x1]
  %v89 = vld [vmem:[%s0 + $0x50] sm:$0x1]
  %v90 = vld [vmem:[%s0 + $0x5c] sm:$0x1]
  %v91 = vld [vmem:[%s0 + $0x68] sm:$0x1]
  %v92 = vld [vmem:[%s0 + $0x74] sm:$0x1]
  %v93 = vld [vmem:[%s0 + $0x80] sm:$0x1]
  %v94 = vld [vmem:[%s0 + $0x8c] sm:$0x1]
  %v95 = vld [vmem:[%s0 + $0x98] sm:$0x1]
  %v96 = vld [vmem:[%s0 + $0xa4] sm:$0x1]
  %v97 = vld [vmem:[%s0 + $0xb0] sm:$0x1]
  %v98 = vld [vmem:[%s0 + $0xbc] sm:$0x1]
  %v99 = vld [vmem:[%s0 + $0xe0] sm:$0x1]
  %v100 = vld [vmem:[%s0 + $0xec] sm:$0x1]
  %v101 = vld [vmem:[%s0 + $0xf8] sm:$0x1]
  %v102 = vld [vmem:[%s0 + $0x104] sm:$0x1]
  %v103 = vld [vmem:[%s0 + $0x110] sm:$0x1]
  %v104 = vld [vmem:[%s0 + $0x11c] sm:$0x1]
  %v105 = vld [vmem:[%s0 + $0x128] sm:$0x1]
  %v106 = vld [vmem:[%s0 + $0x134] sm:$0x1]
  %v107 = vld [vmem:[%s0 + $0x140] sm:$0x1]
  %v108 = vld [vmem:[%s0 + $0x14c] sm:$0x1]
  %v109 = vld [vmem:[%s0 + $0x158] sm:$0x1]
  %v110 = vld [vmem:[%s0 + $0x164] sm:$0x1]
  %v111 = vld [vmem:[%s0 + $0x170] sm:$0x1]
  %v112 = vld [vmem:[%s0 + $0x17c] sm:$0x1]
  %v113 = vld [vmem:[%s0 + $0x188] sm:$0x1]
  %v114 = vld [vmem:[%s0 + $0x194] sm:$0x1]
  %vm115 = vsmask.f32 3328
  %vm116 = vsmask.f32 7440
  %vm117 = vmor %vm115, %vm116
  %v119 = vshrl.u32 %v15, 16
  %v121 = vrot.slane %v119, 4
  %v122 = vshll.u32 %v15, 16
  %v124 = vrot.slane %v122, 5
  %v125 = vor.u32 %v121, %v124
  %v126 = vrot.slane %v125, 4
  %v128 = vshll.u32 %v16, 16
  %v130 = vrot.slane %v128, 5
  %v131 = vsel %vm117, %v126, %v130
  %v132 = vshrl.u32 %v16, 16
  %v134 = vrot.slane %v132, 4
  %v135 = vor.u32 %v134, %v130
  %v136 = vrot.slane %v135, 4
  %v138 = vshll.u32 %v83, 16
  %v140 = vrot.slane %v138, 5
  %v141 = vsel %vm117, %v136, %v140
  %v143 = vshrl.u32 %v17, 16
  %v145 = vrot.slane %v143, 4
  %v146 = vshll.u32 %v17, 16
  %v148 = vrot.slane %v146, 5
  %v149 = vor.u32 %v145, %v148
  %v150 = vrot.slane %v149, 4
  %v152 = vshll.u32 %v18, 16
  %v154 = vrot.slane %v152, 5
  %v155 = vsel %vm117, %v150, %v154
  %v156 = vshrl.u32 %v18, 16
  %v158 = vrot.slane %v156, 4
  %v159 = vor.u32 %v158, %v154
  %v160 = vrot.slane %v159, 4
  %v162 = vshll.u32 %v84, 16
  %v164 = vrot.slane %v162, 5
  %v165 = vsel %vm117, %v160, %v164
  %v167 = vshrl.u32 %v19, 16
  %v169 = vrot.slane %v167, 4
  %v170 = vshll.u32 %v19, 16
  %v172 = vrot.slane %v170, 5
  %v173 = vor.u32 %v169, %v172
  %v174 = vrot.slane %v173, 4
  %v176 = vshll.u32 %v20, 16
  %v178 = vrot.slane %v176, 5
  %v179 = vsel %vm117, %v174, %v178
  %v180 = vshrl.u32 %v20, 16
  %v182 = vrot.slane %v180, 4
  %v183 = vor.u32 %v182, %v178
  %v184 = vrot.slane %v183, 4
  %v186 = vshll.u32 %v85, 16
  %v188 = vrot.slane %v186, 5
  %v189 = vsel %vm117, %v184, %v188
  %v191 = vshrl.u32 %v21, 16
  %v193 = vrot.slane %v191, 4
  %v194 = vshll.u32 %v21, 16
  %v196 = vrot.slane %v194, 5
  %v197 = vor.u32 %v193, %v196
  %v198 = vrot.slane %v197, 4
  %v200 = vshll.u32 %v22, 16
  %v202 = vrot.slane %v200, 5
  %v203 = vsel %vm117, %v198, %v202
  %v204 = vshrl.u32 %v22, 16
  %v206 = vrot.slane %v204, 4
  %v207 = vor.u32 %v206, %v202
  %v208 = vrot.slane %v207, 4
  %v210 = vshll.u32 %v86, 16
  %v212 = vrot.slane %v210, 5
  %v213 = vsel %vm117, %v208, %v212
  %v215 = vshrl.u32 %v23, 16
  %v217 = vrot.slane %v215, 4
  %v218 = vshll.u32 %v23, 16
  %v220 = vrot.slane %v218, 5
  %v221 = vor.u32 %v217, %v220
  %v222 = vrot.slane %v221, 4
  %v224 = vshll.u32 %v24, 16
  %v226 = vrot.slane %v224, 5
  %v227 = vsel %vm117, %v222, %v226
  %v228 = vshrl.u32 %v24, 16
  %v230 = vrot.slane %v228, 4
  %v231 = vor.u32 %v230, %v226
  %v232 = vrot.slane %v231, 4
  %v234 = vshll.u32 %v87, 16
  %v236 = vrot.slane %v234, 5
  %v237 = vsel %vm117, %v232, %v236
  %v239 = vshrl.u32 %v25, 16
  %v241 = vrot.slane %v239, 4
  %v242 = vshll.u32 %v25, 16
  %v244 = vrot.slane %v242, 5
  %v245 = vor.u32 %v241, %v244
  %v246 = vrot.slane %v245, 4
  %v248 = vshll.u32 %v26, 16
  %v250 = vrot.slane %v248, 5
  %v251 = vsel %vm117, %v246, %v250
  %v252 = vshrl.u32 %v26, 16
  %v254 = vrot.slane %v252, 4
  %v255 = vor.u32 %v254, %v250
  %v256 = vrot.slane %v255, 4
  %v258 = vshll.u32 %v88, 16
  %v260 = vrot.slane %v258, 5
  %v261 = vsel %vm117, %v256, %v260
  %v263 = vshrl.u32 %v27, 16
  %v265 = vrot.slane %v263, 4
  %v266 = vshll.u32 %v27, 16
  %v268 = vrot.slane %v266, 5
  %v269 = vor.u32 %v265, %v268
  %v270 = vrot.slane %v269, 4
  %v272 = vshll.u32 %v28, 16
  %v274 = vrot.slane %v272, 5
  %v275 = vsel %vm117, %v270, %v274
  %v276 = vshrl.u32 %v28, 16
  %v278 = vrot.slane %v276, 4
  %v279 = vor.u32 %v278, %v274
  %v280 = vrot.slane %v279, 4
  %v282 = vshll.u32 %v89, 16
  %v284 = vrot.slane %v282, 5
  %v285 = vsel %vm117, %v280, %v284
  %v287 = vshrl.u32 %v29, 16
  %v289 = vrot.slane %v287, 4
  %v290 = vshll.u32 %v29, 16
  %v292 = vrot.slane %v290, 5
  %v293 = vor.u32 %v289, %v292
  %v294 = vrot.slane %v293, 4
  %v296 = vshll.u32 %v30, 16
  %v298 = vrot.slane %v296, 5
  %v299 = vsel %vm117, %v294, %v298
  %v300 = vshrl.u32 %v30, 16
  %v302 = vrot.slane %v300, 4
  %v303 = vor.u32 %v302, %v298
  %v304 = vrot.slane %v303, 4
  %v306 = vshll.u32 %v90, 16
  %v308 = vrot.slane %v306, 5
  %v309 = vsel %vm117, %v304, %v308
  %v311 = vshrl.u32 %v31, 16
  %v313 = vrot.slane %v311, 4
  %v314 = vshll.u32 %v31, 16
  %v316 = vrot.slane %v314, 5
  %v317 = vor.u32 %v313, %v316
  %v318 = vrot.slane %v317, 4
  %v320 = vshll.u32 %v32, 16
  %v322 = vrot.slane %v320, 5
  %v323 = vsel %vm117, %v318, %v322
  %v324 = vshrl.u32 %v32, 16
  %v326 = vrot.slane %v324, 4
  %v327 = vor.u32 %v326, %v322
  %v328 = vrot.slane %v327, 4
  %v330 = vshll.u32 %v91, 16
  %v332 = vrot.slane %v330, 5
  %v333 = vsel %vm117, %v328, %v332
  %v335 = vshrl.u32 %v33, 16
  %v337 = vrot.slane %v335, 4
  %v338 = vshll.u32 %v33, 16
  %v340 = vrot.slane %v338, 5
  %v341 = vor.u32 %v337, %v340
  %v342 = vrot.slane %v341, 4
  %v344 = vshll.u32 %v34, 16
  %v346 = vrot.slane %v344, 5
  %v347 = vsel %vm117, %v342, %v346
  %v348 = vshrl.u32 %v34, 16
  %v350 = vrot.slane %v348, 4
  %v351 = vor.u32 %v350, %v346
  %v352 = vrot.slane %v351, 4
  %v354 = vshll.u32 %v92, 16
  %v356 = vrot.slane %v354, 5
  %v357 = vsel %vm117, %v352, %v356
  %v359 = vshrl.u32 %v35, 16
  %v361 = vrot.slane %v359, 4
  %v362 = vshll.u32 %v35, 16
  %v364 = vrot.slane %v362, 5
  %v365 = vor.u32 %v361, %v364
  %v366 = vrot.slane %v365, 4
  %v368 = vshll.u32 %v36, 16
  %v370 = vrot.slane %v368, 5
  %v371 = vsel %vm117, %v366, %v370
  %v372 = vshrl.u32 %v36, 16
  %v374 = vrot.slane %v372, 4
  %v375 = vor.u32 %v374, %v370
  %v376 = vrot.slane %v375, 4
  %v378 = vshll.u32 %v93, 16
  %v380 = vrot.slane %v378, 5
  %v381 = vsel %vm117, %v376, %v380
  %v383 = vshrl.u32 %v37, 16
  %v385 = vrot.slane %v383, 4
  %v386 = vshll.u32 %v37, 16
  %v388 = vrot.slane %v386, 5
  %v389 = vor.u32 %v385, %v388
  %v390 = vrot.slane %v389, 4
  %v392 = vshll.u32 %v38, 16
  %v394 = vrot.slane %v392, 5
  %v395 = vsel %vm117, %v390, %v394
  %v396 = vshrl.u32 %v38, 16
  %v398 = vrot.slane %v396, 4
  %v399 = vor.u32 %v398, %v394
  %v400 = vrot.slane %v399, 4
  %v402 = vshll.u32 %v94, 16
  %v404 = vrot.slane %v402, 5
  %v405 = vsel %vm117, %v400, %v404
  %v407 = vshrl.u32 %v39, 16
  %v409 = vrot.slane %v407, 4
  %v410 = vshll.u32 %v39, 16
  %v412 = vrot.slane %v410, 5
  %v413 = vor.u32 %v409, %v412
  %v414 = vrot.slane %v413, 4
  %v416 = vshll.u32 %v40, 16
  %v418 = vrot.slane %v416, 5
  %v419 = vsel %vm117, %v414, %v418
  %v420 = vshrl.u32 %v40, 16
  %v422 = vrot.slane %v420, 4
  %v423 = vor.u32 %v422, %v418
  %v424 = vrot.slane %v423, 4
  %v426 = vshll.u32 %v95, 16
  %v428 = vrot.slane %v426, 5
  %v429 = vsel %vm117, %v424, %v428
  %v431 = vshrl.u32 %v41, 16
  %v433 = vrot.slane %v431, 4
  %v434 = vshll.u32 %v41, 16
  %v436 = vrot.slane %v434, 5
  %v437 = vor.u32 %v433, %v436
  %v438 = vrot.slane %v437, 4
  %v440 = vshll.u32 %v42, 16
  %v442 = vrot.slane %v440, 5
  %v443 = vsel %vm117, %v438, %v442
  %v444 = vshrl.u32 %v42, 16
  %v446 = vrot.slane %v444, 4
  %v447 = vor.u32 %v446, %v442
  %v448 = vrot.slane %v447, 4
  %v450 = vshll.u32 %v96, 16
  %v452 = vrot.slane %v450, 5
  %v453 = vsel %vm117, %v448, %v452
  %v455 = vshrl.u32 %v43, 16
  %v457 = vrot.slane %v455, 4
  %v458 = vshll.u32 %v43, 16
  %v460 = vrot.slane %v458, 5
  %v461 = vor.u32 %v457, %v460
  %v462 = vrot.slane %v461, 4
  %v464 = vshll.u32 %v44, 16
  %v466 = vrot.slane %v464, 5
  %v467 = vsel %vm117, %v462, %v466
  %v468 = vshrl.u32 %v44, 16
  %v470 = vrot.slane %v468, 4
  %v471 = vor.u32 %v470, %v466
  %v472 = vrot.slane %v471, 4
  %v474 = vshll.u32 %v97, 16
  %v476 = vrot.slane %v474, 5
  %v477 = vsel %vm117, %v472, %v476
  %v479 = vshrl.u32 %v45, 16
  %v481 = vrot.slane %v479, 4
  %v482 = vshll.u32 %v45, 16
  %v484 = vrot.slane %v482, 5
  %v485 = vor.u32 %v481, %v484
  %v486 = vrot.slane %v485, 4
  %v488 = vshll.u32 %v46, 16
  %v490 = vrot.slane %v488, 5
  %v491 = vsel %vm117, %v486, %v490
  %v492 = vshrl.u32 %v46, 16
  %v494 = vrot.slane %v492, 4
  %v495 = vor.u32 %v494, %v490
  %v496 = vrot.slane %v495, 4
  %v498 = vshll.u32 %v98, 16
  %v500 = vrot.slane %v498, 5
  %v501 = vsel %vm117, %v496, %v500
  %v503 = vshrl.u32 %v47, 16
  %v505 = vrot.slane %v503, 4
  %v506 = vshll.u32 %v47, 16
  %v508 = vrot.slane %v506, 5
  %v509 = vor.u32 %v505, %v508
  %v510 = vrot.slane %v509, 4
  %v512 = vshll.u32 %v48, 16
  %v514 = vrot.slane %v512, 5
  %v515 = vsel %vm117, %v510, %v514
  %v516 = vshrl.u32 %v48, 16
  %v518 = vrot.slane %v516, 4
  %v519 = vor.u32 %v518, %v514
  %v520 = vrot.slane %v519, 4
  %v522 = vshll.u32 %v99, 16
  %v524 = vrot.slane %v522, 5
  %v525 = vsel %vm117, %v520, %v524
  %v527 = vshrl.u32 %v49, 16
  %v529 = vrot.slane %v527, 4
  %v530 = vshll.u32 %v49, 16
  %v532 = vrot.slane %v530, 5
  %v533 = vor.u32 %v529, %v532
  %v534 = vrot.slane %v533, 4
  %v536 = vshll.u32 %v50, 16
  %v538 = vrot.slane %v536, 5
  %v539 = vsel %vm117, %v534, %v538
  %v540 = vshrl.u32 %v50, 16
  %v542 = vrot.slane %v540, 4
  %v543 = vor.u32 %v542, %v538
  %v544 = vrot.slane %v543, 4
  %v546 = vshll.u32 %v100, 16
  %v548 = vrot.slane %v546, 5
  %v549 = vsel %vm117, %v544, %v548
  %v551 = vshrl.u32 %v51, 16
  %v553 = vrot.slane %v551, 4
  %v554 = vshll.u32 %v51, 16
  %v556 = vrot.slane %v554, 5
  %v557 = vor.u32 %v553, %v556
  %v558 = vrot.slane %v557, 4
  %v560 = vshll.u32 %v52, 16
  %v562 = vrot.slane %v560, 5
  %v563 = vsel %vm117, %v558, %v562
  %v564 = vshrl.u32 %v52, 16
  %v566 = vrot.slane %v564, 4
  %v567 = vor.u32 %v566, %v562
  %v568 = vrot.slane %v567, 4
  %v570 = vshll.u32 %v101, 16
  %v572 = vrot.slane %v570, 5
  %v573 = vsel %vm117, %v568, %v572
  %v575 = vshrl.u32 %v53, 16
  %v577 = vrot.slane %v575, 4
  %v578 = vshll.u32 %v53, 16
  %v580 = vrot.slane %v578, 5
  %v581 = vor.u32 %v577, %v580
  %v582 = vrot.slane %v581, 4
  %v584 = vshll.u32 %v54, 16
  %v586 = vrot.slane %v584, 5
  %v587 = vsel %vm117, %v582, %v586
  %v588 = vshrl.u32 %v54, 16
  %v590 = vrot.slane %v588, 4
  %v591 = vor.u32 %v590, %v586
  %v592 = vrot.slane %v591, 4
  %v594 = vshll.u32 %v102, 16
  %v596 = vrot.slane %v594, 5
  %v597 = vsel %vm117, %v592, %v596
  %v599 = vshrl.u32 %v55, 16
  %v601 = vrot.slane %v599, 4
  %v602 = vshll.u32 %v55, 16
  %v604 = vrot.slane %v602, 5
  %v605 = vor.u32 %v601, %v604
  %v606 = vrot.slane %v605, 4
  %v608 = vshll.u32 %v56, 16
  %v610 = vrot.slane %v608, 5
  %v611 = vsel %vm117, %v606, %v610
  %v612 = vshrl.u32 %v56, 16
  %v614 = vrot.slane %v612, 4
  %v615 = vor.u32 %v614, %v610
  %v616 = vrot.slane %v615, 4
  %v618 = vshll.u32 %v103, 16
  %v620 = vrot.slane %v618, 5
  %v621 = vsel %vm117, %v616, %v620
  %v623 = vshrl.u32 %v57, 16
  %v625 = vrot.slane %v623, 4
  %v626 = vshll.u32 %v57, 16
  %v628 = vrot.slane %v626, 5
  %v629 = vor.u32 %v625, %v628
  %v630 = vrot.slane %v629, 4
  %v632 = vshll.u32 %v58, 16
  %v634 = vrot.slane %v632, 5
  %v635 = vsel %vm117, %v630, %v634
  %v636 = vshrl.u32 %v58, 16
  %v638 = vrot.slane %v636, 4
  %v639 = vor.u32 %v638, %v634
  %v640 = vrot.slane %v639, 4
  %v642 = vshll.u32 %v104, 16
  %v644 = vrot.slane %v642, 5
  %v645 = vsel %vm117, %v640, %v644
  %v647 = vshrl.u32 %v59, 16
  %v649 = vrot.slane %v647, 4
  %v650 = vshll.u32 %v59, 16
  %v652 = vrot.slane %v650, 5
  %v653 = vor.u32 %v649, %v652
  %v654 = vrot.slane %v653, 4
  %v656 = vshll.u32 %v60, 16
  %v658 = vrot.slane %v656, 5
  %v659 = vsel %vm117, %v654, %v658
  %v660 = vshrl.u32 %v60, 16
  %v662 = vrot.slane %v660, 4
  %v663 = vor.u32 %v662, %v658
  %v664 = vrot.slane %v663, 4
  %v666 = vshll.u32 %v105, 16
  %v668 = vrot.slane %v666, 5
  %v669 = vsel %vm117, %v664, %v668
  %v671 = vshrl.u32 %v61, 16
  %v673 = vrot.slane %v671, 4
  %v674 = vshll.u32 %v61, 16
  %v676 = vrot.slane %v674, 5
  %v677 = vor.u32 %v673, %v676
  %v678 = vrot.slane %v677, 4
  %v680 = vshll.u32 %v62, 16
  %v682 = vrot.slane %v680, 5
  %v683 = vsel %vm117, %v678, %v682
  %v684 = vshrl.u32 %v62, 16
  %v686 = vrot.slane %v684, 4
  %v687 = vor.u32 %v686, %v682
  %v688 = vrot.slane %v687, 4
  %v690 = vshll.u32 %v106, 16
  %v692 = vrot.slane %v690, 5
  %v693 = vsel %vm117, %v688, %v692
  %v695 = vshrl.u32 %v63, 16
  %v697 = vrot.slane %v695, 4
  %v698 = vshll.u32 %v63, 16
  %v700 = vrot.slane %v698, 5
  %v701 = vor.u32 %v697, %v700
  %v702 = vrot.slane %v701, 4
  %v704 = vshll.u32 %v64, 16
  %v706 = vrot.slane %v704, 5
  %v707 = vsel %vm117, %v702, %v706
  %v708 = vshrl.u32 %v64, 16
  %v710 = vrot.slane %v708, 4
  %v711 = vor.u32 %v710, %v706
  %v712 = vrot.slane %v711, 4
  %v714 = vshll.u32 %v107, 16
  %v716 = vrot.slane %v714, 5
  %v717 = vsel %vm117, %v712, %v716
  %v719 = vshrl.u32 %v65, 16
  %v721 = vrot.slane %v719, 4
  %v722 = vshll.u32 %v65, 16
  %v724 = vrot.slane %v722, 5
  %v725 = vor.u32 %v721, %v724
  %v726 = vrot.slane %v725, 4
  %v728 = vshll.u32 %v66, 16
  %v730 = vrot.slane %v728, 5
  %v731 = vsel %vm117, %v726, %v730
  %v732 = vshrl.u32 %v66, 16
  %v734 = vrot.slane %v732, 4
  %v735 = vor.u32 %v734, %v730
  %v736 = vrot.slane %v735, 4
  %v738 = vshll.u32 %v108, 16
  %v740 = vrot.slane %v738, 5
  %v741 = vsel %vm117, %v736, %v740
  %v743 = vshrl.u32 %v67, 16
  %v745 = vrot.slane %v743, 4
  %v746 = vshll.u32 %v67, 16
  %v748 = vrot.slane %v746, 5
  %v749 = vor.u32 %v745, %v748
  %v750 = vrot.slane %v749, 4
  %v752 = vshll.u32 %v68, 16
  %v754 = vrot.slane %v752, 5
  %v755 = vsel %vm117, %v750, %v754
  %v756 = vshrl.u32 %v68, 16
  %v758 = vrot.slane %v756, 4
  %v759 = vor.u32 %v758, %v754
  %v760 = vrot.slane %v759, 4
  %v762 = vshll.u32 %v109, 16
  %v764 = vrot.slane %v762, 5
  %v765 = vsel %vm117, %v760, %v764
  %v767 = vshrl.u32 %v69, 16
  %v769 = vrot.slane %v767, 4
  %v770 = vshll.u32 %v69, 16
  %v772 = vrot.slane %v770, 5
  %v773 = vor.u32 %v769, %v772
  %v774 = vrot.slane %v773, 4
  %v776 = vshll.u32 %v70, 16
  %v778 = vrot.slane %v776, 5
  %v779 = vsel %vm117, %v774, %v778
  %v780 = vshrl.u32 %v70, 16
  %v782 = vrot.slane %v780, 4
  %v783 = vor.u32 %v782, %v778
  %v784 = vrot.slane %v783, 4
  %v786 = vshll.u32 %v110, 16
  %v788 = vrot.slane %v786, 5
  %v789 = vsel %vm117, %v784, %v788
  %v791 = vshrl.u32 %v71, 16
  %v793 = vrot.slane %v791, 4
  %v794 = vshll.u32 %v71, 16
  %v796 = vrot.slane %v794, 5
  %v797 = vor.u32 %v793, %v796
  %v798 = vrot.slane %v797, 4
  %v800 = vshll.u32 %v72, 16
  %v802 = vrot.slane %v800, 5
  %v803 = vsel %vm117, %v798, %v802
  %v804 = vshrl.u32 %v72, 16
  %v806 = vrot.slane %v804, 4
  %v807 = vor.u32 %v806, %v802
  %v808 = vrot.slane %v807, 4
  %v810 = vshll.u32 %v111, 16
  %v812 = vrot.slane %v810, 5
  %v813 = vsel %vm117, %v808, %v812
  %v815 = vshrl.u32 %v73, 16
  %v817 = vrot.slane %v815, 4
  %v818 = vshll.u32 %v73, 16
  %v820 = vrot.slane %v818, 5
  %v821 = vor.u32 %v817, %v820
  %v822 = vrot.slane %v821, 4
  %v824 = vshll.u32 %v74, 16
  %v826 = vrot.slane %v824, 5
  %v827 = vsel %vm117, %v822, %v826
  %v828 = vshrl.u32 %v74, 16
  %v830 = vrot.slane %v828, 4
  %v831 = vor.u32 %v830, %v826
  %v832 = vrot.slane %v831, 4
  %v834 = vshll.u32 %v112, 16
  %v836 = vrot.slane %v834, 5
  %v837 = vsel %vm117, %v832, %v836
  %v839 = vshrl.u32 %v75, 16
  %v841 = vrot.slane %v839, 4
  %v842 = vshll.u32 %v75, 16
  %v844 = vrot.slane %v842, 5
  %v845 = vor.u32 %v841, %v844
  %v846 = vrot.slane %v845, 4
  %v848 = vshll.u32 %v76, 16
  %v850 = vrot.slane %v848, 5
  %v851 = vsel %vm117, %v846, %v850
  %v852 = vshrl.u32 %v76, 16
  %v854 = vrot.slane %v852, 4
  %v855 = vor.u32 %v854, %v850
  %v856 = vrot.slane %v855, 4
  %v858 = vshll.u32 %v113, 16
  %v860 = vrot.slane %v858, 5
  %v861 = vsel %vm117, %v856, %v860
  %v863 = vshrl.u32 %v77, 16
  %v865 = vrot.slane %v863, 4
  %v866 = vshll.u32 %v77, 16
  %v868 = vrot.slane %v866, 5
  %v869 = vor.u32 %v865, %v868
  %v870 = vrot.slane %v869, 4
  %v872 = vshll.u32 %v78, 16
  %v874 = vrot.slane %v872, 5
  %v875 = vsel %vm117, %v870, %v874
  %v876 = vshrl.u32 %v78, 16
  %v878 = vrot.slane %v876, 4
  %v879 = vor.u32 %v878, %v874
  %v880 = vrot.slane %v879, 4
  %v882 = vshll.u32 %v114, 16
  %v884 = vrot.slane %v882, 5
  %v885 = vsel %vm117, %v880, %v884
  %s886 = scalar_lea.vmem %s1, 16
  %v887 = vld [vmem:[%s886] sm:$0xf]
  %v888 = vld [vmem:[%s886 + $0x4] sm:$0xf]
  %v889 = vld [vmem:[%s886 + $0x8] sm:$0xf]
  %v890 = vld [vmem:[%s886 + $0xc] sm:$0xf]
  %v891 = vunpack.c.l.b16 %v131
  %v892 = vunpack.c.l.b16 %v141
  %v893 = vunpack.c.l.b16 %v155
  %v894 = vunpack.c.l.b16 %v165
  %v895 = vunpack.c.l.b16 %v179
  %v896 = vunpack.c.l.b16 %v189
  %v897 = vunpack.c.l.b16 %v203
  %v898 = vunpack.c.l.b16 %v213
  %v899 = vunpack.c.l.b16 %v227
  %v900 = vunpack.c.l.b16 %v237
  %v901 = vunpack.c.l.b16 %v251
  %v902 = vunpack.c.l.b16 %v261
  %v903 = vunpack.c.l.b16 %v275
  %v904 = vunpack.c.l.b16 %v285
  %v905 = vunpack.c.l.b16 %v299
  %v906 = vunpack.c.l.b16 %v309
  %v907 = vunpack.c.l.b16 %v323
  %v908 = vunpack.c.l.b16 %v333
  %v909 = vunpack.c.l.b16 %v347
  %v910 = vunpack.c.l.b16 %v357
  %v911 = vunpack.c.l.b16 %v371
  %v912 = vunpack.c.l.b16 %v381
  %v913 = vunpack.c.l.b16 %v395
  %v914 = vunpack.c.l.b16 %v405
  %v915 = vunpack.c.l.b16 %v419
  %v916 = vunpack.c.l.b16 %v429
  %v917 = vunpack.c.l.b16 %v443
  %v918 = vunpack.c.l.b16 %v453
  %v919 = vunpack.c.l.b16 %v467
  %v920 = vunpack.c.l.b16 %v477
  %v921 = vunpack.c.l.b16 %v491
  %v922 = vunpack.c.l.b16 %v501
  %v923 = vunpack.c.l.b16 %v515
  %v924 = vunpack.c.l.b16 %v525
  %v925 = vunpack.c.l.b16 %v539
  %v926 = vunpack.c.l.b16 %v549
  %v927 = vunpack.c.l.b16 %v563
  %v928 = vunpack.c.l.b16 %v573
  %v929 = vunpack.c.l.b16 %v587
  %v930 = vunpack.c.l.b16 %v597
  %v931 = vunpack.c.l.b16 %v611
  %v932 = vunpack.c.l.b16 %v621
  %v933 = vunpack.c.l.b16 %v635
  %v934 = vunpack.c.l.b16 %v645
  %v935 = vunpack.c.l.b16 %v659
  %v936 = vunpack.c.l.b16 %v669
  %v937 = vunpack.c.l.b16 %v683
  %v938 = vunpack.c.l.b16 %v693
  %v939 = vunpack.c.l.b16 %v707
  %v940 = vunpack.c.l.b16 %v717
  %v941 = vunpack.c.l.b16 %v731
  %v942 = vunpack.c.l.b16 %v741
  %v943 = vunpack.c.l.b16 %v755
  %v944 = vunpack.c.l.b16 %v765
  %v945 = vunpack.c.l.b16 %v779
  %v946 = vunpack.c.l.b16 %v789
  %v947 = vunpack.c.l.b16 %v803
  %v948 = vunpack.c.l.b16 %v813
  %v949 = vunpack.c.l.b16 %v827
  %v950 = vunpack.c.l.b16 %v837
  %v951 = vunpack.c.l.b16 %v851
  %v952 = vunpack.c.l.b16 %v861
  %v953 = vunpack.c.l.b16 %v875
  %v954 = vunpack.c.l.b16 %v885
  %v955 = vpack.c.b16 %v892, %v891
  %v956 = vpack.c.b16 %v894, %v893
  %v957 = vpack.c.b16 %v896, %v895
  %v958 = vpack.c.b16 %v898, %v897
  %v959 = vpack.c.b16 %v900, %v899
  %v960 = vpack.c.b16 %v902, %v901
  %v961 = vpack.c.b16 %v904, %v903
  %v962 = vpack.c.b16 %v906, %v905
  %v963 = vpack.c.b16 %v908, %v907
  %v964 = vpack.c.b16 %v910, %v909
  %v965 = vpack.c.b16 %v912, %v911
  %v966 = vpack.c.b16 %v914, %v913
  %v967 = vpack.c.b16 %v916, %v915
  %v968 = vpack.c.b16 %v918, %v917
  %v969 = vpack.c.b16 %v920, %v919
  %v970 = vpack.c.b16 %v922, %v921
  %v971 = vpack.c.b16 %v924, %v923
  %v972 = vpack.c.b16 %v926, %v925
  %v973 = vpack.c.b16 %v928, %v927
  %v974 = vpack.c.b16 %v930, %v929
  %v975 = vpack.c.b16 %v932, %v931
  %v976 = vpack.c.b16 %v934, %v933
  %v977 = vpack.c.b16 %v936, %v935
  %v978 = vpack.c.b16 %v938, %v937
  %v979 = vpack.c.b16 %v940, %v939
  %v980 = vpack.c.b16 %v942, %v941
  %v981 = vpack.c.b16 %v944, %v943
  %v982 = vpack.c.b16 %v946, %v945
  %v983 = vpack.c.b16 %v948, %v947
  %v984 = vpack.c.b16 %v950, %v949
  %v985 = vpack.c.b16 %v952, %v951
  %v986 = vpack.c.b16 %v954, %v953
  %v991 = vunpack.c.l.b16 %v887
  %v992 = vunpack.c.l.b16 %v888
  %v993 = vunpack.c.l.b16 %v889
  %v994 = vunpack.c.l.b16 %v890
  %v995 = vpack.c.b16 %v992, %v991
  %v996 = vpack.c.b16 %v994, %v993
  %vm999 = vcmask 261120
  %v1001 = vsel %vm999, %v955, 0
  %v1004 = vsel %vm999, %v956, 0
  %v1007 = vsel %vm999, %v957, 0
  %v1010 = vsel %vm999, %v958, 0
  %v1013 = vsel %vm999, %v959, 0
  %v1016 = vsel %vm999, %v960, 0
  %v1019 = vsel %vm999, %v961, 0
  %v1022 = vsel %vm999, %v962, 0
  %v1025 = vsel %vm999, %v963, 0
  %v1028 = vsel %vm999, %v964, 0
  %v1031 = vsel %vm999, %v965, 0
  %v1034 = vsel %vm999, %v966, 0
  %v1037 = vsel %vm999, %v967, 0
  %v1040 = vsel %vm999, %v968, 0
  %v1043 = vsel %vm999, %v969, 0
  %v1046 = vsel %vm999, %v970, 0
  %v1049 = vsel %vm999, %v971, 0
  %v1052 = vsel %vm999, %v972, 0
  %v1055 = vsel %vm999, %v973, 0
  %v1058 = vsel %vm999, %v974, 0
  %v1061 = vsel %vm999, %v975, 0
  %v1064 = vsel %vm999, %v976, 0
  %v1067 = vsel %vm999, %v977, 0
  %v1070 = vsel %vm999, %v978, 0
  %v1073 = vsel %vm999, %v979, 0
  %v1076 = vsel %vm999, %v980, 0
  %v1079 = vsel %vm999, %v981, 0
  %v1082 = vsel %vm999, %v982, 0
  %v1085 = vsel %vm999, %v983, 0
  %v1088 = vsel %vm999, %v984, 0
  %v1091 = vsel %vm999, %v985, 0
  %v1094 = vsel %vm999, %v986, 0
  %1096 = vmatprep.subr.bf16.mxu0 0
  %1097 = vmatpush1.bf16.msra.mxu0 0
  %1098 = vmatprep.subr.bf16.mxu0 0
  %1099 = vmatpush1.bf16.msra.mxu0 0
  %1100 = vmatprep.subr.bf16.mxu0 0
  %1101 = vmatpush1.bf16.msra.mxu0 0
  %1102 = vmatprep.subr.bf16.mxu0 0
  %1103 = vmatpush1.bf16.msra.mxu0 0
  %1104 = vmatprep.subr.bf16.mxu0 0
  %1105 = vmatpush1.bf16.msra.mxu0 0
  %1106 = vmatprep.subr.bf16.mxu0 0
  %1107 = vmatpush1.bf16.msra.mxu0 0
  %1108 = vmatprep.subr.bf16.mxu0 0
  %1109 = vmatpush1.bf16.msra.mxu0 %v996
  %1110 = vmatprep.subr.bf16.mxu0 0
  %1111 = vmatpush1.bf16.msra.mxu0 %v995
  %1112 = vmatprep.subr.bf16.mxu0 0
  %1113 = vmatpush2.bf16.msra.mxu0 0
  %1114 = vmatprep.subr.bf16.mxu0 0
  %1115 = vmatpush2.bf16.msra.mxu0 0
  %1116 = vmatprep.subr.bf16.mxu0 0
  %1117 = vmatpush2.bf16.msra.mxu0 0
  %1118 = vmatprep.subr.bf16.mxu0 0
  %1119 = vmatpush2.bf16.msra.mxu0 0
  %1120 = vmatprep.subr.bf16.mxu0 0
  %1121 = vmatpush2.bf16.msra.mxu0 0
  %1122 = vmatprep.subr.bf16.mxu0 0
  %1123 = vmatpush2.bf16.msra.mxu0 0
  %1124 = vmatprep.subr.bf16.mxu0 0
  %1125 = vmatpush2.bf16.msra.mxu0 0
  %1126 = vmatprep.subr.bf16.mxu0 0
  %1127 = vmatpush2.bf16.msra.mxu0 0
  %1128 = vmatprep.mubr.bf16.mxu0 0
  %1129 = vmatmul.mubr.bf16.gmra.mxu0 %v1001
  %v1130 = vpop.f32.mrf.mxu0
  %v1131 = vadd.f32 0.0, %v1130
  %v1132 = vpop.f32.mrf.mxu0
  %v1133 = vpop.f32.mrf.mxu0
  %v1134 = vadd.f32 0.0, %v1133
  %v1135 = vpop.f32.mrf.mxu0
  %1136 = vmatprep.mubr.bf16.mxu0 0
  %1137 = vmatmul.mubr.bf16.gmra.mxu0 %v1004
  %v1138 = vpop.f32.mrf.mxu0
  %v1139 = vadd.f32 0.0, %v1138
  %v1140 = vpop.f32.mrf.mxu0
  %v1141 = vpop.f32.mrf.mxu0
  %v1142 = vadd.f32 0.0, %v1141
  %v1143 = vpop.f32.mrf.mxu0
  %1144 = vmatprep.mubr.bf16.mxu0 0
  %1145 = vmatmul.mubr.bf16.gmra.mxu0 %v1007
  %v1146 = vpop.f32.mrf.mxu0
  %v1147 = vadd.f32 0.0, %v1146
  %v1148 = vpop.f32.mrf.mxu0
  %v1149 = vpop.f32.mrf.mxu0
  %v1150 = vadd.f32 0.0, %v1149
  %v1151 = vpop.f32.mrf.mxu0
  %1152 = vmatprep.mubr.bf16.mxu0 0
  %1153 = vmatmul.mubr.bf16.gmra.mxu0 %v1010
  %v1154 = vpop.f32.mrf.mxu0
  %v1155 = vadd.f32 0.0, %v1154
  %v1156 = vpop.f32.mrf.mxu0
  %v1157 = vpop.f32.mrf.mxu0
  %v1158 = vadd.f32 0.0, %v1157
  %v1159 = vpop.f32.mrf.mxu0
  %1160 = vmatprep.mubr.bf16.mxu0 0
  %1161 = vmatmul.mubr.bf16.gmra.mxu0 %v1013
  %v1162 = vpop.f32.mrf.mxu0
  %v1163 = vadd.f32 0.0, %v1162
  %v1164 = vpop.f32.mrf.mxu0
  %v1165 = vpop.f32.mrf.mxu0
  %v1166 = vadd.f32 0.0, %v1165
  %v1167 = vpop.f32.mrf.mxu0
  %1168 = vmatprep.mubr.bf16.mxu0 0
  %1169 = vmatmul.mubr.bf16.gmra.mxu0 %v1016
  %v1170 = vpop.f32.mrf.mxu0
  %v1171 = vadd.f32 0.0, %v1170
  %v1172 = vpop.f32.mrf.mxu0
  %v1173 = vpop.f32.mrf.mxu0
  %v1174 = vadd.f32 0.0, %v1173
  %v1175 = vpop.f32.mrf.mxu0
  %1176 = vmatprep.mubr.bf16.mxu0 0
  %1177 = vmatmul.mubr.bf16.gmra.mxu0 %v1019
  %v1178 = vpop.f32.mrf.mxu0
  %v1179 = vadd.f32 0.0, %v1178
  %v1180 = vpop.f32.mrf.mxu0
  %v1181 = vpop.f32.mrf.mxu0
  %v1182 = vadd.f32 0.0, %v1181
  %v1183 = vpop.f32.mrf.mxu0
  %1184 = vmatprep.mubr.bf16.mxu0 0
  %1185 = vmatmul.mubr.bf16.gmra.mxu0 %v1022
  %v1186 = vpop.f32.mrf.mxu0
  %v1187 = vadd.f32 0.0, %v1186
  %v1188 = vpop.f32.mrf.mxu0
  %v1189 = vpop.f32.mrf.mxu0
  %v1190 = vadd.f32 0.0, %v1189
  %v1191 = vpop.f32.mrf.mxu0
  %1192 = vmatprep.mubr.bf16.mxu0 0
  %1193 = vmatmul.mubr.bf16.gmra.mxu0 %v1025
  %v1194 = vpop.f32.mrf.mxu0
  %v1195 = vadd.f32 0.0, %v1194
  %v1196 = vpop.f32.mrf.mxu0
  %v1197 = vpop.f32.mrf.mxu0
  %v1198 = vadd.f32 0.0, %v1197
  %v1199 = vpop.f32.mrf.mxu0
  %1200 = vmatprep.mubr.bf16.mxu0 0
  %1201 = vmatmul.mubr.bf16.gmra.mxu0 %v1028
  %v1202 = vpop.f32.mrf.mxu0
  %v1203 = vadd.f32 0.0, %v1202
  %v1204 = vpop.f32.mrf.mxu0
  %v1205 = vpop.f32.mrf.mxu0
  %v1206 = vadd.f32 0.0, %v1205
  %v1207 = vpop.f32.mrf.mxu0
  %1208 = vmatprep.mubr.bf16.mxu0 0
  %1209 = vmatmul.mubr.bf16.gmra.mxu0 %v1031
  %v1210 = vpop.f32.mrf.mxu0
  %v1211 = vadd.f32 0.0, %v1210
  %v1212 = vpop.f32.mrf.mxu0
  %v1213 = vpop.f32.mrf.mxu0
  %v1214 = vadd.f32 0.0, %v1213
  %v1215 = vpop.f32.mrf.mxu0
  %1216 = vmatprep.mubr.bf16.mxu0 0
  %1217 = vmatmul.mubr.bf16.gmra.mxu0 %v1034
  %v1218 = vpop.f32.mrf.mxu0
  %v1219 = vadd.f32 0.0, %v1218
  %v1220 = vpop.f32.mrf.mxu0
  %v1221 = vpop.f32.mrf.mxu0
  %v1222 = vadd.f32 0.0, %v1221
  %v1223 = vpop.f32.mrf.mxu0
  %1224 = vmatprep.mubr.bf16.mxu0 0
  %1225 = vmatmul.mubr.bf16.gmra.mxu0 %v1037
  %v1226 = vpop.f32.mrf.mxu0
  %v1227 = vadd.f32 0.0, %v1226
  %v1228 = vpop.f32.mrf.mxu0
  %v1229 = vpop.f32.mrf.mxu0
  %v1230 = vadd.f32 0.0, %v1229
  %v1231 = vpop.f32.mrf.mxu0
  %1232 = vmatprep.mubr.bf16.mxu0 0
  %1233 = vmatmul.mubr.bf16.gmra.mxu0 %v1040
  %v1234 = vpop.f32.mrf.mxu0
  %v1235 = vadd.f32 0.0, %v1234
  %v1236 = vpop.f32.mrf.mxu0
  %v1237 = vpop.f32.mrf.mxu0
  %v1238 = vadd.f32 0.0, %v1237
  %v1239 = vpop.f32.mrf.mxu0
  %1240 = vmatprep.mubr.bf16.mxu0 0
  %1241 = vmatmul.mubr.bf16.gmra.mxu0 %v1043
  %v1242 = vpop.f32.mrf.mxu0
  %v1243 = vadd.f32 0.0, %v1242
  %v1244 = vpop.f32.mrf.mxu0
  %v1245 = vpop.f32.mrf.mxu0
  %v1246 = vadd.f32 0.0, %v1245
  %v1247 = vpop.f32.mrf.mxu0
  %1248 = vmatprep.mubr.bf16.mxu0 0
  %1249 = vmatmul.mubr.bf16.gmra.mxu0 %v1046
  %v1250 = vpop.f32.mrf.mxu0
  %v1251 = vadd.f32 0.0, %v1250
  %v1252 = vpop.f32.mrf.mxu0
  %v1253 = vpop.f32.mrf.mxu0
  %v1254 = vadd.f32 0.0, %v1253
  %v1255 = vpop.f32.mrf.mxu0
  %1256 = vmatprep.mubr.bf16.mxu0 0
  %1257 = vmatmul.mubr.bf16.gmra.mxu0 %v1049
  %v1258 = vpop.f32.mrf.mxu0
  %v1259 = vadd.f32 0.0, %v1258
  %v1260 = vpop.f32.mrf.mxu0
  %v1261 = vpop.f32.mrf.mxu0
  %v1262 = vadd.f32 0.0, %v1261
  %v1263 = vpop.f32.mrf.mxu0
  %1264 = vmatprep.mubr.bf16.mxu0 0
  %1265 = vmatmul.mubr.bf16.gmra.mxu0 %v1052
  %v1266 = vpop.f32.mrf.mxu0
  %v1267 = vadd.f32 0.0, %v1266
  %v1268 = vpop.f32.mrf.mxu0
  %v1269 = vpop.f32.mrf.mxu0
  %v1270 = vadd.f32 0.0, %v1269
  %v1271 = vpop.f32.mrf.mxu0
  %1272 = vmatprep.mubr.bf16.mxu0 0
  %1273 = vmatmul.mubr.bf16.gmra.mxu0 %v1055
  %v1274 = vpop.f32.mrf.mxu0
  %v1275 = vadd.f32 0.0, %v1274
  %v1276 = vpop.f32.mrf.mxu0
  %v1277 = vpop.f32.mrf.mxu0
  %v1278 = vadd.f32 0.0, %v1277
  %v1279 = vpop.f32.mrf.mxu0
  %1280 = vmatprep.mubr.bf16.mxu0 0
  %1281 = vmatmul.mubr.bf16.gmra.mxu0 %v1058
  %v1282 = vpop.f32.mrf.mxu0
  %v1283 = vadd.f32 0.0, %v1282
  %v1284 = vpop.f32.mrf.mxu0
  %v1285 = vpop.f32.mrf.mxu0
  %v1286 = vadd.f32 0.0, %v1285
  %v1287 = vpop.f32.mrf.mxu0
  %1288 = vmatprep.mubr.bf16.mxu0 0
  %1289 = vmatmul.mubr.bf16.gmra.mxu0 %v1061
  %v1290 = vpop.f32.mrf.mxu0
  %v1291 = vadd.f32 0.0, %v1290
  %v1292 = vpop.f32.mrf.mxu0
  %v1293 = vpop.f32.mrf.mxu0
  %v1294 = vadd.f32 0.0, %v1293
  %v1295 = vpop.f32.mrf.mxu0
  %1296 = vmatprep.mubr.bf16.mxu0 0
  %1297 = vmatmul.mubr.bf16.gmra.mxu0 %v1064
  %v1298 = vpop.f32.mrf.mxu0
  %v1299 = vadd.f32 0.0, %v1298
  %v1300 = vpop.f32.mrf.mxu0
  %v1301 = vpop.f32.mrf.mxu0
  %v1302 = vadd.f32 0.0, %v1301
  %v1303 = vpop.f32.mrf.mxu0
  %1304 = vmatprep.mubr.bf16.mxu0 0
  %1305 = vmatmul.mubr.bf16.gmra.mxu0 %v1067
  %v1306 = vpop.f32.mrf.mxu0
  %v1307 = vadd.f32 0.0, %v1306
  %v1308 = vpop.f32.mrf.mxu0
  %v1309 = vpop.f32.mrf.mxu0
  %v1310 = vadd.f32 0.0, %v1309
  %v1311 = vpop.f32.mrf.mxu0
  %1312 = vmatprep.mubr.bf16.mxu0 0
  %1313 = vmatmul.mubr.bf16.gmra.mxu0 %v1070
  %v1314 = vpop.f32.mrf.mxu0
  %v1315 = vadd.f32 0.0, %v1314
  %v1316 = vpop.f32.mrf.mxu0
  %v1317 = vpop.f32.mrf.mxu0
  %v1318 = vadd.f32 0.0, %v1317
  %v1319 = vpop.f32.mrf.mxu0
  %1320 = vmatprep.mubr.bf16.mxu0 0
  %1321 = vmatmul.mubr.bf16.gmra.mxu0 %v1073
  %v1322 = vpop.f32.mrf.mxu0
  %v1323 = vadd.f32 0.0, %v1322
  %v1324 = vpop.f32.mrf.mxu0
  %v1325 = vpop.f32.mrf.mxu0
  %v1326 = vadd.f32 0.0, %v1325
  %v1327 = vpop.f32.mrf.mxu0
  %1328 = vmatprep.mubr.bf16.mxu0 0
  %1329 = vmatmul.mubr.bf16.gmra.mxu0 %v1076
  %v1330 = vpop.f32.mrf.mxu0
  %v1331 = vadd.f32 0.0, %v1330
  %v1332 = vpop.f32.mrf.mxu0
  %v1333 = vpop.f32.mrf.mxu0
  %v1334 = vadd.f32 0.0, %v1333
  %v1335 = vpop.f32.mrf.mxu0
  %1336 = vmatprep.mubr.bf16.mxu0 0
  %1337 = vmatmul.mubr.bf16.gmra.mxu0 %v1079
  %v1338 = vpop.f32.mrf.mxu0
  %v1339 = vadd.f32 0.0, %v1338
  %v1340 = vpop.f32.mrf.mxu0
  %v1341 = vpop.f32.mrf.mxu0
  %v1342 = vadd.f32 0.0, %v1341
  %v1343 = vpop.f32.mrf.mxu0
  %1344 = vmatprep.mubr.bf16.mxu0 0
  %1345 = vmatmul.mubr.bf16.gmra.mxu0 %v1082
  %v1346 = vpop.f32.mrf.mxu0
  %v1347 = vadd.f32 0.0, %v1346
  %v1348 = vpop.f32.mrf.mxu0
  %v1349 = vpop.f32.mrf.mxu0
  %v1350 = vadd.f32 0.0, %v1349
  %v1351 = vpop.f32.mrf.mxu0
  %1352 = vmatprep.mubr.bf16.mxu0 0
  %1353 = vmatmul.mubr.bf16.gmra.mxu0 %v1085
  %v1354 = vpop.f32.mrf.mxu0
  %v1355 = vadd.f32 0.0, %v1354
  %v1356 = vpop.f32.mrf.mxu0
  %v1357 = vpop.f32.mrf.mxu0
  %v1358 = vadd.f32 0.0, %v1357
  %v1359 = vpop.f32.mrf.mxu0
  %1360 = vmatprep.mubr.bf16.mxu0 0
  %1361 = vmatmul.mubr.bf16.gmra.mxu0 %v1088
  %v1362 = vpop.f32.mrf.mxu0
  %v1363 = vadd.f32 0.0, %v1362
  %v1364 = vpop.f32.mrf.mxu0
  %v1365 = vpop.f32.mrf.mxu0
  %v1366 = vadd.f32 0.0, %v1365
  %v1367 = vpop.f32.mrf.mxu0
  %1368 = vmatprep.mubr.bf16.mxu0 0
  %1369 = vmatmul.mubr.bf16.gmra.mxu0 %v1091
  %v1370 = vpop.f32.mrf.mxu0
  %v1371 = vadd.f32 0.0, %v1370
  %v1372 = vpop.f32.mrf.mxu0
  %v1373 = vpop.f32.mrf.mxu0
  %v1374 = vadd.f32 0.0, %v1373
  %v1375 = vpop.f32.mrf.mxu0
  %1376 = vmatprep.mubr.bf16.mxu0 0
  %1377 = vmatmul.mubr.bf16.gmra.mxu0 %v1094
  %v1378 = vpop.f32.mrf.mxu0
  %v1379 = vadd.f32 0.0, %v1378
  %v1380 = vpop.f32.mrf.mxu0
  %v1381 = vpop.f32.mrf.mxu0
  %v1382 = vadd.f32 0.0, %v1381
  %v1383 = vpop.f32.mrf.mxu0
  %1384 = vdwg.mxu0
  %v1449 = vunpack.c.l.b16 %v15
  %v1450 = vunpack.c.l.b16 %v16
  %v1451 = vunpack.c.l.b16 %v17
  %v1452 = vunpack.c.l.b16 %v18
  %v1453 = vunpack.c.l.b16 %v19
  %v1454 = vunpack.c.l.b16 %v20
  %v1455 = vunpack.c.l.b16 %v21
  %v1456 = vunpack.c.l.b16 %v22
  %v1457 = vunpack.c.l.b16 %v23
  %v1458 = vunpack.c.l.b16 %v24
  %v1459 = vunpack.c.l.b16 %v25
  %v1460 = vunpack.c.l.b16 %v26
  %v1461 = vunpack.c.l.b16 %v27
  %v1462 = vunpack.c.l.b16 %v28
  %v1463 = vunpack.c.l.b16 %v29
  %v1464 = vunpack.c.l.b16 %v30
  %v1465 = vunpack.c.l.b16 %v31
  %v1466 = vunpack.c.l.b16 %v32
  %v1467 = vunpack.c.l.b16 %v33
  %v1468 = vunpack.c.l.b16 %v34
  %v1469 = vunpack.c.l.b16 %v35
  %v1470 = vunpack.c.l.b16 %v36
  %v1471 = vunpack.c.l.b16 %v37
  %v1472 = vunpack.c.l.b16 %v38
  %v1473 = vunpack.c.l.b16 %v39
  %v1474 = vunpack.c.l.b16 %v40
  %v1475 = vunpack.c.l.b16 %v41
  %v1476 = vunpack.c.l.b16 %v42
  %v1477 = vunpack.c.l.b16 %v43
  %v1478 = vunpack.c.l.b16 %v44
  %v1479 = vunpack.c.l.b16 %v45
  %v1480 = vunpack.c.l.b16 %v46
  %v1481 = vunpack.c.l.b16 %v47
  %v1482 = vunpack.c.l.b16 %v48
  %v1483 = vunpack.c.l.b16 %v49
  %v1484 = vunpack.c.l.b16 %v50
  %v1485 = vunpack.c.l.b16 %v51
  %v1486 = vunpack.c.l.b16 %v52
  %v1487 = vunpack.c.l.b16 %v53
  %v1488 = vunpack.c.l.b16 %v54
  %v1489 = vunpack.c.l.b16 %v55
  %v1490 = vunpack.c.l.b16 %v56
  %v1491 = vunpack.c.l.b16 %v57
  %v1492 = vunpack.c.l.b16 %v58
  %v1493 = vunpack.c.l.b16 %v59
  %v1494 = vunpack.c.l.b16 %v60
  %v1495 = vunpack.c.l.b16 %v61
  %v1496 = vunpack.c.l.b16 %v62
  %v1497 = vunpack.c.l.b16 %v63
  %v1498 = vunpack.c.l.b16 %v64
  %v1499 = vunpack.c.l.b16 %v65
  %v1500 = vunpack.c.l.b16 %v66
  %v1501 = vunpack.c.l.b16 %v67
  %v1502 = vunpack.c.l.b16 %v68
  %v1503 = vunpack.c.l.b16 %v69
  %v1504 = vunpack.c.l.b16 %v70
  %v1505 = vunpack.c.l.b16 %v71
  %v1506 = vunpack.c.l.b16 %v72
  %v1507 = vunpack.c.l.b16 %v73
  %v1508 = vunpack.c.l.b16 %v74
  %v1509 = vunpack.c.l.b16 %v75
  %v1510 = vunpack.c.l.b16 %v76
  %v1511 = vunpack.c.l.b16 %v77
  %v1512 = vunpack.c.l.b16 %v78
  %v1513 = vpack.c.b16 %v1450, %v1449
  %v1514 = vpack.c.b16 %v1452, %v1451
  %v1515 = vpack.c.b16 %v1454, %v1453
  %v1516 = vpack.c.b16 %v1456, %v1455
  %v1517 = vpack.c.b16 %v1458, %v1457
  %v1518 = vpack.c.b16 %v1460, %v1459
  %v1519 = vpack.c.b16 %v1462, %v1461
  %v1520 = vpack.c.b16 %v1464, %v1463
  %v1521 = vpack.c.b16 %v1466, %v1465
  %v1522 = vpack.c.b16 %v1468, %v1467
  %v1523 = vpack.c.b16 %v1470, %v1469
  %v1524 = vpack.c.b16 %v1472, %v1471
  %v1525 = vpack.c.b16 %v1474, %v1473
  %v1526 = vpack.c.b16 %v1476, %v1475
  %v1527 = vpack.c.b16 %v1478, %v1477
  %v1528 = vpack.c.b16 %v1480, %v1479
  %v1529 = vpack.c.b16 %v1482, %v1481
  %v1530 = vpack.c.b16 %v1484, %v1483
  %v1531 = vpack.c.b16 %v1486, %v1485
  %v1532 = vpack.c.b16 %v1488, %v1487
  %v1533 = vpack.c.b16 %v1490, %v1489
  %v1534 = vpack.c.b16 %v1492, %v1491
  %v1535 = vpack.c.b16 %v1494, %v1493
  %v1536 = vpack.c.b16 %v1496, %v1495
  %v1537 = vpack.c.b16 %v1498, %v1497
  %v1538 = vpack.c.b16 %v1500, %v1499
  %v1539 = vpack.c.b16 %v1502, %v1501
  %v1540 = vpack.c.b16 %v1504, %v1503
  %v1541 = vpack.c.b16 %v1506, %v1505
  %v1542 = vpack.c.b16 %v1508, %v1507
  %v1543 = vpack.c.b16 %v1510, %v1509
  %v1544 = vpack.c.b16 %v1512, %v1511
  %v1549 = vunpack.c.l.b16 %v79
  %v1550 = vunpack.c.l.b16 %v80
  %v1551 = vunpack.c.l.b16 %v81
  %v1552 = vunpack.c.l.b16 %v82
  %v1553 = vpack.c.b16 %v1550, %v1549
  %v1554 = vpack.c.b16 %v1552, %v1551
  %v1558 = vsel %vm999, %v1513, 0
  %v1561 = vsel %vm999, %v1514, 0
  %v1564 = vsel %vm999, %v1515, 0
  %v1567 = vsel %vm999, %v1516, 0
  %v1570 = vsel %vm999, %v1517, 0
  %v1573 = vsel %vm999, %v1518, 0
  %v1576 = vsel %vm999, %v1519, 0
  %v1579 = vsel %vm999, %v1520, 0
  %v1582 = vsel %vm999, %v1521, 0
  %v1585 = vsel %vm999, %v1522, 0
  %v1588 = vsel %vm999, %v1523, 0
  %v1591 = vsel %vm999, %v1524, 0
  %v1594 = vsel %vm999, %v1525, 0
  %v1597 = vsel %vm999, %v1526, 0
  %v1600 = vsel %vm999, %v1527, 0
  %v1603 = vsel %vm999, %v1528, 0
  %v1606 = vsel %vm999, %v1529, 0
  %v1609 = vsel %vm999, %v1530, 0
  %v1612 = vsel %vm999, %v1531, 0
  %v1615 = vsel %vm999, %v1532, 0
  %v1618 = vsel %vm999, %v1533, 0
  %v1621 = vsel %vm999, %v1534, 0
  %v1624 = vsel %vm999, %v1535, 0
  %v1627 = vsel %vm999, %v1536, 0
  %v1630 = vsel %vm999, %v1537, 0
  %v1633 = vsel %vm999, %v1538, 0
  %v1636 = vsel %vm999, %v1539, 0
  %v1639 = vsel %vm999, %v1540, 0
  %v1642 = vsel %vm999, %v1541, 0
  %v1645 = vsel %vm999, %v1542, 0
  %v1648 = vsel %vm999, %v1543, 0
  %v1651 = vsel %vm999, %v1544, 0
  %1653 = vmatprep.subr.bf16.mxu0 0
  %1654 = vmatpush1.bf16.msra.mxu0 0
  %1655 = vmatprep.subr.bf16.mxu0 0
  %1656 = vmatpush1.bf16.msra.mxu0 0
  %1657 = vmatprep.subr.bf16.mxu0 0
  %1658 = vmatpush1.bf16.msra.mxu0 0
  %1659 = vmatprep.subr.bf16.mxu0 0
  %1660 = vmatpush1.bf16.msra.mxu0 0
  %1661 = vmatprep.subr.bf16.mxu0 0
  %1662 = vmatpush1.bf16.msra.mxu0 0
  %1663 = vmatprep.subr.bf16.mxu0 0
  %1664 = vmatpush1.bf16.msra.mxu0 0
  %1665 = vmatprep.subr.bf16.mxu0 0
  %1666 = vmatpush1.bf16.msra.mxu0 %v1554
  %1667 = vmatprep.subr.bf16.mxu0 0
  %1668 = vmatpush1.bf16.msra.mxu0 %v1553
  %1669 = vmatprep.subr.bf16.mxu0 0
  %1670 = vmatpush2.bf16.msra.mxu0 0
  %1671 = vmatprep.subr.bf16.mxu0 0
  %1672 = vmatpush2.bf16.msra.mxu0 0
  %1673 = vmatprep.subr.bf16.mxu0 0
  %1674 = vmatpush2.bf16.msra.mxu0 0
  %1675 = vmatprep.subr.bf16.mxu0 0
  %1676 = vmatpush2.bf16.msra.mxu0 0
  %1677 = vmatprep.subr.bf16.mxu0 0
  %1678 = vmatpush2.bf16.msra.mxu0 0
  %1679 = vmatprep.subr.bf16.mxu0 0
  %1680 = vmatpush2.bf16.msra.mxu0 0
  %1681 = vmatprep.subr.bf16.mxu0 0
  %1682 = vmatpush2.bf16.msra.mxu0 0
  %1683 = vmatprep.subr.bf16.mxu0 0
  %1684 = vmatpush2.bf16.msra.mxu0 0
  %1685 = vmatprep.mubr.bf16.mxu0 0
  %1686 = vmatmul.mubr.bf16.gmra.mxu0 %v1558
  %v1687 = vpop.f32.mrf.mxu0
  %v1688 = vadd.f32 %v1131, %v1687
  %v1689 = vpop.f32.mrf.mxu0
  %v1690 = vpop.f32.mrf.mxu0
  %v1691 = vadd.f32 %v1134, %v1690
  %v1692 = vpop.f32.mrf.mxu0
  %1693 = vmatprep.mubr.bf16.mxu0 0
  %1694 = vmatmul.mubr.bf16.gmra.mxu0 %v1561
  %v1695 = vpop.f32.mrf.mxu0
  %v1696 = vadd.f32 %v1139, %v1695
  %v1697 = vpop.f32.mrf.mxu0
  %v1698 = vpop.f32.mrf.mxu0
  %v1699 = vadd.f32 %v1142, %v1698
  %v1700 = vpop.f32.mrf.mxu0
  %1701 = vmatprep.mubr.bf16.mxu0 0
  %1702 = vmatmul.mubr.bf16.gmra.mxu0 %v1564
  %v1703 = vpop.f32.mrf.mxu0
  %v1704 = vadd.f32 %v1147, %v1703
  %v1705 = vpop.f32.mrf.mxu0
  %v1706 = vpop.f32.mrf.mxu0
  %v1707 = vadd.f32 %v1150, %v1706
  %v1708 = vpop.f32.mrf.mxu0
  %1709 = vmatprep.mubr.bf16.mxu0 0
  %1710 = vmatmul.mubr.bf16.gmra.mxu0 %v1567
  %v1711 = vpop.f32.mrf.mxu0
  %v1712 = vadd.f32 %v1155, %v1711
  %v1713 = vpop.f32.mrf.mxu0
  %v1714 = vpop.f32.mrf.mxu0
  %v1715 = vadd.f32 %v1158, %v1714
  %v1716 = vpop.f32.mrf.mxu0
  %1717 = vmatprep.mubr.bf16.mxu0 0
  %1718 = vmatmul.mubr.bf16.gmra.mxu0 %v1570
  %v1719 = vpop.f32.mrf.mxu0
  %v1720 = vadd.f32 %v1163, %v1719
  %v1721 = vpop.f32.mrf.mxu0
  %v1722 = vpop.f32.mrf.mxu0
  %v1723 = vadd.f32 %v1166, %v1722
  %v1724 = vpop.f32.mrf.mxu0
  %1725 = vmatprep.mubr.bf16.mxu0 0
  %1726 = vmatmul.mubr.bf16.gmra.mxu0 %v1573
  %v1727 = vpop.f32.mrf.mxu0
  %v1728 = vadd.f32 %v1171, %v1727
  %v1729 = vpop.f32.mrf.mxu0
  %v1730 = vpop.f32.mrf.mxu0
  %v1731 = vadd.f32 %v1174, %v1730
  %v1732 = vpop.f32.mrf.mxu0
  %1733 = vmatprep.mubr.bf16.mxu0 0
  %1734 = vmatmul.mubr.bf16.gmra.mxu0 %v1576
  %v1735 = vpop.f32.mrf.mxu0
  %v1736 = vadd.f32 %v1179, %v1735
  %v1737 = vpop.f32.mrf.mxu0
  %v1738 = vpop.f32.mrf.mxu0
  %v1739 = vadd.f32 %v1182, %v1738
  %v1740 = vpop.f32.mrf.mxu0
  %1741 = vmatprep.mubr.bf16.mxu0 0
  %1742 = vmatmul.mubr.bf16.gmra.mxu0 %v1579
  %v1743 = vpop.f32.mrf.mxu0
  %v1744 = vadd.f32 %v1187, %v1743
  %v1745 = vpop.f32.mrf.mxu0
  %v1746 = vpop.f32.mrf.mxu0
  %v1747 = vadd.f32 %v1190, %v1746
  %v1748 = vpop.f32.mrf.mxu0
  %1749 = vmatprep.mubr.bf16.mxu0 0
  %1750 = vmatmul.mubr.bf16.gmra.mxu0 %v1582
  %v1751 = vpop.f32.mrf.mxu0
  %v1752 = vadd.f32 %v1195, %v1751
  %v1753 = vpop.f32.mrf.mxu0
  %v1754 = vpop.f32.mrf.mxu0
  %v1755 = vadd.f32 %v1198, %v1754
  %v1756 = vpop.f32.mrf.mxu0
  %1757 = vmatprep.mubr.bf16.mxu0 0
  %1758 = vmatmul.mubr.bf16.gmra.mxu0 %v1585
  %v1759 = vpop.f32.mrf.mxu0
  %v1760 = vadd.f32 %v1203, %v1759
  %v1761 = vpop.f32.mrf.mxu0
  %v1762 = vpop.f32.mrf.mxu0
  %v1763 = vadd.f32 %v1206, %v1762
  %v1764 = vpop.f32.mrf.mxu0
  %1765 = vmatprep.mubr.bf16.mxu0 0
  %1766 = vmatmul.mubr.bf16.gmra.mxu0 %v1588
  %v1767 = vpop.f32.mrf.mxu0
  %v1768 = vadd.f32 %v1211, %v1767
  %v1769 = vpop.f32.mrf.mxu0
  %v1770 = vpop.f32.mrf.mxu0
  %v1771 = vadd.f32 %v1214, %v1770
  %v1772 = vpop.f32.mrf.mxu0
  %1773 = vmatprep.mubr.bf16.mxu0 0
  %1774 = vmatmul.mubr.bf16.gmra.mxu0 %v1591
  %v1775 = vpop.f32.mrf.mxu0
  %v1776 = vadd.f32 %v1219, %v1775
  %v1777 = vpop.f32.mrf.mxu0
  %v1778 = vpop.f32.mrf.mxu0
  %v1779 = vadd.f32 %v1222, %v1778
  %v1780 = vpop.f32.mrf.mxu0
  %1781 = vmatprep.mubr.bf16.mxu0 0
  %1782 = vmatmul.mubr.bf16.gmra.mxu0 %v1594
  %v1783 = vpop.f32.mrf.mxu0
  %v1784 = vadd.f32 %v1227, %v1783
  %v1785 = vpop.f32.mrf.mxu0
  %v1786 = vpop.f32.mrf.mxu0
  %v1787 = vadd.f32 %v1230, %v1786
  %v1788 = vpop.f32.mrf.mxu0
  %1789 = vmatprep.mubr.bf16.mxu0 0
  %1790 = vmatmul.mubr.bf16.gmra.mxu0 %v1597
  %v1791 = vpop.f32.mrf.mxu0
  %v1792 = vadd.f32 %v1235, %v1791
  %v1793 = vpop.f32.mrf.mxu0
  %v1794 = vpop.f32.mrf.mxu0
  %v1795 = vadd.f32 %v1238, %v1794
  %v1796 = vpop.f32.mrf.mxu0
  %1797 = vmatprep.mubr.bf16.mxu0 0
  %1798 = vmatmul.mubr.bf16.gmra.mxu0 %v1600
  %v1799 = vpop.f32.mrf.mxu0
  %v1800 = vadd.f32 %v1243, %v1799
  %v1801 = vpop.f32.mrf.mxu0
  %v1802 = vpop.f32.mrf.mxu0
  %v1803 = vadd.f32 %v1246, %v1802
  %v1804 = vpop.f32.mrf.mxu0
  %1805 = vmatprep.mubr.bf16.mxu0 0
  %1806 = vmatmul.mubr.bf16.gmra.mxu0 %v1603
  %v1807 = vpop.f32.mrf.mxu0
  %v1808 = vadd.f32 %v1251, %v1807
  %v1809 = vpop.f32.mrf.mxu0
  %v1810 = vpop.f32.mrf.mxu0
  %v1811 = vadd.f32 %v1254, %v1810
  %v1812 = vpop.f32.mrf.mxu0
  %1813 = vmatprep.mubr.bf16.mxu0 0
  %1814 = vmatmul.mubr.bf16.gmra.mxu0 %v1606
  %v1815 = vpop.f32.mrf.mxu0
  %v1816 = vadd.f32 %v1259, %v1815
  %v1817 = vpop.f32.mrf.mxu0
  %v1818 = vpop.f32.mrf.mxu0
  %v1819 = vadd.f32 %v1262, %v1818
  %v1820 = vpop.f32.mrf.mxu0
  %1821 = vmatprep.mubr.bf16.mxu0 0
  %1822 = vmatmul.mubr.bf16.gmra.mxu0 %v1609
  %v1823 = vpop.f32.mrf.mxu0
  %v1824 = vadd.f32 %v1267, %v1823
  %v1825 = vpop.f32.mrf.mxu0
  %v1826 = vpop.f32.mrf.mxu0
  %v1827 = vadd.f32 %v1270, %v1826
  %v1828 = vpop.f32.mrf.mxu0
  %1829 = vmatprep.mubr.bf16.mxu0 0
  %1830 = vmatmul.mubr.bf16.gmra.mxu0 %v1612
  %v1831 = vpop.f32.mrf.mxu0
  %v1832 = vadd.f32 %v1275, %v1831
  %v1833 = vpop.f32.mrf.mxu0
  %v1834 = vpop.f32.mrf.mxu0
  %v1835 = vadd.f32 %v1278, %v1834
  %v1836 = vpop.f32.mrf.mxu0
  %1837 = vmatprep.mubr.bf16.mxu0 0
  %1838 = vmatmul.mubr.bf16.gmra.mxu0 %v1615
  %v1839 = vpop.f32.mrf.mxu0
  %v1840 = vadd.f32 %v1283, %v1839
  %v1841 = vpop.f32.mrf.mxu0
  %v1842 = vpop.f32.mrf.mxu0
  %v1843 = vadd.f32 %v1286, %v1842
  %v1844 = vpop.f32.mrf.mxu0
  %1845 = vmatprep.mubr.bf16.mxu0 0
  %1846 = vmatmul.mubr.bf16.gmra.mxu0 %v1618
  %v1847 = vpop.f32.mrf.mxu0
  %v1848 = vadd.f32 %v1291, %v1847
  %v1849 = vpop.f32.mrf.mxu0
  %v1850 = vpop.f32.mrf.mxu0
  %v1851 = vadd.f32 %v1294, %v1850
  %v1852 = vpop.f32.mrf.mxu0
  %1853 = vmatprep.mubr.bf16.mxu0 0
  %1854 = vmatmul.mubr.bf16.gmra.mxu0 %v1621
  %v1855 = vpop.f32.mrf.mxu0
  %v1856 = vadd.f32 %v1299, %v1855
  %v1857 = vpop.f32.mrf.mxu0
  %v1858 = vpop.f32.mrf.mxu0
  %v1859 = vadd.f32 %v1302, %v1858
  %v1860 = vpop.f32.mrf.mxu0
  %1861 = vmatprep.mubr.bf16.mxu0 0
  %1862 = vmatmul.mubr.bf16.gmra.mxu0 %v1624
  %v1863 = vpop.f32.mrf.mxu0
  %v1864 = vadd.f32 %v1307, %v1863
  %v1865 = vpop.f32.mrf.mxu0
  %v1866 = vpop.f32.mrf.mxu0
  %v1867 = vadd.f32 %v1310, %v1866
  %v1868 = vpop.f32.mrf.mxu0
  %1869 = vmatprep.mubr.bf16.mxu0 0
  %1870 = vmatmul.mubr.bf16.gmra.mxu0 %v1627
  %v1871 = vpop.f32.mrf.mxu0
  %v1872 = vadd.f32 %v1315, %v1871
  %v1873 = vpop.f32.mrf.mxu0
  %v1874 = vpop.f32.mrf.mxu0
  %v1875 = vadd.f32 %v1318, %v1874
  %v1876 = vpop.f32.mrf.mxu0
  %1877 = vmatprep.mubr.bf16.mxu0 0
  %1878 = vmatmul.mubr.bf16.gmra.mxu0 %v1630
  %v1879 = vpop.f32.mrf.mxu0
  %v1880 = vadd.f32 %v1323, %v1879
  %v1881 = vpop.f32.mrf.mxu0
  %v1882 = vpop.f32.mrf.mxu0
  %v1883 = vadd.f32 %v1326, %v1882
  %v1884 = vpop.f32.mrf.mxu0
  %1885 = vmatprep.mubr.bf16.mxu0 0
  %1886 = vmatmul.mubr.bf16.gmra.mxu0 %v1633
  %v1887 = vpop.f32.mrf.mxu0
  %v1888 = vadd.f32 %v1331, %v1887
  %v1889 = vpop.f32.mrf.mxu0
  %v1890 = vpop.f32.mrf.mxu0
  %v1891 = vadd.f32 %v1334, %v1890
  %v1892 = vpop.f32.mrf.mxu0
  %1893 = vmatprep.mubr.bf16.mxu0 0
  %1894 = vmatmul.mubr.bf16.gmra.mxu0 %v1636
  %v1895 = vpop.f32.mrf.mxu0
  %v1896 = vadd.f32 %v1339, %v1895
  %v1897 = vpop.f32.mrf.mxu0
  %v1898 = vpop.f32.mrf.mxu0
  %v1899 = vadd.f32 %v1342, %v1898
  %v1900 = vpop.f32.mrf.mxu0
  %1901 = vmatprep.mubr.bf16.mxu0 0
  %1902 = vmatmul.mubr.bf16.gmra.mxu0 %v1639
  %v1903 = vpop.f32.mrf.mxu0
  %v1904 = vadd.f32 %v1347, %v1903
  %v1905 = vpop.f32.mrf.mxu0
  %v1906 = vpop.f32.mrf.mxu0
  %v1907 = vadd.f32 %v1350, %v1906
  %v1908 = vpop.f32.mrf.mxu0
  %1909 = vmatprep.mubr.bf16.mxu0 0
  %1910 = vmatmul.mubr.bf16.gmra.mxu0 %v1642
  %v1911 = vpop.f32.mrf.mxu0
  %v1912 = vadd.f32 %v1355, %v1911
  %v1913 = vpop.f32.mrf.mxu0
  %v1914 = vpop.f32.mrf.mxu0
  %v1915 = vadd.f32 %v1358, %v1914
  %v1916 = vpop.f32.mrf.mxu0
  %1917 = vmatprep.mubr.bf16.mxu0 0
  %1918 = vmatmul.mubr.bf16.gmra.mxu0 %v1645
  %v1919 = vpop.f32.mrf.mxu0
  %v1920 = vadd.f32 %v1363, %v1919
  %v1921 = vpop.f32.mrf.mxu0
  %v1922 = vpop.f32.mrf.mxu0
  %v1923 = vadd.f32 %v1366, %v1922
  %v1924 = vpop.f32.mrf.mxu0
  %1925 = vmatprep.mubr.bf16.mxu0 0
  %1926 = vmatmul.mubr.bf16.gmra.mxu0 %v1648
  %v1927 = vpop.f32.mrf.mxu0
  %v1928 = vadd.f32 %v1371, %v1927
  %v1929 = vpop.f32.mrf.mxu0
  %v1930 = vpop.f32.mrf.mxu0
  %v1931 = vadd.f32 %v1374, %v1930
  %v1932 = vpop.f32.mrf.mxu0
  %1933 = vmatprep.mubr.bf16.mxu0 0
  %1934 = vmatmul.mubr.bf16.gmra.mxu0 %v1651
  %v1935 = vpop.f32.mrf.mxu0
  %v1936 = vadd.f32 %v1379, %v1935
  %v1937 = vpop.f32.mrf.mxu0
  %v1938 = vpop.f32.mrf.mxu0
  %v1939 = vadd.f32 %v1382, %v1938
  %v1940 = vpop.f32.mrf.mxu0
  %1941 = vdwg.mxu0
  %v1942 = vld [vmem:[%s0] sm:$0xe]
  %v1943 = vld [vmem:[%s0 + $0xc] sm:$0xe]
  %v1944 = vld [vmem:[%s0 + $0x18] sm:$0xe]
  %v1945 = vld [vmem:[%s0 + $0x24] sm:$0xe]
  %v1946 = vld [vmem:[%s0 + $0x30] sm:$0xe]
  %v1947 = vld [vmem:[%s0 + $0x3c] sm:$0xe]
  %v1948 = vld [vmem:[%s0 + $0x48] sm:$0xe]
  %v1949 = vld [vmem:[%s0 + $0x54] sm:$0xe]
  %v1950 = vld [vmem:[%s0 + $0x60] sm:$0xe]
  %v1951 = vld [vmem:[%s0 + $0x6c] sm:$0xe]
  %v1952 = vld [vmem:[%s0 + $0x78] sm:$0xe]
  %v1953 = vld [vmem:[%s0 + $0x84] sm:$0xe]
  %v1954 = vld [vmem:[%s0 + $0x90] sm:$0xe]
  %v1955 = vld [vmem:[%s0 + $0x9c] sm:$0xe]
  %v1956 = vld [vmem:[%s0 + $0xa8] sm:$0xe]
  %v1957 = vld [vmem:[%s0 + $0xb4] sm:$0xe]
  %v1958 = vld [vmem:[%s0 + $0xd8] sm:$0xe]
  %v1959 = vld [vmem:[%s0 + $0xe4] sm:$0xe]
  %v1960 = vld [vmem:[%s0 + $0xf0] sm:$0xe]
  %v1961 = vld [vmem:[%s0 + $0xfc] sm:$0xe]
  %v1962 = vld [vmem:[%s0 + $0x108] sm:$0xe]
  %v1963 = vld [vmem:[%s0 + $0x114] sm:$0xe]
  %v1964 = vld [vmem:[%s0 + $0x120] sm:$0xe]
  %v1965 = vld [vmem:[%s0 + $0x12c] sm:$0xe]
  %v1966 = vld [vmem:[%s0 + $0x138] sm:$0xe]
  %v1967 = vld [vmem:[%s0 + $0x144] sm:$0xe]
  %v1968 = vld [vmem:[%s0 + $0x150] sm:$0xe]
  %v1969 = vld [vmem:[%s0 + $0x15c] sm:$0xe]
  %v1970 = vld [vmem:[%s0 + $0x168] sm:$0xe]
  %v1971 = vld [vmem:[%s0 + $0x174] sm:$0xe]
  %v1972 = vld [vmem:[%s0 + $0x180] sm:$0xe]
  %v1973 = vld [vmem:[%s0 + $0x18c] sm:$0xe]
  %vm2038 = vcmask 1042432
  %vm2039 = vcmask 1046532
  %vm2040 = vmor %vm2038, %vm2039
  %v2041 = vrot.slane %v1942, 5
  %v2042 = vrot.slane %v2041, 4
  %v2043 = vrot.slane %v16, 5
  %v2044 = vsel %vm2040, %v2042, %v2043
  %v2045 = vrot.slane %v2043, 4
  %v2046 = vrot.slane %v83, 5
  %v2047 = vsel %vm2040, %v2045, %v2046
  %v2048 = vrot.slane %v1943, 5
  %v2049 = vrot.slane %v2048, 4
  %v2050 = vrot.slane %v18, 5
  %v2051 = vsel %vm2040, %v2049, %v2050
  %v2052 = vrot.slane %v2050, 4
  %v2053 = vrot.slane %v84, 5
  %v2054 = vsel %vm2040, %v2052, %v2053
  %v2055 = vrot.slane %v1944, 5
  %v2056 = vrot.slane %v2055, 4
  %v2057 = vrot.slane %v20, 5
  %v2058 = vsel %vm2040, %v2056, %v2057
  %v2059 = vrot.slane %v2057, 4
  %v2060 = vrot.slane %v85, 5
  %v2061 = vsel %vm2040, %v2059, %v2060
  %v2062 = vrot.slane %v1945, 5
  %v2063 = vrot.slane %v2062, 4
  %v2064 = vrot.slane %v22, 5
  %v2065 = vsel %vm2040, %v2063, %v2064
  %v2066 = vrot.slane %v2064, 4
  %v2067 = vrot.slane %v86, 5
  %v2068 = vsel %vm2040, %v2066, %v2067
  %v2069 = vrot.slane %v1946, 5
  %v2070 = vrot.slane %v2069, 4
  %v2071 = vrot.slane %v24, 5
  %v2072 = vsel %vm2040, %v2070, %v2071
  %v2073 = vrot.slane %v2071, 4
  %v2074 = vrot.slane %v87, 5
  %v2075 = vsel %vm2040, %v2073, %v2074
  %v2076 = vrot.slane %v1947, 5
  %v2077 = vrot.slane %v2076, 4
  %v2078 = vrot.slane %v26, 5
  %v2079 = vsel %vm2040, %v2077, %v2078
  %v2080 = vrot.slane %v2078, 4
  %v2081 = vrot.slane %v88, 5
  %v2082 = vsel %vm2040, %v2080, %v2081
  %v2083 = vrot.slane %v1948, 5
  %v2084 = vrot.slane %v2083, 4
  %v2085 = vrot.slane %v28, 5
  %v2086 = vsel %vm2040, %v2084, %v2085
  %v2087 = vrot.slane %v2085, 4
  %v2088 = vrot.slane %v89, 5
  %v2089 = vsel %vm2040, %v2087, %v2088
  %v2090 = vrot.slane %v1949, 5
  %v2091 = vrot.slane %v2090, 4
  %v2092 = vrot.slane %v30, 5
  %v2093 = vsel %vm2040, %v2091, %v2092
  %v2094 = vrot.slane %v2092, 4
  %v2095 = vrot.slane %v90, 5
  %v2096 = vsel %vm2040, %v2094, %v2095
  %v2097 = vrot.slane %v1950, 5
  %v2098 = vrot.slane %v2097, 4
  %v2099 = vrot.slane %v32, 5
  %v2100 = vsel %vm2040, %v2098, %v2099
  %v2101 = vrot.slane %v2099, 4
  %v2102 = vrot.slane %v91, 5
  %v2103 = vsel %vm2040, %v2101, %v2102
  %v2104 = vrot.slane %v1951, 5
  %v2105 = vrot.slane %v2104, 4
  %v2106 = vrot.slane %v34, 5
  %v2107 = vsel %vm2040, %v2105, %v2106
  %v2108 = vrot.slane %v2106, 4
  %v2109 = vrot.slane %v92, 5
  %v2110 = vsel %vm2040, %v2108, %v2109
  %v2111 = vrot.slane %v1952, 5
  %v2112 = vrot.slane %v2111, 4
  %v2113 = vrot.slane %v36, 5
  %v2114 = vsel %vm2040, %v2112, %v2113
  %v2115 = vrot.slane %v2113, 4
  %v2116 = vrot.slane %v93, 5
  %v2117 = vsel %vm2040, %v2115, %v2116
  %v2118 = vrot.slane %v1953, 5
  %v2119 = vrot.slane %v2118, 4
  %v2120 = vrot.slane %v38, 5
  %v2121 = vsel %vm2040, %v2119, %v2120
  %v2122 = vrot.slane %v2120, 4
  %v2123 = vrot.slane %v94, 5
  %v2124 = vsel %vm2040, %v2122, %v2123
  %v2125 = vrot.slane %v1954, 5
  %v2126 = vrot.slane %v2125, 4
  %v2127 = vrot.slane %v40, 5
  %v2128 = vsel %vm2040, %v2126, %v2127
  %v2129 = vrot.slane %v2127, 4
  %v2130 = vrot.slane %v95, 5
  %v2131 = vsel %vm2040, %v2129, %v2130
  %v2132 = vrot.slane %v1955, 5
  %v2133 = vrot.slane %v2132, 4
  %v2134 = vrot.slane %v42, 5
  %v2135 = vsel %vm2040, %v2133, %v2134
  %v2136 = vrot.slane %v2134, 4
  %v2137 = vrot.slane %v96, 5
  %v2138 = vsel %vm2040, %v2136, %v2137
  %v2139 = vrot.slane %v1956, 5
  %v2140 = vrot.slane %v2139, 4
  %v2141 = vrot.slane %v44, 5
  %v2142 = vsel %vm2040, %v2140, %v2141
  %v2143 = vrot.slane %v2141, 4
  %v2144 = vrot.slane %v97, 5
  %v2145 = vsel %vm2040, %v2143, %v2144
  %v2146 = vrot.slane %v1957, 5
  %v2147 = vrot.slane %v2146, 4
  %v2148 = vrot.slane %v46, 5
  %v2149 = vsel %vm2040, %v2147, %v2148
  %v2150 = vrot.slane %v2148, 4
  %v2151 = vrot.slane %v98, 5
  %v2152 = vsel %vm2040, %v2150, %v2151
  %v2153 = vrot.slane %v1958, 5
  %v2154 = vrot.slane %v2153, 4
  %v2155 = vrot.slane %v48, 5
  %v2156 = vsel %vm2040, %v2154, %v2155
  %v2157 = vrot.slane %v2155, 4
  %v2158 = vrot.slane %v99, 5
  %v2159 = vsel %vm2040, %v2157, %v2158
  %v2160 = vrot.slane %v1959, 5
  %v2161 = vrot.slane %v2160, 4
  %v2162 = vrot.slane %v50, 5
  %v2163 = vsel %vm2040, %v2161, %v2162
  %v2164 = vrot.slane %v2162, 4
  %v2165 = vrot.slane %v100, 5
  %v2166 = vsel %vm2040, %v2164, %v2165
  %v2167 = vrot.slane %v1960, 5
  %v2168 = vrot.slane %v2167, 4
  %v2169 = vrot.slane %v52, 5
  %v2170 = vsel %vm2040, %v2168, %v2169
  %v2171 = vrot.slane %v2169, 4
  %v2172 = vrot.slane %v101, 5
  %v2173 = vsel %vm2040, %v2171, %v2172
  %v2174 = vrot.slane %v1961, 5
  %v2175 = vrot.slane %v2174, 4
  %v2176 = vrot.slane %v54, 5
  %v2177 = vsel %vm2040, %v2175, %v2176
  %v2178 = vrot.slane %v2176, 4
  %v2179 = vrot.slane %v102, 5
  %v2180 = vsel %vm2040, %v2178, %v2179
  %v2181 = vrot.slane %v1962, 5
  %v2182 = vrot.slane %v2181, 4
  %v2183 = vrot.slane %v56, 5
  %v2184 = vsel %vm2040, %v2182, %v2183
  %v2185 = vrot.slane %v2183, 4
  %v2186 = vrot.slane %v103, 5
  %v2187 = vsel %vm2040, %v2185, %v2186
  %v2188 = vrot.slane %v1963, 5
  %v2189 = vrot.slane %v2188, 4
  %v2190 = vrot.slane %v58, 5
  %v2191 = vsel %vm2040, %v2189, %v2190
  %v2192 = vrot.slane %v2190, 4
  %v2193 = vrot.slane %v104, 5
  %v2194 = vsel %vm2040, %v2192, %v2193
  %v2195 = vrot.slane %v1964, 5
  %v2196 = vrot.slane %v2195, 4
  %v2197 = vrot.slane %v60, 5
  %v2198 = vsel %vm2040, %v2196, %v2197
  %v2199 = vrot.slane %v2197, 4
  %v2200 = vrot.slane %v105, 5
  %v2201 = vsel %vm2040, %v2199, %v2200
  %v2202 = vrot.slane %v1965, 5
  %v2203 = vrot.slane %v2202, 4
  %v2204 = vrot.slane %v62, 5
  %v2205 = vsel %vm2040, %v2203, %v2204
  %v2206 = vrot.slane %v2204, 4
  %v2207 = vrot.slane %v106, 5
  %v2208 = vsel %vm2040, %v2206, %v2207
  %v2209 = vrot.slane %v1966, 5
  %v2210 = vrot.slane %v2209, 4
  %v2211 = vrot.slane %v64, 5
  %v2212 = vsel %vm2040, %v2210, %v2211
  %v2213 = vrot.slane %v2211, 4
  %v2214 = vrot.slane %v107, 5
  %v2215 = vsel %vm2040, %v2213, %v2214
  %v2216 = vrot.slane %v1967, 5
  %v2217 = vrot.slane %v2216, 4
  %v2218 = vrot.slane %v66, 5
  %v2219 = vsel %vm2040, %v2217, %v2218
  %v2220 = vrot.slane %v2218, 4
  %v2221 = vrot.slane %v108, 5
  %v2222 = vsel %vm2040, %v2220, %v2221
  %v2223 = vrot.slane %v1968, 5
  %v2224 = vrot.slane %v2223, 4
  %v2225 = vrot.slane %v68, 5
  %v2226 = vsel %vm2040, %v2224, %v2225
  %v2227 = vrot.slane %v2225, 4
  %v2228 = vrot.slane %v109, 5
  %v2229 = vsel %vm2040, %v2227, %v2228
  %v2230 = vrot.slane %v1969, 5
  %v2231 = vrot.slane %v2230, 4
  %v2232 = vrot.slane %v70, 5
  %v2233 = vsel %vm2040, %v2231, %v2232
  %v2234 = vrot.slane %v2232, 4
  %v2235 = vrot.slane %v110, 5
  %v2236 = vsel %vm2040, %v2234, %v2235
  %v2237 = vrot.slane %v1970, 5
  %v2238 = vrot.slane %v2237, 4
  %v2239 = vrot.slane %v72, 5
  %v2240 = vsel %vm2040, %v2238, %v2239
  %v2241 = vrot.slane %v2239, 4
  %v2242 = vrot.slane %v111, 5
  %v2243 = vsel %vm2040, %v2241, %v2242
  %v2244 = vrot.slane %v1971, 5
  %v2245 = vrot.slane %v2244, 4
  %v2246 = vrot.slane %v74, 5
  %v2247 = vsel %vm2040, %v2245, %v2246
  %v2248 = vrot.slane %v2246, 4
  %v2249 = vrot.slane %v112, 5
  %v2250 = vsel %vm2040, %v2248, %v2249
  %v2251 = vrot.slane %v1972, 5
  %v2252 = vrot.slane %v2251, 4
  %v2253 = vrot.slane %v76, 5
  %v2254 = vsel %vm2040, %v2252, %v2253
  %v2255 = vrot.slane %v2253, 4
  %v2256 = vrot.slane %v113, 5
  %v2257 = vsel %vm2040, %v2255, %v2256
  %v2258 = vrot.slane %v1973, 5
  %v2259 = vrot.slane %v2258, 4
  %v2260 = vrot.slane %v78, 5
  %v2261 = vsel %vm2040, %v2259, %v2260
  %v2262 = vrot.slane %v2260, 4
  %v2263 = vrot.slane %v114, 5
  %v2264 = vsel %vm2040, %v2262, %v2263
  %s2265 = scalar_lea.vmem %s1, 32
  %v2266 = vld [vmem:[%s2265] sm:$0xf]
  %v2267 = vld [vmem:[%s2265 + $0x4] sm:$0xf]
  %v2268 = vld [vmem:[%s2265 + $0x8] sm:$0xf]
  %v2269 = vld [vmem:[%s2265 + $0xc] sm:$0xf]
  %v2270 = vunpack.c.l.b16 %v2044
  %v2271 = vunpack.c.l.b16 %v2047
  %v2272 = vunpack.c.l.b16 %v2051
  %v2273 = vunpack.c.l.b16 %v2054
  %v2274 = vunpack.c.l.b16 %v2058
  %v2275 = vunpack.c.l.b16 %v2061
  %v2276 = vunpack.c.l.b16 %v2065
  %v2277 = vunpack.c.l.b16 %v2068
  %v2278 = vunpack.c.l.b16 %v2072
  %v2279 = vunpack.c.l.b16 %v2075
  %v2280 = vunpack.c.l.b16 %v2079
  %v2281 = vunpack.c.l.b16 %v2082
  %v2282 = vunpack.c.l.b16 %v2086
  %v2283 = vunpack.c.l.b16 %v2089
  %v2284 = vunpack.c.l.b16 %v2093
  %v2285 = vunpack.c.l.b16 %v2096
  %v2286 = vunpack.c.l.b16 %v2100
  %v2287 = vunpack.c.l.b16 %v2103
  %v2288 = vunpack.c.l.b16 %v2107
  %v2289 = vunpack.c.l.b16 %v2110
  %v2290 = vunpack.c.l.b16 %v2114
  %v2291 = vunpack.c.l.b16 %v2117
  %v2292 = vunpack.c.l.b16 %v2121
  %v2293 = vunpack.c.l.b16 %v2124
  %v2294 = vunpack.c.l.b16 %v2128
  %v2295 = vunpack.c.l.b16 %v2131
  %v2296 = vunpack.c.l.b16 %v2135
  %v2297 = vunpack.c.l.b16 %v2138
  %v2298 = vunpack.c.l.b16 %v2142
  %v2299 = vunpack.c.l.b16 %v2145
  %v2300 = vunpack.c.l.b16 %v2149
  %v2301 = vunpack.c.l.b16 %v2152
  %v2302 = vunpack.c.l.b16 %v2156
  %v2303 = vunpack.c.l.b16 %v2159
  %v2304 = vunpack.c.l.b16 %v2163
  %v2305 = vunpack.c.l.b16 %v2166
  %v2306 = vunpack.c.l.b16 %v2170
  %v2307 = vunpack.c.l.b16 %v2173
  %v2308 = vunpack.c.l.b16 %v2177
  %v2309 = vunpack.c.l.b16 %v2180
  %v2310 = vunpack.c.l.b16 %v2184
  %v2311 = vunpack.c.l.b16 %v2187
  %v2312 = vunpack.c.l.b16 %v2191
  %v2313 = vunpack.c.l.b16 %v2194
  %v2314 = vunpack.c.l.b16 %v2198
  %v2315 = vunpack.c.l.b16 %v2201
  %v2316 = vunpack.c.l.b16 %v2205
  %v2317 = vunpack.c.l.b16 %v2208
  %v2318 = vunpack.c.l.b16 %v2212
  %v2319 = vunpack.c.l.b16 %v2215
  %v2320 = vunpack.c.l.b16 %v2219
  %v2321 = vunpack.c.l.b16 %v2222
  %v2322 = vunpack.c.l.b16 %v2226
  %v2323 = vunpack.c.l.b16 %v2229
  %v2324 = vunpack.c.l.b16 %v2233
  %v2325 = vunpack.c.l.b16 %v2236
  %v2326 = vunpack.c.l.b16 %v2240
  %v2327 = vunpack.c.l.b16 %v2243
  %v2328 = vunpack.c.l.b16 %v2247
  %v2329 = vunpack.c.l.b16 %v2250
  %v2330 = vunpack.c.l.b16 %v2254
  %v2331 = vunpack.c.l.b16 %v2257
  %v2332 = vunpack.c.l.b16 %v2261
  %v2333 = vunpack.c.l.b16 %v2264
  %v2334 = vpack.c.b16 %v2271, %v2270
  %v2335 = vpack.c.b16 %v2273, %v2272
  %v2336 = vpack.c.b16 %v2275, %v2274
  %v2337 = vpack.c.b16 %v2277, %v2276
  %v2338 = vpack.c.b16 %v2279, %v2278
  %v2339 = vpack.c.b16 %v2281, %v2280
  %v2340 = vpack.c.b16 %v2283, %v2282
  %v2341 = vpack.c.b16 %v2285, %v2284
  %v2342 = vpack.c.b16 %v2287, %v2286
  %v2343 = vpack.c.b16 %v2289, %v2288
  %v2344 = vpack.c.b16 %v2291, %v2290
  %v2345 = vpack.c.b16 %v2293, %v2292
  %v2346 = vpack.c.b16 %v2295, %v2294
  %v2347 = vpack.c.b16 %v2297, %v2296
  %v2348 = vpack.c.b16 %v2299, %v2298
  %v2349 = vpack.c.b16 %v2301, %v2300
  %v2350 = vpack.c.b16 %v2303, %v2302
  %v2351 = vpack.c.b16 %v2305, %v2304
  %v2352 = vpack.c.b16 %v2307, %v2306
  %v2353 = vpack.c.b16 %v2309, %v2308
  %v2354 = vpack.c.b16 %v2311, %v2310
  %v2355 = vpack.c.b16 %v2313, %v2312
  %v2356 = vpack.c.b16 %v2315, %v2314
  %v2357 = vpack.c.b16 %v2317, %v2316
  %v2358 = vpack.c.b16 %v2319, %v2318
  %v2359 = vpack.c.b16 %v2321, %v2320
  %v2360 = vpack.c.b16 %v2323, %v2322
  %v2361 = vpack.c.b16 %v2325, %v2324
  %v2362 = vpack.c.b16 %v2327, %v2326
  %v2363 = vpack.c.b16 %v2329, %v2328
  %v2364 = vpack.c.b16 %v2331, %v2330
  %v2365 = vpack.c.b16 %v2333, %v2332
  %v2370 = vunpack.c.l.b16 %v2266
  %v2371 = vunpack.c.l.b16 %v2267
  %v2372 = vunpack.c.l.b16 %v2268
  %v2373 = vunpack.c.l.b16 %v2269
  %v2374 = vpack.c.b16 %v2371, %v2370
  %v2375 = vpack.c.b16 %v2373, %v2372
  %v2379 = vsel %vm999, %v2334, 0
  %v2382 = vsel %vm999, %v2335, 0
  %v2385 = vsel %vm999, %v2336, 0
  %v2388 = vsel %vm999, %v2337, 0
  %v2391 = vsel %vm999, %v2338, 0
  %v2394 = vsel %vm999, %v2339, 0
  %v2397 = vsel %vm999, %v2340, 0
  %v2400 = vsel %vm999, %v2341, 0
  %v2403 = vsel %vm999, %v2342, 0
  %v2406 = vsel %vm999, %v2343, 0
  %v2409 = vsel %vm999, %v2344, 0
  %v2412 = vsel %vm999, %v2345, 0
  %v2415 = vsel %vm999, %v2346, 0
  %v2418 = vsel %vm999, %v2347, 0
  %v2421 = vsel %vm999, %v2348, 0
  %v2424 = vsel %vm999, %v2349, 0
  %v2427 = vsel %vm999, %v2350, 0
  %v2430 = vsel %vm999, %v2351, 0
  %v2433 = vsel %vm999, %v2352, 0
  %v2436 = vsel %vm999, %v2353, 0
  %v2439 = vsel %vm999, %v2354, 0
  %v2442 = vsel %vm999, %v2355, 0
  %v2445 = vsel %vm999, %v2356, 0
  %v2448 = vsel %vm999, %v2357, 0
  %v2451 = vsel %vm999, %v2358, 0
  %v2454 = vsel %vm999, %v2359, 0
  %v2457 = vsel %vm999, %v2360, 0
  %v2460 = vsel %vm999, %v2361, 0
  %v2463 = vsel %vm999, %v2362, 0
  %v2466 = vsel %vm999, %v2363, 0
  %v2469 = vsel %vm999, %v2364, 0
  %v2472 = vsel %vm999, %v2365, 0
  %2474 = vmatprep.subr.bf16.mxu0 0
  %2475 = vmatpush1.bf16.msra.mxu0 0
  %2476 = vmatprep.subr.bf16.mxu0 0
  %2477 = vmatpush1.bf16.msra.mxu0 0
  %2478 = vmatprep.subr.bf16.mxu0 0
  %2479 = vmatpush1.bf16.msra.mxu0 0
  %2480 = vmatprep.subr.bf16.mxu0 0
  %2481 = vmatpush1.bf16.msra.mxu0 0
  %2482 = vmatprep.subr.bf16.mxu0 0
  %2483 = vmatpush1.bf16.msra.mxu0 0
  %2484 = vmatprep.subr.bf16.mxu0 0
  %2485 = vmatpush1.bf16.msra.mxu0 0
  %2486 = vmatprep.subr.bf16.mxu0 0
  %2487 = vmatpush1.bf16.msra.mxu0 %v2375
  %2488 = vmatprep.subr.bf16.mxu0 0
  %2489 = vmatpush1.bf16.msra.mxu0 %v2374
  %2490 = vmatprep.subr.bf16.mxu0 0
  %2491 = vmatpush2.bf16.msra.mxu0 0
  %2492 = vmatprep.subr.bf16.mxu0 0
  %2493 = vmatpush2.bf16.msra.mxu0 0
  %2494 = vmatprep.subr.bf16.mxu0 0
  %2495 = vmatpush2.bf16.msra.mxu0 0
  %2496 = vmatprep.subr.bf16.mxu0 0
  %2497 = vmatpush2.bf16.msra.mxu0 0
  %2498 = vmatprep.subr.bf16.mxu0 0
  %2499 = vmatpush2.bf16.msra.mxu0 0
  %2500 = vmatprep.subr.bf16.mxu0 0
  %2501 = vmatpush2.bf16.msra.mxu0 0
  %2502 = vmatprep.subr.bf16.mxu0 0
  %2503 = vmatpush2.bf16.msra.mxu0 0
  %2504 = vmatprep.subr.bf16.mxu0 0
  %2505 = vmatpush2.bf16.msra.mxu0 0
  %2506 = vmatprep.mubr.bf16.mxu0 0
  %2507 = vmatmul.mubr.bf16.gmra.mxu0 %v2379
  %v2508 = vpop.f32.mrf.mxu0
  %v2509 = vadd.f32 0.0, %v2508
  %v2510 = vpop.f32.mrf.mxu0
  %v2511 = vpop.f32.mrf.mxu0
  %v2512 = vadd.f32 0.0, %v2511
  %v2513 = vpop.f32.mrf.mxu0
  %2514 = vmatprep.mubr.bf16.mxu0 0
  %2515 = vmatmul.mubr.bf16.gmra.mxu0 %v2382
  %v2516 = vpop.f32.mrf.mxu0
  %v2517 = vadd.f32 0.0, %v2516
  %v2518 = vpop.f32.mrf.mxu0
  %v2519 = vpop.f32.mrf.mxu0
  %v2520 = vadd.f32 0.0, %v2519
  %v2521 = vpop.f32.mrf.mxu0
  %2522 = vmatprep.mubr.bf16.mxu0 0
  %2523 = vmatmul.mubr.bf16.gmra.mxu0 %v2385
  %v2524 = vpop.f32.mrf.mxu0
  %v2525 = vadd.f32 0.0, %v2524
  %v2526 = vpop.f32.mrf.mxu0
  %v2527 = vpop.f32.mrf.mxu0
  %v2528 = vadd.f32 0.0, %v2527
  %v2529 = vpop.f32.mrf.mxu0
  %2530 = vmatprep.mubr.bf16.mxu0 0
  %2531 = vmatmul.mubr.bf16.gmra.mxu0 %v2388
  %v2532 = vpop.f32.mrf.mxu0
  %v2533 = vadd.f32 0.0, %v2532
  %v2534 = vpop.f32.mrf.mxu0
  %v2535 = vpop.f32.mrf.mxu0
  %v2536 = vadd.f32 0.0, %v2535
  %v2537 = vpop.f32.mrf.mxu0
  %2538 = vmatprep.mubr.bf16.mxu0 0
  %2539 = vmatmul.mubr.bf16.gmra.mxu0 %v2391
  %v2540 = vpop.f32.mrf.mxu0
  %v2541 = vadd.f32 0.0, %v2540
  %v2542 = vpop.f32.mrf.mxu0
  %v2543 = vpop.f32.mrf.mxu0
  %v2544 = vadd.f32 0.0, %v2543
  %v2545 = vpop.f32.mrf.mxu0
  %2546 = vmatprep.mubr.bf16.mxu0 0
  %2547 = vmatmul.mubr.bf16.gmra.mxu0 %v2394
  %v2548 = vpop.f32.mrf.mxu0
  %v2549 = vadd.f32 0.0, %v2548
  %v2550 = vpop.f32.mrf.mxu0
  %v2551 = vpop.f32.mrf.mxu0
  %v2552 = vadd.f32 0.0, %v2551
  %v2553 = vpop.f32.mrf.mxu0
  %2554 = vmatprep.mubr.bf16.mxu0 0
  %2555 = vmatmul.mubr.bf16.gmra.mxu0 %v2397
  %v2556 = vpop.f32.mrf.mxu0
  %v2557 = vadd.f32 0.0, %v2556
  %v2558 = vpop.f32.mrf.mxu0
  %v2559 = vpop.f32.mrf.mxu0
  %v2560 = vadd.f32 0.0, %v2559
  %v2561 = vpop.f32.mrf.mxu0
  %2562 = vmatprep.mubr.bf16.mxu0 0
  %2563 = vmatmul.mubr.bf16.gmra.mxu0 %v2400
  %v2564 = vpop.f32.mrf.mxu0
  %v2565 = vadd.f32 0.0, %v2564
  %v2566 = vpop.f32.mrf.mxu0
  %v2567 = vpop.f32.mrf.mxu0
  %v2568 = vadd.f32 0.0, %v2567
  %v2569 = vpop.f32.mrf.mxu0
  %2570 = vmatprep.mubr.bf16.mxu0 0
  %2571 = vmatmul.mubr.bf16.gmra.mxu0 %v2403
  %v2572 = vpop.f32.mrf.mxu0
  %v2573 = vadd.f32 0.0, %v2572
  %v2574 = vpop.f32.mrf.mxu0
  %v2575 = vpop.f32.mrf.mxu0
  %v2576 = vadd.f32 0.0, %v2575
  %v2577 = vpop.f32.mrf.mxu0
  %2578 = vmatprep.mubr.bf16.mxu0 0
  %2579 = vmatmul.mubr.bf16.gmra.mxu0 %v2406
  %v2580 = vpop.f32.mrf.mxu0
  %v2581 = vadd.f32 0.0, %v2580
  %v2582 = vpop.f32.mrf.mxu0
  %v2583 = vpop.f32.mrf.mxu0
  %v2584 = vadd.f32 0.0, %v2583
  %v2585 = vpop.f32.mrf.mxu0
  %2586 = vmatprep.mubr.bf16.mxu0 0
  %2587 = vmatmul.mubr.bf16.gmra.mxu0 %v2409
  %v2588 = vpop.f32.mrf.mxu0
  %v2589 = vadd.f32 0.0, %v2588
  %v2590 = vpop.f32.mrf.mxu0
  %v2591 = vpop.f32.mrf.mxu0
  %v2592 = vadd.f32 0.0, %v2591
  %v2593 = vpop.f32.mrf.mxu0
  %2594 = vmatprep.mubr.bf16.mxu0 0
  %2595 = vmatmul.mubr.bf16.gmra.mxu0 %v2412
  %v2596 = vpop.f32.mrf.mxu0
  %v2597 = vadd.f32 0.0, %v2596
  %v2598 = vpop.f32.mrf.mxu0
  %v2599 = vpop.f32.mrf.mxu0
  %v2600 = vadd.f32 0.0, %v2599
  %v2601 = vpop.f32.mrf.mxu0
  %2602 = vmatprep.mubr.bf16.mxu0 0
  %2603 = vmatmul.mubr.bf16.gmra.mxu0 %v2415
  %v2604 = vpop.f32.mrf.mxu0
  %v2605 = vadd.f32 0.0, %v2604
  %v2606 = vpop.f32.mrf.mxu0
  %v2607 = vpop.f32.mrf.mxu0
  %v2608 = vadd.f32 0.0, %v2607
  %v2609 = vpop.f32.mrf.mxu0
  %2610 = vmatprep.mubr.bf16.mxu0 0
  %2611 = vmatmul.mubr.bf16.gmra.mxu0 %v2418
  %v2612 = vpop.f32.mrf.mxu0
  %v2613 = vadd.f32 0.0, %v2612
  %v2614 = vpop.f32.mrf.mxu0
  %v2615 = vpop.f32.mrf.mxu0
  %v2616 = vadd.f32 0.0, %v2615
  %v2617 = vpop.f32.mrf.mxu0
  %2618 = vmatprep.mubr.bf16.mxu0 0
  %2619 = vmatmul.mubr.bf16.gmra.mxu0 %v2421
  %v2620 = vpop.f32.mrf.mxu0
  %v2621 = vadd.f32 0.0, %v2620
  %v2622 = vpop.f32.mrf.mxu0
  %v2623 = vpop.f32.mrf.mxu0
  %v2624 = vadd.f32 0.0, %v2623
  %v2625 = vpop.f32.mrf.mxu0
  %2626 = vmatprep.mubr.bf16.mxu0 0
  %2627 = vmatmul.mubr.bf16.gmra.mxu0 %v2424
  %v2628 = vpop.f32.mrf.mxu0
  %v2629 = vadd.f32 0.0, %v2628
  %v2630 = vpop.f32.mrf.mxu0
  %v2631 = vpop.f32.mrf.mxu0
  %v2632 = vadd.f32 0.0, %v2631
  %v2633 = vpop.f32.mrf.mxu0
  %2634 = vmatprep.mubr.bf16.mxu0 0
  %2635 = vmatmul.mubr.bf16.gmra.mxu0 %v2427
  %v2636 = vpop.f32.mrf.mxu0
  %v2637 = vadd.f32 0.0, %v2636
  %v2638 = vpop.f32.mrf.mxu0
  %v2639 = vpop.f32.mrf.mxu0
  %v2640 = vadd.f32 0.0, %v2639
  %v2641 = vpop.f32.mrf.mxu0
  %2642 = vmatprep.mubr.bf16.mxu0 0
  %2643 = vmatmul.mubr.bf16.gmra.mxu0 %v2430
  %v2644 = vpop.f32.mrf.mxu0
  %v2645 = vadd.f32 0.0, %v2644
  %v2646 = vpop.f32.mrf.mxu0
  %v2647 = vpop.f32.mrf.mxu0
  %v2648 = vadd.f32 0.0, %v2647
  %v2649 = vpop.f32.mrf.mxu0
  %2650 = vmatprep.mubr.bf16.mxu0 0
  %2651 = vmatmul.mubr.bf16.gmra.mxu0 %v2433
  %v2652 = vpop.f32.mrf.mxu0
  %v2653 = vadd.f32 0.0, %v2652
  %v2654 = vpop.f32.mrf.mxu0
  %v2655 = vpop.f32.mrf.mxu0
  %v2656 = vadd.f32 0.0, %v2655
  %v2657 = vpop.f32.mrf.mxu0
  %2658 = vmatprep.mubr.bf16.mxu0 0
  %2659 = vmatmul.mubr.bf16.gmra.mxu0 %v2436
  %v2660 = vpop.f32.mrf.mxu0
  %v2661 = vadd.f32 0.0, %v2660
  %v2662 = vpop.f32.mrf.mxu0
  %v2663 = vpop.f32.mrf.mxu0
  %v2664 = vadd.f32 0.0, %v2663
  %v2665 = vpop.f32.mrf.mxu0
  %2666 = vmatprep.mubr.bf16.mxu0 0
  %2667 = vmatmul.mubr.bf16.gmra.mxu0 %v2439
  %v2668 = vpop.f32.mrf.mxu0
  %v2669 = vadd.f32 0.0, %v2668
  %v2670 = vpop.f32.mrf.mxu0
  %v2671 = vpop.f32.mrf.mxu0
  %v2672 = vadd.f32 0.0, %v2671
  %v2673 = vpop.f32.mrf.mxu0
  %2674 = vmatprep.mubr.bf16.mxu0 0
  %2675 = vmatmul.mubr.bf16.gmra.mxu0 %v2442
  %v2676 = vpop.f32.mrf.mxu0
  %v2677 = vadd.f32 0.0, %v2676
  %v2678 = vpop.f32.mrf.mxu0
  %v2679 = vpop.f32.mrf.mxu0
  %v2680 = vadd.f32 0.0, %v2679
  %v2681 = vpop.f32.mrf.mxu0
  %2682 = vmatprep.mubr.bf16.mxu0 0
  %2683 = vmatmul.mubr.bf16.gmra.mxu0 %v2445
  %v2684 = vpop.f32.mrf.mxu0
  %v2685 = vadd.f32 0.0, %v2684
  %v2686 = vpop.f32.mrf.mxu0
  %v2687 = vpop.f32.mrf.mxu0
  %v2688 = vadd.f32 0.0, %v2687
  %v2689 = vpop.f32.mrf.mxu0
  %2690 = vmatprep.mubr.bf16.mxu0 0
  %2691 = vmatmul.mubr.bf16.gmra.mxu0 %v2448
  %v2692 = vpop.f32.mrf.mxu0
  %v2693 = vadd.f32 0.0, %v2692
  %v2694 = vpop.f32.mrf.mxu0
  %v2695 = vpop.f32.mrf.mxu0
  %v2696 = vadd.f32 0.0, %v2695
  %v2697 = vpop.f32.mrf.mxu0
  %2698 = vmatprep.mubr.bf16.mxu0 0
  %2699 = vmatmul.mubr.bf16.gmra.mxu0 %v2451
  %v2700 = vpop.f32.mrf.mxu0
  %v2701 = vadd.f32 0.0, %v2700
  %v2702 = vpop.f32.mrf.mxu0
  %v2703 = vpop.f32.mrf.mxu0
  %v2704 = vadd.f32 0.0, %v2703
  %v2705 = vpop.f32.mrf.mxu0
  %2706 = vmatprep.mubr.bf16.mxu0 0
  %2707 = vmatmul.mubr.bf16.gmra.mxu0 %v2454
  %v2708 = vpop.f32.mrf.mxu0
  %v2709 = vadd.f32 0.0, %v2708
  %v2710 = vpop.f32.mrf.mxu0
  %v2711 = vpop.f32.mrf.mxu0
  %v2712 = vadd.f32 0.0, %v2711
  %v2713 = vpop.f32.mrf.mxu0
  %2714 = vmatprep.mubr.bf16.mxu0 0
  %2715 = vmatmul.mubr.bf16.gmra.mxu0 %v2457
  %v2716 = vpop.f32.mrf.mxu0
  %v2717 = vadd.f32 0.0, %v2716
  %v2718 = vpop.f32.mrf.mxu0
  %v2719 = vpop.f32.mrf.mxu0
  %v2720 = vadd.f32 0.0, %v2719
  %v2721 = vpop.f32.mrf.mxu0
  %2722 = vmatprep.mubr.bf16.mxu0 0
  %2723 = vmatmul.mubr.bf16.gmra.mxu0 %v2460
  %v2724 = vpop.f32.mrf.mxu0
  %v2725 = vadd.f32 0.0, %v2724
  %v2726 = vpop.f32.mrf.mxu0
  %v2727 = vpop.f32.mrf.mxu0
  %v2728 = vadd.f32 0.0, %v2727
  %v2729 = vpop.f32.mrf.mxu0
  %2730 = vmatprep.mubr.bf16.mxu0 0
  %2731 = vmatmul.mubr.bf16.gmra.mxu0 %v2463
  %v2732 = vpop.f32.mrf.mxu0
  %v2733 = vadd.f32 0.0, %v2732
  %v2734 = vpop.f32.mrf.mxu0
  %v2735 = vpop.f32.mrf.mxu0
  %v2736 = vadd.f32 0.0, %v2735
  %v2737 = vpop.f32.mrf.mxu0
  %2738 = vmatprep.mubr.bf16.mxu0 0
  %2739 = vmatmul.mubr.bf16.gmra.mxu0 %v2466
  %v2740 = vpop.f32.mrf.mxu0
  %v2741 = vadd.f32 0.0, %v2740
  %v2742 = vpop.f32.mrf.mxu0
  %v2743 = vpop.f32.mrf.mxu0
  %v2744 = vadd.f32 0.0, %v2743
  %v2745 = vpop.f32.mrf.mxu0
  %2746 = vmatprep.mubr.bf16.mxu0 0
  %2747 = vmatmul.mubr.bf16.gmra.mxu0 %v2469
  %v2748 = vpop.f32.mrf.mxu0
  %v2749 = vadd.f32 0.0, %v2748
  %v2750 = vpop.f32.mrf.mxu0
  %v2751 = vpop.f32.mrf.mxu0
  %v2752 = vadd.f32 0.0, %v2751
  %v2753 = vpop.f32.mrf.mxu0
  %2754 = vmatprep.mubr.bf16.mxu0 0
  %2755 = vmatmul.mubr.bf16.gmra.mxu0 %v2472
  %v2756 = vpop.f32.mrf.mxu0
  %v2757 = vadd.f32 0.0, %v2756
  %v2758 = vpop.f32.mrf.mxu0
  %v2759 = vpop.f32.mrf.mxu0
  %v2760 = vadd.f32 0.0, %v2759
  %v2761 = vpop.f32.mrf.mxu0
  %2762 = vdwg.mxu0
  %v2763 = vadd.f32 %v1688, %v2509
  %v2764 = vadd.f32 %v1691, %v2512
  %v2765 = vadd.f32 %v1696, %v2517
  %v2766 = vadd.f32 %v1699, %v2520
  %v2767 = vadd.f32 %v1704, %v2525
  %v2768 = vadd.f32 %v1707, %v2528
  %v2769 = vadd.f32 %v1712, %v2533
  %v2770 = vadd.f32 %v1715, %v2536
  %v2771 = vadd.f32 %v1720, %v2541
  %v2772 = vadd.f32 %v1723, %v2544
  %v2773 = vadd.f32 %v1728, %v2549
  %v2774 = vadd.f32 %v1731, %v2552
  %v2775 = vadd.f32 %v1736, %v2557
  %v2776 = vadd.f32 %v1739, %v2560
  %v2777 = vadd.f32 %v1744, %v2565
  %v2778 = vadd.f32 %v1747, %v2568
  %v2779 = vadd.f32 %v1752, %v2573
  %v2780 = vadd.f32 %v1755, %v2576
  %v2781 = vadd.f32 %v1760, %v2581
  %v2782 = vadd.f32 %v1763, %v2584
  %v2783 = vadd.f32 %v1768, %v2589
  %v2784 = vadd.f32 %v1771, %v2592
  %v2785 = vadd.f32 %v1776, %v2597
  %v2786 = vadd.f32 %v1779, %v2600
  %v2787 = vadd.f32 %v1784, %v2605
  %v2788 = vadd.f32 %v1787, %v2608
  %v2789 = vadd.f32 %v1792, %v2613
  %v2790 = vadd.f32 %v1795, %v2616
  %v2791 = vadd.f32 %v1800, %v2621
  %v2792 = vadd.f32 %v1803, %v2624
  %v2793 = vadd.f32 %v1808, %v2629
  %v2794 = vadd.f32 %v1811, %v2632
  %v2795 = vadd.f32 %v1816, %v2637
  %v2796 = vadd.f32 %v1819, %v2640
  %v2797 = vadd.f32 %v1824, %v2645
  %v2798 = vadd.f32 %v1827, %v2648
  %v2799 = vadd.f32 %v1832, %v2653
  %v2800 = vadd.f32 %v1835, %v2656
  %v2801 = vadd.f32 %v1840, %v2661
  %v2802 = vadd.f32 %v1843, %v2664
  %v2803 = vadd.f32 %v1848, %v2669
  %v2804 = vadd.f32 %v1851, %v2672
  %v2805 = vadd.f32 %v1856, %v2677
  %v2806 = vadd.f32 %v1859, %v2680
  %v2807 = vadd.f32 %v1864, %v2685
  %v2808 = vadd.f32 %v1867, %v2688
  %v2809 = vadd.f32 %v1872, %v2693
  %v2810 = vadd.f32 %v1875, %v2696
  %v2811 = vadd.f32 %v1880, %v2701
  %v2812 = vadd.f32 %v1883, %v2704
  %v2813 = vadd.f32 %v1888, %v2709
  %v2814 = vadd.f32 %v1891, %v2712
  %v2815 = vadd.f32 %v1896, %v2717
  %v2816 = vadd.f32 %v1899, %v2720
  %v2817 = vadd.f32 %v1904, %v2725
  %v2818 = vadd.f32 %v1907, %v2728
  %v2819 = vadd.f32 %v1912, %v2733
  %v2820 = vadd.f32 %v1915, %v2736
  %v2821 = vadd.f32 %v1920, %v2741
  %v2822 = vadd.f32 %v1923, %v2744
  %v2823 = vadd.f32 %v1928, %v2749
  %v2824 = vadd.f32 %v1931, %v2752
  %v2825 = vadd.f32 %v1936, %v2757
  %v2826 = vadd.f32 %v1939, %v2760
  %s2827 = scalar_lea.vmem %s0, 12
  %v2828 = vld [vmem:[%s2827] sm:$0xf]
  %v2829 = vld [vmem:[%s2827 + $0x4] sm:$0xf]
  %v2830 = vld [vmem:[%s2827 + $0xc] sm:$0xf]
  %v2831 = vld [vmem:[%s2827 + $0x10] sm:$0xf]
  %v2832 = vld [vmem:[%s2827 + $0x18] sm:$0xf]
  %v2833 = vld [vmem:[%s2827 + $0x1c] sm:$0xf]
  %v2834 = vld [vmem:[%s2827 + $0x24] sm:$0xf]
  %v2835 = vld [vmem:[%s2827 + $0x28] sm:$0xf]
  %v2836 = vld [vmem:[%s2827 + $0x30] sm:$0xf]
  %v2837 = vld [vmem:[%s2827 + $0x34] sm:$0xf]
  %v2838 = vld [vmem:[%s2827 + $0x3c] sm:$0xf]
  %v2839 = vld [vmem:[%s2827 + $0x40] sm:$0xf]
  %v2840 = vld [vmem:[%s2827 + $0x48] sm:$0xf]
  %v2841 = vld [vmem:[%s2827 + $0x4c] sm:$0xf]
  %v2842 = vld [vmem:[%s2827 + $0x54] sm:$0xf]
  %v2843 = vld [vmem:[%s2827 + $0x58] sm:$0xf]
  %v2844 = vld [vmem:[%s2827 + $0x60] sm:$0xf]
  %v2845 = vld [vmem:[%s2827 + $0x64] sm:$0xf]
  %v2846 = vld [vmem:[%s2827 + $0x6c] sm:$0xf]
  %v2847 = vld [vmem:[%s2827 + $0x70] sm:$0xf]
  %v2848 = vld [vmem:[%s2827 + $0x78] sm:$0xf]
  %v2849 = vld [vmem:[%s2827 + $0x7c] sm:$0xf]
  %v2850 = vld [vmem:[%s2827 + $0x84] sm:$0xf]
  %v2851 = vld [vmem:[%s2827 + $0x88] sm:$0xf]
  %v2852 = vld [vmem:[%s2827 + $0x90] sm:$0xf]
  %v2853 = vld [vmem:[%s2827 + $0x94] sm:$0xf]
  %v2854 = vld [vmem:[%s2827 + $0x9c] sm:$0xf]
  %v2855 = vld [vmem:[%s2827 + $0xa0] sm:$0xf]
  %v2856 = vld [vmem:[%s2827 + $0xa8] sm:$0xf]
  %v2857 = vld [vmem:[%s2827 + $0xac] sm:$0xf]
  %v2858 = vld [vmem:[%s2827 + $0xb4] sm:$0xf]
  %v2859 = vld [vmem:[%s2827 + $0xb8] sm:$0xf]
  %v2860 = vld [vmem:[%s2827 + $0xd8] sm:$0xf]
  %v2861 = vld [vmem:[%s2827 + $0xdc] sm:$0xf]
  %v2862 = vld [vmem:[%s2827 + $0xe4] sm:$0xf]
  %v2863 = vld [vmem:[%s2827 + $0xe8] sm:$0xf]
  %v2864 = vld [vmem:[%s2827 + $0xf0] sm:$0xf]
  %v2865 = vld [vmem:[%s2827 + $0xf4] sm:$0xf]
  %v2866 = vld [vmem:[%s2827 + $0xfc] sm:$0xf]
  %v2867 = vld [vmem:[%s2827 + $0x100] sm:$0xf]
  %v2868 = vld [vmem:[%s2827 + $0x108] sm:$0xf]
  %v2869 = vld [vmem:[%s2827 + $0x10c] sm:$0xf]
  %v2870 = vld [vmem:[%s2827 + $0x114] sm:$0xf]
  %v2871 = vld [vmem:[%s2827 + $0x118] sm:$0xf]
  %v2872 = vld [vmem:[%s2827 + $0x120] sm:$0xf]
  %v2873 = vld [vmem:[%s2827 + $0x124] sm:$0xf]
  %v2874 = vld [vmem:[%s2827 + $0x12c] sm:$0xf]
  %v2875 = vld [vmem:[%s2827 + $0x130] sm:$0xf]
  %v2876 = vld [vmem:[%s2827 + $0x138] sm:$0xf]
  %v2877 = vld [vmem:[%s2827 + $0x13c] sm:$0xf]
  %v2878 = vld [vmem:[%s2827 + $0x144] sm:$0xf]
  %v2879 = vld [vmem:[%s2827 + $0x148] sm:$0xf]
  %v2880 = vld [vmem:[%s2827 + $0x150] sm:$0xf]
  %v2881 = vld [vmem:[%s2827 + $0x154] sm:$0xf]
  %v2882 = vld [vmem:[%s2827 + $0x15c] sm:$0xf]
  %v2883 = vld [vmem:[%s2827 + $0x160] sm:$0xf]
  %v2884 = vld [vmem:[%s2827 + $0x168] sm:$0xf]
  %v2885 = vld [vmem:[%s2827 + $0x16c] sm:$0xf]
  %v2886 = vld [vmem:[%s2827 + $0x174] sm:$0xf]
  %v2887 = vld [vmem:[%s2827 + $0x178] sm:$0xf]
  %v2888 = vld [vmem:[%s2827 + $0x180] sm:$0xf]
  %v2889 = vld [vmem:[%s2827 + $0x184] sm:$0xf]
  %v2890 = vld [vmem:[%s2827 + $0x18c] sm:$0xf]
  %v2891 = vld [vmem:[%s2827 + $0x190] sm:$0xf]
  %s2892 = scalar_lea.vmem %s1, 48
  %v2893 = vld [vmem:[%s2892] sm:$0xf]
  %v2894 = vld [vmem:[%s2892 + $0x4] sm:$0xf]
  %v2895 = vld [vmem:[%s2892 + $0x8] sm:$0xf]
  %v2896 = vld [vmem:[%s2892 + $0xc] sm:$0xf]
  %v2961 = vunpack.c.l.b16 %v2828
  %v2962 = vunpack.c.l.b16 %v2829
  %v2963 = vunpack.c.l.b16 %v2830
  %v2964 = vunpack.c.l.b16 %v2831
  %v2965 = vunpack.c.l.b16 %v2832
  %v2966 = vunpack.c.l.b16 %v2833
  %v2967 = vunpack.c.l.b16 %v2834
  %v2968 = vunpack.c.l.b16 %v2835
  %v2969 = vunpack.c.l.b16 %v2836
  %v2970 = vunpack.c.l.b16 %v2837
  %v2971 = vunpack.c.l.b16 %v2838
  %v2972 = vunpack.c.l.b16 %v2839
  %v2973 = vunpack.c.l.b16 %v2840
  %v2974 = vunpack.c.l.b16 %v2841
  %v2975 = vunpack.c.l.b16 %v2842
  %v2976 = vunpack.c.l.b16 %v2843
  %v2977 = vunpack.c.l.b16 %v2844
  %v2978 = vunpack.c.l.b16 %v2845
  %v2979 = vunpack.c.l.b16 %v2846
  %v2980 = vunpack.c.l.b16 %v2847
  %v2981 = vunpack.c.l.b16 %v2848
  %v2982 = vunpack.c.l.b16 %v2849
  %v2983 = vunpack.c.l.b16 %v2850
  %v2984 = vunpack.c.l.b16 %v2851
  %v2985 = vunpack.c.l.b16 %v2852
  %v2986 = vunpack.c.l.b16 %v2853
  %v2987 = vunpack.c.l.b16 %v2854
  %v2988 = vunpack.c.l.b16 %v2855
  %v2989 = vunpack.c.l.b16 %v2856
  %v2990 = vunpack.c.l.b16 %v2857
  %v2991 = vunpack.c.l.b16 %v2858
  %v2992 = vunpack.c.l.b16 %v2859
  %v2993 = vunpack.c.l.b16 %v2860
  %v2994 = vunpack.c.l.b16 %v2861
  %v2995 = vunpack.c.l.b16 %v2862
  %v2996 = vunpack.c.l.b16 %v2863
  %v2997 = vunpack.c.l.b16 %v2864
  %v2998 = vunpack.c.l.b16 %v2865
  %v2999 = vunpack.c.l.b16 %v2866
  %v3000 = vunpack.c.l.b16 %v2867
  %v3001 = vunpack.c.l.b16 %v2868
  %v3002 = vunpack.c.l.b16 %v2869
  %v3003 = vunpack.c.l.b16 %v2870
  %v3004 = vunpack.c.l.b16 %v2871
  %v3005 = vunpack.c.l.b16 %v2872
  %v3006 = vunpack.c.l.b16 %v2873
  %v3007 = vunpack.c.l.b16 %v2874
  %v3008 = vunpack.c.l.b16 %v2875
  %v3009 = vunpack.c.l.b16 %v2876
  %v3010 = vunpack.c.l.b16 %v2877
  %v3011 = vunpack.c.l.b16 %v2878
  %v3012 = vunpack.c.l.b16 %v2879
  %v3013 = vunpack.c.l.b16 %v2880
  %v3014 = vunpack.c.l.b16 %v2881
  %v3015 = vunpack.c.l.b16 %v2882
  %v3016 = vunpack.c.l.b16 %v2883
  %v3017 = vunpack.c.l.b16 %v2884
  %v3018 = vunpack.c.l.b16 %v2885
  %v3019 = vunpack.c.l.b16 %v2886
  %v3020 = vunpack.c.l.b16 %v2887
  %v3021 = vunpack.c.l.b16 %v2888
  %v3022 = vunpack.c.l.b16 %v2889
  %v3023 = vunpack.c.l.b16 %v2890
  %v3024 = vunpack.c.l.b16 %v2891
  %v3025 = vpack.c.b16 %v2962, %v2961
  %v3026 = vpack.c.b16 %v2964, %v2963
  %v3027 = vpack.c.b16 %v2966, %v2965
  %v3028 = vpack.c.b16 %v2968, %v2967
  %v3029 = vpack.c.b16 %v2970, %v2969
  %v3030 = vpack.c.b16 %v2972, %v2971
  %v3031 = vpack.c.b16 %v2974, %v2973
  %v3032 = vpack.c.b16 %v2976, %v2975
  %v3033 = vpack.c.b16 %v2978, %v2977
  %v3034 = vpack.c.b16 %v2980, %v2979
  %v3035 = vpack.c.b16 %v2982, %v2981
  %v3036 = vpack.c.b16 %v2984, %v2983
  %v3037 = vpack.c.b16 %v2986, %v2985
  %v3038 = vpack.c.b16 %v2988, %v2987
  %v3039 = vpack.c.b16 %v2990, %v2989
  %v3040 = vpack.c.b16 %v2992, %v2991
  %v3041 = vpack.c.b16 %v2994, %v2993
  %v3042 = vpack.c.b16 %v2996, %v2995
  %v3043 = vpack.c.b16 %v2998, %v2997
  %v3044 = vpack.c.b16 %v3000, %v2999
  %v3045 = vpack.c.b16 %v3002, %v3001
  %v3046 = vpack.c.b16 %v3004, %v3003
  %v3047 = vpack.c.b16 %v3006, %v3005
  %v3048 = vpack.c.b16 %v3008, %v3007
  %v3049 = vpack.c.b16 %v3010, %v3009
  %v3050 = vpack.c.b16 %v3012, %v3011
  %v3051 = vpack.c.b16 %v3014, %v3013
  %v3052 = vpack.c.b16 %v3016, %v3015
  %v3053 = vpack.c.b16 %v3018, %v3017
  %v3054 = vpack.c.b16 %v3020, %v3019
  %v3055 = vpack.c.b16 %v3022, %v3021
  %v3056 = vpack.c.b16 %v3024, %v3023
  %v3061 = vunpack.c.l.b16 %v2893
  %v3062 = vunpack.c.l.b16 %v2894
  %v3063 = vunpack.c.l.b16 %v2895
  %v3064 = vunpack.c.l.b16 %v2896
  %v3065 = vpack.c.b16 %v3062, %v3061
  %v3066 = vpack.c.b16 %v3064, %v3063
  %v3070 = vsel %vm999, %v3025, 0
  %v3073 = vsel %vm999, %v3026, 0
  %v3076 = vsel %vm999, %v3027, 0
  %v3079 = vsel %vm999, %v3028, 0
  %v3082 = vsel %vm999, %v3029, 0
  %v3085 = vsel %vm999, %v3030, 0
  %v3088 = vsel %vm999, %v3031, 0
  %v3091 = vsel %vm999, %v3032, 0
  %v3094 = vsel %vm999, %v3033, 0
  %v3097 = vsel %vm999, %v3034, 0
  %v3100 = vsel %vm999, %v3035, 0
  %v3103 = vsel %vm999, %v3036, 0
  %v3106 = vsel %vm999, %v3037, 0
  %v3109 = vsel %vm999, %v3038, 0
  %v3112 = vsel %vm999, %v3039, 0
  %v3115 = vsel %vm999, %v3040, 0
  %v3118 = vsel %vm999, %v3041, 0
  %v3121 = vsel %vm999, %v3042, 0
  %v3124 = vsel %vm999, %v3043, 0
  %v3127 = vsel %vm999, %v3044, 0
  %v3130 = vsel %vm999, %v3045, 0
  %v3133 = vsel %vm999, %v3046, 0
  %v3136 = vsel %vm999, %v3047, 0
  %v3139 = vsel %vm999, %v3048, 0
  %v3142 = vsel %vm999, %v3049, 0
  %v3145 = vsel %vm999, %v3050, 0
  %v3148 = vsel %vm999, %v3051, 0
  %v3151 = vsel %vm999, %v3052, 0
  %v3154 = vsel %vm999, %v3053, 0
  %v3157 = vsel %vm999, %v3054, 0
  %v3160 = vsel %vm999, %v3055, 0
  %v3163 = vsel %vm999, %v3056, 0
  %3165 = vmatprep.subr.bf16.mxu0 0
  %3166 = vmatpush1.bf16.msra.mxu0 0
  %3167 = vmatprep.subr.bf16.mxu0 0
  %3168 = vmatpush1.bf16.msra.mxu0 0
  %3169 = vmatprep.subr.bf16.mxu0 0
  %3170 = vmatpush1.bf16.msra.mxu0 0
  %3171 = vmatprep.subr.bf16.mxu0 0
  %3172 = vmatpush1.bf16.msra.mxu0 0
  %3173 = vmatprep.subr.bf16.mxu0 0
  %3174 = vmatpush1.bf16.msra.mxu0 0
  %3175 = vmatprep.subr.bf16.mxu0 0
  %3176 = vmatpush1.bf16.msra.mxu0 0
  %3177 = vmatprep.subr.bf16.mxu0 0
  %3178 = vmatpush1.bf16.msra.mxu0 %v3066
  %3179 = vmatprep.subr.bf16.mxu0 0
  %3180 = vmatpush1.bf16.msra.mxu0 %v3065
  %3181 = vmatprep.subr.bf16.mxu0 0
  %3182 = vmatpush2.bf16.msra.mxu0 0
  %3183 = vmatprep.subr.bf16.mxu0 0
  %3184 = vmatpush2.bf16.msra.mxu0 0
  %3185 = vmatprep.subr.bf16.mxu0 0
  %3186 = vmatpush2.bf16.msra.mxu0 0
  %3187 = vmatprep.subr.bf16.mxu0 0
  %3188 = vmatpush2.bf16.msra.mxu0 0
  %3189 = vmatprep.subr.bf16.mxu0 0
  %3190 = vmatpush2.bf16.msra.mxu0 0
  %3191 = vmatprep.subr.bf16.mxu0 0
  %3192 = vmatpush2.bf16.msra.mxu0 0
  %3193 = vmatprep.subr.bf16.mxu0 0
  %3194 = vmatpush2.bf16.msra.mxu0 0
  %3195 = vmatprep.subr.bf16.mxu0 0
  %3196 = vmatpush2.bf16.msra.mxu0 0
  %3197 = vmatprep.mubr.bf16.mxu0 0
  %3198 = vmatmul.mubr.bf16.gmra.mxu0 %v3070
  %v3199 = vpop.f32.mrf.mxu0
  %v3200 = vadd.f32 0.0, %v3199
  %v3201 = vpop.f32.mrf.mxu0
  %v3202 = vpop.f32.mrf.mxu0
  %v3203 = vadd.f32 0.0, %v3202
  %v3204 = vpop.f32.mrf.mxu0
  %3205 = vmatprep.mubr.bf16.mxu0 0
  %3206 = vmatmul.mubr.bf16.gmra.mxu0 %v3073
  %v3207 = vpop.f32.mrf.mxu0
  %v3208 = vadd.f32 0.0, %v3207
  %v3209 = vpop.f32.mrf.mxu0
  %v3210 = vpop.f32.mrf.mxu0
  %v3211 = vadd.f32 0.0, %v3210
  %v3212 = vpop.f32.mrf.mxu0
  %3213 = vmatprep.mubr.bf16.mxu0 0
  %3214 = vmatmul.mubr.bf16.gmra.mxu0 %v3076
  %v3215 = vpop.f32.mrf.mxu0
  %v3216 = vadd.f32 0.0, %v3215
  %v3217 = vpop.f32.mrf.mxu0
  %v3218 = vpop.f32.mrf.mxu0
  %v3219 = vadd.f32 0.0, %v3218
  %v3220 = vpop.f32.mrf.mxu0
  %3221 = vmatprep.mubr.bf16.mxu0 0
  %3222 = vmatmul.mubr.bf16.gmra.mxu0 %v3079
  %v3223 = vpop.f32.mrf.mxu0
  %v3224 = vadd.f32 0.0, %v3223
  %v3225 = vpop.f32.mrf.mxu0
  %v3226 = vpop.f32.mrf.mxu0
  %v3227 = vadd.f32 0.0, %v3226
  %v3228 = vpop.f32.mrf.mxu0
  %3229 = vmatprep.mubr.bf16.mxu0 0
  %3230 = vmatmul.mubr.bf16.gmra.mxu0 %v3082
  %v3231 = vpop.f32.mrf.mxu0
  %v3232 = vadd.f32 0.0, %v3231
  %v3233 = vpop.f32.mrf.mxu0
  %v3234 = vpop.f32.mrf.mxu0
  %v3235 = vadd.f32 0.0, %v3234
  %v3236 = vpop.f32.mrf.mxu0
  %3237 = vmatprep.mubr.bf16.mxu0 0
  %3238 = vmatmul.mubr.bf16.gmra.mxu0 %v3085
  %v3239 = vpop.f32.mrf.mxu0
  %v3240 = vadd.f32 0.0, %v3239
  %v3241 = vpop.f32.mrf.mxu0
  %v3242 = vpop.f32.mrf.mxu0
  %v3243 = vadd.f32 0.0, %v3242
  %v3244 = vpop.f32.mrf.mxu0
  %3245 = vmatprep.mubr.bf16.mxu0 0
  %3246 = vmatmul.mubr.bf16.gmra.mxu0 %v3088
  %v3247 = vpop.f32.mrf.mxu0
  %v3248 = vadd.f32 0.0, %v3247
  %v3249 = vpop.f32.mrf.mxu0
  %v3250 = vpop.f32.mrf.mxu0
  %v3251 = vadd.f32 0.0, %v3250
  %v3252 = vpop.f32.mrf.mxu0
  %3253 = vmatprep.mubr.bf16.mxu0 0
  %3254 = vmatmul.mubr.bf16.gmra.mxu0 %v3091
  %v3255 = vpop.f32.mrf.mxu0
  %v3256 = vadd.f32 0.0, %v3255
  %v3257 = vpop.f32.mrf.mxu0
  %v3258 = vpop.f32.mrf.mxu0
  %v3259 = vadd.f32 0.0, %v3258
  %v3260 = vpop.f32.mrf.mxu0
  %3261 = vmatprep.mubr.bf16.mxu0 0
  %3262 = vmatmul.mubr.bf16.gmra.mxu0 %v3094
  %v3263 = vpop.f32.mrf.mxu0
  %v3264 = vadd.f32 0.0, %v3263
  %v3265 = vpop.f32.mrf.mxu0
  %v3266 = vpop.f32.mrf.mxu0
  %v3267 = vadd.f32 0.0, %v3266
  %v3268 = vpop.f32.mrf.mxu0
  %3269 = vmatprep.mubr.bf16.mxu0 0
  %3270 = vmatmul.mubr.bf16.gmra.mxu0 %v3097
  %v3271 = vpop.f32.mrf.mxu0
  %v3272 = vadd.f32 0.0, %v3271
  %v3273 = vpop.f32.mrf.mxu0
  %v3274 = vpop.f32.mrf.mxu0
  %v3275 = vadd.f32 0.0, %v3274
  %v3276 = vpop.f32.mrf.mxu0
  %3277 = vmatprep.mubr.bf16.mxu0 0
  %3278 = vmatmul.mubr.bf16.gmra.mxu0 %v3100
  %v3279 = vpop.f32.mrf.mxu0
  %v3280 = vadd.f32 0.0, %v3279
  %v3281 = vpop.f32.mrf.mxu0
  %v3282 = vpop.f32.mrf.mxu0
  %v3283 = vadd.f32 0.0, %v3282
  %v3284 = vpop.f32.mrf.mxu0
  %3285 = vmatprep.mubr.bf16.mxu0 0
  %3286 = vmatmul.mubr.bf16.gmra.mxu0 %v3103
  %v3287 = vpop.f32.mrf.mxu0
  %v3288 = vadd.f32 0.0, %v3287
  %v3289 = vpop.f32.mrf.mxu0
  %v3290 = vpop.f32.mrf.mxu0
  %v3291 = vadd.f32 0.0, %v3290
  %v3292 = vpop.f32.mrf.mxu0
  %3293 = vmatprep.mubr.bf16.mxu0 0
  %3294 = vmatmul.mubr.bf16.gmra.mxu0 %v3106
  %v3295 = vpop.f32.mrf.mxu0
  %v3296 = vadd.f32 0.0, %v3295
  %v3297 = vpop.f32.mrf.mxu0
  %v3298 = vpop.f32.mrf.mxu0
  %v3299 = vadd.f32 0.0, %v3298
  %v3300 = vpop.f32.mrf.mxu0
  %3301 = vmatprep.mubr.bf16.mxu0 0
  %3302 = vmatmul.mubr.bf16.gmra.mxu0 %v3109
  %v3303 = vpop.f32.mrf.mxu0
  %v3304 = vadd.f32 0.0, %v3303
  %v3305 = vpop.f32.mrf.mxu0
  %v3306 = vpop.f32.mrf.mxu0
  %v3307 = vadd.f32 0.0, %v3306
  %v3308 = vpop.f32.mrf.mxu0
  %3309 = vmatprep.mubr.bf16.mxu0 0
  %3310 = vmatmul.mubr.bf16.gmra.mxu0 %v3112
  %v3311 = vpop.f32.mrf.mxu0
  %v3312 = vadd.f32 0.0, %v3311
  %v3313 = vpop.f32.mrf.mxu0
  %v3314 = vpop.f32.mrf.mxu0
  %v3315 = vadd.f32 0.0, %v3314
  %v3316 = vpop.f32.mrf.mxu0
  %3317 = vmatprep.mubr.bf16.mxu0 0
  %3318 = vmatmul.mubr.bf16.gmra.mxu0 %v3115
  %v3319 = vpop.f32.mrf.mxu0
  %v3320 = vadd.f32 0.0, %v3319
  %v3321 = vpop.f32.mrf.mxu0
  %v3322 = vpop.f32.mrf.mxu0
  %v3323 = vadd.f32 0.0, %v3322
  %v3324 = vpop.f32.mrf.mxu0
  %3325 = vmatprep.mubr.bf16.mxu0 0
  %3326 = vmatmul.mubr.bf16.gmra.mxu0 %v3118
  %v3327 = vpop.f32.mrf.mxu0
  %v3328 = vadd.f32 0.0, %v3327
  %v3329 = vpop.f32.mrf.mxu0
  %v3330 = vpop.f32.mrf.mxu0
  %v3331 = vadd.f32 0.0, %v3330
  %v3332 = vpop.f32.mrf.mxu0
  %3333 = vmatprep.mubr.bf16.mxu0 0
  %3334 = vmatmul.mubr.bf16.gmra.mxu0 %v3121
  %v3335 = vpop.f32.mrf.mxu0
  %v3336 = vadd.f32 0.0, %v3335
  %v3337 = vpop.f32.mrf.mxu0
  %v3338 = vpop.f32.mrf.mxu0
  %v3339 = vadd.f32 0.0, %v3338
  %v3340 = vpop.f32.mrf.mxu0
  %3341 = vmatprep.mubr.bf16.mxu0 0
  %3342 = vmatmul.mubr.bf16.gmra.mxu0 %v3124
  %v3343 = vpop.f32.mrf.mxu0
  %v3344 = vadd.f32 0.0, %v3343
  %v3345 = vpop.f32.mrf.mxu0
  %v3346 = vpop.f32.mrf.mxu0
  %v3347 = vadd.f32 0.0, %v3346
  %v3348 = vpop.f32.mrf.mxu0
  %3349 = vmatprep.mubr.bf16.mxu0 0
  %3350 = vmatmul.mubr.bf16.gmra.mxu0 %v3127
  %v3351 = vpop.f32.mrf.mxu0
  %v3352 = vadd.f32 0.0, %v3351
  %v3353 = vpop.f32.mrf.mxu0
  %v3354 = vpop.f32.mrf.mxu0
  %v3355 = vadd.f32 0.0, %v3354
  %v3356 = vpop.f32.mrf.mxu0
  %3357 = vmatprep.mubr.bf16.mxu0 0
  %3358 = vmatmul.mubr.bf16.gmra.mxu0 %v3130
  %v3359 = vpop.f32.mrf.mxu0
  %v3360 = vadd.f32 0.0, %v3359
  %v3361 = vpop.f32.mrf.mxu0
  %v3362 = vpop.f32.mrf.mxu0
  %v3363 = vadd.f32 0.0, %v3362
  %v3364 = vpop.f32.mrf.mxu0
  %3365 = vmatprep.mubr.bf16.mxu0 0
  %3366 = vmatmul.mubr.bf16.gmra.mxu0 %v3133
  %v3367 = vpop.f32.mrf.mxu0
  %v3368 = vadd.f32 0.0, %v3367
  %v3369 = vpop.f32.mrf.mxu0
  %v3370 = vpop.f32.mrf.mxu0
  %v3371 = vadd.f32 0.0, %v3370
  %v3372 = vpop.f32.mrf.mxu0
  %3373 = vmatprep.mubr.bf16.mxu0 0
  %3374 = vmatmul.mubr.bf16.gmra.mxu0 %v3136
  %v3375 = vpop.f32.mrf.mxu0
  %v3376 = vadd.f32 0.0, %v3375
  %v3377 = vpop.f32.mrf.mxu0
  %v3378 = vpop.f32.mrf.mxu0
  %v3379 = vadd.f32 0.0, %v3378
  %v3380 = vpop.f32.mrf.mxu0
  %3381 = vmatprep.mubr.bf16.mxu0 0
  %3382 = vmatmul.mubr.bf16.gmra.mxu0 %v3139
  %v3383 = vpop.f32.mrf.mxu0
  %v3384 = vadd.f32 0.0, %v3383
  %v3385 = vpop.f32.mrf.mxu0
  %v3386 = vpop.f32.mrf.mxu0
  %v3387 = vadd.f32 0.0, %v3386
  %v3388 = vpop.f32.mrf.mxu0
  %3389 = vmatprep.mubr.bf16.mxu0 0
  %3390 = vmatmul.mubr.bf16.gmra.mxu0 %v3142
  %v3391 = vpop.f32.mrf.mxu0
  %v3392 = vadd.f32 0.0, %v3391
  %v3393 = vpop.f32.mrf.mxu0
  %v3394 = vpop.f32.mrf.mxu0
  %v3395 = vadd.f32 0.0, %v3394
  %v3396 = vpop.f32.mrf.mxu0
  %3397 = vmatprep.mubr.bf16.mxu0 0
  %3398 = vmatmul.mubr.bf16.gmra.mxu0 %v3145
  %v3399 = vpop.f32.mrf.mxu0
  %v3400 = vadd.f32 0.0, %v3399
  %v3401 = vpop.f32.mrf.mxu0
  %v3402 = vpop.f32.mrf.mxu0
  %v3403 = vadd.f32 0.0, %v3402
  %v3404 = vpop.f32.mrf.mxu0
  %3405 = vmatprep.mubr.bf16.mxu0 0
  %3406 = vmatmul.mubr.bf16.gmra.mxu0 %v3148
  %v3407 = vpop.f32.mrf.mxu0
  %v3408 = vadd.f32 0.0, %v3407
  %v3409 = vpop.f32.mrf.mxu0
  %v3410 = vpop.f32.mrf.mxu0
  %v3411 = vadd.f32 0.0, %v3410
  %v3412 = vpop.f32.mrf.mxu0
  %3413 = vmatprep.mubr.bf16.mxu0 0
  %3414 = vmatmul.mubr.bf16.gmra.mxu0 %v3151
  %v3415 = vpop.f32.mrf.mxu0
  %v3416 = vadd.f32 0.0, %v3415
  %v3417 = vpop.f32.mrf.mxu0
  %v3418 = vpop.f32.mrf.mxu0
  %v3419 = vadd.f32 0.0, %v3418
  %v3420 = vpop.f32.mrf.mxu0
  %3421 = vmatprep.mubr.bf16.mxu0 0
  %3422 = vmatmul.mubr.bf16.gmra.mxu0 %v3154
  %v3423 = vpop.f32.mrf.mxu0
  %v3424 = vadd.f32 0.0, %v3423
  %v3425 = vpop.f32.mrf.mxu0
  %v3426 = vpop.f32.mrf.mxu0
  %v3427 = vadd.f32 0.0, %v3426
  %v3428 = vpop.f32.mrf.mxu0
  %3429 = vmatprep.mubr.bf16.mxu0 0
  %3430 = vmatmul.mubr.bf16.gmra.mxu0 %v3157
  %v3431 = vpop.f32.mrf.mxu0
  %v3432 = vadd.f32 0.0, %v3431
  %v3433 = vpop.f32.mrf.mxu0
  %v3434 = vpop.f32.mrf.mxu0
  %v3435 = vadd.f32 0.0, %v3434
  %v3436 = vpop.f32.mrf.mxu0
  %3437 = vmatprep.mubr.bf16.mxu0 0
  %3438 = vmatmul.mubr.bf16.gmra.mxu0 %v3160
  %v3439 = vpop.f32.mrf.mxu0
  %v3440 = vadd.f32 0.0, %v3439
  %v3441 = vpop.f32.mrf.mxu0
  %v3442 = vpop.f32.mrf.mxu0
  %v3443 = vadd.f32 0.0, %v3442
  %v3444 = vpop.f32.mrf.mxu0
  %3445 = vmatprep.mubr.bf16.mxu0 0
  %3446 = vmatmul.mubr.bf16.gmra.mxu0 %v3163
  %v3447 = vpop.f32.mrf.mxu0
  %v3448 = vadd.f32 0.0, %v3447
  %v3449 = vpop.f32.mrf.mxu0
  %v3450 = vpop.f32.mrf.mxu0
  %v3451 = vadd.f32 0.0, %v3450
  %v3452 = vpop.f32.mrf.mxu0
  %3453 = vdwg.mxu0
  %v3454 = vadd.f32 %v2763, %v3200
  %v3455 = vadd.f32 %v2764, %v3203
  %v3456 = vadd.f32 %v2765, %v3208
  %v3457 = vadd.f32 %v2766, %v3211
  %v3458 = vadd.f32 %v2767, %v3216
  %v3459 = vadd.f32 %v2768, %v3219
  %v3460 = vadd.f32 %v2769, %v3224
  %v3461 = vadd.f32 %v2770, %v3227
  %v3462 = vadd.f32 %v2771, %v3232
  %v3463 = vadd.f32 %v2772, %v3235
  %v3464 = vadd.f32 %v2773, %v3240
  %v3465 = vadd.f32 %v2774, %v3243
  %v3466 = vadd.f32 %v2775, %v3248
  %v3467 = vadd.f32 %v2776, %v3251
  %v3468 = vadd.f32 %v2777, %v3256
  %v3469 = vadd.f32 %v2778, %v3259
  %v3470 = vadd.f32 %v2779, %v3264
  %v3471 = vadd.f32 %v2780, %v3267
  %v3472 = vadd.f32 %v2781, %v3272
  %v3473 = vadd.f32 %v2782, %v3275
  %v3474 = vadd.f32 %v2783, %v3280
  %v3475 = vadd.f32 %v2784, %v3283
  %v3476 = vadd.f32 %v2785, %v3288
  %v3477 = vadd.f32 %v2786, %v3291
  %v3478 = vadd.f32 %v2787, %v3296
  %v3479 = vadd.f32 %v2788, %v3299
  %v3480 = vadd.f32 %v2789, %v3304
  %v3481 = vadd.f32 %v2790, %v3307
  %v3482 = vadd.f32 %v2791, %v3312
  %v3483 = vadd.f32 %v2792, %v3315
  %v3484 = vadd.f32 %v2793, %v3320
  %v3485 = vadd.f32 %v2794, %v3323
  %v3486 = vadd.f32 %v2795, %v3328
  %v3487 = vadd.f32 %v2796, %v3331
  %v3488 = vadd.f32 %v2797, %v3336
  %v3489 = vadd.f32 %v2798, %v3339
  %v3490 = vadd.f32 %v2799, %v3344
  %v3491 = vadd.f32 %v2800, %v3347
  %v3492 = vadd.f32 %v2801, %v3352
  %v3493 = vadd.f32 %v2802, %v3355
  %v3494 = vadd.f32 %v2803, %v3360
  %v3495 = vadd.f32 %v2804, %v3363
  %v3496 = vadd.f32 %v2805, %v3368
  %v3497 = vadd.f32 %v2806, %v3371
  %v3498 = vadd.f32 %v2807, %v3376
  %v3499 = vadd.f32 %v2808, %v3379
  %v3500 = vadd.f32 %v2809, %v3384
  %v3501 = vadd.f32 %v2810, %v3387
  %v3502 = vadd.f32 %v2811, %v3392
  %v3503 = vadd.f32 %v2812, %v3395
  %v3504 = vadd.f32 %v2813, %v3400
  %v3505 = vadd.f32 %v2814, %v3403
  %v3506 = vadd.f32 %v2815, %v3408
  %v3507 = vadd.f32 %v2816, %v3411
  %v3508 = vadd.f32 %v2817, %v3416
  %v3509 = vadd.f32 %v2818, %v3419
  %v3510 = vadd.f32 %v2819, %v3424
  %v3511 = vadd.f32 %v2820, %v3427
  %v3512 = vadd.f32 %v2821, %v3432
  %v3513 = vadd.f32 %v2822, %v3435
  %v3514 = vadd.f32 %v2823, %v3440
  %v3515 = vadd.f32 %v2824, %v3443
  %v3516 = vadd.f32 %v2825, %v3448
  %v3517 = vadd.f32 %v2826, %v3451
  %v3518 = vld [vmem:[%s2827] sm:$0xf]
  %v3519 = vld [vmem:[%s2827 + $0x4] sm:$0xf]
  %v3520 = vld [vmem:[%s2827 + $0x8] sm:$0x1]
  %v3521 = vld [vmem:[%s2827 + $0xc] sm:$0xf]
  %v3522 = vld [vmem:[%s2827 + $0x10] sm:$0xf]
  %v3523 = vld [vmem:[%s2827 + $0x14] sm:$0x1]
  %v3524 = vld [vmem:[%s2827 + $0x18] sm:$0xf]
  %v3525 = vld [vmem:[%s2827 + $0x1c] sm:$0xf]
  %v3526 = vld [vmem:[%s2827 + $0x20] sm:$0x1]
  %v3527 = vld [vmem:[%s2827 + $0x24] sm:$0xf]
  %v3528 = vld [vmem:[%s2827 + $0x28] sm:$0xf]
  %v3529 = vld [vmem:[%s2827 + $0x2c] sm:$0x1]
  %v3530 = vld [vmem:[%s2827 + $0x30] sm:$0xf]
  %v3531 = vld [vmem:[%s2827 + $0x34] sm:$0xf]
  %v3532 = vld [vmem:[%s2827 + $0x38] sm:$0x1]
  %v3533 = vld [vmem:[%s2827 + $0x3c] sm:$0xf]
  %v3534 = vld [vmem:[%s2827 + $0x40] sm:$0xf]
  %v3535 = vld [vmem:[%s2827 + $0x44] sm:$0x1]
  %v3536 = vld [vmem:[%s2827 + $0x48] sm:$0xf]
  %v3537 = vld [vmem:[%s2827 + $0x4c] sm:$0xf]
  %v3538 = vld [vmem:[%s2827 + $0x50] sm:$0x1]
  %v3539 = vld [vmem:[%s2827 + $0x54] sm:$0xf]
  %v3540 = vld [vmem:[%s2827 + $0x58] sm:$0xf]
  %v3541 = vld [vmem:[%s2827 + $0x5c] sm:$0x1]
  %v3542 = vld [vmem:[%s2827 + $0x60] sm:$0xf]
  %v3543 = vld [vmem:[%s2827 + $0x64] sm:$0xf]
  %v3544 = vld [vmem:[%s2827 + $0x68] sm:$0x1]
  %v3545 = vld [vmem:[%s2827 + $0x6c] sm:$0xf]
  %v3546 = vld [vmem:[%s2827 + $0x70] sm:$0xf]
  %v3547 = vld [vmem:[%s2827 + $0x74] sm:$0x1]
  %v3548 = vld [vmem:[%s2827 + $0x78] sm:$0xf]
  %v3549 = vld [vmem:[%s2827 + $0x7c] sm:$0xf]
  %v3550 = vld [vmem:[%s2827 + $0x80] sm:$0x1]
  %v3551 = vld [vmem:[%s2827 + $0x84] sm:$0xf]
  %v3552 = vld [vmem:[%s2827 + $0x88] sm:$0xf]
  %v3553 = vld [vmem:[%s2827 + $0x8c] sm:$0x1]
  %v3554 = vld [vmem:[%s2827 + $0x90] sm:$0xf]
  %v3555 = vld [vmem:[%s2827 + $0x94] sm:$0xf]
  %v3556 = vld [vmem:[%s2827 + $0x98] sm:$0x1]
  %v3557 = vld [vmem:[%s2827 + $0x9c] sm:$0xf]
  %v3558 = vld [vmem:[%s2827 + $0xa0] sm:$0xf]
  %v3559 = vld [vmem:[%s2827 + $0xa4] sm:$0x1]
  %v3560 = vld [vmem:[%s2827 + $0xa8] sm:$0xf]
  %v3561 = vld [vmem:[%s2827 + $0xac] sm:$0xf]
  %v3562 = vld [vmem:[%s2827 + $0xb0] sm:$0x1]
  %v3563 = vld [vmem:[%s2827 + $0xb4] sm:$0xf]
  %v3564 = vld [vmem:[%s2827 + $0xb8] sm:$0xf]
  %v3565 = vld [vmem:[%s2827 + $0xbc] sm:$0x1]
  %v3566 = vld [vmem:[%s2827 + $0xd8] sm:$0xf]
  %v3567 = vld [vmem:[%s2827 + $0xdc] sm:$0xf]
  %v3568 = vld [vmem:[%s2827 + $0xe0] sm:$0x1]
  %v3569 = vld [vmem:[%s2827 + $0xe4] sm:$0xf]
  %v3570 = vld [vmem:[%s2827 + $0xe8] sm:$0xf]
  %v3571 = vld [vmem:[%s2827 + $0xec] sm:$0x1]
  %v3572 = vld [vmem:[%s2827 + $0xf0] sm:$0xf]
  %v3573 = vld [vmem:[%s2827 + $0xf4] sm:$0xf]
  %v3574 = vld [vmem:[%s2827 + $0xf8] sm:$0x1]
  %v3575 = vld [vmem:[%s2827 + $0xfc] sm:$0xf]
  %v3576 = vld [vmem:[%s2827 + $0x100] sm:$0xf]
  %v3577 = vld [vmem:[%s2827 + $0x104] sm:$0x1]
  %v3578 = vld [vmem:[%s2827 + $0x108] sm:$0xf]
  %v3579 = vld [vmem:[%s2827 + $0x10c] sm:$0xf]
  %v3580 = vld [vmem:[%s2827 + $0x110] sm:$0x1]
  %v3581 = vld [vmem:[%s2827 + $0x114] sm:$0xf]
  %v3582 = vld [vmem:[%s2827 + $0x118] sm:$0xf]
  %v3583 = vld [vmem:[%s2827 + $0x11c] sm:$0x1]
  %v3584 = vld [vmem:[%s2827 + $0x120] sm:$0xf]
  %v3585 = vld [vmem:[%s2827 + $0x124] sm:$0xf]
  %v3586 = vld [vmem:[%s2827 + $0x128] sm:$0x1]
  %v3587 = vld [vmem:[%s2827 + $0x12c] sm:$0xf]
  %v3588 = vld [vmem:[%s2827 + $0x130] sm:$0xf]
  %v3589 = vld [vmem:[%s2827 + $0x134] sm:$0x1]
  %v3590 = vld [vmem:[%s2827 + $0x138] sm:$0xf]
  %v3591 = vld [vmem:[%s2827 + $0x13c] sm:$0xf]
  %v3592 = vld [vmem:[%s2827 + $0x140] sm:$0x1]
  %v3593 = vld [vmem:[%s2827 + $0x144] sm:$0xf]
  %v3594 = vld [vmem:[%s2827 + $0x148] sm:$0xf]
  %v3595 = vld [vmem:[%s2827 + $0x14c] sm:$0x1]
  %v3596 = vld [vmem:[%s2827 + $0x150] sm:$0xf]
  %v3597 = vld [vmem:[%s2827 + $0x154] sm:$0xf]
  %v3598 = vld [vmem:[%s2827 + $0x158] sm:$0x1]
  %v3599 = vld [vmem:[%s2827 + $0x15c] sm:$0xf]
  %v3600 = vld [vmem:[%s2827 + $0x160] sm:$0xf]
  %v3601 = vld [vmem:[%s2827 + $0x164] sm:$0x1]
  %v3602 = vld [vmem:[%s2827 + $0x168] sm:$0xf]
  %v3603 = vld [vmem:[%s2827 + $0x16c] sm:$0xf]
  %v3604 = vld [vmem:[%s2827 + $0x170] sm:$0x1]
  %v3605 = vld [vmem:[%s2827 + $0x174] sm:$0xf]
  %v3606 = vld [vmem:[%s2827 + $0x178] sm:$0xf]
  %v3607 = vld [vmem:[%s2827 + $0x17c] sm:$0x1]
  %v3608 = vld [vmem:[%s2827 + $0x180] sm:$0xf]
  %v3609 = vld [vmem:[%s2827 + $0x184] sm:$0xf]
  %v3610 = vld [vmem:[%s2827 + $0x188] sm:$0x1]
  %v3611 = vld [vmem:[%s2827 + $0x18c] sm:$0xf]
  %v3612 = vld [vmem:[%s2827 + $0x190] sm:$0xf]
  %v3613 = vld [vmem:[%s2827 + $0x194] sm:$0x1]
  %v3615 = vshrl.u32 %v3518, 16
  %v3617 = vrot.slane %v3615, 4
  %v3618 = vshll.u32 %v3518, 16
  %v3620 = vrot.slane %v3618, 5
  %v3621 = vor.u32 %v3617, %v3620
  %v3622 = vrot.slane %v3621, 4
  %v3624 = vshll.u32 %v3519, 16
  %v3626 = vrot.slane %v3624, 5
  %v3627 = vsel %vm117, %v3622, %v3626
  %v3628 = vshrl.u32 %v3519, 16
  %v3630 = vrot.slane %v3628, 4
  %v3631 = vor.u32 %v3630, %v3626
  %v3632 = vrot.slane %v3631, 4
  %v3634 = vshll.u32 %v3520, 16
  %v3636 = vrot.slane %v3634, 5
  %v3637 = vsel %vm117, %v3632, %v3636
  %v3639 = vshrl.u32 %v3521, 16
  %v3641 = vrot.slane %v3639, 4
  %v3642 = vshll.u32 %v3521, 16
  %v3644 = vrot.slane %v3642, 5
  %v3645 = vor.u32 %v3641, %v3644
  %v3646 = vrot.slane %v3645, 4
  %v3648 = vshll.u32 %v3522, 16
  %v3650 = vrot.slane %v3648, 5
  %v3651 = vsel %vm117, %v3646, %v3650
  %v3652 = vshrl.u32 %v3522, 16
  %v3654 = vrot.slane %v3652, 4
  %v3655 = vor.u32 %v3654, %v3650
  %v3656 = vrot.slane %v3655, 4
  %v3658 = vshll.u32 %v3523, 16
  %v3660 = vrot.slane %v3658, 5
  %v3661 = vsel %vm117, %v3656, %v3660
  %v3663 = vshrl.u32 %v3524, 16
  %v3665 = vrot.slane %v3663, 4
  %v3666 = vshll.u32 %v3524, 16
  %v3668 = vrot.slane %v3666, 5
  %v3669 = vor.u32 %v3665, %v3668
  %v3670 = vrot.slane %v3669, 4
  %v3672 = vshll.u32 %v3525, 16
  %v3674 = vrot.slane %v3672, 5
  %v3675 = vsel %vm117, %v3670, %v3674
  %v3676 = vshrl.u32 %v3525, 16
  %v3678 = vrot.slane %v3676, 4
  %v3679 = vor.u32 %v3678, %v3674
  %v3680 = vrot.slane %v3679, 4
  %v3682 = vshll.u32 %v3526, 16
  %v3684 = vrot.slane %v3682, 5
  %v3685 = vsel %vm117, %v3680, %v3684
  %v3687 = vshrl.u32 %v3527, 16
  %v3689 = vrot.slane %v3687, 4
  %v3690 = vshll.u32 %v3527, 16
  %v3692 = vrot.slane %v3690, 5
  %v3693 = vor.u32 %v3689, %v3692
  %v3694 = vrot.slane %v3693, 4
  %v3696 = vshll.u32 %v3528, 16
  %v3698 = vrot.slane %v3696, 5
  %v3699 = vsel %vm117, %v3694, %v3698
  %v3700 = vshrl.u32 %v3528, 16
  %v3702 = vrot.slane %v3700, 4
  %v3703 = vor.u32 %v3702, %v3698
  %v3704 = vrot.slane %v3703, 4
  %v3706 = vshll.u32 %v3529, 16
  %v3708 = vrot.slane %v3706, 5
  %v3709 = vsel %vm117, %v3704, %v3708
  %v3711 = vshrl.u32 %v3530, 16
  %v3713 = vrot.slane %v3711, 4
  %v3714 = vshll.u32 %v3530, 16
  %v3716 = vrot.slane %v3714, 5
  %v3717 = vor.u32 %v3713, %v3716
  %v3718 = vrot.slane %v3717, 4
  %v3720 = vshll.u32 %v3531, 16
  %v3722 = vrot.slane %v3720, 5
  %v3723 = vsel %vm117, %v3718, %v3722
  %v3724 = vshrl.u32 %v3531, 16
  %v3726 = vrot.slane %v3724, 4
  %v3727 = vor.u32 %v3726, %v3722
  %v3728 = vrot.slane %v3727, 4
  %v3730 = vshll.u32 %v3532, 16
  %v3732 = vrot.slane %v3730, 5
  %v3733 = vsel %vm117, %v3728, %v3732
  %v3735 = vshrl.u32 %v3533, 16
  %v3737 = vrot.slane %v3735, 4
  %v3738 = vshll.u32 %v3533, 16
  %v3740 = vrot.slane %v3738, 5
  %v3741 = vor.u32 %v3737, %v3740
  %v3742 = vrot.slane %v3741, 4
  %v3744 = vshll.u32 %v3534, 16
  %v3746 = vrot.slane %v3744, 5
  %v3747 = vsel %vm117, %v3742, %v3746
  %v3748 = vshrl.u32 %v3534, 16
  %v3750 = vrot.slane %v3748, 4
  %v3751 = vor.u32 %v3750, %v3746
  %v3752 = vrot.slane %v3751, 4
  %v3754 = vshll.u32 %v3535, 16
  %v3756 = vrot.slane %v3754, 5
  %v3757 = vsel %vm117, %v3752, %v3756
  %v3759 = vshrl.u32 %v3536, 16
  %v3761 = vrot.slane %v3759, 4
  %v3762 = vshll.u32 %v3536, 16
  %v3764 = vrot.slane %v3762, 5
  %v3765 = vor.u32 %v3761, %v3764
  %v3766 = vrot.slane %v3765, 4
  %v3768 = vshll.u32 %v3537, 16
  %v3770 = vrot.slane %v3768, 5
  %v3771 = vsel %vm117, %v3766, %v3770
  %v3772 = vshrl.u32 %v3537, 16
  %v3774 = vrot.slane %v3772, 4
  %v3775 = vor.u32 %v3774, %v3770
  %v3776 = vrot.slane %v3775, 4
  %v3778 = vshll.u32 %v3538, 16
  %v3780 = vrot.slane %v3778, 5
  %v3781 = vsel %vm117, %v3776, %v3780
  %v3783 = vshrl.u32 %v3539, 16
  %v3785 = vrot.slane %v3783, 4
  %v3786 = vshll.u32 %v3539, 16
  %v3788 = vrot.slane %v3786, 5
  %v3789 = vor.u32 %v3785, %v3788
  %v3790 = vrot.slane %v3789, 4
  %v3792 = vshll.u32 %v3540, 16
  %v3794 = vrot.slane %v3792, 5
  %v3795 = vsel %vm117, %v3790, %v3794
  %v3796 = vshrl.u32 %v3540, 16
  %v3798 = vrot.slane %v3796, 4
  %v3799 = vor.u32 %v3798, %v3794
  %v3800 = vrot.slane %v3799, 4
  %v3802 = vshll.u32 %v3541, 16
  %v3804 = vrot.slane %v3802, 5
  %v3805 = vsel %vm117, %v3800, %v3804
  %v3807 = vshrl.u32 %v3542, 16
  %v3809 = vrot.slane %v3807, 4
  %v3810 = vshll.u32 %v3542, 16
  %v3812 = vrot.slane %v3810, 5
  %v3813 = vor.u32 %v3809, %v3812
  %v3814 = vrot.slane %v3813, 4
  %v3816 = vshll.u32 %v3543, 16
  %v3818 = vrot.slane %v3816, 5
  %v3819 = vsel %vm117, %v3814, %v3818
  %v3820 = vshrl.u32 %v3543, 16
  %v3822 = vrot.slane %v3820, 4
  %v3823 = vor.u32 %v3822, %v3818
  %v3824 = vrot.slane %v3823, 4
  %v3826 = vshll.u32 %v3544, 16
  %v3828 = vrot.slane %v3826, 5
  %v3829 = vsel %vm117, %v3824, %v3828
  %v3831 = vshrl.u32 %v3545, 16
  %v3833 = vrot.slane %v3831, 4
  %v3834 = vshll.u32 %v3545, 16
  %v3836 = vrot.slane %v3834, 5
  %v3837 = vor.u32 %v3833, %v3836
  %v3838 = vrot.slane %v3837, 4
  %v3840 = vshll.u32 %v3546, 16
  %v3842 = vrot.slane %v3840, 5
  %v3843 = vsel %vm117, %v3838, %v3842
  %v3844 = vshrl.u32 %v3546, 16
  %v3846 = vrot.slane %v3844, 4
  %v3847 = vor.u32 %v3846, %v3842
  %v3848 = vrot.slane %v3847, 4
  %v3850 = vshll.u32 %v3547, 16
  %v3852 = vrot.slane %v3850, 5
  %v3853 = vsel %vm117, %v3848, %v3852
  %v3855 = vshrl.u32 %v3548, 16
  %v3857 = vrot.slane %v3855, 4
  %v3858 = vshll.u32 %v3548, 16
  %v3860 = vrot.slane %v3858, 5
  %v3861 = vor.u32 %v3857, %v3860
  %v3862 = vrot.slane %v3861, 4
  %v3864 = vshll.u32 %v3549, 16
  %v3866 = vrot.slane %v3864, 5
  %v3867 = vsel %vm117, %v3862, %v3866
  %v3868 = vshrl.u32 %v3549, 16
  %v3870 = vrot.slane %v3868, 4
  %v3871 = vor.u32 %v3870, %v3866
  %v3872 = vrot.slane %v3871, 4
  %v3874 = vshll.u32 %v3550, 16
  %v3876 = vrot.slane %v3874, 5
  %v3877 = vsel %vm117, %v3872, %v3876
  %v3879 = vshrl.u32 %v3551, 16
  %v3881 = vrot.slane %v3879, 4
  %v3882 = vshll.u32 %v3551, 16
  %v3884 = vrot.slane %v3882, 5
  %v3885 = vor.u32 %v3881, %v3884
  %v3886 = vrot.slane %v3885, 4
  %v3888 = vshll.u32 %v3552, 16
  %v3890 = vrot.slane %v3888, 5
  %v3891 = vsel %vm117, %v3886, %v3890
  %v3892 = vshrl.u32 %v3552, 16
  %v3894 = vrot.slane %v3892, 4
  %v3895 = vor.u32 %v3894, %v3890
  %v3896 = vrot.slane %v3895, 4
  %v3898 = vshll.u32 %v3553, 16
  %v3900 = vrot.slane %v3898, 5
  %v3901 = vsel %vm117, %v3896, %v3900
  %v3903 = vshrl.u32 %v3554, 16
  %v3905 = vrot.slane %v3903, 4
  %v3906 = vshll.u32 %v3554, 16
  %v3908 = vrot.slane %v3906, 5
  %v3909 = vor.u32 %v3905, %v3908
  %v3910 = vrot.slane %v3909, 4
  %v3912 = vshll.u32 %v3555, 16
  %v3914 = vrot.slane %v3912, 5
  %v3915 = vsel %vm117, %v3910, %v3914
  %v3916 = vshrl.u32 %v3555, 16
  %v3918 = vrot.slane %v3916, 4
  %v3919 = vor.u32 %v3918, %v3914
  %v3920 = vrot.slane %v3919, 4
  %v3922 = vshll.u32 %v3556, 16
  %v3924 = vrot.slane %v3922, 5
  %v3925 = vsel %vm117, %v3920, %v3924
  %v3927 = vshrl.u32 %v3557, 16
  %v3929 = vrot.slane %v3927, 4
  %v3930 = vshll.u32 %v3557, 16
  %v3932 = vrot.slane %v3930, 5
  %v3933 = vor.u32 %v3929, %v3932
  %v3934 = vrot.slane %v3933, 4
  %v3936 = vshll.u32 %v3558, 16
  %v3938 = vrot.slane %v3936, 5
  %v3939 = vsel %vm117, %v3934, %v3938
  %v3940 = vshrl.u32 %v3558, 16
  %v3942 = vrot.slane %v3940, 4
  %v3943 = vor.u32 %v3942, %v3938
  %v3944 = vrot.slane %v3943, 4
  %v3946 = vshll.u32 %v3559, 16
  %v3948 = vrot.slane %v3946, 5
  %v3949 = vsel %vm117, %v3944, %v3948
  %v3951 = vshrl.u32 %v3560, 16
  %v3953 = vrot.slane %v3951, 4
  %v3954 = vshll.u32 %v3560, 16
  %v3956 = vrot.slane %v3954, 5
  %v3957 = vor.u32 %v3953, %v3956
  %v3958 = vrot.slane %v3957, 4
  %v3960 = vshll.u32 %v3561, 16
  %v3962 = vrot.slane %v3960, 5
  %v3963 = vsel %vm117, %v3958, %v3962
  %v3964 = vshrl.u32 %v3561, 16
  %v3966 = vrot.slane %v3964, 4
  %v3967 = vor.u32 %v3966, %v3962
  %v3968 = vrot.slane %v3967, 4
  %v3970 = vshll.u32 %v3562, 16
  %v3972 = vrot.slane %v3970, 5
  %v3973 = vsel %vm117, %v3968, %v3972
  %v3975 = vshrl.u32 %v3563, 16
  %v3977 = vrot.slane %v3975, 4
  %v3978 = vshll.u32 %v3563, 16
  %v3980 = vrot.slane %v3978, 5
  %v3981 = vor.u32 %v3977, %v3980
  %v3982 = vrot.slane %v3981, 4
  %v3984 = vshll.u32 %v3564, 16
  %v3986 = vrot.slane %v3984, 5
  %v3987 = vsel %vm117, %v3982, %v3986
  %v3988 = vshrl.u32 %v3564, 16
  %v3990 = vrot.slane %v3988, 4
  %v3991 = vor.u32 %v3990, %v3986
  %v3992 = vrot.slane %v3991, 4
  %v3994 = vshll.u32 %v3565, 16
  %v3996 = vrot.slane %v3994, 5
  %v3997 = vsel %vm117, %v3992, %v3996
  %v3999 = vshrl.u32 %v3566, 16
  %v4001 = vrot.slane %v3999, 4
  %v4002 = vshll.u32 %v3566, 16
  %v4004 = vrot.slane %v4002, 5
  %v4005 = vor.u32 %v4001, %v4004
  %v4006 = vrot.slane %v4005, 4
  %v4008 = vshll.u32 %v3567, 16
  %v4010 = vrot.slane %v4008, 5
  %v4011 = vsel %vm117, %v4006, %v4010
  %v4012 = vshrl.u32 %v3567, 16
  %v4014 = vrot.slane %v4012, 4
  %v4015 = vor.u32 %v4014, %v4010
  %v4016 = vrot.slane %v4015, 4
  %v4018 = vshll.u32 %v3568, 16
  %v4020 = vrot.slane %v4018, 5
  %v4021 = vsel %vm117, %v4016, %v4020
  %v4023 = vshrl.u32 %v3569, 16
  %v4025 = vrot.slane %v4023, 4
  %v4026 = vshll.u32 %v3569, 16
  %v4028 = vrot.slane %v4026, 5
  %v4029 = vor.u32 %v4025, %v4028
  %v4030 = vrot.slane %v4029, 4
  %v4032 = vshll.u32 %v3570, 16
  %v4034 = vrot.slane %v4032, 5
  %v4035 = vsel %vm117, %v4030, %v4034
  %v4036 = vshrl.u32 %v3570, 16
  %v4038 = vrot.slane %v4036, 4
  %v4039 = vor.u32 %v4038, %v4034
  %v4040 = vrot.slane %v4039, 4
  %v4042 = vshll.u32 %v3571, 16
  %v4044 = vrot.slane %v4042, 5
  %v4045 = vsel %vm117, %v4040, %v4044
  %v4047 = vshrl.u32 %v3572, 16
  %v4049 = vrot.slane %v4047, 4
  %v4050 = vshll.u32 %v3572, 16
  %v4052 = vrot.slane %v4050, 5
  %v4053 = vor.u32 %v4049, %v4052
  %v4054 = vrot.slane %v4053, 4
  %v4056 = vshll.u32 %v3573, 16
  %v4058 = vrot.slane %v4056, 5
  %v4059 = vsel %vm117, %v4054, %v4058
  %v4060 = vshrl.u32 %v3573, 16
  %v4062 = vrot.slane %v4060, 4
  %v4063 = vor.u32 %v4062, %v4058
  %v4064 = vrot.slane %v4063, 4
  %v4066 = vshll.u32 %v3574, 16
  %v4068 = vrot.slane %v4066, 5
  %v4069 = vsel %vm117, %v4064, %v4068
  %v4071 = vshrl.u32 %v3575, 16
  %v4073 = vrot.slane %v4071, 4
  %v4074 = vshll.u32 %v3575, 16
  %v4076 = vrot.slane %v4074, 5
  %v4077 = vor.u32 %v4073, %v4076
  %v4078 = vrot.slane %v4077, 4
  %v4080 = vshll.u32 %v3576, 16
  %v4082 = vrot.slane %v4080, 5
  %v4083 = vsel %vm117, %v4078, %v4082
  %v4084 = vshrl.u32 %v3576, 16
  %v4086 = vrot.slane %v4084, 4
  %v4087 = vor.u32 %v4086, %v4082
  %v4088 = vrot.slane %v4087, 4
  %v4090 = vshll.u32 %v3577, 16
  %v4092 = vrot.slane %v4090, 5
  %v4093 = vsel %vm117, %v4088, %v4092
  %v4095 = vshrl.u32 %v3578, 16
  %v4097 = vrot.slane %v4095, 4
  %v4098 = vshll.u32 %v3578, 16
  %v4100 = vrot.slane %v4098, 5
  %v4101 = vor.u32 %v4097, %v4100
  %v4102 = vrot.slane %v4101, 4
  %v4104 = vshll.u32 %v3579, 16
  %v4106 = vrot.slane %v4104, 5
  %v4107 = vsel %vm117, %v4102, %v4106
  %v4108 = vshrl.u32 %v3579, 16
  %v4110 = vrot.slane %v4108, 4
  %v4111 = vor.u32 %v4110, %v4106
  %v4112 = vrot.slane %v4111, 4
  %v4114 = vshll.u32 %v3580, 16
  %v4116 = vrot.slane %v4114, 5
  %v4117 = vsel %vm117, %v4112, %v4116
  %v4119 = vshrl.u32 %v3581, 16
  %v4121 = vrot.slane %v4119, 4
  %v4122 = vshll.u32 %v3581, 16
  %v4124 = vrot.slane %v4122, 5
  %v4125 = vor.u32 %v4121, %v4124
  %v4126 = vrot.slane %v4125, 4
  %v4128 = vshll.u32 %v3582, 16
  %v4130 = vrot.slane %v4128, 5
  %v4131 = vsel %vm117, %v4126, %v4130
  %v4132 = vshrl.u32 %v3582, 16
  %v4134 = vrot.slane %v4132, 4
  %v4135 = vor.u32 %v4134, %v4130
  %v4136 = vrot.slane %v4135, 4
  %v4138 = vshll.u32 %v3583, 16
  %v4140 = vrot.slane %v4138, 5
  %v4141 = vsel %vm117, %v4136, %v4140
  %v4143 = vshrl.u32 %v3584, 16
  %v4145 = vrot.slane %v4143, 4
  %v4146 = vshll.u32 %v3584, 16
  %v4148 = vrot.slane %v4146, 5
  %v4149 = vor.u32 %v4145, %v4148
  %v4150 = vrot.slane %v4149, 4
  %v4152 = vshll.u32 %v3585, 16
  %v4154 = vrot.slane %v4152, 5
  %v4155 = vsel %vm117, %v4150, %v4154
  %v4156 = vshrl.u32 %v3585, 16
  %v4158 = vrot.slane %v4156, 4
  %v4159 = vor.u32 %v4158, %v4154
  %v4160 = vrot.slane %v4159, 4
  %v4162 = vshll.u32 %v3586, 16
  %v4164 = vrot.slane %v4162, 5
  %v4165 = vsel %vm117, %v4160, %v4164
  %v4167 = vshrl.u32 %v3587, 16
  %v4169 = vrot.slane %v4167, 4
  %v4170 = vshll.u32 %v3587, 16
  %v4172 = vrot.slane %v4170, 5
  %v4173 = vor.u32 %v4169, %v4172
  %v4174 = vrot.slane %v4173, 4
  %v4176 = vshll.u32 %v3588, 16
  %v4178 = vrot.slane %v4176, 5
  %v4179 = vsel %vm117, %v4174, %v4178
  %v4180 = vshrl.u32 %v3588, 16
  %v4182 = vrot.slane %v4180, 4
  %v4183 = vor.u32 %v4182, %v4178
  %v4184 = vrot.slane %v4183, 4
  %v4186 = vshll.u32 %v3589, 16
  %v4188 = vrot.slane %v4186, 5
  %v4189 = vsel %vm117, %v4184, %v4188
  %v4191 = vshrl.u32 %v3590, 16
  %v4193 = vrot.slane %v4191, 4
  %v4194 = vshll.u32 %v3590, 16
  %v4196 = vrot.slane %v4194, 5
  %v4197 = vor.u32 %v4193, %v4196
  %v4198 = vrot.slane %v4197, 4
  %v4200 = vshll.u32 %v3591, 16
  %v4202 = vrot.slane %v4200, 5
  %v4203 = vsel %vm117, %v4198, %v4202
  %v4204 = vshrl.u32 %v3591, 16
  %v4206 = vrot.slane %v4204, 4
  %v4207 = vor.u32 %v4206, %v4202
  %v4208 = vrot.slane %v4207, 4
  %v4210 = vshll.u32 %v3592, 16
  %v4212 = vrot.slane %v4210, 5
  %v4213 = vsel %vm117, %v4208, %v4212
  %v4215 = vshrl.u32 %v3593, 16
  %v4217 = vrot.slane %v4215, 4
  %v4218 = vshll.u32 %v3593, 16
  %v4220 = vrot.slane %v4218, 5
  %v4221 = vor.u32 %v4217, %v4220
  %v4222 = vrot.slane %v4221, 4
  %v4224 = vshll.u32 %v3594, 16
  %v4226 = vrot.slane %v4224, 5
  %v4227 = vsel %vm117, %v4222, %v4226
  %v4228 = vshrl.u32 %v3594, 16
  %v4230 = vrot.slane %v4228, 4
  %v4231 = vor.u32 %v4230, %v4226
  %v4232 = vrot.slane %v4231, 4
  %v4234 = vshll.u32 %v3595, 16
  %v4236 = vrot.slane %v4234, 5
  %v4237 = vsel %vm117, %v4232, %v4236
  %v4239 = vshrl.u32 %v3596, 16
  %v4241 = vrot.slane %v4239, 4
  %v4242 = vshll.u32 %v3596, 16
  %v4244 = vrot.slane %v4242, 5
  %v4245 = vor.u32 %v4241, %v4244
  %v4246 = vrot.slane %v4245, 4
  %v4248 = vshll.u32 %v3597, 16
  %v4250 = vrot.slane %v4248, 5
  %v4251 = vsel %vm117, %v4246, %v4250
  %v4252 = vshrl.u32 %v3597, 16
  %v4254 = vrot.slane %v4252, 4
  %v4255 = vor.u32 %v4254, %v4250
  %v4256 = vrot.slane %v4255, 4
  %v4258 = vshll.u32 %v3598, 16
  %v4260 = vrot.slane %v4258, 5
  %v4261 = vsel %vm117, %v4256, %v4260
  %v4263 = vshrl.u32 %v3599, 16
  %v4265 = vrot.slane %v4263, 4
  %v4266 = vshll.u32 %v3599, 16
  %v4268 = vrot.slane %v4266, 5
  %v4269 = vor.u32 %v4265, %v4268
  %v4270 = vrot.slane %v4269, 4
  %v4272 = vshll.u32 %v3600, 16
  %v4274 = vrot.slane %v4272, 5
  %v4275 = vsel %vm117, %v4270, %v4274
  %v4276 = vshrl.u32 %v3600, 16
  %v4278 = vrot.slane %v4276, 4
  %v4279 = vor.u32 %v4278, %v4274
  %v4280 = vrot.slane %v4279, 4
  %v4282 = vshll.u32 %v3601, 16
  %v4284 = vrot.slane %v4282, 5
  %v4285 = vsel %vm117, %v4280, %v4284
  %v4287 = vshrl.u32 %v3602, 16
  %v4289 = vrot.slane %v4287, 4
  %v4290 = vshll.u32 %v3602, 16
  %v4292 = vrot.slane %v4290, 5
  %v4293 = vor.u32 %v4289, %v4292
  %v4294 = vrot.slane %v4293, 4
  %v4296 = vshll.u32 %v3603, 16
  %v4298 = vrot.slane %v4296, 5
  %v4299 = vsel %vm117, %v4294, %v4298
  %v4300 = vshrl.u32 %v3603, 16
  %v4302 = vrot.slane %v4300, 4
  %v4303 = vor.u32 %v4302, %v4298
  %v4304 = vrot.slane %v4303, 4
  %v4306 = vshll.u32 %v3604, 16
  %v4308 = vrot.slane %v4306, 5
  %v4309 = vsel %vm117, %v4304, %v4308
  %v4311 = vshrl.u32 %v3605, 16
  %v4313 = vrot.slane %v4311, 4
  %v4314 = vshll.u32 %v3605, 16
  %v4316 = vrot.slane %v4314, 5
  %v4317 = vor.u32 %v4313, %v4316
  %v4318 = vrot.slane %v4317, 4
  %v4320 = vshll.u32 %v3606, 16
  %v4322 = vrot.slane %v4320, 5
  %v4323 = vsel %vm117, %v4318, %v4322
  %v4324 = vshrl.u32 %v3606, 16
  %v4326 = vrot.slane %v4324, 4
  %v4327 = vor.u32 %v4326, %v4322
  %v4328 = vrot.slane %v4327, 4
  %v4330 = vshll.u32 %v3607, 16
  %v4332 = vrot.slane %v4330, 5
  %v4333 = vsel %vm117, %v4328, %v4332
  %v4335 = vshrl.u32 %v3608, 16
  %v4337 = vrot.slane %v4335, 4
  %v4338 = vshll.u32 %v3608, 16
  %v4340 = vrot.slane %v4338, 5
  %v4341 = vor.u32 %v4337, %v4340
  %v4342 = vrot.slane %v4341, 4
  %v4344 = vshll.u32 %v3609, 16
  %v4346 = vrot.slane %v4344, 5
  %v4347 = vsel %vm117, %v4342, %v4346
  %v4348 = vshrl.u32 %v3609, 16
  %v4350 = vrot.slane %v4348, 4
  %v4351 = vor.u32 %v4350, %v4346
  %v4352 = vrot.slane %v4351, 4
  %v4354 = vshll.u32 %v3610, 16
  %v4356 = vrot.slane %v4354, 5
  %v4357 = vsel %vm117, %v4352, %v4356
  %v4359 = vshrl.u32 %v3611, 16
  %v4361 = vrot.slane %v4359, 4
  %v4362 = vshll.u32 %v3611, 16
  %v4364 = vrot.slane %v4362, 5
  %v4365 = vor.u32 %v4361, %v4364
  %v4366 = vrot.slane %v4365, 4
  %v4368 = vshll.u32 %v3612, 16
  %v4370 = vrot.slane %v4368, 5
  %v4371 = vsel %vm117, %v4366, %v4370
  %v4372 = vshrl.u32 %v3612, 16
  %v4374 = vrot.slane %v4372, 4
  %v4375 = vor.u32 %v4374, %v4370
  %v4376 = vrot.slane %v4375, 4
  %v4378 = vshll.u32 %v3613, 16
  %v4380 = vrot.slane %v4378, 5
  %v4381 = vsel %vm117, %v4376, %v4380
  %s4382 = scalar_lea.vmem %s1, 64
  %v4383 = vld [vmem:[%s4382] sm:$0xf]
  %v4384 = vld [vmem:[%s4382 + $0x4] sm:$0xf]
  %v4385 = vld [vmem:[%s4382 + $0x8] sm:$0xf]
  %v4386 = vld [vmem:[%s4382 + $0xc] sm:$0xf]
  %v4387 = vunpack.c.l.b16 %v3627
  %v4388 = vunpack.c.l.b16 %v3637
  %v4389 = vunpack.c.l.b16 %v3651
  %v4390 = vunpack.c.l.b16 %v3661
  %v4391 = vunpack.c.l.b16 %v3675
  %v4392 = vunpack.c.l.b16 %v3685
  %v4393 = vunpack.c.l.b16 %v3699
  %v4394 = vunpack.c.l.b16 %v3709
  %v4395 = vunpack.c.l.b16 %v3723
  %v4396 = vunpack.c.l.b16 %v3733
  %v4397 = vunpack.c.l.b16 %v3747
  %v4398 = vunpack.c.l.b16 %v3757
  %v4399 = vunpack.c.l.b16 %v3771
  %v4400 = vunpack.c.l.b16 %v3781
  %v4401 = vunpack.c.l.b16 %v3795
  %v4402 = vunpack.c.l.b16 %v3805
  %v4403 = vunpack.c.l.b16 %v3819
  %v4404 = vunpack.c.l.b16 %v3829
  %v4405 = vunpack.c.l.b16 %v3843
  %v4406 = vunpack.c.l.b16 %v3853
  %v4407 = vunpack.c.l.b16 %v3867
  %v4408 = vunpack.c.l.b16 %v3877
  %v4409 = vunpack.c.l.b16 %v3891
  %v4410 = vunpack.c.l.b16 %v3901
  %v4411 = vunpack.c.l.b16 %v3915
  %v4412 = vunpack.c.l.b16 %v3925
  %v4413 = vunpack.c.l.b16 %v3939
  %v4414 = vunpack.c.l.b16 %v3949
  %v4415 = vunpack.c.l.b16 %v3963
  %v4416 = vunpack.c.l.b16 %v3973
  %v4417 = vunpack.c.l.b16 %v3987
  %v4418 = vunpack.c.l.b16 %v3997
  %v4419 = vunpack.c.l.b16 %v4011
  %v4420 = vunpack.c.l.b16 %v4021
  %v4421 = vunpack.c.l.b16 %v4035
  %v4422 = vunpack.c.l.b16 %v4045
  %v4423 = vunpack.c.l.b16 %v4059
  %v4424 = vunpack.c.l.b16 %v4069
  %v4425 = vunpack.c.l.b16 %v4083
  %v4426 = vunpack.c.l.b16 %v4093
  %v4427 = vunpack.c.l.b16 %v4107
  %v4428 = vunpack.c.l.b16 %v4117
  %v4429 = vunpack.c.l.b16 %v4131
  %v4430 = vunpack.c.l.b16 %v4141
  %v4431 = vunpack.c.l.b16 %v4155
  %v4432 = vunpack.c.l.b16 %v4165
  %v4433 = vunpack.c.l.b16 %v4179
  %v4434 = vunpack.c.l.b16 %v4189
  %v4435 = vunpack.c.l.b16 %v4203
  %v4436 = vunpack.c.l.b16 %v4213
  %v4437 = vunpack.c.l.b16 %v4227
  %v4438 = vunpack.c.l.b16 %v4237
  %v4439 = vunpack.c.l.b16 %v4251
  %v4440 = vunpack.c.l.b16 %v4261
  %v4441 = vunpack.c.l.b16 %v4275
  %v4442 = vunpack.c.l.b16 %v4285
  %v4443 = vunpack.c.l.b16 %v4299
  %v4444 = vunpack.c.l.b16 %v4309
  %v4445 = vunpack.c.l.b16 %v4323
  %v4446 = vunpack.c.l.b16 %v4333
  %v4447 = vunpack.c.l.b16 %v4347
  %v4448 = vunpack.c.l.b16 %v4357
  %v4449 = vunpack.c.l.b16 %v4371
  %v4450 = vunpack.c.l.b16 %v4381
  %v4451 = vpack.c.b16 %v4388, %v4387
  %v4452 = vpack.c.b16 %v4390, %v4389
  %v4453 = vpack.c.b16 %v4392, %v4391
  %v4454 = vpack.c.b16 %v4394, %v4393
  %v4455 = vpack.c.b16 %v4396, %v4395
  %v4456 = vpack.c.b16 %v4398, %v4397
  %v4457 = vpack.c.b16 %v4400, %v4399
  %v4458 = vpack.c.b16 %v4402, %v4401
  %v4459 = vpack.c.b16 %v4404, %v4403
  %v4460 = vpack.c.b16 %v4406, %v4405
  %v4461 = vpack.c.b16 %v4408, %v4407
  %v4462 = vpack.c.b16 %v4410, %v4409
  %v4463 = vpack.c.b16 %v4412, %v4411
  %v4464 = vpack.c.b16 %v4414, %v4413
  %v4465 = vpack.c.b16 %v4416, %v4415
  %v4466 = vpack.c.b16 %v4418, %v4417
  %v4467 = vpack.c.b16 %v4420, %v4419
  %v4468 = vpack.c.b16 %v4422, %v4421
  %v4469 = vpack.c.b16 %v4424, %v4423
  %v4470 = vpack.c.b16 %v4426, %v4425
  %v4471 = vpack.c.b16 %v4428, %v4427
  %v4472 = vpack.c.b16 %v4430, %v4429
  %v4473 = vpack.c.b16 %v4432, %v4431
  %v4474 = vpack.c.b16 %v4434, %v4433
  %v4475 = vpack.c.b16 %v4436, %v4435
  %v4476 = vpack.c.b16 %v4438, %v4437
  %v4477 = vpack.c.b16 %v4440, %v4439
  %v4478 = vpack.c.b16 %v4442, %v4441
  %v4479 = vpack.c.b16 %v4444, %v4443
  %v4480 = vpack.c.b16 %v4446, %v4445
  %v4481 = vpack.c.b16 %v4448, %v4447
  %v4482 = vpack.c.b16 %v4450, %v4449
  %v4487 = vunpack.c.l.b16 %v4383
  %v4488 = vunpack.c.l.b16 %v4384
  %v4489 = vunpack.c.l.b16 %v4385
  %v4490 = vunpack.c.l.b16 %v4386
  %v4491 = vpack.c.b16 %v4488, %v4487
  %v4492 = vpack.c.b16 %v4490, %v4489
  %v4496 = vsel %vm999, %v4451, 0
  %v4499 = vsel %vm999, %v4452, 0
  %v4502 = vsel %vm999, %v4453, 0
  %v4505 = vsel %vm999, %v4454, 0
  %v4508 = vsel %vm999, %v4455, 0
  %v4511 = vsel %vm999, %v4456, 0
  %v4514 = vsel %vm999, %v4457, 0
  %v4517 = vsel %vm999, %v4458, 0
  %v4520 = vsel %vm999, %v4459, 0
  %v4523 = vsel %vm999, %v4460, 0
  %v4526 = vsel %vm999, %v4461, 0
  %v4529 = vsel %vm999, %v4462, 0
  %v4532 = vsel %vm999, %v4463, 0
  %v4535 = vsel %vm999, %v4464, 0
  %v4538 = vsel %vm999, %v4465, 0
  %v4541 = vsel %vm999, %v4466, 0
  %v4544 = vsel %vm999, %v4467, 0
  %v4547 = vsel %vm999, %v4468, 0
  %v4550 = vsel %vm999, %v4469, 0
  %v4553 = vsel %vm999, %v4470, 0
  %v4556 = vsel %vm999, %v4471, 0
  %v4559 = vsel %vm999, %v4472, 0
  %v4562 = vsel %vm999, %v4473, 0
  %v4565 = vsel %vm999, %v4474, 0
  %v4568 = vsel %vm999, %v4475, 0
  %v4571 = vsel %vm999, %v4476, 0
  %v4574 = vsel %vm999, %v4477, 0
  %v4577 = vsel %vm999, %v4478, 0
  %v4580 = vsel %vm999, %v4479, 0
  %v4583 = vsel %vm999, %v4480, 0
  %v4586 = vsel %vm999, %v4481, 0
  %v4589 = vsel %vm999, %v4482, 0
  %4591 = vmatprep.subr.bf16.mxu0 0
  %4592 = vmatpush1.bf16.msra.mxu0 0
  %4593 = vmatprep.subr.bf16.mxu0 0
  %4594 = vmatpush1.bf16.msra.mxu0 0
  %4595 = vmatprep.subr.bf16.mxu0 0
  %4596 = vmatpush1.bf16.msra.mxu0 0
  %4597 = vmatprep.subr.bf16.mxu0 0
  %4598 = vmatpush1.bf16.msra.mxu0 0
  %4599 = vmatprep.subr.bf16.mxu0 0
  %4600 = vmatpush1.bf16.msra.mxu0 0
  %4601 = vmatprep.subr.bf16.mxu0 0
  %4602 = vmatpush1.bf16.msra.mxu0 0
  %4603 = vmatprep.subr.bf16.mxu0 0
  %4604 = vmatpush1.bf16.msra.mxu0 %v4492
  %4605 = vmatprep.subr.bf16.mxu0 0
  %4606 = vmatpush1.bf16.msra.mxu0 %v4491
  %4607 = vmatprep.subr.bf16.mxu0 0
  %4608 = vmatpush2.bf16.msra.mxu0 0
  %4609 = vmatprep.subr.bf16.mxu0 0
  %4610 = vmatpush2.bf16.msra.mxu0 0
  %4611 = vmatprep.subr.bf16.mxu0 0
  %4612 = vmatpush2.bf16.msra.mxu0 0
  %4613 = vmatprep.subr.bf16.mxu0 0
  %4614 = vmatpush2.bf16.msra.mxu0 0
  %4615 = vmatprep.subr.bf16.mxu0 0
  %4616 = vmatpush2.bf16.msra.mxu0 0
  %4617 = vmatprep.subr.bf16.mxu0 0
  %4618 = vmatpush2.bf16.msra.mxu0 0
  %4619 = vmatprep.subr.bf16.mxu0 0
  %4620 = vmatpush2.bf16.msra.mxu0 0
  %4621 = vmatprep.subr.bf16.mxu0 0
  %4622 = vmatpush2.bf16.msra.mxu0 0
  %4623 = vmatprep.mubr.bf16.mxu0 0
  %4624 = vmatmul.mubr.bf16.gmra.mxu0 %v4496
  %v4625 = vpop.f32.mrf.mxu0
  %v4626 = vadd.f32 0.0, %v4625
  %v4627 = vpop.f32.mrf.mxu0
  %v4628 = vpop.f32.mrf.mxu0
  %v4629 = vadd.f32 0.0, %v4628
  %v4630 = vpop.f32.mrf.mxu0
  %4631 = vmatprep.mubr.bf16.mxu0 0
  %4632 = vmatmul.mubr.bf16.gmra.mxu0 %v4499
  %v4633 = vpop.f32.mrf.mxu0
  %v4634 = vadd.f32 0.0, %v4633
  %v4635 = vpop.f32.mrf.mxu0
  %v4636 = vpop.f32.mrf.mxu0
  %v4637 = vadd.f32 0.0, %v4636
  %v4638 = vpop.f32.mrf.mxu0
  %4639 = vmatprep.mubr.bf16.mxu0 0
  %4640 = vmatmul.mubr.bf16.gmra.mxu0 %v4502
  %v4641 = vpop.f32.mrf.mxu0
  %v4642 = vadd.f32 0.0, %v4641
  %v4643 = vpop.f32.mrf.mxu0
  %v4644 = vpop.f32.mrf.mxu0
  %v4645 = vadd.f32 0.0, %v4644
  %v4646 = vpop.f32.mrf.mxu0
  %4647 = vmatprep.mubr.bf16.mxu0 0
  %4648 = vmatmul.mubr.bf16.gmra.mxu0 %v4505
  %v4649 = vpop.f32.mrf.mxu0
  %v4650 = vadd.f32 0.0, %v4649
  %v4651 = vpop.f32.mrf.mxu0
  %v4652 = vpop.f32.mrf.mxu0
  %v4653 = vadd.f32 0.0, %v4652
  %v4654 = vpop.f32.mrf.mxu0
  %4655 = vmatprep.mubr.bf16.mxu0 0
  %4656 = vmatmul.mubr.bf16.gmra.mxu0 %v4508
  %v4657 = vpop.f32.mrf.mxu0
  %v4658 = vadd.f32 0.0, %v4657
  %v4659 = vpop.f32.mrf.mxu0
  %v4660 = vpop.f32.mrf.mxu0
  %v4661 = vadd.f32 0.0, %v4660
  %v4662 = vpop.f32.mrf.mxu0
  %4663 = vmatprep.mubr.bf16.mxu0 0
  %4664 = vmatmul.mubr.bf16.gmra.mxu0 %v4511
  %v4665 = vpop.f32.mrf.mxu0
  %v4666 = vadd.f32 0.0, %v4665
  %v4667 = vpop.f32.mrf.mxu0
  %v4668 = vpop.f32.mrf.mxu0
  %v4669 = vadd.f32 0.0, %v4668
  %v4670 = vpop.f32.mrf.mxu0
  %4671 = vmatprep.mubr.bf16.mxu0 0
  %4672 = vmatmul.mubr.bf16.gmra.mxu0 %v4514
  %v4673 = vpop.f32.mrf.mxu0
  %v4674 = vadd.f32 0.0, %v4673
  %v4675 = vpop.f32.mrf.mxu0
  %v4676 = vpop.f32.mrf.mxu0
  %v4677 = vadd.f32 0.0, %v4676
  %v4678 = vpop.f32.mrf.mxu0
  %4679 = vmatprep.mubr.bf16.mxu0 0
  %4680 = vmatmul.mubr.bf16.gmra.mxu0 %v4517
  %v4681 = vpop.f32.mrf.mxu0
  %v4682 = vadd.f32 0.0, %v4681
  %v4683 = vpop.f32.mrf.mxu0
  %v4684 = vpop.f32.mrf.mxu0
  %v4685 = vadd.f32 0.0, %v4684
  %v4686 = vpop.f32.mrf.mxu0
  %4687 = vmatprep.mubr.bf16.mxu0 0
  %4688 = vmatmul.mubr.bf16.gmra.mxu0 %v4520
  %v4689 = vpop.f32.mrf.mxu0
  %v4690 = vadd.f32 0.0, %v4689
  %v4691 = vpop.f32.mrf.mxu0
  %v4692 = vpop.f32.mrf.mxu0
  %v4693 = vadd.f32 0.0, %v4692
  %v4694 = vpop.f32.mrf.mxu0
  %4695 = vmatprep.mubr.bf16.mxu0 0
  %4696 = vmatmul.mubr.bf16.gmra.mxu0 %v4523
  %v4697 = vpop.f32.mrf.mxu0
  %v4698 = vadd.f32 0.0, %v4697
  %v4699 = vpop.f32.mrf.mxu0
  %v4700 = vpop.f32.mrf.mxu0
  %v4701 = vadd.f32 0.0, %v4700
  %v4702 = vpop.f32.mrf.mxu0
  %4703 = vmatprep.mubr.bf16.mxu0 0
  %4704 = vmatmul.mubr.bf16.gmra.mxu0 %v4526
  %v4705 = vpop.f32.mrf.mxu0
  %v4706 = vadd.f32 0.0, %v4705
  %v4707 = vpop.f32.mrf.mxu0
  %v4708 = vpop.f32.mrf.mxu0
  %v4709 = vadd.f32 0.0, %v4708
  %v4710 = vpop.f32.mrf.mxu0
  %4711 = vmatprep.mubr.bf16.mxu0 0
  %4712 = vmatmul.mubr.bf16.gmra.mxu0 %v4529
  %v4713 = vpop.f32.mrf.mxu0
  %v4714 = vadd.f32 0.0, %v4713
  %v4715 = vpop.f32.mrf.mxu0
  %v4716 = vpop.f32.mrf.mxu0
  %v4717 = vadd.f32 0.0, %v4716
  %v4718 = vpop.f32.mrf.mxu0
  %4719 = vmatprep.mubr.bf16.mxu0 0
  %4720 = vmatmul.mubr.bf16.gmra.mxu0 %v4532
  %v4721 = vpop.f32.mrf.mxu0
  %v4722 = vadd.f32 0.0, %v4721
  %v4723 = vpop.f32.mrf.mxu0
  %v4724 = vpop.f32.mrf.mxu0
  %v4725 = vadd.f32 0.0, %v4724
  %v4726 = vpop.f32.mrf.mxu0
  %4727 = vmatprep.mubr.bf16.mxu0 0
  %4728 = vmatmul.mubr.bf16.gmra.mxu0 %v4535
  %v4729 = vpop.f32.mrf.mxu0
  %v4730 = vadd.f32 0.0, %v4729
  %v4731 = vpop.f32.mrf.mxu0
  %v4732 = vpop.f32.mrf.mxu0
  %v4733 = vadd.f32 0.0, %v4732
  %v4734 = vpop.f32.mrf.mxu0
  %4735 = vmatprep.mubr.bf16.mxu0 0
  %4736 = vmatmul.mubr.bf16.gmra.mxu0 %v4538
  %v4737 = vpop.f32.mrf.mxu0
  %v4738 = vadd.f32 0.0, %v4737
  %v4739 = vpop.f32.mrf.mxu0
  %v4740 = vpop.f32.mrf.mxu0
  %v4741 = vadd.f32 0.0, %v4740
  %v4742 = vpop.f32.mrf.mxu0
  %4743 = vmatprep.mubr.bf16.mxu0 0
  %4744 = vmatmul.mubr.bf16.gmra.mxu0 %v4541
  %v4745 = vpop.f32.mrf.mxu0
  %v4746 = vadd.f32 0.0, %v4745
  %v4747 = vpop.f32.mrf.mxu0
  %v4748 = vpop.f32.mrf.mxu0
  %v4749 = vadd.f32 0.0, %v4748
  %v4750 = vpop.f32.mrf.mxu0
  %4751 = vmatprep.mubr.bf16.mxu0 0
  %4752 = vmatmul.mubr.bf16.gmra.mxu0 %v4544
  %v4753 = vpop.f32.mrf.mxu0
  %v4754 = vadd.f32 0.0, %v4753
  %v4755 = vpop.f32.mrf.mxu0
  %v4756 = vpop.f32.mrf.mxu0
  %v4757 = vadd.f32 0.0, %v4756
  %v4758 = vpop.f32.mrf.mxu0
  %4759 = vmatprep.mubr.bf16.mxu0 0
  %4760 = vmatmul.mubr.bf16.gmra.mxu0 %v4547
  %v4761 = vpop.f32.mrf.mxu0
  %v4762 = vadd.f32 0.0, %v4761
  %v4763 = vpop.f32.mrf.mxu0
  %v4764 = vpop.f32.mrf.mxu0
  %v4765 = vadd.f32 0.0, %v4764
  %v4766 = vpop.f32.mrf.mxu0
  %4767 = vmatprep.mubr.bf16.mxu0 0
  %4768 = vmatmul.mubr.bf16.gmra.mxu0 %v4550
  %v4769 = vpop.f32.mrf.mxu0
  %v4770 = vadd.f32 0.0, %v4769
  %v4771 = vpop.f32.mrf.mxu0
  %v4772 = vpop.f32.mrf.mxu0
  %v4773 = vadd.f32 0.0, %v4772
  %v4774 = vpop.f32.mrf.mxu0
  %4775 = vmatprep.mubr.bf16.mxu0 0
  %4776 = vmatmul.mubr.bf16.gmra.mxu0 %v4553
  %v4777 = vpop.f32.mrf.mxu0
  %v4778 = vadd.f32 0.0, %v4777
  %v4779 = vpop.f32.mrf.mxu0
  %v4780 = vpop.f32.mrf.mxu0
  %v4781 = vadd.f32 0.0, %v4780
  %v4782 = vpop.f32.mrf.mxu0
  %4783 = vmatprep.mubr.bf16.mxu0 0
  %4784 = vmatmul.mubr.bf16.gmra.mxu0 %v4556
  %v4785 = vpop.f32.mrf.mxu0
  %v4786 = vadd.f32 0.0, %v4785
  %v4787 = vpop.f32.mrf.mxu0
  %v4788 = vpop.f32.mrf.mxu0
  %v4789 = vadd.f32 0.0, %v4788
  %v4790 = vpop.f32.mrf.mxu0
  %4791 = vmatprep.mubr.bf16.mxu0 0
  %4792 = vmatmul.mubr.bf16.gmra.mxu0 %v4559
  %v4793 = vpop.f32.mrf.mxu0
  %v4794 = vadd.f32 0.0, %v4793
  %v4795 = vpop.f32.mrf.mxu0
  %v4796 = vpop.f32.mrf.mxu0
  %v4797 = vadd.f32 0.0, %v4796
  %v4798 = vpop.f32.mrf.mxu0
  %4799 = vmatprep.mubr.bf16.mxu0 0
  %4800 = vmatmul.mubr.bf16.gmra.mxu0 %v4562
  %v4801 = vpop.f32.mrf.mxu0
  %v4802 = vadd.f32 0.0, %v4801
  %v4803 = vpop.f32.mrf.mxu0
  %v4804 = vpop.f32.mrf.mxu0
  %v4805 = vadd.f32 0.0, %v4804
  %v4806 = vpop.f32.mrf.mxu0
  %4807 = vmatprep.mubr.bf16.mxu0 0
  %4808 = vmatmul.mubr.bf16.gmra.mxu0 %v4565
  %v4809 = vpop.f32.mrf.mxu0
  %v4810 = vadd.f32 0.0, %v4809
  %v4811 = vpop.f32.mrf.mxu0
  %v4812 = vpop.f32.mrf.mxu0
  %v4813 = vadd.f32 0.0, %v4812
  %v4814 = vpop.f32.mrf.mxu0
  %4815 = vmatprep.mubr.bf16.mxu0 0
  %4816 = vmatmul.mubr.bf16.gmra.mxu0 %v4568
  %v4817 = vpop.f32.mrf.mxu0
  %v4818 = vadd.f32 0.0, %v4817
  %v4819 = vpop.f32.mrf.mxu0
  %v4820 = vpop.f32.mrf.mxu0
  %v4821 = vadd.f32 0.0, %v4820
  %v4822 = vpop.f32.mrf.mxu0
  %4823 = vmatprep.mubr.bf16.mxu0 0
  %4824 = vmatmul.mubr.bf16.gmra.mxu0 %v4571
  %v4825 = vpop.f32.mrf.mxu0
  %v4826 = vadd.f32 0.0, %v4825
  %v4827 = vpop.f32.mrf.mxu0
  %v4828 = vpop.f32.mrf.mxu0
  %v4829 = vadd.f32 0.0, %v4828
  %v4830 = vpop.f32.mrf.mxu0
  %4831 = vmatprep.mubr.bf16.mxu0 0
  %4832 = vmatmul.mubr.bf16.gmra.mxu0 %v4574
  %v4833 = vpop.f32.mrf.mxu0
  %v4834 = vadd.f32 0.0, %v4833
  %v4835 = vpop.f32.mrf.mxu0
  %v4836 = vpop.f32.mrf.mxu0
  %v4837 = vadd.f32 0.0, %v4836
  %v4838 = vpop.f32.mrf.mxu0
  %4839 = vmatprep.mubr.bf16.mxu0 0
  %4840 = vmatmul.mubr.bf16.gmra.mxu0 %v4577
  %v4841 = vpop.f32.mrf.mxu0
  %v4842 = vadd.f32 0.0, %v4841
  %v4843 = vpop.f32.mrf.mxu0
  %v4844 = vpop.f32.mrf.mxu0
  %v4845 = vadd.f32 0.0, %v4844
  %v4846 = vpop.f32.mrf.mxu0
  %4847 = vmatprep.mubr.bf16.mxu0 0
  %4848 = vmatmul.mubr.bf16.gmra.mxu0 %v4580
  %v4849 = vpop.f32.mrf.mxu0
  %v4850 = vadd.f32 0.0, %v4849
  %v4851 = vpop.f32.mrf.mxu0
  %v4852 = vpop.f32.mrf.mxu0
  %v4853 = vadd.f32 0.0, %v4852
  %v4854 = vpop.f32.mrf.mxu0
  %4855 = vmatprep.mubr.bf16.mxu0 0
  %4856 = vmatmul.mubr.bf16.gmra.mxu0 %v4583
  %v4857 = vpop.f32.mrf.mxu0
  %v4858 = vadd.f32 0.0, %v4857
  %v4859 = vpop.f32.mrf.mxu0
  %v4860 = vpop.f32.mrf.mxu0
  %v4861 = vadd.f32 0.0, %v4860
  %v4862 = vpop.f32.mrf.mxu0
  %4863 = vmatprep.mubr.bf16.mxu0 0
  %4864 = vmatmul.mubr.bf16.gmra.mxu0 %v4586
  %v4865 = vpop.f32.mrf.mxu0
  %v4866 = vadd.f32 0.0, %v4865
  %v4867 = vpop.f32.mrf.mxu0
  %v4868 = vpop.f32.mrf.mxu0
  %v4869 = vadd.f32 0.0, %v4868
  %v4870 = vpop.f32.mrf.mxu0
  %4871 = vmatprep.mubr.bf16.mxu0 0
  %4872 = vmatmul.mubr.bf16.gmra.mxu0 %v4589
  %v4873 = vpop.f32.mrf.mxu0
  %v4874 = vadd.f32 0.0, %v4873
  %v4875 = vpop.f32.mrf.mxu0
  %v4876 = vpop.f32.mrf.mxu0
  %v4877 = vadd.f32 0.0, %v4876
  %v4878 = vpop.f32.mrf.mxu0
  %4879 = vdwg.mxu0
  %v4880 = vadd.f32 %v3454, %v4626
  %v4881 = vadd.f32 %v3455, %v4629
  %v4882 = vadd.f32 %v3456, %v4634
  %v4883 = vadd.f32 %v3457, %v4637
  %v4884 = vadd.f32 %v3458, %v4642
  %v4885 = vadd.f32 %v3459, %v4645
  %v4886 = vadd.f32 %v3460, %v4650
  %v4887 = vadd.f32 %v3461, %v4653
  %v4888 = vadd.f32 %v3462, %v4658
  %v4889 = vadd.f32 %v3463, %v4661
  %v4890 = vadd.f32 %v3464, %v4666
  %v4891 = vadd.f32 %v3465, %v4669
  %v4892 = vadd.f32 %v3466, %v4674
  %v4893 = vadd.f32 %v3467, %v4677
  %v4894 = vadd.f32 %v3468, %v4682
  %v4895 = vadd.f32 %v3469, %v4685
  %v4896 = vadd.f32 %v3470, %v4690
  %v4897 = vadd.f32 %v3471, %v4693
  %v4898 = vadd.f32 %v3472, %v4698
  %v4899 = vadd.f32 %v3473, %v4701
  %v4900 = vadd.f32 %v3474, %v4706
  %v4901 = vadd.f32 %v3475, %v4709
  %v4902 = vadd.f32 %v3476, %v4714
  %v4903 = vadd.f32 %v3477, %v4717
  %v4904 = vadd.f32 %v3478, %v4722
  %v4905 = vadd.f32 %v3479, %v4725
  %v4906 = vadd.f32 %v3480, %v4730
  %v4907 = vadd.f32 %v3481, %v4733
  %v4908 = vadd.f32 %v3482, %v4738
  %v4909 = vadd.f32 %v3483, %v4741
  %v4910 = vadd.f32 %v3484, %v4746
  %v4911 = vadd.f32 %v3485, %v4749
  %v4912 = vadd.f32 %v3486, %v4754
  %v4913 = vadd.f32 %v3487, %v4757
  %v4914 = vadd.f32 %v3488, %v4762
  %v4915 = vadd.f32 %v3489, %v4765
  %v4916 = vadd.f32 %v3490, %v4770
  %v4917 = vadd.f32 %v3491, %v4773
  %v4918 = vadd.f32 %v3492, %v4778
  %v4919 = vadd.f32 %v3493, %v4781
  %v4920 = vadd.f32 %v3494, %v4786
  %v4921 = vadd.f32 %v3495, %v4789
  %v4922 = vadd.f32 %v3496, %v4794
  %v4923 = vadd.f32 %v3497, %v4797
  %v4924 = vadd.f32 %v3498, %v4802
  %v4925 = vadd.f32 %v3499, %v4805
  %v4926 = vadd.f32 %v3500, %v4810
  %v4927 = vadd.f32 %v3501, %v4813
  %v4928 = vadd.f32 %v3502, %v4818
  %v4929 = vadd.f32 %v3503, %v4821
  %v4930 = vadd.f32 %v3504, %v4826
  %v4931 = vadd.f32 %v3505, %v4829
  %v4932 = vadd.f32 %v3506, %v4834
  %v4933 = vadd.f32 %v3507, %v4837
  %v4934 = vadd.f32 %v3508, %v4842
  %v4935 = vadd.f32 %v3509, %v4845
  %v4936 = vadd.f32 %v3510, %v4850
  %v4937 = vadd.f32 %v3511, %v4853
  %v4938 = vadd.f32 %v3512, %v4858
  %v4939 = vadd.f32 %v3513, %v4861
  %v4940 = vadd.f32 %v3514, %v4866
  %v4941 = vadd.f32 %v3515, %v4869
  %v4942 = vadd.f32 %v3516, %v4874
  %v4943 = vadd.f32 %v3517, %v4877
  %v4944 = vld [vmem:[%s2827] sm:$0xe]
  %v4945 = vld [vmem:[%s2827 + $0xc] sm:$0xe]
  %v4946 = vld [vmem:[%s2827 + $0x18] sm:$0xe]
  %v4947 = vld [vmem:[%s2827 + $0x24] sm:$0xe]
  %v4948 = vld [vmem:[%s2827 + $0x30] sm:$0xe]
  %v4949 = vld [vmem:[%s2827 + $0x3c] sm:$0xe]
  %v4950 = vld [vmem:[%s2827 + $0x48] sm:$0xe]
  %v4951 = vld [vmem:[%s2827 + $0x54] sm:$0xe]
  %v4952 = vld [vmem:[%s2827 + $0x60] sm:$0xe]
  %v4953 = vld [vmem:[%s2827 + $0x6c] sm:$0xe]
  %v4954 = vld [vmem:[%s2827 + $0x78] sm:$0xe]
  %v4955 = vld [vmem:[%s2827 + $0x84] sm:$0xe]
  %v4956 = vld [vmem:[%s2827 + $0x90] sm:$0xe]
  %v4957 = vld [vmem:[%s2827 + $0x9c] sm:$0xe]
  %v4958 = vld [vmem:[%s2827 + $0xa8] sm:$0xe]
  %v4959 = vld [vmem:[%s2827 + $0xb4] sm:$0xe]
  %v4960 = vld [vmem:[%s2827 + $0xd8] sm:$0xe]
  %v4961 = vld [vmem:[%s2827 + $0xe4] sm:$0xe]
  %v4962 = vld [vmem:[%s2827 + $0xf0] sm:$0xe]
  %v4963 = vld [vmem:[%s2827 + $0xfc] sm:$0xe]
  %v4964 = vld [vmem:[%s2827 + $0x108] sm:$0xe]
  %v4965 = vld [vmem:[%s2827 + $0x114] sm:$0xe]
  %v4966 = vld [vmem:[%s2827 + $0x120] sm:$0xe]
  %v4967 = vld [vmem:[%s2827 + $0x12c] sm:$0xe]
  %v4968 = vld [vmem:[%s2827 + $0x138] sm:$0xe]
  %v4969 = vld [vmem:[%s2827 + $0x144] sm:$0xe]
  %v4970 = vld [vmem:[%s2827 + $0x150] sm:$0xe]
  %v4971 = vld [vmem:[%s2827 + $0x15c] sm:$0xe]
  %v4972 = vld [vmem:[%s2827 + $0x168] sm:$0xe]
  %v4973 = vld [vmem:[%s2827 + $0x174] sm:$0xe]
  %v4974 = vld [vmem:[%s2827 + $0x180] sm:$0xe]
  %v4975 = vld [vmem:[%s2827 + $0x18c] sm:$0xe]
  %v5072 = vrot.slane %v4944, 5
  %v5073 = vrot.slane %v5072, 4
  %v5074 = vrot.slane %v3519, 5
  %v5075 = vsel %vm2040, %v5073, %v5074
  %v5076 = vrot.slane %v5074, 4
  %v5077 = vrot.slane %v3520, 5
  %v5078 = vsel %vm2040, %v5076, %v5077
  %v5079 = vrot.slane %v4945, 5
  %v5080 = vrot.slane %v5079, 4
  %v5081 = vrot.slane %v3522, 5
  %v5082 = vsel %vm2040, %v5080, %v5081
  %v5083 = vrot.slane %v5081, 4
  %v5084 = vrot.slane %v3523, 5
  %v5085 = vsel %vm2040, %v5083, %v5084
  %v5086 = vrot.slane %v4946, 5
  %v5087 = vrot.slane %v5086, 4
  %v5088 = vrot.slane %v3525, 5
  %v5089 = vsel %vm2040, %v5087, %v5088
  %v5090 = vrot.slane %v5088, 4
  %v5091 = vrot.slane %v3526, 5
  %v5092 = vsel %vm2040, %v5090, %v5091
  %v5093 = vrot.slane %v4947, 5
  %v5094 = vrot.slane %v5093, 4
  %v5095 = vrot.slane %v3528, 5
  %v5096 = vsel %vm2040, %v5094, %v5095
  %v5097 = vrot.slane %v5095, 4
  %v5098 = vrot.slane %v3529, 5
  %v5099 = vsel %vm2040, %v5097, %v5098
  %v5100 = vrot.slane %v4948, 5
  %v5101 = vrot.slane %v5100, 4
  %v5102 = vrot.slane %v3531, 5
  %v5103 = vsel %vm2040, %v5101, %v5102
  %v5104 = vrot.slane %v5102, 4
  %v5105 = vrot.slane %v3532, 5
  %v5106 = vsel %vm2040, %v5104, %v5105
  %v5107 = vrot.slane %v4949, 5
  %v5108 = vrot.slane %v5107, 4
  %v5109 = vrot.slane %v3534, 5
  %v5110 = vsel %vm2040, %v5108, %v5109
  %v5111 = vrot.slane %v5109, 4
  %v5112 = vrot.slane %v3535, 5
  %v5113 = vsel %vm2040, %v5111, %v5112
  %v5114 = vrot.slane %v4950, 5
  %v5115 = vrot.slane %v5114, 4
  %v5116 = vrot.slane %v3537, 5
  %v5117 = vsel %vm2040, %v5115, %v5116
  %v5118 = vrot.slane %v5116, 4
  %v5119 = vrot.slane %v3538, 5
  %v5120 = vsel %vm2040, %v5118, %v5119
  %v5121 = vrot.slane %v4951, 5
  %v5122 = vrot.slane %v5121, 4
  %v5123 = vrot.slane %v3540, 5
  %v5124 = vsel %vm2040, %v5122, %v5123
  %v5125 = vrot.slane %v5123, 4
  %v5126 = vrot.slane %v3541, 5
  %v5127 = vsel %vm2040, %v5125, %v5126
  %v5128 = vrot.slane %v4952, 5
  %v5129 = vrot.slane %v5128, 4
  %v5130 = vrot.slane %v3543, 5
  %v5131 = vsel %vm2040, %v5129, %v5130
  %v5132 = vrot.slane %v5130, 4
  %v5133 = vrot.slane %v3544, 5
  %v5134 = vsel %vm2040, %v5132, %v5133
  %v5135 = vrot.slane %v4953, 5
  %v5136 = vrot.slane %v5135, 4
  %v5137 = vrot.slane %v3546, 5
  %v5138 = vsel %vm2040, %v5136, %v5137
  %v5139 = vrot.slane %v5137, 4
  %v5140 = vrot.slane %v3547, 5
  %v5141 = vsel %vm2040, %v5139, %v5140
  %v5142 = vrot.slane %v4954, 5
  %v5143 = vrot.slane %v5142, 4
  %v5144 = vrot.slane %v3549, 5
  %v5145 = vsel %vm2040, %v5143, %v5144
  %v5146 = vrot.slane %v5144, 4
  %v5147 = vrot.slane %v3550, 5
  %v5148 = vsel %vm2040, %v5146, %v5147
  %v5149 = vrot.slane %v4955, 5
  %v5150 = vrot.slane %v5149, 4
  %v5151 = vrot.slane %v3552, 5
  %v5152 = vsel %vm2040, %v5150, %v5151
  %v5153 = vrot.slane %v5151, 4
  %v5154 = vrot.slane %v3553, 5
  %v5155 = vsel %vm2040, %v5153, %v5154
  %v5156 = vrot.slane %v4956, 5
  %v5157 = vrot.slane %v5156, 4
  %v5158 = vrot.slane %v3555, 5
  %v5159 = vsel %vm2040, %v5157, %v5158
  %v5160 = vrot.slane %v5158, 4
  %v5161 = vrot.slane %v3556, 5
  %v5162 = vsel %vm2040, %v5160, %v5161
  %v5163 = vrot.slane %v4957, 5
  %v5164 = vrot.slane %v5163, 4
  %v5165 = vrot.slane %v3558, 5
  %v5166 = vsel %vm2040, %v5164, %v5165
  %v5167 = vrot.slane %v5165, 4
  %v5168 = vrot.slane %v3559, 5
  %v5169 = vsel %vm2040, %v5167, %v5168
  %v5170 = vrot.slane %v4958, 5
  %v5171 = vrot.slane %v5170, 4
  %v5172 = vrot.slane %v3561, 5
  %v5173 = vsel %vm2040, %v5171, %v5172
  %v5174 = vrot.slane %v5172, 4
  %v5175 = vrot.slane %v3562, 5
  %v5176 = vsel %vm2040, %v5174, %v5175
  %v5177 = vrot.slane %v4959, 5
  %v5178 = vrot.slane %v5177, 4
  %v5179 = vrot.slane %v3564, 5
  %v5180 = vsel %vm2040, %v5178, %v5179
  %v5181 = vrot.slane %v5179, 4
  %v5182 = vrot.slane %v3565, 5
  %v5183 = vsel %vm2040, %v5181, %v5182
  %v5184 = vrot.slane %v4960, 5
  %v5185 = vrot.slane %v5184, 4
  %v5186 = vrot.slane %v3567, 5
  %v5187 = vsel %vm2040, %v5185, %v5186
  %v5188 = vrot.slane %v5186, 4
  %v5189 = vrot.slane %v3568, 5
  %v5190 = vsel %vm2040, %v5188, %v5189
  %v5191 = vrot.slane %v4961, 5
  %v5192 = vrot.slane %v5191, 4
  %v5193 = vrot.slane %v3570, 5
  %v5194 = vsel %vm2040, %v5192, %v5193
  %v5195 = vrot.slane %v5193, 4
  %v5196 = vrot.slane %v3571, 5
  %v5197 = vsel %vm2040, %v5195, %v5196
  %v5198 = vrot.slane %v4962, 5
  %v5199 = vrot.slane %v5198, 4
  %v5200 = vrot.slane %v3573, 5
  %v5201 = vsel %vm2040, %v5199, %v5200
  %v5202 = vrot.slane %v5200, 4
  %v5203 = vrot.slane %v3574, 5
  %v5204 = vsel %vm2040, %v5202, %v5203
  %v5205 = vrot.slane %v4963, 5
  %v5206 = vrot.slane %v5205, 4
  %v5207 = vrot.slane %v3576, 5
  %v5208 = vsel %vm2040, %v5206, %v5207
  %v5209 = vrot.slane %v5207, 4
  %v5210 = vrot.slane %v3577, 5
  %v5211 = vsel %vm2040, %v5209, %v5210
  %v5212 = vrot.slane %v4964, 5
  %v5213 = vrot.slane %v5212, 4
  %v5214 = vrot.slane %v3579, 5
  %v5215 = vsel %vm2040, %v5213, %v5214
  %v5216 = vrot.slane %v5214, 4
  %v5217 = vrot.slane %v3580, 5
  %v5218 = vsel %vm2040, %v5216, %v5217
  %v5219 = vrot.slane %v4965, 5
  %v5220 = vrot.slane %v5219, 4
  %v5221 = vrot.slane %v3582, 5
  %v5222 = vsel %vm2040, %v5220, %v5221
  %v5223 = vrot.slane %v5221, 4
  %v5224 = vrot.slane %v3583, 5
  %v5225 = vsel %vm2040, %v5223, %v5224
  %v5226 = vrot.slane %v4966, 5
  %v5227 = vrot.slane %v5226, 4
  %v5228 = vrot.slane %v3585, 5
  %v5229 = vsel %vm2040, %v5227, %v5228
  %v5230 = vrot.slane %v5228, 4
  %v5231 = vrot.slane %v3586, 5
  %v5232 = vsel %vm2040, %v5230, %v5231
  %v5233 = vrot.slane %v4967, 5
  %v5234 = vrot.slane %v5233, 4
  %v5235 = vrot.slane %v3588, 5
  %v5236 = vsel %vm2040, %v5234, %v5235
  %v5237 = vrot.slane %v5235, 4
  %v5238 = vrot.slane %v3589, 5
  %v5239 = vsel %vm2040, %v5237, %v5238
  %v5240 = vrot.slane %v4968, 5
  %v5241 = vrot.slane %v5240, 4
  %v5242 = vrot.slane %v3591, 5
  %v5243 = vsel %vm2040, %v5241, %v5242
  %v5244 = vrot.slane %v5242, 4
  %v5245 = vrot.slane %v3592, 5
  %v5246 = vsel %vm2040, %v5244, %v5245
  %v5247 = vrot.slane %v4969, 5
  %v5248 = vrot.slane %v5247, 4
  %v5249 = vrot.slane %v3594, 5
  %v5250 = vsel %vm2040, %v5248, %v5249
  %v5251 = vrot.slane %v5249, 4
  %v5252 = vrot.slane %v3595, 5
  %v5253 = vsel %vm2040, %v5251, %v5252
  %v5254 = vrot.slane %v4970, 5
  %v5255 = vrot.slane %v5254, 4
  %v5256 = vrot.slane %v3597, 5
  %v5257 = vsel %vm2040, %v5255, %v5256
  %v5258 = vrot.slane %v5256, 4
  %v5259 = vrot.slane %v3598, 5
  %v5260 = vsel %vm2040, %v5258, %v5259
  %v5261 = vrot.slane %v4971, 5
  %v5262 = vrot.slane %v5261, 4
  %v5263 = vrot.slane %v3600, 5
  %v5264 = vsel %vm2040, %v5262, %v5263
  %v5265 = vrot.slane %v5263, 4
  %v5266 = vrot.slane %v3601, 5
  %v5267 = vsel %vm2040, %v5265, %v5266
  %v5268 = vrot.slane %v4972, 5
  %v5269 = vrot.slane %v5268, 4
  %v5270 = vrot.slane %v3603, 5
  %v5271 = vsel %vm2040, %v5269, %v5270
  %v5272 = vrot.slane %v5270, 4
  %v5273 = vrot.slane %v3604, 5
  %v5274 = vsel %vm2040, %v5272, %v5273
  %v5275 = vrot.slane %v4973, 5
  %v5276 = vrot.slane %v5275, 4
  %v5277 = vrot.slane %v3606, 5
  %v5278 = vsel %vm2040, %v5276, %v5277
  %v5279 = vrot.slane %v5277, 4
  %v5280 = vrot.slane %v3607, 5
  %v5281 = vsel %vm2040, %v5279, %v5280
  %v5282 = vrot.slane %v4974, 5
  %v5283 = vrot.slane %v5282, 4
  %v5284 = vrot.slane %v3609, 5
  %v5285 = vsel %vm2040, %v5283, %v5284
  %v5286 = vrot.slane %v5284, 4
  %v5287 = vrot.slane %v3610, 5
  %v5288 = vsel %vm2040, %v5286, %v5287
  %v5289 = vrot.slane %v4975, 5
  %v5290 = vrot.slane %v5289, 4
  %v5291 = vrot.slane %v3612, 5
  %v5292 = vsel %vm2040, %v5290, %v5291
  %v5293 = vrot.slane %v5291, 4
  %v5294 = vrot.slane %v3613, 5
  %v5295 = vsel %vm2040, %v5293, %v5294
  %s5296 = scalar_lea.vmem %s1, 80
  %v5297 = vld [vmem:[%s5296] sm:$0xf]
  %v5298 = vld [vmem:[%s5296 + $0x4] sm:$0xf]
  %v5299 = vld [vmem:[%s5296 + $0x8] sm:$0xf]
  %v5300 = vld [vmem:[%s5296 + $0xc] sm:$0xf]
  %v5301 = vunpack.c.l.b16 %v5075
  %v5302 = vunpack.c.l.b16 %v5078
  %v5303 = vunpack.c.l.b16 %v5082
  %v5304 = vunpack.c.l.b16 %v5085
  %v5305 = vunpack.c.l.b16 %v5089
  %v5306 = vunpack.c.l.b16 %v5092
  %v5307 = vunpack.c.l.b16 %v5096
  %v5308 = vunpack.c.l.b16 %v5099
  %v5309 = vunpack.c.l.b16 %v5103
  %v5310 = vunpack.c.l.b16 %v5106
  %v5311 = vunpack.c.l.b16 %v5110
  %v5312 = vunpack.c.l.b16 %v5113
  %v5313 = vunpack.c.l.b16 %v5117
  %v5314 = vunpack.c.l.b16 %v5120
  %v5315 = vunpack.c.l.b16 %v5124
  %v5316 = vunpack.c.l.b16 %v5127
  %v5317 = vunpack.c.l.b16 %v5131
  %v5318 = vunpack.c.l.b16 %v5134
  %v5319 = vunpack.c.l.b16 %v5138
  %v5320 = vunpack.c.l.b16 %v5141
  %v5321 = vunpack.c.l.b16 %v5145
  %v5322 = vunpack.c.l.b16 %v5148
  %v5323 = vunpack.c.l.b16 %v5152
  %v5324 = vunpack.c.l.b16 %v5155
  %v5325 = vunpack.c.l.b16 %v5159
  %v5326 = vunpack.c.l.b16 %v5162
  %v5327 = vunpack.c.l.b16 %v5166
  %v5328 = vunpack.c.l.b16 %v5169
  %v5329 = vunpack.c.l.b16 %v5173
  %v5330 = vunpack.c.l.b16 %v5176
  %v5331 = vunpack.c.l.b16 %v5180
  %v5332 = vunpack.c.l.b16 %v5183
  %v5333 = vunpack.c.l.b16 %v5187
  %v5334 = vunpack.c.l.b16 %v5190
  %v5335 = vunpack.c.l.b16 %v5194
  %v5336 = vunpack.c.l.b16 %v5197
  %v5337 = vunpack.c.l.b16 %v5201
  %v5338 = vunpack.c.l.b16 %v5204
  %v5339 = vunpack.c.l.b16 %v5208
  %v5340 = vunpack.c.l.b16 %v5211
  %v5341 = vunpack.c.l.b16 %v5215
  %v5342 = vunpack.c.l.b16 %v5218
  %v5343 = vunpack.c.l.b16 %v5222
  %v5344 = vunpack.c.l.b16 %v5225
  %v5345 = vunpack.c.l.b16 %v5229
  %v5346 = vunpack.c.l.b16 %v5232
  %v5347 = vunpack.c.l.b16 %v5236
  %v5348 = vunpack.c.l.b16 %v5239
  %v5349 = vunpack.c.l.b16 %v5243
  %v5350 = vunpack.c.l.b16 %v5246
  %v5351 = vunpack.c.l.b16 %v5250
  %v5352 = vunpack.c.l.b16 %v5253
  %v5353 = vunpack.c.l.b16 %v5257
  %v5354 = vunpack.c.l.b16 %v5260
  %v5355 = vunpack.c.l.b16 %v5264
  %v5356 = vunpack.c.l.b16 %v5267
  %v5357 = vunpack.c.l.b16 %v5271
  %v5358 = vunpack.c.l.b16 %v5274
  %v5359 = vunpack.c.l.b16 %v5278
  %v5360 = vunpack.c.l.b16 %v5281
  %v5361 = vunpack.c.l.b16 %v5285
  %v5362 = vunpack.c.l.b16 %v5288
  %v5363 = vunpack.c.l.b16 %v5292
  %v5364 = vunpack.c.l.b16 %v5295
  %v5365 = vpack.c.b16 %v5302, %v5301
  %v5366 = vpack.c.b16 %v5304, %v5303
  %v5367 = vpack.c.b16 %v5306, %v5305
  %v5368 = vpack.c.b16 %v5308, %v5307
  %v5369 = vpack.c.b16 %v5310, %v5309
  %v5370 = vpack.c.b16 %v5312, %v5311
  %v5371 = vpack.c.b16 %v5314, %v5313
  %v5372 = vpack.c.b16 %v5316, %v5315
  %v5373 = vpack.c.b16 %v5318, %v5317
  %v5374 = vpack.c.b16 %v5320, %v5319
  %v5375 = vpack.c.b16 %v5322, %v5321
  %v5376 = vpack.c.b16 %v5324, %v5323
  %v5377 = vpack.c.b16 %v5326, %v5325
  %v5378 = vpack.c.b16 %v5328, %v5327
  %v5379 = vpack.c.b16 %v5330, %v5329
  %v5380 = vpack.c.b16 %v5332, %v5331
  %v5381 = vpack.c.b16 %v5334, %v5333
  %v5382 = vpack.c.b16 %v5336, %v5335
  %v5383 = vpack.c.b16 %v5338, %v5337
  %v5384 = vpack.c.b16 %v5340, %v5339
  %v5385 = vpack.c.b16 %v5342, %v5341
  %v5386 = vpack.c.b16 %v5344, %v5343
  %v5387 = vpack.c.b16 %v5346, %v5345
  %v5388 = vpack.c.b16 %v5348, %v5347
  %v5389 = vpack.c.b16 %v5350, %v5349
  %v5390 = vpack.c.b16 %v5352, %v5351
  %v5391 = vpack.c.b16 %v5354, %v5353
  %v5392 = vpack.c.b16 %v5356, %v5355
  %v5393 = vpack.c.b16 %v5358, %v5357
  %v5394 = vpack.c.b16 %v5360, %v5359
  %v5395 = vpack.c.b16 %v5362, %v5361
  %v5396 = vpack.c.b16 %v5364, %v5363
  %v5401 = vunpack.c.l.b16 %v5297
  %v5402 = vunpack.c.l.b16 %v5298
  %v5403 = vunpack.c.l.b16 %v5299
  %v5404 = vunpack.c.l.b16 %v5300
  %v5405 = vpack.c.b16 %v5402, %v5401
  %v5406 = vpack.c.b16 %v5404, %v5403
  %v5410 = vsel %vm999, %v5365, 0
  %v5413 = vsel %vm999, %v5366, 0
  %v5416 = vsel %vm999, %v5367, 0
  %v5419 = vsel %vm999, %v5368, 0
  %v5422 = vsel %vm999, %v5369, 0
  %v5425 = vsel %vm999, %v5370, 0
  %v5428 = vsel %vm999, %v5371, 0
  %v5431 = vsel %vm999, %v5372, 0
  %v5434 = vsel %vm999, %v5373, 0
  %v5437 = vsel %vm999, %v5374, 0
  %v5440 = vsel %vm999, %v5375, 0
  %v5443 = vsel %vm999, %v5376, 0
  %v5446 = vsel %vm999, %v5377, 0
  %v5449 = vsel %vm999, %v5378, 0
  %v5452 = vsel %vm999, %v5379, 0
  %v5455 = vsel %vm999, %v5380, 0
  %v5458 = vsel %vm999, %v5381, 0
  %v5461 = vsel %vm999, %v5382, 0
  %v5464 = vsel %vm999, %v5383, 0
  %v5467 = vsel %vm999, %v5384, 0
  %v5470 = vsel %vm999, %v5385, 0
  %v5473 = vsel %vm999, %v5386, 0
  %v5476 = vsel %vm999, %v5387, 0
  %v5479 = vsel %vm999, %v5388, 0
  %v5482 = vsel %vm999, %v5389, 0
  %v5485 = vsel %vm999, %v5390, 0
  %v5488 = vsel %vm999, %v5391, 0
  %v5491 = vsel %vm999, %v5392, 0
  %v5494 = vsel %vm999, %v5393, 0
  %v5497 = vsel %vm999, %v5394, 0
  %v5500 = vsel %vm999, %v5395, 0
  %v5503 = vsel %vm999, %v5396, 0
  %5505 = vmatprep.subr.bf16.mxu0 0
  %5506 = vmatpush1.bf16.msra.mxu0 0
  %5507 = vmatprep.subr.bf16.mxu0 0
  %5508 = vmatpush1.bf16.msra.mxu0 0
  %5509 = vmatprep.subr.bf16.mxu0 0
  %5510 = vmatpush1.bf16.msra.mxu0 0
  %5511 = vmatprep.subr.bf16.mxu0 0
  %5512 = vmatpush1.bf16.msra.mxu0 0
  %5513 = vmatprep.subr.bf16.mxu0 0
  %5514 = vmatpush1.bf16.msra.mxu0 0
  %5515 = vmatprep.subr.bf16.mxu0 0
  %5516 = vmatpush1.bf16.msra.mxu0 0
  %5517 = vmatprep.subr.bf16.mxu0 0
  %5518 = vmatpush1.bf16.msra.mxu0 %v5406
  %5519 = vmatprep.subr.bf16.mxu0 0
  %5520 = vmatpush1.bf16.msra.mxu0 %v5405
  %5521 = vmatprep.subr.bf16.mxu0 0
  %5522 = vmatpush2.bf16.msra.mxu0 0
  %5523 = vmatprep.subr.bf16.mxu0 0
  %5524 = vmatpush2.bf16.msra.mxu0 0
  %5525 = vmatprep.subr.bf16.mxu0 0
  %5526 = vmatpush2.bf16.msra.mxu0 0
  %5527 = vmatprep.subr.bf16.mxu0 0
  %5528 = vmatpush2.bf16.msra.mxu0 0
  %5529 = vmatprep.subr.bf16.mxu0 0
  %5530 = vmatpush2.bf16.msra.mxu0 0
  %5531 = vmatprep.subr.bf16.mxu0 0
  %5532 = vmatpush2.bf16.msra.mxu0 0
  %5533 = vmatprep.subr.bf16.mxu0 0
  %5534 = vmatpush2.bf16.msra.mxu0 0
  %5535 = vmatprep.subr.bf16.mxu0 0
  %5536 = vmatpush2.bf16.msra.mxu0 0
  %5537 = vmatprep.mubr.bf16.mxu0 0
  %5538 = vmatmul.mubr.bf16.gmra.mxu0 %v5410
  %v5539 = vpop.f32.mrf.mxu0
  %v5540 = vadd.f32 0.0, %v5539
  %v5541 = vpop.f32.mrf.mxu0
  %v5542 = vpop.f32.mrf.mxu0
  %v5543 = vadd.f32 0.0, %v5542
  %v5544 = vpop.f32.mrf.mxu0
  %5545 = vmatprep.mubr.bf16.mxu0 0
  %5546 = vmatmul.mubr.bf16.gmra.mxu0 %v5413
  %v5547 = vpop.f32.mrf.mxu0
  %v5548 = vadd.f32 0.0, %v5547
  %v5549 = vpop.f32.mrf.mxu0
  %v5550 = vpop.f32.mrf.mxu0
  %v5551 = vadd.f32 0.0, %v5550
  %v5552 = vpop.f32.mrf.mxu0
  %5553 = vmatprep.mubr.bf16.mxu0 0
  %5554 = vmatmul.mubr.bf16.gmra.mxu0 %v5416
  %v5555 = vpop.f32.mrf.mxu0
  %v5556 = vadd.f32 0.0, %v5555
  %v5557 = vpop.f32.mrf.mxu0
  %v5558 = vpop.f32.mrf.mxu0
  %v5559 = vadd.f32 0.0, %v5558
  %v5560 = vpop.f32.mrf.mxu0
  %5561 = vmatprep.mubr.bf16.mxu0 0
  %5562 = vmatmul.mubr.bf16.gmra.mxu0 %v5419
  %v5563 = vpop.f32.mrf.mxu0
  %v5564 = vadd.f32 0.0, %v5563
  %v5565 = vpop.f32.mrf.mxu0
  %v5566 = vpop.f32.mrf.mxu0
  %v5567 = vadd.f32 0.0, %v5566
  %v5568 = vpop.f32.mrf.mxu0
  %5569 = vmatprep.mubr.bf16.mxu0 0
  %5570 = vmatmul.mubr.bf16.gmra.mxu0 %v5422
  %v5571 = vpop.f32.mrf.mxu0
  %v5572 = vadd.f32 0.0, %v5571
  %v5573 = vpop.f32.mrf.mxu0
  %v5574 = vpop.f32.mrf.mxu0
  %v5575 = vadd.f32 0.0, %v5574
  %v5576 = vpop.f32.mrf.mxu0
  %5577 = vmatprep.mubr.bf16.mxu0 0
  %5578 = vmatmul.mubr.bf16.gmra.mxu0 %v5425
  %v5579 = vpop.f32.mrf.mxu0
  %v5580 = vadd.f32 0.0, %v5579
  %v5581 = vpop.f32.mrf.mxu0
  %v5582 = vpop.f32.mrf.mxu0
  %v5583 = vadd.f32 0.0, %v5582
  %v5584 = vpop.f32.mrf.mxu0
  %5585 = vmatprep.mubr.bf16.mxu0 0
  %5586 = vmatmul.mubr.bf16.gmra.mxu0 %v5428
  %v5587 = vpop.f32.mrf.mxu0
  %v5588 = vadd.f32 0.0, %v5587
  %v5589 = vpop.f32.mrf.mxu0
  %v5590 = vpop.f32.mrf.mxu0
  %v5591 = vadd.f32 0.0, %v5590
  %v5592 = vpop.f32.mrf.mxu0
  %5593 = vmatprep.mubr.bf16.mxu0 0
  %5594 = vmatmul.mubr.bf16.gmra.mxu0 %v5431
  %v5595 = vpop.f32.mrf.mxu0
  %v5596 = vadd.f32 0.0, %v5595
  %v5597 = vpop.f32.mrf.mxu0
  %v5598 = vpop.f32.mrf.mxu0
  %v5599 = vadd.f32 0.0, %v5598
  %v5600 = vpop.f32.mrf.mxu0
  %5601 = vmatprep.mubr.bf16.mxu0 0
  %5602 = vmatmul.mubr.bf16.gmra.mxu0 %v5434
  %v5603 = vpop.f32.mrf.mxu0
  %v5604 = vadd.f32 0.0, %v5603
  %v5605 = vpop.f32.mrf.mxu0
  %v5606 = vpop.f32.mrf.mxu0
  %v5607 = vadd.f32 0.0, %v5606
  %v5608 = vpop.f32.mrf.mxu0
  %5609 = vmatprep.mubr.bf16.mxu0 0
  %5610 = vmatmul.mubr.bf16.gmra.mxu0 %v5437
  %v5611 = vpop.f32.mrf.mxu0
  %v5612 = vadd.f32 0.0, %v5611
  %v5613 = vpop.f32.mrf.mxu0
  %v5614 = vpop.f32.mrf.mxu0
  %v5615 = vadd.f32 0.0, %v5614
  %v5616 = vpop.f32.mrf.mxu0
  %5617 = vmatprep.mubr.bf16.mxu0 0
  %5618 = vmatmul.mubr.bf16.gmra.mxu0 %v5440
  %v5619 = vpop.f32.mrf.mxu0
  %v5620 = vadd.f32 0.0, %v5619
  %v5621 = vpop.f32.mrf.mxu0
  %v5622 = vpop.f32.mrf.mxu0
  %v5623 = vadd.f32 0.0, %v5622
  %v5624 = vpop.f32.mrf.mxu0
  %5625 = vmatprep.mubr.bf16.mxu0 0
  %5626 = vmatmul.mubr.bf16.gmra.mxu0 %v5443
  %v5627 = vpop.f32.mrf.mxu0
  %v5628 = vadd.f32 0.0, %v5627
  %v5629 = vpop.f32.mrf.mxu0
  %v5630 = vpop.f32.mrf.mxu0
  %v5631 = vadd.f32 0.0, %v5630
  %v5632 = vpop.f32.mrf.mxu0
  %5633 = vmatprep.mubr.bf16.mxu0 0
  %5634 = vmatmul.mubr.bf16.gmra.mxu0 %v5446
  %v5635 = vpop.f32.mrf.mxu0
  %v5636 = vadd.f32 0.0, %v5635
  %v5637 = vpop.f32.mrf.mxu0
  %v5638 = vpop.f32.mrf.mxu0
  %v5639 = vadd.f32 0.0, %v5638
  %v5640 = vpop.f32.mrf.mxu0
  %5641 = vmatprep.mubr.bf16.mxu0 0
  %5642 = vmatmul.mubr.bf16.gmra.mxu0 %v5449
  %v5643 = vpop.f32.mrf.mxu0
  %v5644 = vadd.f32 0.0, %v5643
  %v5645 = vpop.f32.mrf.mxu0
  %v5646 = vpop.f32.mrf.mxu0
  %v5647 = vadd.f32 0.0, %v5646
  %v5648 = vpop.f32.mrf.mxu0
  %5649 = vmatprep.mubr.bf16.mxu0 0
  %5650 = vmatmul.mubr.bf16.gmra.mxu0 %v5452
  %v5651 = vpop.f32.mrf.mxu0
  %v5652 = vadd.f32 0.0, %v5651
  %v5653 = vpop.f32.mrf.mxu0
  %v5654 = vpop.f32.mrf.mxu0
  %v5655 = vadd.f32 0.0, %v5654
  %v5656 = vpop.f32.mrf.mxu0
  %5657 = vmatprep.mubr.bf16.mxu0 0
  %5658 = vmatmul.mubr.bf16.gmra.mxu0 %v5455
  %v5659 = vpop.f32.mrf.mxu0
  %v5660 = vadd.f32 0.0, %v5659
  %v5661 = vpop.f32.mrf.mxu0
  %v5662 = vpop.f32.mrf.mxu0
  %v5663 = vadd.f32 0.0, %v5662
  %v5664 = vpop.f32.mrf.mxu0
  %5665 = vmatprep.mubr.bf16.mxu0 0
  %5666 = vmatmul.mubr.bf16.gmra.mxu0 %v5458
  %v5667 = vpop.f32.mrf.mxu0
  %v5668 = vadd.f32 0.0, %v5667
  %v5669 = vpop.f32.mrf.mxu0
  %v5670 = vpop.f32.mrf.mxu0
  %v5671 = vadd.f32 0.0, %v5670
  %v5672 = vpop.f32.mrf.mxu0
  %5673 = vmatprep.mubr.bf16.mxu0 0
  %5674 = vmatmul.mubr.bf16.gmra.mxu0 %v5461
  %v5675 = vpop.f32.mrf.mxu0
  %v5676 = vadd.f32 0.0, %v5675
  %v5677 = vpop.f32.mrf.mxu0
  %v5678 = vpop.f32.mrf.mxu0
  %v5679 = vadd.f32 0.0, %v5678
  %v5680 = vpop.f32.mrf.mxu0
  %5681 = vmatprep.mubr.bf16.mxu0 0
  %5682 = vmatmul.mubr.bf16.gmra.mxu0 %v5464
  %v5683 = vpop.f32.mrf.mxu0
  %v5684 = vadd.f32 0.0, %v5683
  %v5685 = vpop.f32.mrf.mxu0
  %v5686 = vpop.f32.mrf.mxu0
  %v5687 = vadd.f32 0.0, %v5686
  %v5688 = vpop.f32.mrf.mxu0
  %5689 = vmatprep.mubr.bf16.mxu0 0
  %5690 = vmatmul.mubr.bf16.gmra.mxu0 %v5467
  %v5691 = vpop.f32.mrf.mxu0
  %v5692 = vadd.f32 0.0, %v5691
  %v5693 = vpop.f32.mrf.mxu0
  %v5694 = vpop.f32.mrf.mxu0
  %v5695 = vadd.f32 0.0, %v5694
  %v5696 = vpop.f32.mrf.mxu0
  %5697 = vmatprep.mubr.bf16.mxu0 0
  %5698 = vmatmul.mubr.bf16.gmra.mxu0 %v5470
  %v5699 = vpop.f32.mrf.mxu0
  %v5700 = vadd.f32 0.0, %v5699
  %v5701 = vpop.f32.mrf.mxu0
  %v5702 = vpop.f32.mrf.mxu0
  %v5703 = vadd.f32 0.0, %v5702
  %v5704 = vpop.f32.mrf.mxu0
  %5705 = vmatprep.mubr.bf16.mxu0 0
  %5706 = vmatmul.mubr.bf16.gmra.mxu0 %v5473
  %v5707 = vpop.f32.mrf.mxu0
  %v5708 = vadd.f32 0.0, %v5707
  %v5709 = vpop.f32.mrf.mxu0
  %v5710 = vpop.f32.mrf.mxu0
  %v5711 = vadd.f32 0.0, %v5710
  %v5712 = vpop.f32.mrf.mxu0
  %5713 = vmatprep.mubr.bf16.mxu0 0
  %5714 = vmatmul.mubr.bf16.gmra.mxu0 %v5476
  %v5715 = vpop.f32.mrf.mxu0
  %v5716 = vadd.f32 0.0, %v5715
  %v5717 = vpop.f32.mrf.mxu0
  %v5718 = vpop.f32.mrf.mxu0
  %v5719 = vadd.f32 0.0, %v5718
  %v5720 = vpop.f32.mrf.mxu0
  %5721 = vmatprep.mubr.bf16.mxu0 0
  %5722 = vmatmul.mubr.bf16.gmra.mxu0 %v5479
  %v5723 = vpop.f32.mrf.mxu0
  %v5724 = vadd.f32 0.0, %v5723
  %v5725 = vpop.f32.mrf.mxu0
  %v5726 = vpop.f32.mrf.mxu0
  %v5727 = vadd.f32 0.0, %v5726
  %v5728 = vpop.f32.mrf.mxu0
  %5729 = vmatprep.mubr.bf16.mxu0 0
  %5730 = vmatmul.mubr.bf16.gmra.mxu0 %v5482
  %v5731 = vpop.f32.mrf.mxu0
  %v5732 = vadd.f32 0.0, %v5731
  %v5733 = vpop.f32.mrf.mxu0
  %v5734 = vpop.f32.mrf.mxu0
  %v5735 = vadd.f32 0.0, %v5734
  %v5736 = vpop.f32.mrf.mxu0
  %5737 = vmatprep.mubr.bf16.mxu0 0
  %5738 = vmatmul.mubr.bf16.gmra.mxu0 %v5485
  %v5739 = vpop.f32.mrf.mxu0
  %v5740 = vadd.f32 0.0, %v5739
  %v5741 = vpop.f32.mrf.mxu0
  %v5742 = vpop.f32.mrf.mxu0
  %v5743 = vadd.f32 0.0, %v5742
  %v5744 = vpop.f32.mrf.mxu0
  %5745 = vmatprep.mubr.bf16.mxu0 0
  %5746 = vmatmul.mubr.bf16.gmra.mxu0 %v5488
  %v5747 = vpop.f32.mrf.mxu0
  %v5748 = vadd.f32 0.0, %v5747
  %v5749 = vpop.f32.mrf.mxu0
  %v5750 = vpop.f32.mrf.mxu0
  %v5751 = vadd.f32 0.0, %v5750
  %v5752 = vpop.f32.mrf.mxu0
  %5753 = vmatprep.mubr.bf16.mxu0 0
  %5754 = vmatmul.mubr.bf16.gmra.mxu0 %v5491
  %v5755 = vpop.f32.mrf.mxu0
  %v5756 = vadd.f32 0.0, %v5755
  %v5757 = vpop.f32.mrf.mxu0
  %v5758 = vpop.f32.mrf.mxu0
  %v5759 = vadd.f32 0.0, %v5758
  %v5760 = vpop.f32.mrf.mxu0
  %5761 = vmatprep.mubr.bf16.mxu0 0
  %5762 = vmatmul.mubr.bf16.gmra.mxu0 %v5494
  %v5763 = vpop.f32.mrf.mxu0
  %v5764 = vadd.f32 0.0, %v5763
  %v5765 = vpop.f32.mrf.mxu0
  %v5766 = vpop.f32.mrf.mxu0
  %v5767 = vadd.f32 0.0, %v5766
  %v5768 = vpop.f32.mrf.mxu0
  %5769 = vmatprep.mubr.bf16.mxu0 0
  %5770 = vmatmul.mubr.bf16.gmra.mxu0 %v5497
  %v5771 = vpop.f32.mrf.mxu0
  %v5772 = vadd.f32 0.0, %v5771
  %v5773 = vpop.f32.mrf.mxu0
  %v5774 = vpop.f32.mrf.mxu0
  %v5775 = vadd.f32 0.0, %v5774
  %v5776 = vpop.f32.mrf.mxu0
  %5777 = vmatprep.mubr.bf16.mxu0 0
  %5778 = vmatmul.mubr.bf16.gmra.mxu0 %v5500
  %v5779 = vpop.f32.mrf.mxu0
  %v5780 = vadd.f32 0.0, %v5779
  %v5781 = vpop.f32.mrf.mxu0
  %v5782 = vpop.f32.mrf.mxu0
  %v5783 = vadd.f32 0.0, %v5782
  %v5784 = vpop.f32.mrf.mxu0
  %5785 = vmatprep.mubr.bf16.mxu0 0
  %5786 = vmatmul.mubr.bf16.gmra.mxu0 %v5503
  %v5787 = vpop.f32.mrf.mxu0
  %v5788 = vadd.f32 0.0, %v5787
  %v5789 = vpop.f32.mrf.mxu0
  %v5790 = vpop.f32.mrf.mxu0
  %v5791 = vadd.f32 0.0, %v5790
  %v5792 = vpop.f32.mrf.mxu0
  %5793 = vdwg.mxu0
  %v5794 = vadd.f32 %v4880, %v5540
  %v5795 = vadd.f32 %v4881, %v5543
  %v5796 = vadd.f32 %v4882, %v5548
  %v5797 = vadd.f32 %v4883, %v5551
  %v5798 = vadd.f32 %v4884, %v5556
  %v5799 = vadd.f32 %v4885, %v5559
  %v5800 = vadd.f32 %v4886, %v5564
  %v5801 = vadd.f32 %v4887, %v5567
  %v5802 = vadd.f32 %v4888, %v5572
  %v5803 = vadd.f32 %v4889, %v5575
  %v5804 = vadd.f32 %v4890, %v5580
  %v5805 = vadd.f32 %v4891, %v5583
  %v5806 = vadd.f32 %v4892, %v5588
  %v5807 = vadd.f32 %v4893, %v5591
  %v5808 = vadd.f32 %v4894, %v5596
  %v5809 = vadd.f32 %v4895, %v5599
  %v5810 = vadd.f32 %v4896, %v5604
  %v5811 = vadd.f32 %v4897, %v5607
  %v5812 = vadd.f32 %v4898, %v5612
  %v5813 = vadd.f32 %v4899, %v5615
  %v5814 = vadd.f32 %v4900, %v5620
  %v5815 = vadd.f32 %v4901, %v5623
  %v5816 = vadd.f32 %v4902, %v5628
  %v5817 = vadd.f32 %v4903, %v5631
  %v5818 = vadd.f32 %v4904, %v5636
  %v5819 = vadd.f32 %v4905, %v5639
  %v5820 = vadd.f32 %v4906, %v5644
  %v5821 = vadd.f32 %v4907, %v5647
  %v5822 = vadd.f32 %v4908, %v5652
  %v5823 = vadd.f32 %v4909, %v5655
  %v5824 = vadd.f32 %v4910, %v5660
  %v5825 = vadd.f32 %v4911, %v5663
  %v5826 = vadd.f32 %v4912, %v5668
  %v5827 = vadd.f32 %v4913, %v5671
  %v5828 = vadd.f32 %v4914, %v5676
  %v5829 = vadd.f32 %v4915, %v5679
  %v5830 = vadd.f32 %v4916, %v5684
  %v5831 = vadd.f32 %v4917, %v5687
  %v5832 = vadd.f32 %v4918, %v5692
  %v5833 = vadd.f32 %v4919, %v5695
  %v5834 = vadd.f32 %v4920, %v5700
  %v5835 = vadd.f32 %v4921, %v5703
  %v5836 = vadd.f32 %v4922, %v5708
  %v5837 = vadd.f32 %v4923, %v5711
  %v5838 = vadd.f32 %v4924, %v5716
  %v5839 = vadd.f32 %v4925, %v5719
  %v5840 = vadd.f32 %v4926, %v5724
  %v5841 = vadd.f32 %v4927, %v5727
  %v5842 = vadd.f32 %v4928, %v5732
  %v5843 = vadd.f32 %v4929, %v5735
  %v5844 = vadd.f32 %v4930, %v5740
  %v5845 = vadd.f32 %v4931, %v5743
  %v5846 = vadd.f32 %v4932, %v5748
  %v5847 = vadd.f32 %v4933, %v5751
  %v5848 = vadd.f32 %v4934, %v5756
  %v5849 = vadd.f32 %v4935, %v5759
  %v5850 = vadd.f32 %v4936, %v5764
  %v5851 = vadd.f32 %v4937, %v5767
  %v5852 = vadd.f32 %v4938, %v5772
  %v5853 = vadd.f32 %v4939, %v5775
  %v5854 = vadd.f32 %v4940, %v5780
  %v5855 = vadd.f32 %v4941, %v5783
  %v5856 = vadd.f32 %v4942, %v5788
  %v5857 = vadd.f32 %v4943, %v5791
  %s5858 = scalar_lea.vmem %s0, 24
  %v5859 = vld [vmem:[%s5858] sm:$0xf]
  %v5860 = vld [vmem:[%s5858 + $0x4] sm:$0xf]
  %v5861 = vld [vmem:[%s5858 + $0xc] sm:$0xf]
  %v5862 = vld [vmem:[%s5858 + $0x10] sm:$0xf]
  %v5863 = vld [vmem:[%s5858 + $0x18] sm:$0xf]
  %v5864 = vld [vmem:[%s5858 + $0x1c] sm:$0xf]
  %v5865 = vld [vmem:[%s5858 + $0x24] sm:$0xf]
  %v5866 = vld [vmem:[%s5858 + $0x28] sm:$0xf]
  %v5867 = vld [vmem:[%s5858 + $0x30] sm:$0xf]
  %v5868 = vld [vmem:[%s5858 + $0x34] sm:$0xf]
  %v5869 = vld [vmem:[%s5858 + $0x3c] sm:$0xf]
  %v5870 = vld [vmem:[%s5858 + $0x40] sm:$0xf]
  %v5871 = vld [vmem:[%s5858 + $0x48] sm:$0xf]
  %v5872 = vld [vmem:[%s5858 + $0x4c] sm:$0xf]
  %v5873 = vld [vmem:[%s5858 + $0x54] sm:$0xf]
  %v5874 = vld [vmem:[%s5858 + $0x58] sm:$0xf]
  %v5875 = vld [vmem:[%s5858 + $0x60] sm:$0xf]
  %v5876 = vld [vmem:[%s5858 + $0x64] sm:$0xf]
  %v5877 = vld [vmem:[%s5858 + $0x6c] sm:$0xf]
  %v5878 = vld [vmem:[%s5858 + $0x70] sm:$0xf]
  %v5879 = vld [vmem:[%s5858 + $0x78] sm:$0xf]
  %v5880 = vld [vmem:[%s5858 + $0x7c] sm:$0xf]
  %v5881 = vld [vmem:[%s5858 + $0x84] sm:$0xf]
  %v5882 = vld [vmem:[%s5858 + $0x88] sm:$0xf]
  %v5883 = vld [vmem:[%s5858 + $0x90] sm:$0xf]
  %v5884 = vld [vmem:[%s5858 + $0x94] sm:$0xf]
  %v5885 = vld [vmem:[%s5858 + $0x9c] sm:$0xf]
  %v5886 = vld [vmem:[%s5858 + $0xa0] sm:$0xf]
  %v5887 = vld [vmem:[%s5858 + $0xa8] sm:$0xf]
  %v5888 = vld [vmem:[%s5858 + $0xac] sm:$0xf]
  %v5889 = vld [vmem:[%s5858 + $0xb4] sm:$0xf]
  %v5890 = vld [vmem:[%s5858 + $0xb8] sm:$0xf]
  %v5891 = vld [vmem:[%s5858 + $0xd8] sm:$0xf]
  %v5892 = vld [vmem:[%s5858 + $0xdc] sm:$0xf]
  %v5893 = vld [vmem:[%s5858 + $0xe4] sm:$0xf]
  %v5894 = vld [vmem:[%s5858 + $0xe8] sm:$0xf]
  %v5895 = vld [vmem:[%s5858 + $0xf0] sm:$0xf]
  %v5896 = vld [vmem:[%s5858 + $0xf4] sm:$0xf]
  %v5897 = vld [vmem:[%s5858 + $0xfc] sm:$0xf]
  %v5898 = vld [vmem:[%s5858 + $0x100] sm:$0xf]
  %v5899 = vld [vmem:[%s5858 + $0x108] sm:$0xf]
  %v5900 = vld [vmem:[%s5858 + $0x10c] sm:$0xf]
  %v5901 = vld [vmem:[%s5858 + $0x114] sm:$0xf]
  %v5902 = vld [vmem:[%s5858 + $0x118] sm:$0xf]
  %v5903 = vld [vmem:[%s5858 + $0x120] sm:$0xf]
  %v5904 = vld [vmem:[%s5858 + $0x124] sm:$0xf]
  %v5905 = vld [vmem:[%s5858 + $0x12c] sm:$0xf]
  %v5906 = vld [vmem:[%s5858 + $0x130] sm:$0xf]
  %v5907 = vld [vmem:[%s5858 + $0x138] sm:$0xf]
  %v5908 = vld [vmem:[%s5858 + $0x13c] sm:$0xf]
  %v5909 = vld [vmem:[%s5858 + $0x144] sm:$0xf]
  %v5910 = vld [vmem:[%s5858 + $0x148] sm:$0xf]
  %v5911 = vld [vmem:[%s5858 + $0x150] sm:$0xf]
  %v5912 = vld [vmem:[%s5858 + $0x154] sm:$0xf]
  %v5913 = vld [vmem:[%s5858 + $0x15c] sm:$0xf]
  %v5914 = vld [vmem:[%s5858 + $0x160] sm:$0xf]
  %v5915 = vld [vmem:[%s5858 + $0x168] sm:$0xf]
  %v5916 = vld [vmem:[%s5858 + $0x16c] sm:$0xf]
  %v5917 = vld [vmem:[%s5858 + $0x174] sm:$0xf]
  %v5918 = vld [vmem:[%s5858 + $0x178] sm:$0xf]
  %v5919 = vld [vmem:[%s5858 + $0x180] sm:$0xf]
  %v5920 = vld [vmem:[%s5858 + $0x184] sm:$0xf]
  %v5921 = vld [vmem:[%s5858 + $0x18c] sm:$0xf]
  %v5922 = vld [vmem:[%s5858 + $0x190] sm:$0xf]
  %s5923 = scalar_lea.vmem %s1, 96
  %v5924 = vld [vmem:[%s5923] sm:$0xf]
  %v5925 = vld [vmem:[%s5923 + $0x4] sm:$0xf]
  %v5926 = vld [vmem:[%s5923 + $0x8] sm:$0xf]
  %v5927 = vld [vmem:[%s5923 + $0xc] sm:$0xf]
  %v5992 = vunpack.c.l.b16 %v5859
  %v5993 = vunpack.c.l.b16 %v5860
  %v5994 = vunpack.c.l.b16 %v5861
  %v5995 = vunpack.c.l.b16 %v5862
  %v5996 = vunpack.c.l.b16 %v5863
  %v5997 = vunpack.c.l.b16 %v5864
  %v5998 = vunpack.c.l.b16 %v5865
  %v5999 = vunpack.c.l.b16 %v5866
  %v6000 = vunpack.c.l.b16 %v5867
  %v6001 = vunpack.c.l.b16 %v5868
  %v6002 = vunpack.c.l.b16 %v5869
  %v6003 = vunpack.c.l.b16 %v5870
  %v6004 = vunpack.c.l.b16 %v5871
  %v6005 = vunpack.c.l.b16 %v5872
  %v6006 = vunpack.c.l.b16 %v5873
  %v6007 = vunpack.c.l.b16 %v5874
  %v6008 = vunpack.c.l.b16 %v5875
  %v6009 = vunpack.c.l.b16 %v5876
  %v6010 = vunpack.c.l.b16 %v5877
  %v6011 = vunpack.c.l.b16 %v5878
  %v6012 = vunpack.c.l.b16 %v5879
  %v6013 = vunpack.c.l.b16 %v5880
  %v6014 = vunpack.c.l.b16 %v5881
  %v6015 = vunpack.c.l.b16 %v5882
  %v6016 = vunpack.c.l.b16 %v5883
  %v6017 = vunpack.c.l.b16 %v5884
  %v6018 = vunpack.c.l.b16 %v5885
  %v6019 = vunpack.c.l.b16 %v5886
  %v6020 = vunpack.c.l.b16 %v5887
  %v6021 = vunpack.c.l.b16 %v5888
  %v6022 = vunpack.c.l.b16 %v5889
  %v6023 = vunpack.c.l.b16 %v5890
  %v6024 = vunpack.c.l.b16 %v5891
  %v6025 = vunpack.c.l.b16 %v5892
  %v6026 = vunpack.c.l.b16 %v5893
  %v6027 = vunpack.c.l.b16 %v5894
  %v6028 = vunpack.c.l.b16 %v5895
  %v6029 = vunpack.c.l.b16 %v5896
  %v6030 = vunpack.c.l.b16 %v5897
  %v6031 = vunpack.c.l.b16 %v5898
  %v6032 = vunpack.c.l.b16 %v5899
  %v6033 = vunpack.c.l.b16 %v5900
  %v6034 = vunpack.c.l.b16 %v5901
  %v6035 = vunpack.c.l.b16 %v5902
  %v6036 = vunpack.c.l.b16 %v5903
  %v6037 = vunpack.c.l.b16 %v5904
  %v6038 = vunpack.c.l.b16 %v5905
  %v6039 = vunpack.c.l.b16 %v5906
  %v6040 = vunpack.c.l.b16 %v5907
  %v6041 = vunpack.c.l.b16 %v5908
  %v6042 = vunpack.c.l.b16 %v5909
  %v6043 = vunpack.c.l.b16 %v5910
  %v6044 = vunpack.c.l.b16 %v5911
  %v6045 = vunpack.c.l.b16 %v5912
  %v6046 = vunpack.c.l.b16 %v5913
  %v6047 = vunpack.c.l.b16 %v5914
  %v6048 = vunpack.c.l.b16 %v5915
  %v6049 = vunpack.c.l.b16 %v5916
  %v6050 = vunpack.c.l.b16 %v5917
  %v6051 = vunpack.c.l.b16 %v5918
  %v6052 = vunpack.c.l.b16 %v5919
  %v6053 = vunpack.c.l.b16 %v5920
  %v6054 = vunpack.c.l.b16 %v5921
  %v6055 = vunpack.c.l.b16 %v5922
  %v6056 = vpack.c.b16 %v5993, %v5992
  %v6057 = vpack.c.b16 %v5995, %v5994
  %v6058 = vpack.c.b16 %v5997, %v5996
  %v6059 = vpack.c.b16 %v5999, %v5998
  %v6060 = vpack.c.b16 %v6001, %v6000
  %v6061 = vpack.c.b16 %v6003, %v6002
  %v6062 = vpack.c.b16 %v6005, %v6004
  %v6063 = vpack.c.b16 %v6007, %v6006
  %v6064 = vpack.c.b16 %v6009, %v6008
  %v6065 = vpack.c.b16 %v6011, %v6010
  %v6066 = vpack.c.b16 %v6013, %v6012
  %v6067 = vpack.c.b16 %v6015, %v6014
  %v6068 = vpack.c.b16 %v6017, %v6016
  %v6069 = vpack.c.b16 %v6019, %v6018
  %v6070 = vpack.c.b16 %v6021, %v6020
  %v6071 = vpack.c.b16 %v6023, %v6022
  %v6072 = vpack.c.b16 %v6025, %v6024
  %v6073 = vpack.c.b16 %v6027, %v6026
  %v6074 = vpack.c.b16 %v6029, %v6028
  %v6075 = vpack.c.b16 %v6031, %v6030
  %v6076 = vpack.c.b16 %v6033, %v6032
  %v6077 = vpack.c.b16 %v6035, %v6034
  %v6078 = vpack.c.b16 %v6037, %v6036
  %v6079 = vpack.c.b16 %v6039, %v6038
  %v6080 = vpack.c.b16 %v6041, %v6040
  %v6081 = vpack.c.b16 %v6043, %v6042
  %v6082 = vpack.c.b16 %v6045, %v6044
  %v6083 = vpack.c.b16 %v6047, %v6046
  %v6084 = vpack.c.b16 %v6049, %v6048
  %v6085 = vpack.c.b16 %v6051, %v6050
  %v6086 = vpack.c.b16 %v6053, %v6052
  %v6087 = vpack.c.b16 %v6055, %v6054
  %v6092 = vunpack.c.l.b16 %v5924
  %v6093 = vunpack.c.l.b16 %v5925
  %v6094 = vunpack.c.l.b16 %v5926
  %v6095 = vunpack.c.l.b16 %v5927
  %v6096 = vpack.c.b16 %v6093, %v6092
  %v6097 = vpack.c.b16 %v6095, %v6094
  %v6101 = vsel %vm999, %v6056, 0
  %v6104 = vsel %vm999, %v6057, 0
  %v6107 = vsel %vm999, %v6058, 0
  %v6110 = vsel %vm999, %v6059, 0
  %v6113 = vsel %vm999, %v6060, 0
  %v6116 = vsel %vm999, %v6061, 0
  %v6119 = vsel %vm999, %v6062, 0
  %v6122 = vsel %vm999, %v6063, 0
  %v6125 = vsel %vm999, %v6064, 0
  %v6128 = vsel %vm999, %v6065, 0
  %v6131 = vsel %vm999, %v6066, 0
  %v6134 = vsel %vm999, %v6067, 0
  %v6137 = vsel %vm999, %v6068, 0
  %v6140 = vsel %vm999, %v6069, 0
  %v6143 = vsel %vm999, %v6070, 0
  %v6146 = vsel %vm999, %v6071, 0
  %v6149 = vsel %vm999, %v6072, 0
  %v6152 = vsel %vm999, %v6073, 0
  %v6155 = vsel %vm999, %v6074, 0
  %v6158 = vsel %vm999, %v6075, 0
  %v6161 = vsel %vm999, %v6076, 0
  %v6164 = vsel %vm999, %v6077, 0
  %v6167 = vsel %vm999, %v6078, 0
  %v6170 = vsel %vm999, %v6079, 0
  %v6173 = vsel %vm999, %v6080, 0
  %v6176 = vsel %vm999, %v6081, 0
  %v6179 = vsel %vm999, %v6082, 0
  %v6182 = vsel %vm999, %v6083, 0
  %v6185 = vsel %vm999, %v6084, 0
  %v6188 = vsel %vm999, %v6085, 0
  %v6191 = vsel %vm999, %v6086, 0
  %v6194 = vsel %vm999, %v6087, 0
  %6196 = vmatprep.subr.bf16.mxu0 0
  %6197 = vmatpush1.bf16.msra.mxu0 0
  %6198 = vmatprep.subr.bf16.mxu0 0
  %6199 = vmatpush1.bf16.msra.mxu0 0
  %6200 = vmatprep.subr.bf16.mxu0 0
  %6201 = vmatpush1.bf16.msra.mxu0 0
  %6202 = vmatprep.subr.bf16.mxu0 0
  %6203 = vmatpush1.bf16.msra.mxu0 0
  %6204 = vmatprep.subr.bf16.mxu0 0
  %6205 = vmatpush1.bf16.msra.mxu0 0
  %6206 = vmatprep.subr.bf16.mxu0 0
  %6207 = vmatpush1.bf16.msra.mxu0 0
  %6208 = vmatprep.subr.bf16.mxu0 0
  %6209 = vmatpush1.bf16.msra.mxu0 %v6097
  %6210 = vmatprep.subr.bf16.mxu0 0
  %6211 = vmatpush1.bf16.msra.mxu0 %v6096
  %6212 = vmatprep.subr.bf16.mxu0 0
  %6213 = vmatpush2.bf16.msra.mxu0 0
  %6214 = vmatprep.subr.bf16.mxu0 0
  %6215 = vmatpush2.bf16.msra.mxu0 0
  %6216 = vmatprep.subr.bf16.mxu0 0
  %6217 = vmatpush2.bf16.msra.mxu0 0
  %6218 = vmatprep.subr.bf16.mxu0 0
  %6219 = vmatpush2.bf16.msra.mxu0 0
  %6220 = vmatprep.subr.bf16.mxu0 0
  %6221 = vmatpush2.bf16.msra.mxu0 0
  %6222 = vmatprep.subr.bf16.mxu0 0
  %6223 = vmatpush2.bf16.msra.mxu0 0
  %6224 = vmatprep.subr.bf16.mxu0 0
  %6225 = vmatpush2.bf16.msra.mxu0 0
  %6226 = vmatprep.subr.bf16.mxu0 0
  %6227 = vmatpush2.bf16.msra.mxu0 0
  %6228 = vmatprep.mubr.bf16.mxu0 0
  %6229 = vmatmul.mubr.bf16.gmra.mxu0 %v6101
  %v6230 = vpop.f32.mrf.mxu0
  %v6231 = vadd.f32 0.0, %v6230
  %v6232 = vpop.f32.mrf.mxu0
  %v6233 = vpop.f32.mrf.mxu0
  %v6234 = vadd.f32 0.0, %v6233
  %v6235 = vpop.f32.mrf.mxu0
  %6236 = vmatprep.mubr.bf16.mxu0 0
  %6237 = vmatmul.mubr.bf16.gmra.mxu0 %v6104
  %v6238 = vpop.f32.mrf.mxu0
  %v6239 = vadd.f32 0.0, %v6238
  %v6240 = vpop.f32.mrf.mxu0
  %v6241 = vpop.f32.mrf.mxu0
  %v6242 = vadd.f32 0.0, %v6241
  %v6243 = vpop.f32.mrf.mxu0
  %6244 = vmatprep.mubr.bf16.mxu0 0
  %6245 = vmatmul.mubr.bf16.gmra.mxu0 %v6107
  %v6246 = vpop.f32.mrf.mxu0
  %v6247 = vadd.f32 0.0, %v6246
  %v6248 = vpop.f32.mrf.mxu0
  %v6249 = vpop.f32.mrf.mxu0
  %v6250 = vadd.f32 0.0, %v6249
  %v6251 = vpop.f32.mrf.mxu0
  %6252 = vmatprep.mubr.bf16.mxu0 0
  %6253 = vmatmul.mubr.bf16.gmra.mxu0 %v6110
  %v6254 = vpop.f32.mrf.mxu0
  %v6255 = vadd.f32 0.0, %v6254
  %v6256 = vpop.f32.mrf.mxu0
  %v6257 = vpop.f32.mrf.mxu0
  %v6258 = vadd.f32 0.0, %v6257
  %v6259 = vpop.f32.mrf.mxu0
  %6260 = vmatprep.mubr.bf16.mxu0 0
  %6261 = vmatmul.mubr.bf16.gmra.mxu0 %v6113
  %v6262 = vpop.f32.mrf.mxu0
  %v6263 = vadd.f32 0.0, %v6262
  %v6264 = vpop.f32.mrf.mxu0
  %v6265 = vpop.f32.mrf.mxu0
  %v6266 = vadd.f32 0.0, %v6265
  %v6267 = vpop.f32.mrf.mxu0
  %6268 = vmatprep.mubr.bf16.mxu0 0
  %6269 = vmatmul.mubr.bf16.gmra.mxu0 %v6116
  %v6270 = vpop.f32.mrf.mxu0
  %v6271 = vadd.f32 0.0, %v6270
  %v6272 = vpop.f32.mrf.mxu0
  %v6273 = vpop.f32.mrf.mxu0
  %v6274 = vadd.f32 0.0, %v6273
  %v6275 = vpop.f32.mrf.mxu0
  %6276 = vmatprep.mubr.bf16.mxu0 0
  %6277 = vmatmul.mubr.bf16.gmra.mxu0 %v6119
  %v6278 = vpop.f32.mrf.mxu0
  %v6279 = vadd.f32 0.0, %v6278
  %v6280 = vpop.f32.mrf.mxu0
  %v6281 = vpop.f32.mrf.mxu0
  %v6282 = vadd.f32 0.0, %v6281
  %v6283 = vpop.f32.mrf.mxu0
  %6284 = vmatprep.mubr.bf16.mxu0 0
  %6285 = vmatmul.mubr.bf16.gmra.mxu0 %v6122
  %v6286 = vpop.f32.mrf.mxu0
  %v6287 = vadd.f32 0.0, %v6286
  %v6288 = vpop.f32.mrf.mxu0
  %v6289 = vpop.f32.mrf.mxu0
  %v6290 = vadd.f32 0.0, %v6289
  %v6291 = vpop.f32.mrf.mxu0
  %6292 = vmatprep.mubr.bf16.mxu0 0
  %6293 = vmatmul.mubr.bf16.gmra.mxu0 %v6125
  %v6294 = vpop.f32.mrf.mxu0
  %v6295 = vadd.f32 0.0, %v6294
  %v6296 = vpop.f32.mrf.mxu0
  %v6297 = vpop.f32.mrf.mxu0
  %v6298 = vadd.f32 0.0, %v6297
  %v6299 = vpop.f32.mrf.mxu0
  %6300 = vmatprep.mubr.bf16.mxu0 0
  %6301 = vmatmul.mubr.bf16.gmra.mxu0 %v6128
  %v6302 = vpop.f32.mrf.mxu0
  %v6303 = vadd.f32 0.0, %v6302
  %v6304 = vpop.f32.mrf.mxu0
  %v6305 = vpop.f32.mrf.mxu0
  %v6306 = vadd.f32 0.0, %v6305
  %v6307 = vpop.f32.mrf.mxu0
  %6308 = vmatprep.mubr.bf16.mxu0 0
  %6309 = vmatmul.mubr.bf16.gmra.mxu0 %v6131
  %v6310 = vpop.f32.mrf.mxu0
  %v6311 = vadd.f32 0.0, %v6310
  %v6312 = vpop.f32.mrf.mxu0
  %v6313 = vpop.f32.mrf.mxu0
  %v6314 = vadd.f32 0.0, %v6313
  %v6315 = vpop.f32.mrf.mxu0
  %6316 = vmatprep.mubr.bf16.mxu0 0
  %6317 = vmatmul.mubr.bf16.gmra.mxu0 %v6134
  %v6318 = vpop.f32.mrf.mxu0
  %v6319 = vadd.f32 0.0, %v6318
  %v6320 = vpop.f32.mrf.mxu0
  %v6321 = vpop.f32.mrf.mxu0
  %v6322 = vadd.f32 0.0, %v6321
  %v6323 = vpop.f32.mrf.mxu0
  %6324 = vmatprep.mubr.bf16.mxu0 0
  %6325 = vmatmul.mubr.bf16.gmra.mxu0 %v6137
  %v6326 = vpop.f32.mrf.mxu0
  %v6327 = vadd.f32 0.0, %v6326
  %v6328 = vpop.f32.mrf.mxu0
  %v6329 = vpop.f32.mrf.mxu0
  %v6330 = vadd.f32 0.0, %v6329
  %v6331 = vpop.f32.mrf.mxu0
  %6332 = vmatprep.mubr.bf16.mxu0 0
  %6333 = vmatmul.mubr.bf16.gmra.mxu0 %v6140
  %v6334 = vpop.f32.mrf.mxu0
  %v6335 = vadd.f32 0.0, %v6334
  %v6336 = vpop.f32.mrf.mxu0
  %v6337 = vpop.f32.mrf.mxu0
  %v6338 = vadd.f32 0.0, %v6337
  %v6339 = vpop.f32.mrf.mxu0
  %6340 = vmatprep.mubr.bf16.mxu0 0
  %6341 = vmatmul.mubr.bf16.gmra.mxu0 %v6143
  %v6342 = vpop.f32.mrf.mxu0
  %v6343 = vadd.f32 0.0, %v6342
  %v6344 = vpop.f32.mrf.mxu0
  %v6345 = vpop.f32.mrf.mxu0
  %v6346 = vadd.f32 0.0, %v6345
  %v6347 = vpop.f32.mrf.mxu0
  %6348 = vmatprep.mubr.bf16.mxu0 0
  %6349 = vmatmul.mubr.bf16.gmra.mxu0 %v6146
  %v6350 = vpop.f32.mrf.mxu0
  %v6351 = vadd.f32 0.0, %v6350
  %v6352 = vpop.f32.mrf.mxu0
  %v6353 = vpop.f32.mrf.mxu0
  %v6354 = vadd.f32 0.0, %v6353
  %v6355 = vpop.f32.mrf.mxu0
  %6356 = vmatprep.mubr.bf16.mxu0 0
  %6357 = vmatmul.mubr.bf16.gmra.mxu0 %v6149
  %v6358 = vpop.f32.mrf.mxu0
  %v6359 = vadd.f32 0.0, %v6358
  %v6360 = vpop.f32.mrf.mxu0
  %v6361 = vpop.f32.mrf.mxu0
  %v6362 = vadd.f32 0.0, %v6361
  %v6363 = vpop.f32.mrf.mxu0
  %6364 = vmatprep.mubr.bf16.mxu0 0
  %6365 = vmatmul.mubr.bf16.gmra.mxu0 %v6152
  %v6366 = vpop.f32.mrf.mxu0
  %v6367 = vadd.f32 0.0, %v6366
  %v6368 = vpop.f32.mrf.mxu0
  %v6369 = vpop.f32.mrf.mxu0
  %v6370 = vadd.f32 0.0, %v6369
  %v6371 = vpop.f32.mrf.mxu0
  %6372 = vmatprep.mubr.bf16.mxu0 0
  %6373 = vmatmul.mubr.bf16.gmra.mxu0 %v6155
  %v6374 = vpop.f32.mrf.mxu0
  %v6375 = vadd.f32 0.0, %v6374
  %v6376 = vpop.f32.mrf.mxu0
  %v6377 = vpop.f32.mrf.mxu0
  %v6378 = vadd.f32 0.0, %v6377
  %v6379 = vpop.f32.mrf.mxu0
  %6380 = vmatprep.mubr.bf16.mxu0 0
  %6381 = vmatmul.mubr.bf16.gmra.mxu0 %v6158
  %v6382 = vpop.f32.mrf.mxu0
  %v6383 = vadd.f32 0.0, %v6382
  %v6384 = vpop.f32.mrf.mxu0
  %v6385 = vpop.f32.mrf.mxu0
  %v6386 = vadd.f32 0.0, %v6385
  %v6387 = vpop.f32.mrf.mxu0
  %6388 = vmatprep.mubr.bf16.mxu0 0
  %6389 = vmatmul.mubr.bf16.gmra.mxu0 %v6161
  %v6390 = vpop.f32.mrf.mxu0
  %v6391 = vadd.f32 0.0, %v6390
  %v6392 = vpop.f32.mrf.mxu0
  %v6393 = vpop.f32.mrf.mxu0
  %v6394 = vadd.f32 0.0, %v6393
  %v6395 = vpop.f32.mrf.mxu0
  %6396 = vmatprep.mubr.bf16.mxu0 0
  %6397 = vmatmul.mubr.bf16.gmra.mxu0 %v6164
  %v6398 = vpop.f32.mrf.mxu0
  %v6399 = vadd.f32 0.0, %v6398
  %v6400 = vpop.f32.mrf.mxu0
  %v6401 = vpop.f32.mrf.mxu0
  %v6402 = vadd.f32 0.0, %v6401
  %v6403 = vpop.f32.mrf.mxu0
  %6404 = vmatprep.mubr.bf16.mxu0 0
  %6405 = vmatmul.mubr.bf16.gmra.mxu0 %v6167
  %v6406 = vpop.f32.mrf.mxu0
  %v6407 = vadd.f32 0.0, %v6406
  %v6408 = vpop.f32.mrf.mxu0
  %v6409 = vpop.f32.mrf.mxu0
  %v6410 = vadd.f32 0.0, %v6409
  %v6411 = vpop.f32.mrf.mxu0
  %6412 = vmatprep.mubr.bf16.mxu0 0
  %6413 = vmatmul.mubr.bf16.gmra.mxu0 %v6170
  %v6414 = vpop.f32.mrf.mxu0
  %v6415 = vadd.f32 0.0, %v6414
  %v6416 = vpop.f32.mrf.mxu0
  %v6417 = vpop.f32.mrf.mxu0
  %v6418 = vadd.f32 0.0, %v6417
  %v6419 = vpop.f32.mrf.mxu0
  %6420 = vmatprep.mubr.bf16.mxu0 0
  %6421 = vmatmul.mubr.bf16.gmra.mxu0 %v6173
  %v6422 = vpop.f32.mrf.mxu0
  %v6423 = vadd.f32 0.0, %v6422
  %v6424 = vpop.f32.mrf.mxu0
  %v6425 = vpop.f32.mrf.mxu0
  %v6426 = vadd.f32 0.0, %v6425
  %v6427 = vpop.f32.mrf.mxu0
  %6428 = vmatprep.mubr.bf16.mxu0 0
  %6429 = vmatmul.mubr.bf16.gmra.mxu0 %v6176
  %v6430 = vpop.f32.mrf.mxu0
  %v6431 = vadd.f32 0.0, %v6430
  %v6432 = vpop.f32.mrf.mxu0
  %v6433 = vpop.f32.mrf.mxu0
  %v6434 = vadd.f32 0.0, %v6433
  %v6435 = vpop.f32.mrf.mxu0
  %6436 = vmatprep.mubr.bf16.mxu0 0
  %6437 = vmatmul.mubr.bf16.gmra.mxu0 %v6179
  %v6438 = vpop.f32.mrf.mxu0
  %v6439 = vadd.f32 0.0, %v6438
  %v6440 = vpop.f32.mrf.mxu0
  %v6441 = vpop.f32.mrf.mxu0
  %v6442 = vadd.f32 0.0, %v6441
  %v6443 = vpop.f32.mrf.mxu0
  %6444 = vmatprep.mubr.bf16.mxu0 0
  %6445 = vmatmul.mubr.bf16.gmra.mxu0 %v6182
  %v6446 = vpop.f32.mrf.mxu0
  %v6447 = vadd.f32 0.0, %v6446
  %v6448 = vpop.f32.mrf.mxu0
  %v6449 = vpop.f32.mrf.mxu0
  %v6450 = vadd.f32 0.0, %v6449
  %v6451 = vpop.f32.mrf.mxu0
  %6452 = vmatprep.mubr.bf16.mxu0 0
  %6453 = vmatmul.mubr.bf16.gmra.mxu0 %v6185
  %v6454 = vpop.f32.mrf.mxu0
  %v6455 = vadd.f32 0.0, %v6454
  %v6456 = vpop.f32.mrf.mxu0
  %v6457 = vpop.f32.mrf.mxu0
  %v6458 = vadd.f32 0.0, %v6457
  %v6459 = vpop.f32.mrf.mxu0
  %6460 = vmatprep.mubr.bf16.mxu0 0
  %6461 = vmatmul.mubr.bf16.gmra.mxu0 %v6188
  %v6462 = vpop.f32.mrf.mxu0
  %v6463 = vadd.f32 0.0, %v6462
  %v6464 = vpop.f32.mrf.mxu0
  %v6465 = vpop.f32.mrf.mxu0
  %v6466 = vadd.f32 0.0, %v6465
  %v6467 = vpop.f32.mrf.mxu0
  %6468 = vmatprep.mubr.bf16.mxu0 0
  %6469 = vmatmul.mubr.bf16.gmra.mxu0 %v6191
  %v6470 = vpop.f32.mrf.mxu0
  %v6471 = vadd.f32 0.0, %v6470
  %v6472 = vpop.f32.mrf.mxu0
  %v6473 = vpop.f32.mrf.mxu0
  %v6474 = vadd.f32 0.0, %v6473
  %v6475 = vpop.f32.mrf.mxu0
  %6476 = vmatprep.mubr.bf16.mxu0 0
  %6477 = vmatmul.mubr.bf16.gmra.mxu0 %v6194
  %v6478 = vpop.f32.mrf.mxu0
  %v6479 = vadd.f32 0.0, %v6478
  %v6480 = vpop.f32.mrf.mxu0
  %v6481 = vpop.f32.mrf.mxu0
  %v6482 = vadd.f32 0.0, %v6481
  %v6483 = vpop.f32.mrf.mxu0
  %6484 = vdwg.mxu0
  %v6485 = vadd.f32 %v5794, %v6231
  %v6486 = vadd.f32 %v5795, %v6234
  %v6487 = vadd.f32 %v5796, %v6239
  %v6488 = vadd.f32 %v5797, %v6242
  %v6489 = vadd.f32 %v5798, %v6247
  %v6490 = vadd.f32 %v5799, %v6250
  %v6491 = vadd.f32 %v5800, %v6255
  %v6492 = vadd.f32 %v5801, %v6258
  %v6493 = vadd.f32 %v5802, %v6263
  %v6494 = vadd.f32 %v5803, %v6266
  %v6495 = vadd.f32 %v5804, %v6271
  %v6496 = vadd.f32 %v5805, %v6274
  %v6497 = vadd.f32 %v5806, %v6279
  %v6498 = vadd.f32 %v5807, %v6282
  %v6499 = vadd.f32 %v5808, %v6287
  %v6500 = vadd.f32 %v5809, %v6290
  %v6501 = vadd.f32 %v5810, %v6295
  %v6502 = vadd.f32 %v5811, %v6298
  %v6503 = vadd.f32 %v5812, %v6303
  %v6504 = vadd.f32 %v5813, %v6306
  %v6505 = vadd.f32 %v5814, %v6311
  %v6506 = vadd.f32 %v5815, %v6314
  %v6507 = vadd.f32 %v5816, %v6319
  %v6508 = vadd.f32 %v5817, %v6322
  %v6509 = vadd.f32 %v5818, %v6327
  %v6510 = vadd.f32 %v5819, %v6330
  %v6511 = vadd.f32 %v5820, %v6335
  %v6512 = vadd.f32 %v5821, %v6338
  %v6513 = vadd.f32 %v5822, %v6343
  %v6514 = vadd.f32 %v5823, %v6346
  %v6515 = vadd.f32 %v5824, %v6351
  %v6516 = vadd.f32 %v5825, %v6354
  %v6517 = vadd.f32 %v5826, %v6359
  %v6518 = vadd.f32 %v5827, %v6362
  %v6519 = vadd.f32 %v5828, %v6367
  %v6520 = vadd.f32 %v5829, %v6370
  %v6521 = vadd.f32 %v5830, %v6375
  %v6522 = vadd.f32 %v5831, %v6378
  %v6523 = vadd.f32 %v5832, %v6383
  %v6524 = vadd.f32 %v5833, %v6386
  %v6525 = vadd.f32 %v5834, %v6391
  %v6526 = vadd.f32 %v5835, %v6394
  %v6527 = vadd.f32 %v5836, %v6399
  %v6528 = vadd.f32 %v5837, %v6402
  %v6529 = vadd.f32 %v5838, %v6407
  %v6530 = vadd.f32 %v5839, %v6410
  %v6531 = vadd.f32 %v5840, %v6415
  %v6532 = vadd.f32 %v5841, %v6418
  %v6533 = vadd.f32 %v5842, %v6423
  %v6534 = vadd.f32 %v5843, %v6426
  %v6535 = vadd.f32 %v5844, %v6431
  %v6536 = vadd.f32 %v5845, %v6434
  %v6537 = vadd.f32 %v5846, %v6439
  %v6538 = vadd.f32 %v5847, %v6442
  %v6539 = vadd.f32 %v5848, %v6447
  %v6540 = vadd.f32 %v5849, %v6450
  %v6541 = vadd.f32 %v5850, %v6455
  %v6542 = vadd.f32 %v5851, %v6458
  %v6543 = vadd.f32 %v5852, %v6463
  %v6544 = vadd.f32 %v5853, %v6466
  %v6545 = vadd.f32 %v5854, %v6471
  %v6546 = vadd.f32 %v5855, %v6474
  %v6547 = vadd.f32 %v5856, %v6479
  %v6548 = vadd.f32 %v5857, %v6482
  %v6549 = vld [vmem:[%s5858] sm:$0xf]
  %v6550 = vld [vmem:[%s5858 + $0x4] sm:$0xf]
  %v6551 = vld [vmem:[%s5858 + $0x8] sm:$0x1]
  %v6552 = vld [vmem:[%s5858 + $0xc] sm:$0xf]
  %v6553 = vld [vmem:[%s5858 + $0x10] sm:$0xf]
  %v6554 = vld [vmem:[%s5858 + $0x14] sm:$0x1]
  %v6555 = vld [vmem:[%s5858 + $0x18] sm:$0xf]
  %v6556 = vld [vmem:[%s5858 + $0x1c] sm:$0xf]
  %v6557 = vld [vmem:[%s5858 + $0x20] sm:$0x1]
  %v6558 = vld [vmem:[%s5858 + $0x24] sm:$0xf]
  %v6559 = vld [vmem:[%s5858 + $0x28] sm:$0xf]
  %v6560 = vld [vmem:[%s5858 + $0x2c] sm:$0x1]
  %v6561 = vld [vmem:[%s5858 + $0x30] sm:$0xf]
  %v6562 = vld [vmem:[%s5858 + $0x34] sm:$0xf]
  %v6563 = vld [vmem:[%s5858 + $0x38] sm:$0x1]
  %v6564 = vld [vmem:[%s5858 + $0x3c] sm:$0xf]
  %v6565 = vld [vmem:[%s5858 + $0x40] sm:$0xf]
  %v6566 = vld [vmem:[%s5858 + $0x44] sm:$0x1]
  %v6567 = vld [vmem:[%s5858 + $0x48] sm:$0xf]
  %v6568 = vld [vmem:[%s5858 + $0x4c] sm:$0xf]
  %v6569 = vld [vmem:[%s5858 + $0x50] sm:$0x1]
  %v6570 = vld [vmem:[%s5858 + $0x54] sm:$0xf]
  %v6571 = vld [vmem:[%s5858 + $0x58] sm:$0xf]
  %v6572 = vld [vmem:[%s5858 + $0x5c] sm:$0x1]
  %v6573 = vld [vmem:[%s5858 + $0x60] sm:$0xf]
  %v6574 = vld [vmem:[%s5858 + $0x64] sm:$0xf]
  %v6575 = vld [vmem:[%s5858 + $0x68] sm:$0x1]
  %v6576 = vld [vmem:[%s5858 + $0x6c] sm:$0xf]
  %v6577 = vld [vmem:[%s5858 + $0x70] sm:$0xf]
  %v6578 = vld [vmem:[%s5858 + $0x74] sm:$0x1]
  %v6579 = vld [vmem:[%s5858 + $0x78] sm:$0xf]
  %v6580 = vld [vmem:[%s5858 + $0x7c] sm:$0xf]
  %v6581 = vld [vmem:[%s5858 + $0x80] sm:$0x1]
  %v6582 = vld [vmem:[%s5858 + $0x84] sm:$0xf]
  %v6583 = vld [vmem:[%s5858 + $0x88] sm:$0xf]
  %v6584 = vld [vmem:[%s5858 + $0x8c] sm:$0x1]
  %v6585 = vld [vmem:[%s5858 + $0x90] sm:$0xf]
  %v6586 = vld [vmem:[%s5858 + $0x94] sm:$0xf]
  %v6587 = vld [vmem:[%s5858 + $0x98] sm:$0x1]
  %v6588 = vld [vmem:[%s5858 + $0x9c] sm:$0xf]
  %v6589 = vld [vmem:[%s5858 + $0xa0] sm:$0xf]
  %v6590 = vld [vmem:[%s5858 + $0xa4] sm:$0x1]
  %v6591 = vld [vmem:[%s5858 + $0xa8] sm:$0xf]
  %v6592 = vld [vmem:[%s5858 + $0xac] sm:$0xf]
  %v6593 = vld [vmem:[%s5858 + $0xb0] sm:$0x1]
  %v6594 = vld [vmem:[%s5858 + $0xb4] sm:$0xf]
  %v6595 = vld [vmem:[%s5858 + $0xb8] sm:$0xf]
  %v6596 = vld [vmem:[%s5858 + $0xbc] sm:$0x1]
  %v6597 = vld [vmem:[%s5858 + $0xd8] sm:$0xf]
  %v6598 = vld [vmem:[%s5858 + $0xdc] sm:$0xf]
  %v6599 = vld [vmem:[%s5858 + $0xe0] sm:$0x1]
  %v6600 = vld [vmem:[%s5858 + $0xe4] sm:$0xf]
  %v6601 = vld [vmem:[%s5858 + $0xe8] sm:$0xf]
  %v6602 = vld [vmem:[%s5858 + $0xec] sm:$0x1]
  %v6603 = vld [vmem:[%s5858 + $0xf0] sm:$0xf]
  %v6604 = vld [vmem:[%s5858 + $0xf4] sm:$0xf]
  %v6605 = vld [vmem:[%s5858 + $0xf8] sm:$0x1]
  %v6606 = vld [vmem:[%s5858 + $0xfc] sm:$0xf]
  %v6607 = vld [vmem:[%s5858 + $0x100] sm:$0xf]
  %v6608 = vld [vmem:[%s5858 + $0x104] sm:$0x1]
  %v6609 = vld [vmem:[%s5858 + $0x108] sm:$0xf]
  %v6610 = vld [vmem:[%s5858 + $0x10c] sm:$0xf]
  %v6611 = vld [vmem:[%s5858 + $0x110] sm:$0x1]
  %v6612 = vld [vmem:[%s5858 + $0x114] sm:$0xf]
  %v6613 = vld [vmem:[%s5858 + $0x118] sm:$0xf]
  %v6614 = vld [vmem:[%s5858 + $0x11c] sm:$0x1]
  %v6615 = vld [vmem:[%s5858 + $0x120] sm:$0xf]
  %v6616 = vld [vmem:[%s5858 + $0x124] sm:$0xf]
  %v6617 = vld [vmem:[%s5858 + $0x128] sm:$0x1]
  %v6618 = vld [vmem:[%s5858 + $0x12c] sm:$0xf]
  %v6619 = vld [vmem:[%s5858 + $0x130] sm:$0xf]
  %v6620 = vld [vmem:[%s5858 + $0x134] sm:$0x1]
  %v6621 = vld [vmem:[%s5858 + $0x138] sm:$0xf]
  %v6622 = vld [vmem:[%s5858 + $0x13c] sm:$0xf]
  %v6623 = vld [vmem:[%s5858 + $0x140] sm:$0x1]
  %v6624 = vld [vmem:[%s5858 + $0x144] sm:$0xf]
  %v6625 = vld [vmem:[%s5858 + $0x148] sm:$0xf]
  %v6626 = vld [vmem:[%s5858 + $0x14c] sm:$0x1]
  %v6627 = vld [vmem:[%s5858 + $0x150] sm:$0xf]
  %v6628 = vld [vmem:[%s5858 + $0x154] sm:$0xf]
  %v6629 = vld [vmem:[%s5858 + $0x158] sm:$0x1]
  %v6630 = vld [vmem:[%s5858 + $0x15c] sm:$0xf]
  %v6631 = vld [vmem:[%s5858 + $0x160] sm:$0xf]
  %v6632 = vld [vmem:[%s5858 + $0x164] sm:$0x1]
  %v6633 = vld [vmem:[%s5858 + $0x168] sm:$0xf]
  %v6634 = vld [vmem:[%s5858 + $0x16c] sm:$0xf]
  %v6635 = vld [vmem:[%s5858 + $0x170] sm:$0x1]
  %v6636 = vld [vmem:[%s5858 + $0x174] sm:$0xf]
  %v6637 = vld [vmem:[%s5858 + $0x178] sm:$0xf]
  %v6638 = vld [vmem:[%s5858 + $0x17c] sm:$0x1]
  %v6639 = vld [vmem:[%s5858 + $0x180] sm:$0xf]
  %v6640 = vld [vmem:[%s5858 + $0x184] sm:$0xf]
  %v6641 = vld [vmem:[%s5858 + $0x188] sm:$0x1]
  %v6642 = vld [vmem:[%s5858 + $0x18c] sm:$0xf]
  %v6643 = vld [vmem:[%s5858 + $0x190] sm:$0xf]
  %v6644 = vld [vmem:[%s5858 + $0x194] sm:$0x1]
  %v6646 = vshrl.u32 %v6549, 16
  %v6648 = vrot.slane %v6646, 4
  %v6649 = vshll.u32 %v6549, 16
  %v6651 = vrot.slane %v6649, 5
  %v6652 = vor.u32 %v6648, %v6651
  %v6653 = vrot.slane %v6652, 4
  %v6655 = vshll.u32 %v6550, 16
  %v6657 = vrot.slane %v6655, 5
  %v6658 = vsel %vm117, %v6653, %v6657
  %v6659 = vshrl.u32 %v6550, 16
  %v6661 = vrot.slane %v6659, 4
  %v6662 = vor.u32 %v6661, %v6657
  %v6663 = vrot.slane %v6662, 4
  %v6665 = vshll.u32 %v6551, 16
  %v6667 = vrot.slane %v6665, 5
  %v6668 = vsel %vm117, %v6663, %v6667
  %v6670 = vshrl.u32 %v6552, 16
  %v6672 = vrot.slane %v6670, 4
  %v6673 = vshll.u32 %v6552, 16
  %v6675 = vrot.slane %v6673, 5
  %v6676 = vor.u32 %v6672, %v6675
  %v6677 = vrot.slane %v6676, 4
  %v6679 = vshll.u32 %v6553, 16
  %v6681 = vrot.slane %v6679, 5
  %v6682 = vsel %vm117, %v6677, %v6681
  %v6683 = vshrl.u32 %v6553, 16
  %v6685 = vrot.slane %v6683, 4
  %v6686 = vor.u32 %v6685, %v6681
  %v6687 = vrot.slane %v6686, 4
  %v6689 = vshll.u32 %v6554, 16
  %v6691 = vrot.slane %v6689, 5
  %v6692 = vsel %vm117, %v6687, %v6691
  %v6694 = vshrl.u32 %v6555, 16
  %v6696 = vrot.slane %v6694, 4
  %v6697 = vshll.u32 %v6555, 16
  %v6699 = vrot.slane %v6697, 5
  %v6700 = vor.u32 %v6696, %v6699
  %v6701 = vrot.slane %v6700, 4
  %v6703 = vshll.u32 %v6556, 16
  %v6705 = vrot.slane %v6703, 5
  %v6706 = vsel %vm117, %v6701, %v6705
  %v6707 = vshrl.u32 %v6556, 16
  %v6709 = vrot.slane %v6707, 4
  %v6710 = vor.u32 %v6709, %v6705
  %v6711 = vrot.slane %v6710, 4
  %v6713 = vshll.u32 %v6557, 16
  %v6715 = vrot.slane %v6713, 5
  %v6716 = vsel %vm117, %v6711, %v6715
  %v6718 = vshrl.u32 %v6558, 16
  %v6720 = vrot.slane %v6718, 4
  %v6721 = vshll.u32 %v6558, 16
  %v6723 = vrot.slane %v6721, 5
  %v6724 = vor.u32 %v6720, %v6723
  %v6725 = vrot.slane %v6724, 4
  %v6727 = vshll.u32 %v6559, 16
  %v6729 = vrot.slane %v6727, 5
  %v6730 = vsel %vm117, %v6725, %v6729
  %v6731 = vshrl.u32 %v6559, 16
  %v6733 = vrot.slane %v6731, 4
  %v6734 = vor.u32 %v6733, %v6729
  %v6735 = vrot.slane %v6734, 4
  %v6737 = vshll.u32 %v6560, 16
  %v6739 = vrot.slane %v6737, 5
  %v6740 = vsel %vm117, %v6735, %v6739
  %v6742 = vshrl.u32 %v6561, 16
  %v6744 = vrot.slane %v6742, 4
  %v6745 = vshll.u32 %v6561, 16
  %v6747 = vrot.slane %v6745, 5
  %v6748 = vor.u32 %v6744, %v6747
  %v6749 = vrot.slane %v6748, 4
  %v6751 = vshll.u32 %v6562, 16
  %v6753 = vrot.slane %v6751, 5
  %v6754 = vsel %vm117, %v6749, %v6753
  %v6755 = vshrl.u32 %v6562, 16
  %v6757 = vrot.slane %v6755, 4
  %v6758 = vor.u32 %v6757, %v6753
  %v6759 = vrot.slane %v6758, 4
  %v6761 = vshll.u32 %v6563, 16
  %v6763 = vrot.slane %v6761, 5
  %v6764 = vsel %vm117, %v6759, %v6763
  %v6766 = vshrl.u32 %v6564, 16
  %v6768 = vrot.slane %v6766, 4
  %v6769 = vshll.u32 %v6564, 16
  %v6771 = vrot.slane %v6769, 5
  %v6772 = vor.u32 %v6768, %v6771
  %v6773 = vrot.slane %v6772, 4
  %v6775 = vshll.u32 %v6565, 16
  %v6777 = vrot.slane %v6775, 5
  %v6778 = vsel %vm117, %v6773, %v6777
  %v6779 = vshrl.u32 %v6565, 16
  %v6781 = vrot.slane %v6779, 4
  %v6782 = vor.u32 %v6781, %v6777
  %v6783 = vrot.slane %v6782, 4
  %v6785 = vshll.u32 %v6566, 16
  %v6787 = vrot.slane %v6785, 5
  %v6788 = vsel %vm117, %v6783, %v6787
  %v6790 = vshrl.u32 %v6567, 16
  %v6792 = vrot.slane %v6790, 4
  %v6793 = vshll.u32 %v6567, 16
  %v6795 = vrot.slane %v6793, 5
  %v6796 = vor.u32 %v6792, %v6795
  %v6797 = vrot.slane %v6796, 4
  %v6799 = vshll.u32 %v6568, 16
  %v6801 = vrot.slane %v6799, 5
  %v6802 = vsel %vm117, %v6797, %v6801
  %v6803 = vshrl.u32 %v6568, 16
  %v6805 = vrot.slane %v6803, 4
  %v6806 = vor.u32 %v6805, %v6801
  %v6807 = vrot.slane %v6806, 4
  %v6809 = vshll.u32 %v6569, 16
  %v6811 = vrot.slane %v6809, 5
  %v6812 = vsel %vm117, %v6807, %v6811
  %v6814 = vshrl.u32 %v6570, 16
  %v6816 = vrot.slane %v6814, 4
  %v6817 = vshll.u32 %v6570, 16
  %v6819 = vrot.slane %v6817, 5
  %v6820 = vor.u32 %v6816, %v6819
  %v6821 = vrot.slane %v6820, 4
  %v6823 = vshll.u32 %v6571, 16
  %v6825 = vrot.slane %v6823, 5
  %v6826 = vsel %vm117, %v6821, %v6825
  %v6827 = vshrl.u32 %v6571, 16
  %v6829 = vrot.slane %v6827, 4
  %v6830 = vor.u32 %v6829, %v6825
  %v6831 = vrot.slane %v6830, 4
  %v6833 = vshll.u32 %v6572, 16
  %v6835 = vrot.slane %v6833, 5
  %v6836 = vsel %vm117, %v6831, %v6835
  %v6838 = vshrl.u32 %v6573, 16
  %v6840 = vrot.slane %v6838, 4
  %v6841 = vshll.u32 %v6573, 16
  %v6843 = vrot.slane %v6841, 5
  %v6844 = vor.u32 %v6840, %v6843
  %v6845 = vrot.slane %v6844, 4
  %v6847 = vshll.u32 %v6574, 16
  %v6849 = vrot.slane %v6847, 5
  %v6850 = vsel %vm117, %v6845, %v6849
  %v6851 = vshrl.u32 %v6574, 16
  %v6853 = vrot.slane %v6851, 4
  %v6854 = vor.u32 %v6853, %v6849
  %v6855 = vrot.slane %v6854, 4
  %v6857 = vshll.u32 %v6575, 16
  %v6859 = vrot.slane %v6857, 5
  %v6860 = vsel %vm117, %v6855, %v6859
  %v6862 = vshrl.u32 %v6576, 16
  %v6864 = vrot.slane %v6862, 4
  %v6865 = vshll.u32 %v6576, 16
  %v6867 = vrot.slane %v6865, 5
  %v6868 = vor.u32 %v6864, %v6867
  %v6869 = vrot.slane %v6868, 4
  %v6871 = vshll.u32 %v6577, 16
  %v6873 = vrot.slane %v6871, 5
  %v6874 = vsel %vm117, %v6869, %v6873
  %v6875 = vshrl.u32 %v6577, 16
  %v6877 = vrot.slane %v6875, 4
  %v6878 = vor.u32 %v6877, %v6873
  %v6879 = vrot.slane %v6878, 4
  %v6881 = vshll.u32 %v6578, 16
  %v6883 = vrot.slane %v6881, 5
  %v6884 = vsel %vm117, %v6879, %v6883
  %v6886 = vshrl.u32 %v6579, 16
  %v6888 = vrot.slane %v6886, 4
  %v6889 = vshll.u32 %v6579, 16
  %v6891 = vrot.slane %v6889, 5
  %v6892 = vor.u32 %v6888, %v6891
  %v6893 = vrot.slane %v6892, 4
  %v6895 = vshll.u32 %v6580, 16
  %v6897 = vrot.slane %v6895, 5
  %v6898 = vsel %vm117, %v6893, %v6897
  %v6899 = vshrl.u32 %v6580, 16
  %v6901 = vrot.slane %v6899, 4
  %v6902 = vor.u32 %v6901, %v6897
  %v6903 = vrot.slane %v6902, 4
  %v6905 = vshll.u32 %v6581, 16
  %v6907 = vrot.slane %v6905, 5
  %v6908 = vsel %vm117, %v6903, %v6907
  %v6910 = vshrl.u32 %v6582, 16
  %v6912 = vrot.slane %v6910, 4
  %v6913 = vshll.u32 %v6582, 16
  %v6915 = vrot.slane %v6913, 5
  %v6916 = vor.u32 %v6912, %v6915
  %v6917 = vrot.slane %v6916, 4
  %v6919 = vshll.u32 %v6583, 16
  %v6921 = vrot.slane %v6919, 5
  %v6922 = vsel %vm117, %v6917, %v6921
  %v6923 = vshrl.u32 %v6583, 16
  %v6925 = vrot.slane %v6923, 4
  %v6926 = vor.u32 %v6925, %v6921
  %v6927 = vrot.slane %v6926, 4
  %v6929 = vshll.u32 %v6584, 16
  %v6931 = vrot.slane %v6929, 5
  %v6932 = vsel %vm117, %v6927, %v6931
  %v6934 = vshrl.u32 %v6585, 16
  %v6936 = vrot.slane %v6934, 4
  %v6937 = vshll.u32 %v6585, 16
  %v6939 = vrot.slane %v6937, 5
  %v6940 = vor.u32 %v6936, %v6939
  %v6941 = vrot.slane %v6940, 4
  %v6943 = vshll.u32 %v6586, 16
  %v6945 = vrot.slane %v6943, 5
  %v6946 = vsel %vm117, %v6941, %v6945
  %v6947 = vshrl.u32 %v6586, 16
  %v6949 = vrot.slane %v6947, 4
  %v6950 = vor.u32 %v6949, %v6945
  %v6951 = vrot.slane %v6950, 4
  %v6953 = vshll.u32 %v6587, 16
  %v6955 = vrot.slane %v6953, 5
  %v6956 = vsel %vm117, %v6951, %v6955
  %v6958 = vshrl.u32 %v6588, 16
  %v6960 = vrot.slane %v6958, 4
  %v6961 = vshll.u32 %v6588, 16
  %v6963 = vrot.slane %v6961, 5
  %v6964 = vor.u32 %v6960, %v6963
  %v6965 = vrot.slane %v6964, 4
  %v6967 = vshll.u32 %v6589, 16
  %v6969 = vrot.slane %v6967, 5
  %v6970 = vsel %vm117, %v6965, %v6969
  %v6971 = vshrl.u32 %v6589, 16
  %v6973 = vrot.slane %v6971, 4
  %v6974 = vor.u32 %v6973, %v6969
  %v6975 = vrot.slane %v6974, 4
  %v6977 = vshll.u32 %v6590, 16
  %v6979 = vrot.slane %v6977, 5
  %v6980 = vsel %vm117, %v6975, %v6979
  %v6982 = vshrl.u32 %v6591, 16
  %v6984 = vrot.slane %v6982, 4
  %v6985 = vshll.u32 %v6591, 16
  %v6987 = vrot.slane %v6985, 5
  %v6988 = vor.u32 %v6984, %v6987
  %v6989 = vrot.slane %v6988, 4
  %v6991 = vshll.u32 %v6592, 16
  %v6993 = vrot.slane %v6991, 5
  %v6994 = vsel %vm117, %v6989, %v6993
  %v6995 = vshrl.u32 %v6592, 16
  %v6997 = vrot.slane %v6995, 4
  %v6998 = vor.u32 %v6997, %v6993
  %v6999 = vrot.slane %v6998, 4
  %v7001 = vshll.u32 %v6593, 16
  %v7003 = vrot.slane %v7001, 5
  %v7004 = vsel %vm117, %v6999, %v7003
  %v7006 = vshrl.u32 %v6594, 16
  %v7008 = vrot.slane %v7006, 4
  %v7009 = vshll.u32 %v6594, 16
  %v7011 = vrot.slane %v7009, 5
  %v7012 = vor.u32 %v7008, %v7011
  %v7013 = vrot.slane %v7012, 4
  %v7015 = vshll.u32 %v6595, 16
  %v7017 = vrot.slane %v7015, 5
  %v7018 = vsel %vm117, %v7013, %v7017
  %v7019 = vshrl.u32 %v6595, 16
  %v7021 = vrot.slane %v7019, 4
  %v7022 = vor.u32 %v7021, %v7017
  %v7023 = vrot.slane %v7022, 4
  %v7025 = vshll.u32 %v6596, 16
  %v7027 = vrot.slane %v7025, 5
  %v7028 = vsel %vm117, %v7023, %v7027
  %v7030 = vshrl.u32 %v6597, 16
  %v7032 = vrot.slane %v7030, 4
  %v7033 = vshll.u32 %v6597, 16
  %v7035 = vrot.slane %v7033, 5
  %v7036 = vor.u32 %v7032, %v7035
  %v7037 = vrot.slane %v7036, 4
  %v7039 = vshll.u32 %v6598, 16
  %v7041 = vrot.slane %v7039, 5
  %v7042 = vsel %vm117, %v7037, %v7041
  %v7043 = vshrl.u32 %v6598, 16
  %v7045 = vrot.slane %v7043, 4
  %v7046 = vor.u32 %v7045, %v7041
  %v7047 = vrot.slane %v7046, 4
  %v7049 = vshll.u32 %v6599, 16
  %v7051 = vrot.slane %v7049, 5
  %v7052 = vsel %vm117, %v7047, %v7051
  %v7054 = vshrl.u32 %v6600, 16
  %v7056 = vrot.slane %v7054, 4
  %v7057 = vshll.u32 %v6600, 16
  %v7059 = vrot.slane %v7057, 5
  %v7060 = vor.u32 %v7056, %v7059
  %v7061 = vrot.slane %v7060, 4
  %v7063 = vshll.u32 %v6601, 16
  %v7065 = vrot.slane %v7063, 5
  %v7066 = vsel %vm117, %v7061, %v7065
  %v7067 = vshrl.u32 %v6601, 16
  %v7069 = vrot.slane %v7067, 4
  %v7070 = vor.u32 %v7069, %v7065
  %v7071 = vrot.slane %v7070, 4
  %v7073 = vshll.u32 %v6602, 16
  %v7075 = vrot.slane %v7073, 5
  %v7076 = vsel %vm117, %v7071, %v7075
  %v7078 = vshrl.u32 %v6603, 16
  %v7080 = vrot.slane %v7078, 4
  %v7081 = vshll.u32 %v6603, 16
  %v7083 = vrot.slane %v7081, 5
  %v7084 = vor.u32 %v7080, %v7083
  %v7085 = vrot.slane %v7084, 4
  %v7087 = vshll.u32 %v6604, 16
  %v7089 = vrot.slane %v7087, 5
  %v7090 = vsel %vm117, %v7085, %v7089
  %v7091 = vshrl.u32 %v6604, 16
  %v7093 = vrot.slane %v7091, 4
  %v7094 = vor.u32 %v7093, %v7089
  %v7095 = vrot.slane %v7094, 4
  %v7097 = vshll.u32 %v6605, 16
  %v7099 = vrot.slane %v7097, 5
  %v7100 = vsel %vm117, %v7095, %v7099
  %v7102 = vshrl.u32 %v6606, 16
  %v7104 = vrot.slane %v7102, 4
  %v7105 = vshll.u32 %v6606, 16
  %v7107 = vrot.slane %v7105, 5
  %v7108 = vor.u32 %v7104, %v7107
  %v7109 = vrot.slane %v7108, 4
  %v7111 = vshll.u32 %v6607, 16
  %v7113 = vrot.slane %v7111, 5
  %v7114 = vsel %vm117, %v7109, %v7113
  %v7115 = vshrl.u32 %v6607, 16
  %v7117 = vrot.slane %v7115, 4
  %v7118 = vor.u32 %v7117, %v7113
  %v7119 = vrot.slane %v7118, 4
  %v7121 = vshll.u32 %v6608, 16
  %v7123 = vrot.slane %v7121, 5
  %v7124 = vsel %vm117, %v7119, %v7123
  %v7126 = vshrl.u32 %v6609, 16
  %v7128 = vrot.slane %v7126, 4
  %v7129 = vshll.u32 %v6609, 16
  %v7131 = vrot.slane %v7129, 5
  %v7132 = vor.u32 %v7128, %v7131
  %v7133 = vrot.slane %v7132, 4
  %v7135 = vshll.u32 %v6610, 16
  %v7137 = vrot.slane %v7135, 5
  %v7138 = vsel %vm117, %v7133, %v7137
  %v7139 = vshrl.u32 %v6610, 16
  %v7141 = vrot.slane %v7139, 4
  %v7142 = vor.u32 %v7141, %v7137
  %v7143 = vrot.slane %v7142, 4
  %v7145 = vshll.u32 %v6611, 16
  %v7147 = vrot.slane %v7145, 5
  %v7148 = vsel %vm117, %v7143, %v7147
  %v7150 = vshrl.u32 %v6612, 16
  %v7152 = vrot.slane %v7150, 4
  %v7153 = vshll.u32 %v6612, 16
  %v7155 = vrot.slane %v7153, 5
  %v7156 = vor.u32 %v7152, %v7155
  %v7157 = vrot.slane %v7156, 4
  %v7159 = vshll.u32 %v6613, 16
  %v7161 = vrot.slane %v7159, 5
  %v7162 = vsel %vm117, %v7157, %v7161
  %v7163 = vshrl.u32 %v6613, 16
  %v7165 = vrot.slane %v7163, 4
  %v7166 = vor.u32 %v7165, %v7161
  %v7167 = vrot.slane %v7166, 4
  %v7169 = vshll.u32 %v6614, 16
  %v7171 = vrot.slane %v7169, 5
  %v7172 = vsel %vm117, %v7167, %v7171
  %v7174 = vshrl.u32 %v6615, 16
  %v7176 = vrot.slane %v7174, 4
  %v7177 = vshll.u32 %v6615, 16
  %v7179 = vrot.slane %v7177, 5
  %v7180 = vor.u32 %v7176, %v7179
  %v7181 = vrot.slane %v7180, 4
  %v7183 = vshll.u32 %v6616, 16
  %v7185 = vrot.slane %v7183, 5
  %v7186 = vsel %vm117, %v7181, %v7185
  %v7187 = vshrl.u32 %v6616, 16
  %v7189 = vrot.slane %v7187, 4
  %v7190 = vor.u32 %v7189, %v7185
  %v7191 = vrot.slane %v7190, 4
  %v7193 = vshll.u32 %v6617, 16
  %v7195 = vrot.slane %v7193, 5
  %v7196 = vsel %vm117, %v7191, %v7195
  %v7198 = vshrl.u32 %v6618, 16
  %v7200 = vrot.slane %v7198, 4
  %v7201 = vshll.u32 %v6618, 16
  %v7203 = vrot.slane %v7201, 5
  %v7204 = vor.u32 %v7200, %v7203
  %v7205 = vrot.slane %v7204, 4
  %v7207 = vshll.u32 %v6619, 16
  %v7209 = vrot.slane %v7207, 5
  %v7210 = vsel %vm117, %v7205, %v7209
  %v7211 = vshrl.u32 %v6619, 16
  %v7213 = vrot.slane %v7211, 4
  %v7214 = vor.u32 %v7213, %v7209
  %v7215 = vrot.slane %v7214, 4
  %v7217 = vshll.u32 %v6620, 16
  %v7219 = vrot.slane %v7217, 5
  %v7220 = vsel %vm117, %v7215, %v7219
  %v7222 = vshrl.u32 %v6621, 16
  %v7224 = vrot.slane %v7222, 4
  %v7225 = vshll.u32 %v6621, 16
  %v7227 = vrot.slane %v7225, 5
  %v7228 = vor.u32 %v7224, %v7227
  %v7229 = vrot.slane %v7228, 4
  %v7231 = vshll.u32 %v6622, 16
  %v7233 = vrot.slane %v7231, 5
  %v7234 = vsel %vm117, %v7229, %v7233
  %v7235 = vshrl.u32 %v6622, 16
  %v7237 = vrot.slane %v7235, 4
  %v7238 = vor.u32 %v7237, %v7233
  %v7239 = vrot.slane %v7238, 4
  %v7241 = vshll.u32 %v6623, 16
  %v7243 = vrot.slane %v7241, 5
  %v7244 = vsel %vm117, %v7239, %v7243
  %v7246 = vshrl.u32 %v6624, 16
  %v7248 = vrot.slane %v7246, 4
  %v7249 = vshll.u32 %v6624, 16
  %v7251 = vrot.slane %v7249, 5
  %v7252 = vor.u32 %v7248, %v7251
  %v7253 = vrot.slane %v7252, 4
  %v7255 = vshll.u32 %v6625, 16
  %v7257 = vrot.slane %v7255, 5
  %v7258 = vsel %vm117, %v7253, %v7257
  %v7259 = vshrl.u32 %v6625, 16
  %v7261 = vrot.slane %v7259, 4
  %v7262 = vor.u32 %v7261, %v7257
  %v7263 = vrot.slane %v7262, 4
  %v7265 = vshll.u32 %v6626, 16
  %v7267 = vrot.slane %v7265, 5
  %v7268 = vsel %vm117, %v7263, %v7267
  %v7270 = vshrl.u32 %v6627, 16
  %v7272 = vrot.slane %v7270, 4
  %v7273 = vshll.u32 %v6627, 16
  %v7275 = vrot.slane %v7273, 5
  %v7276 = vor.u32 %v7272, %v7275
  %v7277 = vrot.slane %v7276, 4
  %v7279 = vshll.u32 %v6628, 16
  %v7281 = vrot.slane %v7279, 5
  %v7282 = vsel %vm117, %v7277, %v7281
  %v7283 = vshrl.u32 %v6628, 16
  %v7285 = vrot.slane %v7283, 4
  %v7286 = vor.u32 %v7285, %v7281
  %v7287 = vrot.slane %v7286, 4
  %v7289 = vshll.u32 %v6629, 16
  %v7291 = vrot.slane %v7289, 5
  %v7292 = vsel %vm117, %v7287, %v7291
  %v7294 = vshrl.u32 %v6630, 16
  %v7296 = vrot.slane %v7294, 4
  %v7297 = vshll.u32 %v6630, 16
  %v7299 = vrot.slane %v7297, 5
  %v7300 = vor.u32 %v7296, %v7299
  %v7301 = vrot.slane %v7300, 4
  %v7303 = vshll.u32 %v6631, 16
  %v7305 = vrot.slane %v7303, 5
  %v7306 = vsel %vm117, %v7301, %v7305
  %v7307 = vshrl.u32 %v6631, 16
  %v7309 = vrot.slane %v7307, 4
  %v7310 = vor.u32 %v7309, %v7305
  %v7311 = vrot.slane %v7310, 4
  %v7313 = vshll.u32 %v6632, 16
  %v7315 = vrot.slane %v7313, 5
  %v7316 = vsel %vm117, %v7311, %v7315
  %v7318 = vshrl.u32 %v6633, 16
  %v7320 = vrot.slane %v7318, 4
  %v7321 = vshll.u32 %v6633, 16
  %v7323 = vrot.slane %v7321, 5
  %v7324 = vor.u32 %v7320, %v7323
  %v7325 = vrot.slane %v7324, 4
  %v7327 = vshll.u32 %v6634, 16
  %v7329 = vrot.slane %v7327, 5
  %v7330 = vsel %vm117, %v7325, %v7329
  %v7331 = vshrl.u32 %v6634, 16
  %v7333 = vrot.slane %v7331, 4
  %v7334 = vor.u32 %v7333, %v7329
  %v7335 = vrot.slane %v7334, 4
  %v7337 = vshll.u32 %v6635, 16
  %v7339 = vrot.slane %v7337, 5
  %v7340 = vsel %vm117, %v7335, %v7339
  %v7342 = vshrl.u32 %v6636, 16
  %v7344 = vrot.slane %v7342, 4
  %v7345 = vshll.u32 %v6636, 16
  %v7347 = vrot.slane %v7345, 5
  %v7348 = vor.u32 %v7344, %v7347
  %v7349 = vrot.slane %v7348, 4
  %v7351 = vshll.u32 %v6637, 16
  %v7353 = vrot.slane %v7351, 5
  %v7354 = vsel %vm117, %v7349, %v7353
  %v7355 = vshrl.u32 %v6637, 16
  %v7357 = vrot.slane %v7355, 4
  %v7358 = vor.u32 %v7357, %v7353
  %v7359 = vrot.slane %v7358, 4
  %v7361 = vshll.u32 %v6638, 16
  %v7363 = vrot.slane %v7361, 5
  %v7364 = vsel %vm117, %v7359, %v7363
  %v7366 = vshrl.u32 %v6639, 16
  %v7368 = vrot.slane %v7366, 4
  %v7369 = vshll.u32 %v6639, 16
  %v7371 = vrot.slane %v7369, 5
  %v7372 = vor.u32 %v7368, %v7371
  %v7373 = vrot.slane %v7372, 4
  %v7375 = vshll.u32 %v6640, 16
  %v7377 = vrot.slane %v7375, 5
  %v7378 = vsel %vm117, %v7373, %v7377
  %v7379 = vshrl.u32 %v6640, 16
  %v7381 = vrot.slane %v7379, 4
  %v7382 = vor.u32 %v7381, %v7377
  %v7383 = vrot.slane %v7382, 4
  %v7385 = vshll.u32 %v6641, 16
  %v7387 = vrot.slane %v7385, 5
  %v7388 = vsel %vm117, %v7383, %v7387
  %v7390 = vshrl.u32 %v6642, 16
  %v7392 = vrot.slane %v7390, 4
  %v7393 = vshll.u32 %v6642, 16
  %v7395 = vrot.slane %v7393, 5
  %v7396 = vor.u32 %v7392, %v7395
  %v7397 = vrot.slane %v7396, 4
  %v7399 = vshll.u32 %v6643, 16
  %v7401 = vrot.slane %v7399, 5
  %v7402 = vsel %vm117, %v7397, %v7401
  %v7403 = vshrl.u32 %v6643, 16
  %v7405 = vrot.slane %v7403, 4
  %v7406 = vor.u32 %v7405, %v7401
  %v7407 = vrot.slane %v7406, 4
  %v7409 = vshll.u32 %v6644, 16
  %v7411 = vrot.slane %v7409, 5
  %v7412 = vsel %vm117, %v7407, %v7411
  %s7413 = scalar_lea.vmem %s1, 112
  %v7414 = vld [vmem:[%s7413] sm:$0xf]
  %v7415 = vld [vmem:[%s7413 + $0x4] sm:$0xf]
  %v7416 = vld [vmem:[%s7413 + $0x8] sm:$0xf]
  %v7417 = vld [vmem:[%s7413 + $0xc] sm:$0xf]
  %v7418 = vunpack.c.l.b16 %v6658
  %v7419 = vunpack.c.l.b16 %v6668
  %v7420 = vunpack.c.l.b16 %v6682
  %v7421 = vunpack.c.l.b16 %v6692
  %v7422 = vunpack.c.l.b16 %v6706
  %v7423 = vunpack.c.l.b16 %v6716
  %v7424 = vunpack.c.l.b16 %v6730
  %v7425 = vunpack.c.l.b16 %v6740
  %v7426 = vunpack.c.l.b16 %v6754
  %v7427 = vunpack.c.l.b16 %v6764
  %v7428 = vunpack.c.l.b16 %v6778
  %v7429 = vunpack.c.l.b16 %v6788
  %v7430 = vunpack.c.l.b16 %v6802
  %v7431 = vunpack.c.l.b16 %v6812
  %v7432 = vunpack.c.l.b16 %v6826
  %v7433 = vunpack.c.l.b16 %v6836
  %v7434 = vunpack.c.l.b16 %v6850
  %v7435 = vunpack.c.l.b16 %v6860
  %v7436 = vunpack.c.l.b16 %v6874
  %v7437 = vunpack.c.l.b16 %v6884
  %v7438 = vunpack.c.l.b16 %v6898
  %v7439 = vunpack.c.l.b16 %v6908
  %v7440 = vunpack.c.l.b16 %v6922
  %v7441 = vunpack.c.l.b16 %v6932
  %v7442 = vunpack.c.l.b16 %v6946
  %v7443 = vunpack.c.l.b16 %v6956
  %v7444 = vunpack.c.l.b16 %v6970
  %v7445 = vunpack.c.l.b16 %v6980
  %v7446 = vunpack.c.l.b16 %v6994
  %v7447 = vunpack.c.l.b16 %v7004
  %v7448 = vunpack.c.l.b16 %v7018
  %v7449 = vunpack.c.l.b16 %v7028
  %v7450 = vunpack.c.l.b16 %v7042
  %v7451 = vunpack.c.l.b16 %v7052
  %v7452 = vunpack.c.l.b16 %v7066
  %v7453 = vunpack.c.l.b16 %v7076
  %v7454 = vunpack.c.l.b16 %v7090
  %v7455 = vunpack.c.l.b16 %v7100
  %v7456 = vunpack.c.l.b16 %v7114
  %v7457 = vunpack.c.l.b16 %v7124
  %v7458 = vunpack.c.l.b16 %v7138
  %v7459 = vunpack.c.l.b16 %v7148
  %v7460 = vunpack.c.l.b16 %v7162
  %v7461 = vunpack.c.l.b16 %v7172
  %v7462 = vunpack.c.l.b16 %v7186
  %v7463 = vunpack.c.l.b16 %v7196
  %v7464 = vunpack.c.l.b16 %v7210
  %v7465 = vunpack.c.l.b16 %v7220
  %v7466 = vunpack.c.l.b16 %v7234
  %v7467 = vunpack.c.l.b16 %v7244
  %v7468 = vunpack.c.l.b16 %v7258
  %v7469 = vunpack.c.l.b16 %v7268
  %v7470 = vunpack.c.l.b16 %v7282
  %v7471 = vunpack.c.l.b16 %v7292
  %v7472 = vunpack.c.l.b16 %v7306
  %v7473 = vunpack.c.l.b16 %v7316
  %v7474 = vunpack.c.l.b16 %v7330
  %v7475 = vunpack.c.l.b16 %v7340
  %v7476 = vunpack.c.l.b16 %v7354
  %v7477 = vunpack.c.l.b16 %v7364
  %v7478 = vunpack.c.l.b16 %v7378
  %v7479 = vunpack.c.l.b16 %v7388
  %v7480 = vunpack.c.l.b16 %v7402
  %v7481 = vunpack.c.l.b16 %v7412
  %v7482 = vpack.c.b16 %v7419, %v7418
  %v7483 = vpack.c.b16 %v7421, %v7420
  %v7484 = vpack.c.b16 %v7423, %v7422
  %v7485 = vpack.c.b16 %v7425, %v7424
  %v7486 = vpack.c.b16 %v7427, %v7426
  %v7487 = vpack.c.b16 %v7429, %v7428
  %v7488 = vpack.c.b16 %v7431, %v7430
  %v7489 = vpack.c.b16 %v7433, %v7432
  %v7490 = vpack.c.b16 %v7435, %v7434
  %v7491 = vpack.c.b16 %v7437, %v7436
  %v7492 = vpack.c.b16 %v7439, %v7438
  %v7493 = vpack.c.b16 %v7441, %v7440
  %v7494 = vpack.c.b16 %v7443, %v7442
  %v7495 = vpack.c.b16 %v7445, %v7444
  %v7496 = vpack.c.b16 %v7447, %v7446
  %v7497 = vpack.c.b16 %v7449, %v7448
  %v7498 = vpack.c.b16 %v7451, %v7450
  %v7499 = vpack.c.b16 %v7453, %v7452
  %v7500 = vpack.c.b16 %v7455, %v7454
  %v7501 = vpack.c.b16 %v7457, %v7456
  %v7502 = vpack.c.b16 %v7459, %v7458
  %v7503 = vpack.c.b16 %v7461, %v7460
  %v7504 = vpack.c.b16 %v7463, %v7462
  %v7505 = vpack.c.b16 %v7465, %v7464
  %v7506 = vpack.c.b16 %v7467, %v7466
  %v7507 = vpack.c.b16 %v7469, %v7468
  %v7508 = vpack.c.b16 %v7471, %v7470
  %v7509 = vpack.c.b16 %v7473, %v7472
  %v7510 = vpack.c.b16 %v7475, %v7474
  %v7511 = vpack.c.b16 %v7477, %v7476
  %v7512 = vpack.c.b16 %v7479, %v7478
  %v7513 = vpack.c.b16 %v7481, %v7480
  %v7518 = vunpack.c.l.b16 %v7414
  %v7519 = vunpack.c.l.b16 %v7415
  %v7520 = vunpack.c.l.b16 %v7416
  %v7521 = vunpack.c.l.b16 %v7417
  %v7522 = vpack.c.b16 %v7519, %v7518
  %v7523 = vpack.c.b16 %v7521, %v7520
  %v7527 = vsel %vm999, %v7482, 0
  %v7530 = vsel %vm999, %v7483, 0
  %v7533 = vsel %vm999, %v7484, 0
  %v7536 = vsel %vm999, %v7485, 0
  %v7539 = vsel %vm999, %v7486, 0
  %v7542 = vsel %vm999, %v7487, 0
  %v7545 = vsel %vm999, %v7488, 0
  %v7548 = vsel %vm999, %v7489, 0
  %v7551 = vsel %vm999, %v7490, 0
  %v7554 = vsel %vm999, %v7491, 0
  %v7557 = vsel %vm999, %v7492, 0
  %v7560 = vsel %vm999, %v7493, 0
  %v7563 = vsel %vm999, %v7494, 0
  %v7566 = vsel %vm999, %v7495, 0
  %v7569 = vsel %vm999, %v7496, 0
  %v7572 = vsel %vm999, %v7497, 0
  %v7575 = vsel %vm999, %v7498, 0
  %v7578 = vsel %vm999, %v7499, 0
  %v7581 = vsel %vm999, %v7500, 0
  %v7584 = vsel %vm999, %v7501, 0
  %v7587 = vsel %vm999, %v7502, 0
  %v7590 = vsel %vm999, %v7503, 0
  %v7593 = vsel %vm999, %v7504, 0
  %v7596 = vsel %vm999, %v7505, 0
  %v7599 = vsel %vm999, %v7506, 0
  %v7602 = vsel %vm999, %v7507, 0
  %v7605 = vsel %vm999, %v7508, 0
  %v7608 = vsel %vm999, %v7509, 0
  %v7611 = vsel %vm999, %v7510, 0
  %v7614 = vsel %vm999, %v7511, 0
  %v7617 = vsel %vm999, %v7512, 0
  %v7620 = vsel %vm999, %v7513, 0
  %7622 = vmatprep.subr.bf16.mxu0 0
  %7623 = vmatpush1.bf16.msra.mxu0 0
  %7624 = vmatprep.subr.bf16.mxu0 0
  %7625 = vmatpush1.bf16.msra.mxu0 0
  %7626 = vmatprep.subr.bf16.mxu0 0
  %7627 = vmatpush1.bf16.msra.mxu0 0
  %7628 = vmatprep.subr.bf16.mxu0 0
  %7629 = vmatpush1.bf16.msra.mxu0 0
  %7630 = vmatprep.subr.bf16.mxu0 0
  %7631 = vmatpush1.bf16.msra.mxu0 0
  %7632 = vmatprep.subr.bf16.mxu0 0
  %7633 = vmatpush1.bf16.msra.mxu0 0
  %7634 = vmatprep.subr.bf16.mxu0 0
  %7635 = vmatpush1.bf16.msra.mxu0 %v7523
  %7636 = vmatprep.subr.bf16.mxu0 0
  %7637 = vmatpush1.bf16.msra.mxu0 %v7522
  %7638 = vmatprep.subr.bf16.mxu0 0
  %7639 = vmatpush2.bf16.msra.mxu0 0
  %7640 = vmatprep.subr.bf16.mxu0 0
  %7641 = vmatpush2.bf16.msra.mxu0 0
  %7642 = vmatprep.subr.bf16.mxu0 0
  %7643 = vmatpush2.bf16.msra.mxu0 0
  %7644 = vmatprep.subr.bf16.mxu0 0
  %7645 = vmatpush2.bf16.msra.mxu0 0
  %7646 = vmatprep.subr.bf16.mxu0 0
  %7647 = vmatpush2.bf16.msra.mxu0 0
  %7648 = vmatprep.subr.bf16.mxu0 0
  %7649 = vmatpush2.bf16.msra.mxu0 0
  %7650 = vmatprep.subr.bf16.mxu0 0
  %7651 = vmatpush2.bf16.msra.mxu0 0
  %7652 = vmatprep.subr.bf16.mxu0 0
  %7653 = vmatpush2.bf16.msra.mxu0 0
  %7654 = vmatprep.mubr.bf16.mxu0 0
  %7655 = vmatmul.mubr.bf16.gmra.mxu0 %v7527
  %v7656 = vpop.f32.mrf.mxu0
  %v7657 = vadd.f32 0.0, %v7656
  %v7658 = vpop.f32.mrf.mxu0
  %v7659 = vpop.f32.mrf.mxu0
  %v7660 = vadd.f32 0.0, %v7659
  %v7661 = vpop.f32.mrf.mxu0
  %7662 = vmatprep.mubr.bf16.mxu0 0
  %7663 = vmatmul.mubr.bf16.gmra.mxu0 %v7530
  %v7664 = vpop.f32.mrf.mxu0
  %v7665 = vadd.f32 0.0, %v7664
  %v7666 = vpop.f32.mrf.mxu0
  %v7667 = vpop.f32.mrf.mxu0
  %v7668 = vadd.f32 0.0, %v7667
  %v7669 = vpop.f32.mrf.mxu0
  %7670 = vmatprep.mubr.bf16.mxu0 0
  %7671 = vmatmul.mubr.bf16.gmra.mxu0 %v7533
  %v7672 = vpop.f32.mrf.mxu0
  %v7673 = vadd.f32 0.0, %v7672
  %v7674 = vpop.f32.mrf.mxu0
  %v7675 = vpop.f32.mrf.mxu0
  %v7676 = vadd.f32 0.0, %v7675
  %v7677 = vpop.f32.mrf.mxu0
  %7678 = vmatprep.mubr.bf16.mxu0 0
  %7679 = vmatmul.mubr.bf16.gmra.mxu0 %v7536
  %v7680 = vpop.f32.mrf.mxu0
  %v7681 = vadd.f32 0.0, %v7680
  %v7682 = vpop.f32.mrf.mxu0
  %v7683 = vpop.f32.mrf.mxu0
  %v7684 = vadd.f32 0.0, %v7683
  %v7685 = vpop.f32.mrf.mxu0
  %7686 = vmatprep.mubr.bf16.mxu0 0
  %7687 = vmatmul.mubr.bf16.gmra.mxu0 %v7539
  %v7688 = vpop.f32.mrf.mxu0
  %v7689 = vadd.f32 0.0, %v7688
  %v7690 = vpop.f32.mrf.mxu0
  %v7691 = vpop.f32.mrf.mxu0
  %v7692 = vadd.f32 0.0, %v7691
  %v7693 = vpop.f32.mrf.mxu0
  %7694 = vmatprep.mubr.bf16.mxu0 0
  %7695 = vmatmul.mubr.bf16.gmra.mxu0 %v7542
  %v7696 = vpop.f32.mrf.mxu0
  %v7697 = vadd.f32 0.0, %v7696
  %v7698 = vpop.f32.mrf.mxu0
  %v7699 = vpop.f32.mrf.mxu0
  %v7700 = vadd.f32 0.0, %v7699
  %v7701 = vpop.f32.mrf.mxu0
  %7702 = vmatprep.mubr.bf16.mxu0 0
  %7703 = vmatmul.mubr.bf16.gmra.mxu0 %v7545
  %v7704 = vpop.f32.mrf.mxu0
  %v7705 = vadd.f32 0.0, %v7704
  %v7706 = vpop.f32.mrf.mxu0
  %v7707 = vpop.f32.mrf.mxu0
  %v7708 = vadd.f32 0.0, %v7707
  %v7709 = vpop.f32.mrf.mxu0
  %7710 = vmatprep.mubr.bf16.mxu0 0
  %7711 = vmatmul.mubr.bf16.gmra.mxu0 %v7548
  %v7712 = vpop.f32.mrf.mxu0
  %v7713 = vadd.f32 0.0, %v7712
  %v7714 = vpop.f32.mrf.mxu0
  %v7715 = vpop.f32.mrf.mxu0
  %v7716 = vadd.f32 0.0, %v7715
  %v7717 = vpop.f32.mrf.mxu0
  %7718 = vmatprep.mubr.bf16.mxu0 0
  %7719 = vmatmul.mubr.bf16.gmra.mxu0 %v7551
  %v7720 = vpop.f32.mrf.mxu0
  %v7721 = vadd.f32 0.0, %v7720
  %v7722 = vpop.f32.mrf.mxu0
  %v7723 = vpop.f32.mrf.mxu0
  %v7724 = vadd.f32 0.0, %v7723
  %v7725 = vpop.f32.mrf.mxu0
  %7726 = vmatprep.mubr.bf16.mxu0 0
  %7727 = vmatmul.mubr.bf16.gmra.mxu0 %v7554
  %v7728 = vpop.f32.mrf.mxu0
  %v7729 = vadd.f32 0.0, %v7728
  %v7730 = vpop.f32.mrf.mxu0
  %v7731 = vpop.f32.mrf.mxu0
  %v7732 = vadd.f32 0.0, %v7731
  %v7733 = vpop.f32.mrf.mxu0
  %7734 = vmatprep.mubr.bf16.mxu0 0
  %7735 = vmatmul.mubr.bf16.gmra.mxu0 %v7557
  %v7736 = vpop.f32.mrf.mxu0
  %v7737 = vadd.f32 0.0, %v7736
  %v7738 = vpop.f32.mrf.mxu0
  %v7739 = vpop.f32.mrf.mxu0
  %v7740 = vadd.f32 0.0, %v7739
  %v7741 = vpop.f32.mrf.mxu0
  %7742 = vmatprep.mubr.bf16.mxu0 0
  %7743 = vmatmul.mubr.bf16.gmra.mxu0 %v7560
  %v7744 = vpop.f32.mrf.mxu0
  %v7745 = vadd.f32 0.0, %v7744
  %v7746 = vpop.f32.mrf.mxu0
  %v7747 = vpop.f32.mrf.mxu0
  %v7748 = vadd.f32 0.0, %v7747
  %v7749 = vpop.f32.mrf.mxu0
  %7750 = vmatprep.mubr.bf16.mxu0 0
  %7751 = vmatmul.mubr.bf16.gmra.mxu0 %v7563
  %v7752 = vpop.f32.mrf.mxu0
  %v7753 = vadd.f32 0.0, %v7752
  %v7754 = vpop.f32.mrf.mxu0
  %v7755 = vpop.f32.mrf.mxu0
  %v7756 = vadd.f32 0.0, %v7755
  %v7757 = vpop.f32.mrf.mxu0
  %7758 = vmatprep.mubr.bf16.mxu0 0
  %7759 = vmatmul.mubr.bf16.gmra.mxu0 %v7566
  %v7760 = vpop.f32.mrf.mxu0
  %v7761 = vadd.f32 0.0, %v7760
  %v7762 = vpop.f32.mrf.mxu0
  %v7763 = vpop.f32.mrf.mxu0
  %v7764 = vadd.f32 0.0, %v7763
  %v7765 = vpop.f32.mrf.mxu0
  %7766 = vmatprep.mubr.bf16.mxu0 0
  %7767 = vmatmul.mubr.bf16.gmra.mxu0 %v7569
  %v7768 = vpop.f32.mrf.mxu0
  %v7769 = vadd.f32 0.0, %v7768
  %v7770 = vpop.f32.mrf.mxu0
  %v7771 = vpop.f32.mrf.mxu0
  %v7772 = vadd.f32 0.0, %v7771
  %v7773 = vpop.f32.mrf.mxu0
  %7774 = vmatprep.mubr.bf16.mxu0 0
  %7775 = vmatmul.mubr.bf16.gmra.mxu0 %v7572
  %v7776 = vpop.f32.mrf.mxu0
  %v7777 = vadd.f32 0.0, %v7776
  %v7778 = vpop.f32.mrf.mxu0
  %v7779 = vpop.f32.mrf.mxu0
  %v7780 = vadd.f32 0.0, %v7779
  %v7781 = vpop.f32.mrf.mxu0
  %7782 = vmatprep.mubr.bf16.mxu0 0
  %7783 = vmatmul.mubr.bf16.gmra.mxu0 %v7575
  %v7784 = vpop.f32.mrf.mxu0
  %v7785 = vadd.f32 0.0, %v7784
  %v7786 = vpop.f32.mrf.mxu0
  %v7787 = vpop.f32.mrf.mxu0
  %v7788 = vadd.f32 0.0, %v7787
  %v7789 = vpop.f32.mrf.mxu0
  %7790 = vmatprep.mubr.bf16.mxu0 0
  %7791 = vmatmul.mubr.bf16.gmra.mxu0 %v7578
  %v7792 = vpop.f32.mrf.mxu0
  %v7793 = vadd.f32 0.0, %v7792
  %v7794 = vpop.f32.mrf.mxu0
  %v7795 = vpop.f32.mrf.mxu0
  %v7796 = vadd.f32 0.0, %v7795
  %v7797 = vpop.f32.mrf.mxu0
  %7798 = vmatprep.mubr.bf16.mxu0 0
  %7799 = vmatmul.mubr.bf16.gmra.mxu0 %v7581
  %v7800 = vpop.f32.mrf.mxu0
  %v7801 = vadd.f32 0.0, %v7800
  %v7802 = vpop.f32.mrf.mxu0
  %v7803 = vpop.f32.mrf.mxu0
  %v7804 = vadd.f32 0.0, %v7803
  %v7805 = vpop.f32.mrf.mxu0
  %7806 = vmatprep.mubr.bf16.mxu0 0
  %7807 = vmatmul.mubr.bf16.gmra.mxu0 %v7584
  %v7808 = vpop.f32.mrf.mxu0
  %v7809 = vadd.f32 0.0, %v7808
  %v7810 = vpop.f32.mrf.mxu0
  %v7811 = vpop.f32.mrf.mxu0
  %v7812 = vadd.f32 0.0, %v7811
  %v7813 = vpop.f32.mrf.mxu0
  %7814 = vmatprep.mubr.bf16.mxu0 0
  %7815 = vmatmul.mubr.bf16.gmra.mxu0 %v7587
  %v7816 = vpop.f32.mrf.mxu0
  %v7817 = vadd.f32 0.0, %v7816
  %v7818 = vpop.f32.mrf.mxu0
  %v7819 = vpop.f32.mrf.mxu0
  %v7820 = vadd.f32 0.0, %v7819
  %v7821 = vpop.f32.mrf.mxu0
  %7822 = vmatprep.mubr.bf16.mxu0 0
  %7823 = vmatmul.mubr.bf16.gmra.mxu0 %v7590
  %v7824 = vpop.f32.mrf.mxu0
  %v7825 = vadd.f32 0.0, %v7824
  %v7826 = vpop.f32.mrf.mxu0
  %v7827 = vpop.f32.mrf.mxu0
  %v7828 = vadd.f32 0.0, %v7827
  %v7829 = vpop.f32.mrf.mxu0
  %7830 = vmatprep.mubr.bf16.mxu0 0
  %7831 = vmatmul.mubr.bf16.gmra.mxu0 %v7593
  %v7832 = vpop.f32.mrf.mxu0
  %v7833 = vadd.f32 0.0, %v7832
  %v7834 = vpop.f32.mrf.mxu0
  %v7835 = vpop.f32.mrf.mxu0
  %v7836 = vadd.f32 0.0, %v7835
  %v7837 = vpop.f32.mrf.mxu0
  %7838 = vmatprep.mubr.bf16.mxu0 0
  %7839 = vmatmul.mubr.bf16.gmra.mxu0 %v7596
  %v7840 = vpop.f32.mrf.mxu0
  %v7841 = vadd.f32 0.0, %v7840
  %v7842 = vpop.f32.mrf.mxu0
  %v7843 = vpop.f32.mrf.mxu0
  %v7844 = vadd.f32 0.0, %v7843
  %v7845 = vpop.f32.mrf.mxu0
  %7846 = vmatprep.mubr.bf16.mxu0 0
  %7847 = vmatmul.mubr.bf16.gmra.mxu0 %v7599
  %v7848 = vpop.f32.mrf.mxu0
  %v7849 = vadd.f32 0.0, %v7848
  %v7850 = vpop.f32.mrf.mxu0
  %v7851 = vpop.f32.mrf.mxu0
  %v7852 = vadd.f32 0.0, %v7851
  %v7853 = vpop.f32.mrf.mxu0
  %7854 = vmatprep.mubr.bf16.mxu0 0
  %7855 = vmatmul.mubr.bf16.gmra.mxu0 %v7602
  %v7856 = vpop.f32.mrf.mxu0
  %v7857 = vadd.f32 0.0, %v7856
  %v7858 = vpop.f32.mrf.mxu0
  %v7859 = vpop.f32.mrf.mxu0
  %v7860 = vadd.f32 0.0, %v7859
  %v7861 = vpop.f32.mrf.mxu0
  %7862 = vmatprep.mubr.bf16.mxu0 0
  %7863 = vmatmul.mubr.bf16.gmra.mxu0 %v7605
  %v7864 = vpop.f32.mrf.mxu0
  %v7865 = vadd.f32 0.0, %v7864
  %v7866 = vpop.f32.mrf.mxu0
  %v7867 = vpop.f32.mrf.mxu0
  %v7868 = vadd.f32 0.0, %v7867
  %v7869 = vpop.f32.mrf.mxu0
  %7870 = vmatprep.mubr.bf16.mxu0 0
  %7871 = vmatmul.mubr.bf16.gmra.mxu0 %v7608
  %v7872 = vpop.f32.mrf.mxu0
  %v7873 = vadd.f32 0.0, %v7872
  %v7874 = vpop.f32.mrf.mxu0
  %v7875 = vpop.f32.mrf.mxu0
  %v7876 = vadd.f32 0.0, %v7875
  %v7877 = vpop.f32.mrf.mxu0
  %7878 = vmatprep.mubr.bf16.mxu0 0
  %7879 = vmatmul.mubr.bf16.gmra.mxu0 %v7611
  %v7880 = vpop.f32.mrf.mxu0
  %v7881 = vadd.f32 0.0, %v7880
  %v7882 = vpop.f32.mrf.mxu0
  %v7883 = vpop.f32.mrf.mxu0
  %v7884 = vadd.f32 0.0, %v7883
  %v7885 = vpop.f32.mrf.mxu0
  %7886 = vmatprep.mubr.bf16.mxu0 0
  %7887 = vmatmul.mubr.bf16.gmra.mxu0 %v7614
  %v7888 = vpop.f32.mrf.mxu0
  %v7889 = vadd.f32 0.0, %v7888
  %v7890 = vpop.f32.mrf.mxu0
  %v7891 = vpop.f32.mrf.mxu0
  %v7892 = vadd.f32 0.0, %v7891
  %v7893 = vpop.f32.mrf.mxu0
  %7894 = vmatprep.mubr.bf16.mxu0 0
  %7895 = vmatmul.mubr.bf16.gmra.mxu0 %v7617
  %v7896 = vpop.f32.mrf.mxu0
  %v7897 = vadd.f32 0.0, %v7896
  %v7898 = vpop.f32.mrf.mxu0
  %v7899 = vpop.f32.mrf.mxu0
  %v7900 = vadd.f32 0.0, %v7899
  %v7901 = vpop.f32.mrf.mxu0
  %7902 = vmatprep.mubr.bf16.mxu0 0
  %7903 = vmatmul.mubr.bf16.gmra.mxu0 %v7620
  %v7904 = vpop.f32.mrf.mxu0
  %v7905 = vadd.f32 0.0, %v7904
  %v7906 = vpop.f32.mrf.mxu0
  %v7907 = vpop.f32.mrf.mxu0
  %v7908 = vadd.f32 0.0, %v7907
  %v7909 = vpop.f32.mrf.mxu0
  %7910 = vdwg.mxu0
  %v7911 = vadd.f32 %v6485, %v7657
  %v7912 = vadd.f32 %v6486, %v7660
  %v7913 = vadd.f32 %v6487, %v7665
  %v7914 = vadd.f32 %v6488, %v7668
  %v7915 = vadd.f32 %v6489, %v7673
  %v7916 = vadd.f32 %v6490, %v7676
  %v7917 = vadd.f32 %v6491, %v7681
  %v7918 = vadd.f32 %v6492, %v7684
  %v7919 = vadd.f32 %v6493, %v7689
  %v7920 = vadd.f32 %v6494, %v7692
  %v7921 = vadd.f32 %v6495, %v7697
  %v7922 = vadd.f32 %v6496, %v7700
  %v7923 = vadd.f32 %v6497, %v7705
  %v7924 = vadd.f32 %v6498, %v7708
  %v7925 = vadd.f32 %v6499, %v7713
  %v7926 = vadd.f32 %v6500, %v7716
  %v7927 = vadd.f32 %v6501, %v7721
  %v7928 = vadd.f32 %v6502, %v7724
  %v7929 = vadd.f32 %v6503, %v7729
  %v7930 = vadd.f32 %v6504, %v7732
  %v7931 = vadd.f32 %v6505, %v7737
  %v7932 = vadd.f32 %v6506, %v7740
  %v7933 = vadd.f32 %v6507, %v7745
  %v7934 = vadd.f32 %v6508, %v7748
  %v7935 = vadd.f32 %v6509, %v7753
  %v7936 = vadd.f32 %v6510, %v7756
  %v7937 = vadd.f32 %v6511, %v7761
  %v7938 = vadd.f32 %v6512, %v7764
  %v7939 = vadd.f32 %v6513, %v7769
  %v7940 = vadd.f32 %v6514, %v7772
  %v7941 = vadd.f32 %v6515, %v7777
  %v7942 = vadd.f32 %v6516, %v7780
  %v7943 = vadd.f32 %v6517, %v7785
  %v7944 = vadd.f32 %v6518, %v7788
  %v7945 = vadd.f32 %v6519, %v7793
  %v7946 = vadd.f32 %v6520, %v7796
  %v7947 = vadd.f32 %v6521, %v7801
  %v7948 = vadd.f32 %v6522, %v7804
  %v7949 = vadd.f32 %v6523, %v7809
  %v7950 = vadd.f32 %v6524, %v7812
  %v7951 = vadd.f32 %v6525, %v7817
  %v7952 = vadd.f32 %v6526, %v7820
  %v7953 = vadd.f32 %v6527, %v7825
  %v7954 = vadd.f32 %v6528, %v7828
  %v7955 = vadd.f32 %v6529, %v7833
  %v7956 = vadd.f32 %v6530, %v7836
  %v7957 = vadd.f32 %v6531, %v7841
  %v7958 = vadd.f32 %v6532, %v7844
  %v7959 = vadd.f32 %v6533, %v7849
  %v7960 = vadd.f32 %v6534, %v7852
  %v7961 = vadd.f32 %v6535, %v7857
  %v7962 = vadd.f32 %v6536, %v7860
  %v7963 = vadd.f32 %v6537, %v7865
  %v7964 = vadd.f32 %v6538, %v7868
  %v7965 = vadd.f32 %v6539, %v7873
  %v7966 = vadd.f32 %v6540, %v7876
  %v7967 = vadd.f32 %v6541, %v7881
  %v7968 = vadd.f32 %v6542, %v7884
  %v7969 = vadd.f32 %v6543, %v7889
  %v7970 = vadd.f32 %v6544, %v7892
  %v7971 = vadd.f32 %v6545, %v7897
  %v7972 = vadd.f32 %v6546, %v7900
  %v7973 = vadd.f32 %v6547, %v7905
  %v7974 = vadd.f32 %v6548, %v7908
  %v7975 = vld [vmem:[%s5858] sm:$0xe]
  %v7976 = vld [vmem:[%s5858 + $0xc] sm:$0xe]
  %v7977 = vld [vmem:[%s5858 + $0x18] sm:$0xe]
  %v7978 = vld [vmem:[%s5858 + $0x24] sm:$0xe]
  %v7979 = vld [vmem:[%s5858 + $0x30] sm:$0xe]
  %v7980 = vld [vmem:[%s5858 + $0x3c] sm:$0xe]
  %v7981 = vld [vmem:[%s5858 + $0x48] sm:$0xe]
  %v7982 = vld [vmem:[%s5858 + $0x54] sm:$0xe]
  %v7983 = vld [vmem:[%s5858 + $0x60] sm:$0xe]
  %v7984 = vld [vmem:[%s5858 + $0x6c] sm:$0xe]
  %v7985 = vld [vmem:[%s5858 + $0x78] sm:$0xe]
  %v7986 = vld [vmem:[%s5858 + $0x84] sm:$0xe]
  %v7987 = vld [vmem:[%s5858 + $0x90] sm:$0xe]
  %v7988 = vld [vmem:[%s5858 + $0x9c] sm:$0xe]
  %v7989 = vld [vmem:[%s5858 + $0xa8] sm:$0xe]
  %v7990 = vld [vmem:[%s5858 + $0xb4] sm:$0xe]
  %v7991 = vld [vmem:[%s5858 + $0xd8] sm:$0xe]
  %v7992 = vld [vmem:[%s5858 + $0xe4] sm:$0xe]
  %v7993 = vld [vmem:[%s5858 + $0xf0] sm:$0xe]
  %v7994 = vld [vmem:[%s5858 + $0xfc] sm:$0xe]
  %v7995 = vld [vmem:[%s5858 + $0x108] sm:$0xe]
  %v7996 = vld [vmem:[%s5858 + $0x114] sm:$0xe]
  %v7997 = vld [vmem:[%s5858 + $0x120] sm:$0xe]
  %v7998 = vld [vmem:[%s5858 + $0x12c] sm:$0xe]
  %v7999 = vld [vmem:[%s5858 + $0x138] sm:$0xe]
  %v8000 = vld [vmem:[%s5858 + $0x144] sm:$0xe]
  %v8001 = vld [vmem:[%s5858 + $0x150] sm:$0xe]
  %v8002 = vld [vmem:[%s5858 + $0x15c] sm:$0xe]
  %v8003 = vld [vmem:[%s5858 + $0x168] sm:$0xe]
  %v8004 = vld [vmem:[%s5858 + $0x174] sm:$0xe]
  %v8005 = vld [vmem:[%s5858 + $0x180] sm:$0xe]
  %v8006 = vld [vmem:[%s5858 + $0x18c] sm:$0xe]
  %v8103 = vrot.slane %v7975, 5
  %v8104 = vrot.slane %v8103, 4
  %v8105 = vrot.slane %v6550, 5
  %v8106 = vsel %vm2040, %v8104, %v8105
  %v8107 = vrot.slane %v8105, 4
  %v8108 = vrot.slane %v6551, 5
  %v8109 = vsel %vm2040, %v8107, %v8108
  %v8110 = vrot.slane %v7976, 5
  %v8111 = vrot.slane %v8110, 4
  %v8112 = vrot.slane %v6553, 5
  %v8113 = vsel %vm2040, %v8111, %v8112
  %v8114 = vrot.slane %v8112, 4
  %v8115 = vrot.slane %v6554, 5
  %v8116 = vsel %vm2040, %v8114, %v8115
  %v8117 = vrot.slane %v7977, 5
  %v8118 = vrot.slane %v8117, 4
  %v8119 = vrot.slane %v6556, 5
  %v8120 = vsel %vm2040, %v8118, %v8119
  %v8121 = vrot.slane %v8119, 4
  %v8122 = vrot.slane %v6557, 5
  %v8123 = vsel %vm2040, %v8121, %v8122
  %v8124 = vrot.slane %v7978, 5
  %v8125 = vrot.slane %v8124, 4
  %v8126 = vrot.slane %v6559, 5
  %v8127 = vsel %vm2040, %v8125, %v8126
  %v8128 = vrot.slane %v8126, 4
  %v8129 = vrot.slane %v6560, 5
  %v8130 = vsel %vm2040, %v8128, %v8129
  %v8131 = vrot.slane %v7979, 5
  %v8132 = vrot.slane %v8131, 4
  %v8133 = vrot.slane %v6562, 5
  %v8134 = vsel %vm2040, %v8132, %v8133
  %v8135 = vrot.slane %v8133, 4
  %v8136 = vrot.slane %v6563, 5
  %v8137 = vsel %vm2040, %v8135, %v8136
  %v8138 = vrot.slane %v7980, 5
  %v8139 = vrot.slane %v8138, 4
  %v8140 = vrot.slane %v6565, 5
  %v8141 = vsel %vm2040, %v8139, %v8140
  %v8142 = vrot.slane %v8140, 4
  %v8143 = vrot.slane %v6566, 5
  %v8144 = vsel %vm2040, %v8142, %v8143
  %v8145 = vrot.slane %v7981, 5
  %v8146 = vrot.slane %v8145, 4
  %v8147 = vrot.slane %v6568, 5
  %v8148 = vsel %vm2040, %v8146, %v8147
  %v8149 = vrot.slane %v8147, 4
  %v8150 = vrot.slane %v6569, 5
  %v8151 = vsel %vm2040, %v8149, %v8150
  %v8152 = vrot.slane %v7982, 5
  %v8153 = vrot.slane %v8152, 4
  %v8154 = vrot.slane %v6571, 5
  %v8155 = vsel %vm2040, %v8153, %v8154
  %v8156 = vrot.slane %v8154, 4
  %v8157 = vrot.slane %v6572, 5
  %v8158 = vsel %vm2040, %v8156, %v8157
  %v8159 = vrot.slane %v7983, 5
  %v8160 = vrot.slane %v8159, 4
  %v8161 = vrot.slane %v6574, 5
  %v8162 = vsel %vm2040, %v8160, %v8161
  %v8163 = vrot.slane %v8161, 4
  %v8164 = vrot.slane %v6575, 5
  %v8165 = vsel %vm2040, %v8163, %v8164
  %v8166 = vrot.slane %v7984, 5
  %v8167 = vrot.slane %v8166, 4
  %v8168 = vrot.slane %v6577, 5
  %v8169 = vsel %vm2040, %v8167, %v8168
  %v8170 = vrot.slane %v8168, 4
  %v8171 = vrot.slane %v6578, 5
  %v8172 = vsel %vm2040, %v8170, %v8171
  %v8173 = vrot.slane %v7985, 5
  %v8174 = vrot.slane %v8173, 4
  %v8175 = vrot.slane %v6580, 5
  %v8176 = vsel %vm2040, %v8174, %v8175
  %v8177 = vrot.slane %v8175, 4
  %v8178 = vrot.slane %v6581, 5
  %v8179 = vsel %vm2040, %v8177, %v8178
  %v8180 = vrot.slane %v7986, 5
  %v8181 = vrot.slane %v8180, 4
  %v8182 = vrot.slane %v6583, 5
  %v8183 = vsel %vm2040, %v8181, %v8182
  %v8184 = vrot.slane %v8182, 4
  %v8185 = vrot.slane %v6584, 5
  %v8186 = vsel %vm2040, %v8184, %v8185
  %v8187 = vrot.slane %v7987, 5
  %v8188 = vrot.slane %v8187, 4
  %v8189 = vrot.slane %v6586, 5
  %v8190 = vsel %vm2040, %v8188, %v8189
  %v8191 = vrot.slane %v8189, 4
  %v8192 = vrot.slane %v6587, 5
  %v8193 = vsel %vm2040, %v8191, %v8192
  %v8194 = vrot.slane %v7988, 5
  %v8195 = vrot.slane %v8194, 4
  %v8196 = vrot.slane %v6589, 5
  %v8197 = vsel %vm2040, %v8195, %v8196
  %v8198 = vrot.slane %v8196, 4
  %v8199 = vrot.slane %v6590, 5
  %v8200 = vsel %vm2040, %v8198, %v8199
  %v8201 = vrot.slane %v7989, 5
  %v8202 = vrot.slane %v8201, 4
  %v8203 = vrot.slane %v6592, 5
  %v8204 = vsel %vm2040, %v8202, %v8203
  %v8205 = vrot.slane %v8203, 4
  %v8206 = vrot.slane %v6593, 5
  %v8207 = vsel %vm2040, %v8205, %v8206
  %v8208 = vrot.slane %v7990, 5
  %v8209 = vrot.slane %v8208, 4
  %v8210 = vrot.slane %v6595, 5
  %v8211 = vsel %vm2040, %v8209, %v8210
  %v8212 = vrot.slane %v8210, 4
  %v8213 = vrot.slane %v6596, 5
  %v8214 = vsel %vm2040, %v8212, %v8213
  %v8215 = vrot.slane %v7991, 5
  %v8216 = vrot.slane %v8215, 4
  %v8217 = vrot.slane %v6598, 5
  %v8218 = vsel %vm2040, %v8216, %v8217
  %v8219 = vrot.slane %v8217, 4
  %v8220 = vrot.slane %v6599, 5
  %v8221 = vsel %vm2040, %v8219, %v8220
  %v8222 = vrot.slane %v7992, 5
  %v8223 = vrot.slane %v8222, 4
  %v8224 = vrot.slane %v6601, 5
  %v8225 = vsel %vm2040, %v8223, %v8224
  %v8226 = vrot.slane %v8224, 4
  %v8227 = vrot.slane %v6602, 5
  %v8228 = vsel %vm2040, %v8226, %v8227
  %v8229 = vrot.slane %v7993, 5
  %v8230 = vrot.slane %v8229, 4
  %v8231 = vrot.slane %v6604, 5
  %v8232 = vsel %vm2040, %v8230, %v8231
  %v8233 = vrot.slane %v8231, 4
  %v8234 = vrot.slane %v6605, 5
  %v8235 = vsel %vm2040, %v8233, %v8234
  %v8236 = vrot.slane %v7994, 5
  %v8237 = vrot.slane %v8236, 4
  %v8238 = vrot.slane %v6607, 5
  %v8239 = vsel %vm2040, %v8237, %v8238
  %v8240 = vrot.slane %v8238, 4
  %v8241 = vrot.slane %v6608, 5
  %v8242 = vsel %vm2040, %v8240, %v8241
  %v8243 = vrot.slane %v7995, 5
  %v8244 = vrot.slane %v8243, 4
  %v8245 = vrot.slane %v6610, 5
  %v8246 = vsel %vm2040, %v8244, %v8245
  %v8247 = vrot.slane %v8245, 4
  %v8248 = vrot.slane %v6611, 5
  %v8249 = vsel %vm2040, %v8247, %v8248
  %v8250 = vrot.slane %v7996, 5
  %v8251 = vrot.slane %v8250, 4
  %v8252 = vrot.slane %v6613, 5
  %v8253 = vsel %vm2040, %v8251, %v8252
  %v8254 = vrot.slane %v8252, 4
  %v8255 = vrot.slane %v6614, 5
  %v8256 = vsel %vm2040, %v8254, %v8255
  %v8257 = vrot.slane %v7997, 5
  %v8258 = vrot.slane %v8257, 4
  %v8259 = vrot.slane %v6616, 5
  %v8260 = vsel %vm2040, %v8258, %v8259
  %v8261 = vrot.slane %v8259, 4
  %v8262 = vrot.slane %v6617, 5
  %v8263 = vsel %vm2040, %v8261, %v8262
  %v8264 = vrot.slane %v7998, 5
  %v8265 = vrot.slane %v8264, 4
  %v8266 = vrot.slane %v6619, 5
  %v8267 = vsel %vm2040, %v8265, %v8266
  %v8268 = vrot.slane %v8266, 4
  %v8269 = vrot.slane %v6620, 5
  %v8270 = vsel %vm2040, %v8268, %v8269
  %v8271 = vrot.slane %v7999, 5
  %v8272 = vrot.slane %v8271, 4
  %v8273 = vrot.slane %v6622, 5
  %v8274 = vsel %vm2040, %v8272, %v8273
  %v8275 = vrot.slane %v8273, 4
  %v8276 = vrot.slane %v6623, 5
  %v8277 = vsel %vm2040, %v8275, %v8276
  %v8278 = vrot.slane %v8000, 5
  %v8279 = vrot.slane %v8278, 4
  %v8280 = vrot.slane %v6625, 5
  %v8281 = vsel %vm2040, %v8279, %v8280
  %v8282 = vrot.slane %v8280, 4
  %v8283 = vrot.slane %v6626, 5
  %v8284 = vsel %vm2040, %v8282, %v8283
  %v8285 = vrot.slane %v8001, 5
  %v8286 = vrot.slane %v8285, 4
  %v8287 = vrot.slane %v6628, 5
  %v8288 = vsel %vm2040, %v8286, %v8287
  %v8289 = vrot.slane %v8287, 4
  %v8290 = vrot.slane %v6629, 5
  %v8291 = vsel %vm2040, %v8289, %v8290
  %v8292 = vrot.slane %v8002, 5
  %v8293 = vrot.slane %v8292, 4
  %v8294 = vrot.slane %v6631, 5
  %v8295 = vsel %vm2040, %v8293, %v8294
  %v8296 = vrot.slane %v8294, 4
  %v8297 = vrot.slane %v6632, 5
  %v8298 = vsel %vm2040, %v8296, %v8297
  %v8299 = vrot.slane %v8003, 5
  %v8300 = vrot.slane %v8299, 4
  %v8301 = vrot.slane %v6634, 5
  %v8302 = vsel %vm2040, %v8300, %v8301
  %v8303 = vrot.slane %v8301, 4
  %v8304 = vrot.slane %v6635, 5
  %v8305 = vsel %vm2040, %v8303, %v8304
  %v8306 = vrot.slane %v8004, 5
  %v8307 = vrot.slane %v8306, 4
  %v8308 = vrot.slane %v6637, 5
  %v8309 = vsel %vm2040, %v8307, %v8308
  %v8310 = vrot.slane %v8308, 4
  %v8311 = vrot.slane %v6638, 5
  %v8312 = vsel %vm2040, %v8310, %v8311
  %v8313 = vrot.slane %v8005, 5
  %v8314 = vrot.slane %v8313, 4
  %v8315 = vrot.slane %v6640, 5
  %v8316 = vsel %vm2040, %v8314, %v8315
  %v8317 = vrot.slane %v8315, 4
  %v8318 = vrot.slane %v6641, 5
  %v8319 = vsel %vm2040, %v8317, %v8318
  %v8320 = vrot.slane %v8006, 5
  %v8321 = vrot.slane %v8320, 4
  %v8322 = vrot.slane %v6643, 5
  %v8323 = vsel %vm2040, %v8321, %v8322
  %v8324 = vrot.slane %v8322, 4
  %v8325 = vrot.slane %v6644, 5
  %v8326 = vsel %vm2040, %v8324, %v8325
  %s8327 = scalar_lea.vmem %s1, 128
  %v8328 = vld [vmem:[%s8327] sm:$0xf]
  %v8329 = vld [vmem:[%s8327 + $0x4] sm:$0xf]
  %v8330 = vld [vmem:[%s8327 + $0x8] sm:$0xf]
  %v8331 = vld [vmem:[%s8327 + $0xc] sm:$0xf]
  %v8332 = vunpack.c.l.b16 %v8106
  %v8333 = vunpack.c.l.b16 %v8109
  %v8334 = vunpack.c.l.b16 %v8113
  %v8335 = vunpack.c.l.b16 %v8116
  %v8336 = vunpack.c.l.b16 %v8120
  %v8337 = vunpack.c.l.b16 %v8123
  %v8338 = vunpack.c.l.b16 %v8127
  %v8339 = vunpack.c.l.b16 %v8130
  %v8340 = vunpack.c.l.b16 %v8134
  %v8341 = vunpack.c.l.b16 %v8137
  %v8342 = vunpack.c.l.b16 %v8141
  %v8343 = vunpack.c.l.b16 %v8144
  %v8344 = vunpack.c.l.b16 %v8148
  %v8345 = vunpack.c.l.b16 %v8151
  %v8346 = vunpack.c.l.b16 %v8155
  %v8347 = vunpack.c.l.b16 %v8158
  %v8348 = vunpack.c.l.b16 %v8162
  %v8349 = vunpack.c.l.b16 %v8165
  %v8350 = vunpack.c.l.b16 %v8169
  %v8351 = vunpack.c.l.b16 %v8172
  %v8352 = vunpack.c.l.b16 %v8176
  %v8353 = vunpack.c.l.b16 %v8179
  %v8354 = vunpack.c.l.b16 %v8183
  %v8355 = vunpack.c.l.b16 %v8186
  %v8356 = vunpack.c.l.b16 %v8190
  %v8357 = vunpack.c.l.b16 %v8193
  %v8358 = vunpack.c.l.b16 %v8197
  %v8359 = vunpack.c.l.b16 %v8200
  %v8360 = vunpack.c.l.b16 %v8204
  %v8361 = vunpack.c.l.b16 %v8207
  %v8362 = vunpack.c.l.b16 %v8211
  %v8363 = vunpack.c.l.b16 %v8214
  %v8364 = vunpack.c.l.b16 %v8218
  %v8365 = vunpack.c.l.b16 %v8221
  %v8366 = vunpack.c.l.b16 %v8225
  %v8367 = vunpack.c.l.b16 %v8228
  %v8368 = vunpack.c.l.b16 %v8232
  %v8369 = vunpack.c.l.b16 %v8235
  %v8370 = vunpack.c.l.b16 %v8239
  %v8371 = vunpack.c.l.b16 %v8242
  %v8372 = vunpack.c.l.b16 %v8246
  %v8373 = vunpack.c.l.b16 %v8249
  %v8374 = vunpack.c.l.b16 %v8253
  %v8375 = vunpack.c.l.b16 %v8256
  %v8376 = vunpack.c.l.b16 %v8260
  %v8377 = vunpack.c.l.b16 %v8263
  %v8378 = vunpack.c.l.b16 %v8267
  %v8379 = vunpack.c.l.b16 %v8270
  %v8380 = vunpack.c.l.b16 %v8274
  %v8381 = vunpack.c.l.b16 %v8277
  %v8382 = vunpack.c.l.b16 %v8281
  %v8383 = vunpack.c.l.b16 %v8284
  %v8384 = vunpack.c.l.b16 %v8288
  %v8385 = vunpack.c.l.b16 %v8291
  %v8386 = vunpack.c.l.b16 %v8295
  %v8387 = vunpack.c.l.b16 %v8298
  %v8388 = vunpack.c.l.b16 %v8302
  %v8389 = vunpack.c.l.b16 %v8305
  %v8390 = vunpack.c.l.b16 %v8309
  %v8391 = vunpack.c.l.b16 %v8312
  %v8392 = vunpack.c.l.b16 %v8316
  %v8393 = vunpack.c.l.b16 %v8319
  %v8394 = vunpack.c.l.b16 %v8323
  %v8395 = vunpack.c.l.b16 %v8326
  %v8396 = vpack.c.b16 %v8333, %v8332
  %v8397 = vpack.c.b16 %v8335, %v8334
  %v8398 = vpack.c.b16 %v8337, %v8336
  %v8399 = vpack.c.b16 %v8339, %v8338
  %v8400 = vpack.c.b16 %v8341, %v8340
  %v8401 = vpack.c.b16 %v8343, %v8342
  %v8402 = vpack.c.b16 %v8345, %v8344
  %v8403 = vpack.c.b16 %v8347, %v8346
  %v8404 = vpack.c.b16 %v8349, %v8348
  %v8405 = vpack.c.b16 %v8351, %v8350
  %v8406 = vpack.c.b16 %v8353, %v8352
  %v8407 = vpack.c.b16 %v8355, %v8354
  %v8408 = vpack.c.b16 %v8357, %v8356
  %v8409 = vpack.c.b16 %v8359, %v8358
  %v8410 = vpack.c.b16 %v8361, %v8360
  %v8411 = vpack.c.b16 %v8363, %v8362
  %v8412 = vpack.c.b16 %v8365, %v8364
  %v8413 = vpack.c.b16 %v8367, %v8366
  %v8414 = vpack.c.b16 %v8369, %v8368
  %v8415 = vpack.c.b16 %v8371, %v8370
  %v8416 = vpack.c.b16 %v8373, %v8372
  %v8417 = vpack.c.b16 %v8375, %v8374
  %v8418 = vpack.c.b16 %v8377, %v8376
  %v8419 = vpack.c.b16 %v8379, %v8378
  %v8420 = vpack.c.b16 %v8381, %v8380
  %v8421 = vpack.c.b16 %v8383, %v8382
  %v8422 = vpack.c.b16 %v8385, %v8384
  %v8423 = vpack.c.b16 %v8387, %v8386
  %v8424 = vpack.c.b16 %v8389, %v8388
  %v8425 = vpack.c.b16 %v8391, %v8390
  %v8426 = vpack.c.b16 %v8393, %v8392
  %v8427 = vpack.c.b16 %v8395, %v8394
  %v8432 = vunpack.c.l.b16 %v8328
  %v8433 = vunpack.c.l.b16 %v8329
  %v8434 = vunpack.c.l.b16 %v8330
  %v8435 = vunpack.c.l.b16 %v8331
  %v8436 = vpack.c.b16 %v8433, %v8432
  %v8437 = vpack.c.b16 %v8435, %v8434
  %v8441 = vsel %vm999, %v8396, 0
  %v8444 = vsel %vm999, %v8397, 0
  %v8447 = vsel %vm999, %v8398, 0
  %v8450 = vsel %vm999, %v8399, 0
  %v8453 = vsel %vm999, %v8400, 0
  %v8456 = vsel %vm999, %v8401, 0
  %v8459 = vsel %vm999, %v8402, 0
  %v8462 = vsel %vm999, %v8403, 0
  %v8465 = vsel %vm999, %v8404, 0
  %v8468 = vsel %vm999, %v8405, 0
  %v8471 = vsel %vm999, %v8406, 0
  %v8474 = vsel %vm999, %v8407, 0
  %v8477 = vsel %vm999, %v8408, 0
  %v8480 = vsel %vm999, %v8409, 0
  %v8483 = vsel %vm999, %v8410, 0
  %v8486 = vsel %vm999, %v8411, 0
  %v8489 = vsel %vm999, %v8412, 0
  %v8492 = vsel %vm999, %v8413, 0
  %v8495 = vsel %vm999, %v8414, 0
  %v8498 = vsel %vm999, %v8415, 0
  %v8501 = vsel %vm999, %v8416, 0
  %v8504 = vsel %vm999, %v8417, 0
  %v8507 = vsel %vm999, %v8418, 0
  %v8510 = vsel %vm999, %v8419, 0
  %v8513 = vsel %vm999, %v8420, 0
  %v8516 = vsel %vm999, %v8421, 0
  %v8519 = vsel %vm999, %v8422, 0
  %v8522 = vsel %vm999, %v8423, 0
  %v8525 = vsel %vm999, %v8424, 0
  %v8528 = vsel %vm999, %v8425, 0
  %v8531 = vsel %vm999, %v8426, 0
  %v8534 = vsel %vm999, %v8427, 0
  %8536 = vmatprep.subr.bf16.mxu0 0
  %8537 = vmatpush1.bf16.msra.mxu0 0
  %8538 = vmatprep.subr.bf16.mxu0 0
  %8539 = vmatpush1.bf16.msra.mxu0 0
  %8540 = vmatprep.subr.bf16.mxu0 0
  %8541 = vmatpush1.bf16.msra.mxu0 0
  %8542 = vmatprep.subr.bf16.mxu0 0
  %8543 = vmatpush1.bf16.msra.mxu0 0
  %8544 = vmatprep.subr.bf16.mxu0 0
  %8545 = vmatpush1.bf16.msra.mxu0 0
  %8546 = vmatprep.subr.bf16.mxu0 0
  %8547 = vmatpush1.bf16.msra.mxu0 0
  %8548 = vmatprep.subr.bf16.mxu0 0
  %8549 = vmatpush1.bf16.msra.mxu0 %v8437
  %8550 = vmatprep.subr.bf16.mxu0 0
  %8551 = vmatpush1.bf16.msra.mxu0 %v8436
  %8552 = vmatprep.subr.bf16.mxu0 0
  %8553 = vmatpush2.bf16.msra.mxu0 0
  %8554 = vmatprep.subr.bf16.mxu0 0
  %8555 = vmatpush2.bf16.msra.mxu0 0
  %8556 = vmatprep.subr.bf16.mxu0 0
  %8557 = vmatpush2.bf16.msra.mxu0 0
  %8558 = vmatprep.subr.bf16.mxu0 0
  %8559 = vmatpush2.bf16.msra.mxu0 0
  %8560 = vmatprep.subr.bf16.mxu0 0
  %8561 = vmatpush2.bf16.msra.mxu0 0
  %8562 = vmatprep.subr.bf16.mxu0 0
  %8563 = vmatpush2.bf16.msra.mxu0 0
  %8564 = vmatprep.subr.bf16.mxu0 0
  %8565 = vmatpush2.bf16.msra.mxu0 0
  %8566 = vmatprep.subr.bf16.mxu0 0
  %8567 = vmatpush2.bf16.msra.mxu0 0
  %8568 = vmatprep.mubr.bf16.mxu0 0
  %8569 = vmatmul.mubr.bf16.gmra.mxu0 %v8441
  %v8570 = vpop.f32.mrf.mxu0
  %v8571 = vadd.f32 0.0, %v8570
  %v8572 = vpop.f32.mrf.mxu0
  %v8573 = vpop.f32.mrf.mxu0
  %v8574 = vadd.f32 0.0, %v8573
  %v8575 = vpop.f32.mrf.mxu0
  %8576 = vmatprep.mubr.bf16.mxu0 0
  %8577 = vmatmul.mubr.bf16.gmra.mxu0 %v8444
  %v8578 = vpop.f32.mrf.mxu0
  %v8579 = vadd.f32 0.0, %v8578
  %v8580 = vpop.f32.mrf.mxu0
  %v8581 = vpop.f32.mrf.mxu0
  %v8582 = vadd.f32 0.0, %v8581
  %v8583 = vpop.f32.mrf.mxu0
  %8584 = vmatprep.mubr.bf16.mxu0 0
  %8585 = vmatmul.mubr.bf16.gmra.mxu0 %v8447
  %v8586 = vpop.f32.mrf.mxu0
  %v8587 = vadd.f32 0.0, %v8586
  %v8588 = vpop.f32.mrf.mxu0
  %v8589 = vpop.f32.mrf.mxu0
  %v8590 = vadd.f32 0.0, %v8589
  %v8591 = vpop.f32.mrf.mxu0
  %8592 = vmatprep.mubr.bf16.mxu0 0
  %8593 = vmatmul.mubr.bf16.gmra.mxu0 %v8450
  %v8594 = vpop.f32.mrf.mxu0
  %v8595 = vadd.f32 0.0, %v8594
  %v8596 = vpop.f32.mrf.mxu0
  %v8597 = vpop.f32.mrf.mxu0
  %v8598 = vadd.f32 0.0, %v8597
  %v8599 = vpop.f32.mrf.mxu0
  %8600 = vmatprep.mubr.bf16.mxu0 0
  %8601 = vmatmul.mubr.bf16.gmra.mxu0 %v8453
  %v8602 = vpop.f32.mrf.mxu0
  %v8603 = vadd.f32 0.0, %v8602
  %v8604 = vpop.f32.mrf.mxu0
  %v8605 = vpop.f32.mrf.mxu0
  %v8606 = vadd.f32 0.0, %v8605
  %v8607 = vpop.f32.mrf.mxu0
  %8608 = vmatprep.mubr.bf16.mxu0 0
  %8609 = vmatmul.mubr.bf16.gmra.mxu0 %v8456
  %v8610 = vpop.f32.mrf.mxu0
  %v8611 = vadd.f32 0.0, %v8610
  %v8612 = vpop.f32.mrf.mxu0
  %v8613 = vpop.f32.mrf.mxu0
  %v8614 = vadd.f32 0.0, %v8613
  %v8615 = vpop.f32.mrf.mxu0
  %8616 = vmatprep.mubr.bf16.mxu0 0
  %8617 = vmatmul.mubr.bf16.gmra.mxu0 %v8459
  %v8618 = vpop.f32.mrf.mxu0
  %v8619 = vadd.f32 0.0, %v8618
  %v8620 = vpop.f32.mrf.mxu0
  %v8621 = vpop.f32.mrf.mxu0
  %v8622 = vadd.f32 0.0, %v8621
  %v8623 = vpop.f32.mrf.mxu0
  %8624 = vmatprep.mubr.bf16.mxu0 0
  %8625 = vmatmul.mubr.bf16.gmra.mxu0 %v8462
  %v8626 = vpop.f32.mrf.mxu0
  %v8627 = vadd.f32 0.0, %v8626
  %v8628 = vpop.f32.mrf.mxu0
  %v8629 = vpop.f32.mrf.mxu0
  %v8630 = vadd.f32 0.0, %v8629
  %v8631 = vpop.f32.mrf.mxu0
  %8632 = vmatprep.mubr.bf16.mxu0 0
  %8633 = vmatmul.mubr.bf16.gmra.mxu0 %v8465
  %v8634 = vpop.f32.mrf.mxu0
  %v8635 = vadd.f32 0.0, %v8634
  %v8636 = vpop.f32.mrf.mxu0
  %v8637 = vpop.f32.mrf.mxu0
  %v8638 = vadd.f32 0.0, %v8637
  %v8639 = vpop.f32.mrf.mxu0
  %8640 = vmatprep.mubr.bf16.mxu0 0
  %8641 = vmatmul.mubr.bf16.gmra.mxu0 %v8468
  %v8642 = vpop.f32.mrf.mxu0
  %v8643 = vadd.f32 0.0, %v8642
  %v8644 = vpop.f32.mrf.mxu0
  %v8645 = vpop.f32.mrf.mxu0
  %v8646 = vadd.f32 0.0, %v8645
  %v8647 = vpop.f32.mrf.mxu0
  %8648 = vmatprep.mubr.bf16.mxu0 0
  %8649 = vmatmul.mubr.bf16.gmra.mxu0 %v8471
  %v8650 = vpop.f32.mrf.mxu0
  %v8651 = vadd.f32 0.0, %v8650
  %v8652 = vpop.f32.mrf.mxu0
  %v8653 = vpop.f32.mrf.mxu0
  %v8654 = vadd.f32 0.0, %v8653
  %v8655 = vpop.f32.mrf.mxu0
  %8656 = vmatprep.mubr.bf16.mxu0 0
  %8657 = vmatmul.mubr.bf16.gmra.mxu0 %v8474
  %v8658 = vpop.f32.mrf.mxu0
  %v8659 = vadd.f32 0.0, %v8658
  %v8660 = vpop.f32.mrf.mxu0
  %v8661 = vpop.f32.mrf.mxu0
  %v8662 = vadd.f32 0.0, %v8661
  %v8663 = vpop.f32.mrf.mxu0
  %8664 = vmatprep.mubr.bf16.mxu0 0
  %8665 = vmatmul.mubr.bf16.gmra.mxu0 %v8477
  %v8666 = vpop.f32.mrf.mxu0
  %v8667 = vadd.f32 0.0, %v8666
  %v8668 = vpop.f32.mrf.mxu0
  %v8669 = vpop.f32.mrf.mxu0
  %v8670 = vadd.f32 0.0, %v8669
  %v8671 = vpop.f32.mrf.mxu0
  %8672 = vmatprep.mubr.bf16.mxu0 0
  %8673 = vmatmul.mubr.bf16.gmra.mxu0 %v8480
  %v8674 = vpop.f32.mrf.mxu0
  %v8675 = vadd.f32 0.0, %v8674
  %v8676 = vpop.f32.mrf.mxu0
  %v8677 = vpop.f32.mrf.mxu0
  %v8678 = vadd.f32 0.0, %v8677
  %v8679 = vpop.f32.mrf.mxu0
  %8680 = vmatprep.mubr.bf16.mxu0 0
  %8681 = vmatmul.mubr.bf16.gmra.mxu0 %v8483
  %v8682 = vpop.f32.mrf.mxu0
  %v8683 = vadd.f32 0.0, %v8682
  %v8684 = vpop.f32.mrf.mxu0
  %v8685 = vpop.f32.mrf.mxu0
  %v8686 = vadd.f32 0.0, %v8685
  %v8687 = vpop.f32.mrf.mxu0
  %8688 = vmatprep.mubr.bf16.mxu0 0
  %8689 = vmatmul.mubr.bf16.gmra.mxu0 %v8486
  %v8690 = vpop.f32.mrf.mxu0
  %v8691 = vadd.f32 0.0, %v8690
  %v8692 = vpop.f32.mrf.mxu0
  %v8693 = vpop.f32.mrf.mxu0
  %v8694 = vadd.f32 0.0, %v8693
  %v8695 = vpop.f32.mrf.mxu0
  %8696 = vmatprep.mubr.bf16.mxu0 0
  %8697 = vmatmul.mubr.bf16.gmra.mxu0 %v8489
  %v8698 = vpop.f32.mrf.mxu0
  %v8699 = vadd.f32 0.0, %v8698
  %v8700 = vpop.f32.mrf.mxu0
  %v8701 = vpop.f32.mrf.mxu0
  %v8702 = vadd.f32 0.0, %v8701
  %v8703 = vpop.f32.mrf.mxu0
  %8704 = vmatprep.mubr.bf16.mxu0 0
  %8705 = vmatmul.mubr.bf16.gmra.mxu0 %v8492
  %v8706 = vpop.f32.mrf.mxu0
  %v8707 = vadd.f32 0.0, %v8706
  %v8708 = vpop.f32.mrf.mxu0
  %v8709 = vpop.f32.mrf.mxu0
  %v8710 = vadd.f32 0.0, %v8709
  %v8711 = vpop.f32.mrf.mxu0
  %8712 = vmatprep.mubr.bf16.mxu0 0
  %8713 = vmatmul.mubr.bf16.gmra.mxu0 %v8495
  %v8714 = vpop.f32.mrf.mxu0
  %v8715 = vadd.f32 0.0, %v8714
  %v8716 = vpop.f32.mrf.mxu0
  %v8717 = vpop.f32.mrf.mxu0
  %v8718 = vadd.f32 0.0, %v8717
  %v8719 = vpop.f32.mrf.mxu0
  %8720 = vmatprep.mubr.bf16.mxu0 0
  %8721 = vmatmul.mubr.bf16.gmra.mxu0 %v8498
  %v8722 = vpop.f32.mrf.mxu0
  %v8723 = vadd.f32 0.0, %v8722
  %v8724 = vpop.f32.mrf.mxu0
  %v8725 = vpop.f32.mrf.mxu0
  %v8726 = vadd.f32 0.0, %v8725
  %v8727 = vpop.f32.mrf.mxu0
  %8728 = vmatprep.mubr.bf16.mxu0 0
  %8729 = vmatmul.mubr.bf16.gmra.mxu0 %v8501
  %v8730 = vpop.f32.mrf.mxu0
  %v8731 = vadd.f32 0.0, %v8730
  %v8732 = vpop.f32.mrf.mxu0
  %v8733 = vpop.f32.mrf.mxu0
  %v8734 = vadd.f32 0.0, %v8733
  %v8735 = vpop.f32.mrf.mxu0
  %8736 = vmatprep.mubr.bf16.mxu0 0
  %8737 = vmatmul.mubr.bf16.gmra.mxu0 %v8504
  %v8738 = vpop.f32.mrf.mxu0
  %v8739 = vadd.f32 0.0, %v8738
  %v8740 = vpop.f32.mrf.mxu0
  %v8741 = vpop.f32.mrf.mxu0
  %v8742 = vadd.f32 0.0, %v8741
  %v8743 = vpop.f32.mrf.mxu0
  %8744 = vmatprep.mubr.bf16.mxu0 0
  %8745 = vmatmul.mubr.bf16.gmra.mxu0 %v8507
  %v8746 = vpop.f32.mrf.mxu0
  %v8747 = vadd.f32 0.0, %v8746
  %v8748 = vpop.f32.mrf.mxu0
  %v8749 = vpop.f32.mrf.mxu0
  %v8750 = vadd.f32 0.0, %v8749
  %v8751 = vpop.f32.mrf.mxu0
  %8752 = vmatprep.mubr.bf16.mxu0 0
  %8753 = vmatmul.mubr.bf16.gmra.mxu0 %v8510
  %v8754 = vpop.f32.mrf.mxu0
  %v8755 = vadd.f32 0.0, %v8754
  %v8756 = vpop.f32.mrf.mxu0
  %v8757 = vpop.f32.mrf.mxu0
  %v8758 = vadd.f32 0.0, %v8757
  %v8759 = vpop.f32.mrf.mxu0
  %8760 = vmatprep.mubr.bf16.mxu0 0
  %8761 = vmatmul.mubr.bf16.gmra.mxu0 %v8513
  %v8762 = vpop.f32.mrf.mxu0
  %v8763 = vadd.f32 0.0, %v8762
  %v8764 = vpop.f32.mrf.mxu0
  %v8765 = vpop.f32.mrf.mxu0
  %v8766 = vadd.f32 0.0, %v8765
  %v8767 = vpop.f32.mrf.mxu0
  %8768 = vmatprep.mubr.bf16.mxu0 0
  %8769 = vmatmul.mubr.bf16.gmra.mxu0 %v8516
  %v8770 = vpop.f32.mrf.mxu0
  %v8771 = vadd.f32 0.0, %v8770
  %v8772 = vpop.f32.mrf.mxu0
  %v8773 = vpop.f32.mrf.mxu0
  %v8774 = vadd.f32 0.0, %v8773
  %v8775 = vpop.f32.mrf.mxu0
  %8776 = vmatprep.mubr.bf16.mxu0 0
  %8777 = vmatmul.mubr.bf16.gmra.mxu0 %v8519
  %v8778 = vpop.f32.mrf.mxu0
  %v8779 = vadd.f32 0.0, %v8778
  %v8780 = vpop.f32.mrf.mxu0
  %v8781 = vpop.f32.mrf.mxu0
  %v8782 = vadd.f32 0.0, %v8781
  %v8783 = vpop.f32.mrf.mxu0
  %8784 = vmatprep.mubr.bf16.mxu0 0
  %8785 = vmatmul.mubr.bf16.gmra.mxu0 %v8522
  %v8786 = vpop.f32.mrf.mxu0
  %v8787 = vadd.f32 0.0, %v8786
  %v8788 = vpop.f32.mrf.mxu0
  %v8789 = vpop.f32.mrf.mxu0
  %v8790 = vadd.f32 0.0, %v8789
  %v8791 = vpop.f32.mrf.mxu0
  %8792 = vmatprep.mubr.bf16.mxu0 0
  %8793 = vmatmul.mubr.bf16.gmra.mxu0 %v8525
  %v8794 = vpop.f32.mrf.mxu0
  %v8795 = vadd.f32 0.0, %v8794
  %v8796 = vpop.f32.mrf.mxu0
  %v8797 = vpop.f32.mrf.mxu0
  %v8798 = vadd.f32 0.0, %v8797
  %v8799 = vpop.f32.mrf.mxu0
  %8800 = vmatprep.mubr.bf16.mxu0 0
  %8801 = vmatmul.mubr.bf16.gmra.mxu0 %v8528
  %v8802 = vpop.f32.mrf.mxu0
  %v8803 = vadd.f32 0.0, %v8802
  %v8804 = vpop.f32.mrf.mxu0
  %v8805 = vpop.f32.mrf.mxu0
  %v8806 = vadd.f32 0.0, %v8805
  %v8807 = vpop.f32.mrf.mxu0
  %8808 = vmatprep.mubr.bf16.mxu0 0
  %8809 = vmatmul.mubr.bf16.gmra.mxu0 %v8531
  %v8810 = vpop.f32.mrf.mxu0
  %v8811 = vadd.f32 0.0, %v8810
  %v8812 = vpop.f32.mrf.mxu0
  %v8813 = vpop.f32.mrf.mxu0
  %v8814 = vadd.f32 0.0, %v8813
  %v8815 = vpop.f32.mrf.mxu0
  %8816 = vmatprep.mubr.bf16.mxu0 0
  %8817 = vmatmul.mubr.bf16.gmra.mxu0 %v8534
  %v8818 = vpop.f32.mrf.mxu0
  %v8819 = vadd.f32 0.0, %v8818
  %v8820 = vpop.f32.mrf.mxu0
  %v8821 = vpop.f32.mrf.mxu0
  %v8822 = vadd.f32 0.0, %v8821
  %v8823 = vpop.f32.mrf.mxu0
  %8824 = vdwg.mxu0
  %v8825 = vadd.f32 %v7911, %v8571
  %v8826 = vadd.f32 %v7912, %v8574
  %v8827 = vadd.f32 %v7913, %v8579
  %v8828 = vadd.f32 %v7914, %v8582
  %v8829 = vadd.f32 %v7915, %v8587
  %v8830 = vadd.f32 %v7916, %v8590
  %v8831 = vadd.f32 %v7917, %v8595
  %v8832 = vadd.f32 %v7918, %v8598
  %v8833 = vadd.f32 %v7919, %v8603
  %v8834 = vadd.f32 %v7920, %v8606
  %v8835 = vadd.f32 %v7921, %v8611
  %v8836 = vadd.f32 %v7922, %v8614
  %v8837 = vadd.f32 %v7923, %v8619
  %v8838 = vadd.f32 %v7924, %v8622
  %v8839 = vadd.f32 %v7925, %v8627
  %v8840 = vadd.f32 %v7926, %v8630
  %v8841 = vadd.f32 %v7927, %v8635
  %v8842 = vadd.f32 %v7928, %v8638
  %v8843 = vadd.f32 %v7929, %v8643
  %v8844 = vadd.f32 %v7930, %v8646
  %v8845 = vadd.f32 %v7931, %v8651
  %v8846 = vadd.f32 %v7932, %v8654
  %v8847 = vadd.f32 %v7933, %v8659
  %v8848 = vadd.f32 %v7934, %v8662
  %v8849 = vadd.f32 %v7935, %v8667
  %v8850 = vadd.f32 %v7936, %v8670
  %v8851 = vadd.f32 %v7937, %v8675
  %v8852 = vadd.f32 %v7938, %v8678
  %v8853 = vadd.f32 %v7939, %v8683
  %v8854 = vadd.f32 %v7940, %v8686
  %v8855 = vadd.f32 %v7941, %v8691
  %v8856 = vadd.f32 %v7942, %v8694
  %v8857 = vadd.f32 %v7943, %v8699
  %v8858 = vadd.f32 %v7944, %v8702
  %v8859 = vadd.f32 %v7945, %v8707
  %v8860 = vadd.f32 %v7946, %v8710
  %v8861 = vadd.f32 %v7947, %v8715
  %v8862 = vadd.f32 %v7948, %v8718
  %v8863 = vadd.f32 %v7949, %v8723
  %v8864 = vadd.f32 %v7950, %v8726
  %v8865 = vadd.f32 %v7951, %v8731
  %v8866 = vadd.f32 %v7952, %v8734
  %v8867 = vadd.f32 %v7953, %v8739
  %v8868 = vadd.f32 %v7954, %v8742
  %v8869 = vadd.f32 %v7955, %v8747
  %v8870 = vadd.f32 %v7956, %v8750
  %v8871 = vadd.f32 %v7957, %v8755
  %v8872 = vadd.f32 %v7958, %v8758
  %v8873 = vadd.f32 %v7959, %v8763
  %v8874 = vadd.f32 %v7960, %v8766
  %v8875 = vadd.f32 %v7961, %v8771
  %v8876 = vadd.f32 %v7962, %v8774
  %v8877 = vadd.f32 %v7963, %v8779
  %v8878 = vadd.f32 %v7964, %v8782
  %v8879 = vadd.f32 %v7965, %v8787
  %v8880 = vadd.f32 %v7966, %v8790
  %v8881 = vadd.f32 %v7967, %v8795
  %v8882 = vadd.f32 %v7968, %v8798
  %v8883 = vadd.f32 %v7969, %v8803
  %v8884 = vadd.f32 %v7970, %v8806
  %v8885 = vadd.f32 %v7971, %v8811
  %v8886 = vadd.f32 %v7972, %v8814
  %v8887 = vadd.f32 %v7973, %v8819
  %v8888 = vadd.f32 %v7974, %v8822
  %v8889 = vld [vmem:[%s2] sm:$0x1]
  %v8891 = vlaneseq
  %v8892 = vshrl.u32 %v8891, 7
  %v8893 = vsub.s32 0, %v8892
  %v8894 = vrot.slane %v8889, %v8893
  %v8896 = vadd.f32 %v8825, %v8894
  %v8897 = vadd.f32 %v8826, %v8894
  %v8898 = vadd.f32 %v8827, %v8894
  %v8899 = vadd.f32 %v8828, %v8894
  %v8900 = vadd.f32 %v8829, %v8894
  %v8901 = vadd.f32 %v8830, %v8894
  %v8902 = vadd.f32 %v8831, %v8894
  %v8903 = vadd.f32 %v8832, %v8894
  %v8904 = vadd.f32 %v8833, %v8894
  %v8905 = vadd.f32 %v8834, %v8894
  %v8906 = vadd.f32 %v8835, %v8894
  %v8907 = vadd.f32 %v8836, %v8894
  %v8908 = vadd.f32 %v8837, %v8894
  %v8909 = vadd.f32 %v8838, %v8894
  %v8910 = vadd.f32 %v8839, %v8894
  %v8911 = vadd.f32 %v8840, %v8894
  %v8912 = vadd.f32 %v8841, %v8894
  %v8913 = vadd.f32 %v8842, %v8894
  %v8914 = vadd.f32 %v8843, %v8894
  %v8915 = vadd.f32 %v8844, %v8894
  %v8916 = vadd.f32 %v8845, %v8894
  %v8917 = vadd.f32 %v8846, %v8894
  %v8918 = vadd.f32 %v8847, %v8894
  %v8919 = vadd.f32 %v8848, %v8894
  %v8920 = vadd.f32 %v8849, %v8894
  %v8921 = vadd.f32 %v8850, %v8894
  %v8922 = vadd.f32 %v8851, %v8894
  %v8923 = vadd.f32 %v8852, %v8894
  %v8924 = vadd.f32 %v8853, %v8894
  %v8925 = vadd.f32 %v8854, %v8894
  %v8926 = vadd.f32 %v8855, %v8894
  %v8927 = vadd.f32 %v8856, %v8894
  %v8928 = vadd.f32 %v8857, %v8894
  %v8929 = vadd.f32 %v8858, %v8894
  %v8930 = vadd.f32 %v8859, %v8894
  %v8931 = vadd.f32 %v8860, %v8894
  %v8932 = vadd.f32 %v8861, %v8894
  %v8933 = vadd.f32 %v8862, %v8894
  %v8934 = vadd.f32 %v8863, %v8894
  %v8935 = vadd.f32 %v8864, %v8894
  %v8936 = vadd.f32 %v8865, %v8894
  %v8937 = vadd.f32 %v8866, %v8894
  %v8938 = vadd.f32 %v8867, %v8894
  %v8939 = vadd.f32 %v8868, %v8894
  %v8940 = vadd.f32 %v8869, %v8894
  %v8941 = vadd.f32 %v8870, %v8894
  %v8942 = vadd.f32 %v8871, %v8894
  %v8943 = vadd.f32 %v8872, %v8894
  %v8944 = vadd.f32 %v8873, %v8894
  %v8945 = vadd.f32 %v8874, %v8894
  %v8946 = vadd.f32 %v8875, %v8894
  %v8947 = vadd.f32 %v8876, %v8894
  %v8948 = vadd.f32 %v8877, %v8894
  %v8949 = vadd.f32 %v8878, %v8894
  %v8950 = vadd.f32 %v8879, %v8894
  %v8951 = vadd.f32 %v8880, %v8894
  %v8952 = vadd.f32 %v8881, %v8894
  %v8953 = vadd.f32 %v8882, %v8894
  %v8954 = vadd.f32 %v8883, %v8894
  %v8955 = vadd.f32 %v8884, %v8894
  %v8956 = vadd.f32 %v8885, %v8894
  %v8957 = vadd.f32 %v8886, %v8894
  %v8958 = vadd.f32 %v8887, %v8894
  %v8959 = vadd.f32 %v8888, %v8894
  %v8960 = vmax.f32 %v8896, 0.0
  %v8961 = vmax.f32 %v8897, 0.0
  %v8962 = vmax.f32 %v8898, 0.0
  %v8963 = vmax.f32 %v8899, 0.0
  %v8964 = vmax.f32 %v8900, 0.0
  %v8965 = vmax.f32 %v8901, 0.0
  %v8966 = vmax.f32 %v8902, 0.0
  %v8967 = vmax.f32 %v8903, 0.0
  %v8968 = vmax.f32 %v8904, 0.0
  %v8969 = vmax.f32 %v8905, 0.0
  %v8970 = vmax.f32 %v8906, 0.0
  %v8971 = vmax.f32 %v8907, 0.0
  %v8972 = vmax.f32 %v8908, 0.0
  %v8973 = vmax.f32 %v8909, 0.0
  %v8974 = vmax.f32 %v8910, 0.0
  %v8975 = vmax.f32 %v8911, 0.0
  %v8976 = vmax.f32 %v8912, 0.0
  %v8977 = vmax.f32 %v8913, 0.0
  %v8978 = vmax.f32 %v8914, 0.0
  %v8979 = vmax.f32 %v8915, 0.0
  %v8980 = vmax.f32 %v8916, 0.0
  %v8981 = vmax.f32 %v8917, 0.0
  %v8982 = vmax.f32 %v8918, 0.0
  %v8983 = vmax.f32 %v8919, 0.0
  %v8984 = vmax.f32 %v8920, 0.0
  %v8985 = vmax.f32 %v8921, 0.0
  %v8986 = vmax.f32 %v8922, 0.0
  %v8987 = vmax.f32 %v8923, 0.0
  %v8988 = vmax.f32 %v8924, 0.0
  %v8989 = vmax.f32 %v8925, 0.0
  %v8990 = vmax.f32 %v8926, 0.0
  %v8991 = vmax.f32 %v8927, 0.0
  %v8992 = vmax.f32 %v8928, 0.0
  %v8993 = vmax.f32 %v8929, 0.0
  %v8994 = vmax.f32 %v8930, 0.0
  %v8995 = vmax.f32 %v8931, 0.0
  %v8996 = vmax.f32 %v8932, 0.0
  %v8997 = vmax.f32 %v8933, 0.0
  %v8998 = vmax.f32 %v8934, 0.0
  %v8999 = vmax.f32 %v8935, 0.0
  %v9000 = vmax.f32 %v8936, 0.0
  %v9001 = vmax.f32 %v8937, 0.0
  %v9002 = vmax.f32 %v8938, 0.0
  %v9003 = vmax.f32 %v8939, 0.0
  %v9004 = vmax.f32 %v8940, 0.0
  %v9005 = vmax.f32 %v8941, 0.0
  %v9006 = vmax.f32 %v8942, 0.0
  %v9007 = vmax.f32 %v8943, 0.0
  %v9008 = vmax.f32 %v8944, 0.0
  %v9009 = vmax.f32 %v8945, 0.0
  %v9010 = vmax.f32 %v8946, 0.0
  %v9011 = vmax.f32 %v8947, 0.0
  %v9012 = vmax.f32 %v8948, 0.0
  %v9013 = vmax.f32 %v8949, 0.0
  %v9014 = vmax.f32 %v8950, 0.0
  %v9015 = vmax.f32 %v8951, 0.0
  %v9016 = vmax.f32 %v8952, 0.0
  %v9017 = vmax.f32 %v8953, 0.0
  %v9018 = vmax.f32 %v8954, 0.0
  %v9019 = vmax.f32 %v8955, 0.0
  %v9020 = vmax.f32 %v8956, 0.0
  %v9021 = vmax.f32 %v8957, 0.0
  %v9022 = vmax.f32 %v8958, 0.0
  %v9023 = vmax.f32 %v8959, 0.0
  %v9024 = vpack.c.bf16 %v8961, %v8960
  %v9025 = vpack.c.bf16 %v8963, %v8962
  %v9026 = vpack.c.bf16 %v8965, %v8964
  %v9027 = vpack.c.bf16 %v8967, %v8966
  %v9028 = vpack.c.bf16 %v8969, %v8968
  %v9029 = vpack.c.bf16 %v8971, %v8970
  %v9030 = vpack.c.bf16 %v8973, %v8972
  %v9031 = vpack.c.bf16 %v8975, %v8974
  %v9032 = vpack.c.bf16 %v8977, %v8976
  %v9033 = vpack.c.bf16 %v8979, %v8978
  %v9034 = vpack.c.bf16 %v8981, %v8980
  %v9035 = vpack.c.bf16 %v8983, %v8982
  %v9036 = vpack.c.bf16 %v8985, %v8984
  %v9037 = vpack.c.bf16 %v8987, %v8986
  %v9038 = vpack.c.bf16 %v8989, %v8988
  %v9039 = vpack.c.bf16 %v8991, %v8990
  %v9040 = vpack.c.bf16 %v8993, %v8992
  %v9041 = vpack.c.bf16 %v8995, %v8994
  %v9042 = vpack.c.bf16 %v8997, %v8996
  %v9043 = vpack.c.bf16 %v8999, %v8998
  %v9044 = vpack.c.bf16 %v9001, %v9000
  %v9045 = vpack.c.bf16 %v9003, %v9002
  %v9046 = vpack.c.bf16 %v9005, %v9004
  %v9047 = vpack.c.bf16 %v9007, %v9006
  %v9048 = vpack.c.bf16 %v9009, %v9008
  %v9049 = vpack.c.bf16 %v9011, %v9010
  %v9050 = vpack.c.bf16 %v9013, %v9012
  %v9051 = vpack.c.bf16 %v9015, %v9014
  %v9052 = vpack.c.bf16 %v9017, %v9016
  %v9053 = vpack.c.bf16 %v9019, %v9018
  %v9054 = vpack.c.bf16 %v9021, %v9020
  %v9055 = vpack.c.bf16 %v9023, %v9022
  %v9088 = vunpack.c.l.b16 %v9024
  %v9089 = vunpack.c.h.b16 %v9024
  %v9090 = vunpack.c.l.b16 %v9025
  %v9091 = vunpack.c.h.b16 %v9025
  %v9092 = vunpack.c.l.b16 %v9026
  %v9093 = vunpack.c.h.b16 %v9026
  %v9094 = vunpack.c.l.b16 %v9027
  %v9095 = vunpack.c.h.b16 %v9027
  %v9096 = vunpack.c.l.b16 %v9028
  %v9097 = vunpack.c.h.b16 %v9028
  %v9098 = vunpack.c.l.b16 %v9029
  %v9099 = vunpack.c.h.b16 %v9029
  %v9100 = vunpack.c.l.b16 %v9030
  %v9101 = vunpack.c.h.b16 %v9030
  %v9102 = vunpack.c.l.b16 %v9031
  %v9103 = vunpack.c.h.b16 %v9031
  %v9104 = vunpack.c.l.b16 %v9032
  %v9105 = vunpack.c.h.b16 %v9032
  %v9106 = vunpack.c.l.b16 %v9033
  %v9107 = vunpack.c.h.b16 %v9033
  %v9108 = vunpack.c.l.b16 %v9034
  %v9109 = vunpack.c.h.b16 %v9034
  %v9110 = vunpack.c.l.b16 %v9035
  %v9111 = vunpack.c.h.b16 %v9035
  %v9112 = vunpack.c.l.b16 %v9036
  %v9113 = vunpack.c.h.b16 %v9036
  %v9114 = vunpack.c.l.b16 %v9037
  %v9115 = vunpack.c.h.b16 %v9037
  %v9116 = vunpack.c.l.b16 %v9038
  %v9117 = vunpack.c.h.b16 %v9038
  %v9118 = vunpack.c.l.b16 %v9039
  %v9119 = vunpack.c.h.b16 %v9039
  %v9120 = vunpack.c.l.b16 %v9040
  %v9121 = vunpack.c.h.b16 %v9040
  %v9122 = vunpack.c.l.b16 %v9041
  %v9123 = vunpack.c.h.b16 %v9041
  %v9124 = vunpack.c.l.b16 %v9042
  %v9125 = vunpack.c.h.b16 %v9042
  %v9126 = vunpack.c.l.b16 %v9043
  %v9127 = vunpack.c.h.b16 %v9043
  %v9128 = vunpack.c.l.b16 %v9044
  %v9129 = vunpack.c.h.b16 %v9044
  %v9130 = vunpack.c.l.b16 %v9045
  %v9131 = vunpack.c.h.b16 %v9045
  %v9132 = vunpack.c.l.b16 %v9046
  %v9133 = vunpack.c.h.b16 %v9046
  %v9134 = vunpack.c.l.b16 %v9047
  %v9135 = vunpack.c.h.b16 %v9047
  %v9136 = vunpack.c.l.b16 %v9048
  %v9137 = vunpack.c.h.b16 %v9048
  %v9138 = vunpack.c.l.b16 %v9049
  %v9139 = vunpack.c.h.b16 %v9049
  %v9140 = vunpack.c.l.b16 %v9050
  %v9141 = vunpack.c.h.b16 %v9050
  %v9142 = vunpack.c.l.b16 %v9051
  %v9143 = vunpack.c.h.b16 %v9051
  %v9144 = vunpack.c.l.b16 %v9052
  %v9145 = vunpack.c.h.b16 %v9052
  %v9146 = vunpack.c.l.b16 %v9053
  %v9147 = vunpack.c.h.b16 %v9053
  %v9148 = vunpack.c.l.b16 %v9054
  %v9149 = vunpack.c.h.b16 %v9054
  %v9150 = vunpack.c.l.b16 %v9055
  %v9151 = vunpack.c.h.b16 %v9055
  %v9152 = vpack.c.b16 %v9088, %v9088
  %v9153 = vpack.c.b16 %v9089, %v9089
  %v9154 = vpack.c.b16 %v9090, %v9090
  %v9155 = vpack.c.b16 %v9091, %v9091
  %v9156 = vpack.c.b16 %v9092, %v9092
  %v9157 = vpack.c.b16 %v9093, %v9093
  %v9158 = vpack.c.b16 %v9094, %v9094
  %v9159 = vpack.c.b16 %v9095, %v9095
  %v9160 = vpack.c.b16 %v9096, %v9096
  %v9161 = vpack.c.b16 %v9097, %v9097
  %v9162 = vpack.c.b16 %v9098, %v9098
  %v9163 = vpack.c.b16 %v9099, %v9099
  %v9164 = vpack.c.b16 %v9100, %v9100
  %v9165 = vpack.c.b16 %v9101, %v9101
  %v9166 = vpack.c.b16 %v9102, %v9102
  %v9167 = vpack.c.b16 %v9103, %v9103
  %v9168 = vpack.c.b16 %v9104, %v9104
  %v9169 = vpack.c.b16 %v9105, %v9105
  %v9170 = vpack.c.b16 %v9106, %v9106
  %v9171 = vpack.c.b16 %v9107, %v9107
  %v9172 = vpack.c.b16 %v9108, %v9108
  %v9173 = vpack.c.b16 %v9109, %v9109
  %v9174 = vpack.c.b16 %v9110, %v9110
  %v9175 = vpack.c.b16 %v9111, %v9111
  %v9176 = vpack.c.b16 %v9112, %v9112
  %v9177 = vpack.c.b16 %v9113, %v9113
  %v9178 = vpack.c.b16 %v9114, %v9114
  %v9179 = vpack.c.b16 %v9115, %v9115
  %v9180 = vpack.c.b16 %v9116, %v9116
  %v9181 = vpack.c.b16 %v9117, %v9117
  %v9182 = vpack.c.b16 %v9118, %v9118
  %v9183 = vpack.c.b16 %v9119, %v9119
  %v9184 = vpack.c.b16 %v9120, %v9120
  %v9185 = vpack.c.b16 %v9121, %v9121
  %v9186 = vpack.c.b16 %v9122, %v9122
  %v9187 = vpack.c.b16 %v9123, %v9123
  %v9188 = vpack.c.b16 %v9124, %v9124
  %v9189 = vpack.c.b16 %v9125, %v9125
  %v9190 = vpack.c.b16 %v9126, %v9126
  %v9191 = vpack.c.b16 %v9127, %v9127
  %v9192 = vpack.c.b16 %v9128, %v9128
  %v9193 = vpack.c.b16 %v9129, %v9129
  %v9194 = vpack.c.b16 %v9130, %v9130
  %v9195 = vpack.c.b16 %v9131, %v9131
  %v9196 = vpack.c.b16 %v9132, %v9132
  %v9197 = vpack.c.b16 %v9133, %v9133
  %v9198 = vpack.c.b16 %v9134, %v9134
  %v9199 = vpack.c.b16 %v9135, %v9135
  %v9200 = vpack.c.b16 %v9136, %v9136
  %v9201 = vpack.c.b16 %v9137, %v9137
  %v9202 = vpack.c.b16 %v9138, %v9138
  %v9203 = vpack.c.b16 %v9139, %v9139
  %v9204 = vpack.c.b16 %v9140, %v9140
  %v9205 = vpack.c.b16 %v9141, %v9141
  %v9206 = vpack.c.b16 %v9142, %v9142
  %v9207 = vpack.c.b16 %v9143, %v9143
  %v9208 = vpack.c.b16 %v9144, %v9144
  %v9209 = vpack.c.b16 %v9145, %v9145
  %v9210 = vpack.c.b16 %v9146, %v9146
  %v9211 = vpack.c.b16 %v9147, %v9147
  %v9212 = vpack.c.b16 %v9148, %v9148
  %v9213 = vpack.c.b16 %v9149, %v9149
  %v9214 = vpack.c.b16 %v9150, %v9150
  %v9215 = vpack.c.b16 %v9151, %v9151
  %vm9280 = vcmask 257024
  %9281 = vst.msk [vmem:[%s3] sm:$0xf] %vm9280, %v9152
  %9282 = vst.msk [vmem:[%s3 + $0x4] sm:$0xf] %vm9280, %v9153
  %9283 = vst.msk [vmem:[%s3 + $0x8] sm:$0xf] %vm9280, %v9154
  %9284 = vst.msk [vmem:[%s3 + $0xc] sm:$0xf] %vm9280, %v9155
  %9285 = vst.msk [vmem:[%s3 + $0x10] sm:$0xf] %vm9280, %v9156
  %9286 = vst.msk [vmem:[%s3 + $0x14] sm:$0xf] %vm9280, %v9157
  %9287 = vst.msk [vmem:[%s3 + $0x18] sm:$0xf] %vm9280, %v9158
  %9288 = vst.msk [vmem:[%s3 + $0x1c] sm:$0xf] %vm9280, %v9159
  %9289 = vst.msk [vmem:[%s3 + $0x20] sm:$0xf] %vm9280, %v9160
  %9290 = vst.msk [vmem:[%s3 + $0x24] sm:$0xf] %vm9280, %v9161
  %9291 = vst.msk [vmem:[%s3 + $0x28] sm:$0xf] %vm9280, %v9162
  %9292 = vst.msk [vmem:[%s3 + $0x2c] sm:$0xf] %vm9280, %v9163
  %9293 = vst.msk [vmem:[%s3 + $0x30] sm:$0xf] %vm9280, %v9164
  %9294 = vst.msk [vmem:[%s3 + $0x34] sm:$0xf] %vm9280, %v9165
  %9295 = vst.msk [vmem:[%s3 + $0x38] sm:$0xf] %vm9280, %v9166
  %9296 = vst.msk [vmem:[%s3 + $0x3c] sm:$0xf] %vm9280, %v9167
  %9297 = vst.msk [vmem:[%s3 + $0x40] sm:$0xf] %vm9280, %v9168
  %9298 = vst.msk [vmem:[%s3 + $0x44] sm:$0xf] %vm9280, %v9169
  %9299 = vst.msk [vmem:[%s3 + $0x48] sm:$0xf] %vm9280, %v9170
  %9300 = vst.msk [vmem:[%s3 + $0x4c] sm:$0xf] %vm9280, %v9171
  %9301 = vst.msk [vmem:[%s3 + $0x50] sm:$0xf] %vm9280, %v9172
  %9302 = vst.msk [vmem:[%s3 + $0x54] sm:$0xf] %vm9280, %v9173
  %9303 = vst.msk [vmem:[%s3 + $0x58] sm:$0xf] %vm9280, %v9174
  %9304 = vst.msk [vmem:[%s3 + $0x5c] sm:$0xf] %vm9280, %v9175
  %9305 = vst.msk [vmem:[%s3 + $0x60] sm:$0xf] %vm9280, %v9176
  %9306 = vst.msk [vmem:[%s3 + $0x64] sm:$0xf] %vm9280, %v9177
  %9307 = vst.msk [vmem:[%s3 + $0x68] sm:$0xf] %vm9280, %v9178
  %9308 = vst.msk [vmem:[%s3 + $0x6c] sm:$0xf] %vm9280, %v9179
  %9309 = vst.msk [vmem:[%s3 + $0x70] sm:$0xf] %vm9280, %v9180
  %9310 = vst.msk [vmem:[%s3 + $0x74] sm:$0xf] %vm9280, %v9181
  %9311 = vst.msk [vmem:[%s3 + $0x78] sm:$0xf] %vm9280, %v9182
  %9312 = vst.msk [vmem:[%s3 + $0x7c] sm:$0xf] %vm9280, %v9183
  %9313 = vst.msk [vmem:[%s3 + $0x80] sm:$0xf] %vm9280, %v9184
  %9314 = vst.msk [vmem:[%s3 + $0x84] sm:$0xf] %vm9280, %v9185
  %9315 = vst.msk [vmem:[%s3 + $0x88] sm:$0xf] %vm9280, %v9186
  %9316 = vst.msk [vmem:[%s3 + $0x8c] sm:$0xf] %vm9280, %v9187
  %9317 = vst.msk [vmem:[%s3 + $0x90] sm:$0xf] %vm9280, %v9188
  %9318 = vst.msk [vmem:[%s3 + $0x94] sm:$0xf] %vm9280, %v9189
  %9319 = vst.msk [vmem:[%s3 + $0x98] sm:$0xf] %vm9280, %v9190
  %9320 = vst.msk [vmem:[%s3 + $0x9c] sm:$0xf] %vm9280, %v9191
  %9321 = vst.msk [vmem:[%s3 + $0xa0] sm:$0xf] %vm9280, %v9192
  %9322 = vst.msk [vmem:[%s3 + $0xa4] sm:$0xf] %vm9280, %v9193
  %9323 = vst.msk [vmem:[%s3 + $0xa8] sm:$0xf] %vm9280, %v9194
  %9324 = vst.msk [vmem:[%s3 + $0xac] sm:$0xf] %vm9280, %v9195
  %9325 = vst.msk [vmem:[%s3 + $0xb0] sm:$0xf] %vm9280, %v9196
  %9326 = vst.msk [vmem:[%s3 + $0xb4] sm:$0xf] %vm9280, %v9197
  %9327 = vst.msk [vmem:[%s3 + $0xb8] sm:$0xf] %vm9280, %v9198
  %9328 = vst.msk [vmem:[%s3 + $0xbc] sm:$0xf] %vm9280, %v9199
  %9329 = vst.msk [vmem:[%s3 + $0xc0] sm:$0xf] %vm9280, %v9200
  %9330 = vst.msk [vmem:[%s3 + $0xc4] sm:$0xf] %vm9280, %v9201
  %9331 = vst.msk [vmem:[%s3 + $0xc8] sm:$0xf] %vm9280, %v9202
  %9332 = vst.msk [vmem:[%s3 + $0xcc] sm:$0xf] %vm9280, %v9203
  %9333 = vst.msk [vmem:[%s3 + $0xd0] sm:$0xf] %vm9280, %v9204
  %9334 = vst.msk [vmem:[%s3 + $0xd4] sm:$0xf] %vm9280, %v9205
  %9335 = vst.msk [vmem:[%s3 + $0xd8] sm:$0xf] %vm9280, %v9206
  %9336 = vst.msk [vmem:[%s3 + $0xdc] sm:$0xf] %vm9280, %v9207
  %9337 = vst.msk [vmem:[%s3 + $0xe0] sm:$0xf] %vm9280, %v9208
  %9338 = vst.msk [vmem:[%s3 + $0xe4] sm:$0xf] %vm9280, %v9209
  %9339 = vst.msk [vmem:[%s3 + $0xe8] sm:$0xf] %vm9280, %v9210
  %9340 = vst.msk [vmem:[%s3 + $0xec] sm:$0xf] %vm9280, %v9211
  %9341 = vst.msk [vmem:[%s3 + $0xf0] sm:$0xf] %vm9280, %v9212
  %9342 = vst.msk [vmem:[%s3 + $0xf4] sm:$0xf] %vm9280, %v9213
  %9343 = vst.msk [vmem:[%s3 + $0xf8] sm:$0xf] %vm9280, %v9214
  %9344 = vst.msk [vmem:[%s3 + $0xfc] sm:$0xf] %vm9280, %v9215
  // Predicated region
  $region14: #{fwd.8} parent=0 // pred_check
    _
  $region15: #{fwd.8} parent=0 // pred_check_branch
    %9346 = sbr.rel (0) target = $region17
  $region16: #{fwd.8} parent=0 // pred_region
    _
  $region17: #{fwd.8} parent=0 // pred_fallthru
    _
  // Predicated region
  $region18: #{fwd.8} parent=0 // pred_check
    _
  $region19: #{fwd.8} parent=0 // pred_check_branch
    %9348 = sbr.rel (0) target = $region21
  $region20: #{fwd.8} parent=0 // pred_region
    _
  $region21: #{fwd.8} parent=0 // pred_fallthru
    _

</llo_original>
